<compile_context>
chip_gen: v7x
topology: tpu7x:2x2x1
jax: 0.10.0
libtpu: 0.0.40
codegen_flags: <defaults>
</compile_context>

<pallas_src>
import functools
import math

import jax
import jax.numpy as jnp
from jax.experimental import pallas as pl
from jax.experimental.pallas import tpu as pltpu


# ---------------------------------------------------------------------------
# in-kernel helpers (all f32 elementwise math)
# ---------------------------------------------------------------------------
def _layernorm(x, gamma, beta, eps=1e-5):
    # PyTorch nn.LayerNorm: biased variance over the last dim, eps=1e-5.
    mu = jnp.mean(x, axis=-1, keepdims=True)
    xc = x - mu
    var = jnp.mean(xc * xc, axis=-1, keepdims=True)
    return xc * jax.lax.rsqrt(var + eps) * gamma + beta


def _erf_f32(x):
    # Eigen/XLA float32 rational approximation of erf (matches lax.erf on f32);
    # built only from mul/add/div so it lowers cleanly in Mosaic.
    x = jnp.clip(x, -4.0, 4.0)
    x2 = x * x
    p = jnp.float32(-2.72614225801306e-10)
    p = p * x2 + jnp.float32(2.77068142495902e-08)
    p = p * x2 + jnp.float32(-2.10102402082508e-06)
    p = p * x2 + jnp.float32(-5.69250639462346e-05)
    p = p * x2 + jnp.float32(-7.34990630326855e-04)
    p = p * x2 + jnp.float32(-2.95459980854025e-03)
    p = p * x2 + jnp.float32(-1.60960333262415e-02)
    p = p * x
    q = jnp.float32(-1.45660718464996e-05)
    q = q * x2 + jnp.float32(-2.13374055278905e-04)
    q = q * x2 + jnp.float32(-1.68282697438203e-03)
    q = q * x2 + jnp.float32(-7.37332916720468e-03)
    q = q * x2 + jnp.float32(-1.42647390514189e-02)
    return p / q


def _gelu_exact(x):
    # nn.GELU() default == exact erf-based GELU.
    return 0.5 * x * (1.0 + _erf_f32(x * jnp.float32(1.0 / math.sqrt(2.0))))


# ---------------------------------------------------------------------------
# kernel: one batch-block (block_b sequences) per grid step
# ---------------------------------------------------------------------------
def _att_block_kernel(num_heads, compute_dtype, approx_recip,
                      x_ref,
                      g1_ref, b1_ref,
                      wqkv_ref, bqkv_ref,
                      wo_ref, bo_ref,
                      g2_ref, b2_ref,
                      g3_ref, b3_ref,
                      wl1_ref, bl1_ref,
                      g4_ref, b4_ref,
                      wl2_ref, bl2_ref,
                      o_ref):
    Bblk, S, E = x_ref.shape
    H = num_heads
    Dh = E // H
    rows = Bblk * S
    scale = jnp.float32(1.0 / math.sqrt(Dh))
    cdt = compute_dtype

    # (Bblk, S, E) -> (rows, E): merges major dims only (free).
    x = x_ref[...].astype(jnp.float32).reshape(rows, E)

    # --- layer_norm1 ---
    xn = _layernorm(x, g1_ref[...], b1_ref[...])
    xn_c = xn.astype(cdt)

    # --- fused QKV projection: one wide MXU pass (N = 3E), lane-dense weight ---
    qkv = jnp.dot(xn_c, wqkv_ref[...],
                  preferred_element_type=jnp.float32) + bqkv_ref[...]
    q = qkv[:, :E]
    k = qkv[:, E:2 * E]
    v = qkv[:, 2 * E:]

    # --- multi-head self-attention (no masks, dropout=0) ---
    # Per-head lane slices of the fused q/k/v; accumulate directly through the
    # lane-dense out-projection so only the f32 accumulator stays live.
    att = jnp.zeros((rows, E), jnp.float32)
    for h in range(H):                                   # static, small
        lo, hi = h * Dh, (h + 1) * Dh
        qh = q[:, lo:hi].reshape(Bblk, S, Dh).astype(cdt)
        kh = k[:, lo:hi].reshape(Bblk, S, Dh).astype(cdt)
        vh = v[:, lo:hi].reshape(Bblk, S, Dh).astype(cdt)

        s = jnp.einsum('bqd,bkd->bqk', qh, kh,
                       preferred_element_type=jnp.float32) * scale
        s = s - jnp.max(s, axis=-1, keepdims=True)
        p = jnp.exp(s)
        inv = pl.reciprocal(jnp.sum(p, axis=-1, keepdims=True),
                            approx=approx_recip)
        p = p * inv
        oh = jnp.einsum('bqk,bkd->bqd', p.astype(cdt), vh,
                        preferred_element_type=jnp.float32)   # (Bblk, S, Dh)

        # concat-over-heads + (E,E) out-proj  ==  sum_h  o_h @ Wo[lo:hi, :]
        att = att + jnp.dot(oh.reshape(rows, Dh).astype(cdt),
                            wo_ref[lo:hi, :],
                            preferred_element_type=jnp.float32)
    att = att + bo_ref[...]

    # --- layer_norm2, residual against the *normed* x (as in the module), layer_norm3 ---
    att = _layernorm(att, g2_ref[...], b2_ref[...])
    x2 = xn + att
    x3 = _layernorm(x2, g3_ref[...], b3_ref[...])

    # --- MLP: linear1 -> GELU -> layer_norm4 -> linear2, residual ---
    h1 = jnp.dot(x3.astype(cdt), wl1_ref[...],
                 preferred_element_type=jnp.float32) + bl1_ref[...]
    h1 = _gelu_exact(h1)
    h1 = _layernorm(h1, g4_ref[...], b4_ref[...])
    h2 = jnp.dot(h1.astype(cdt), wl2_ref[...],
                 preferred_element_type=jnp.float32) + bl2_ref[...]

    out = x3 + h2
    o_ref[...] = out.reshape(Bblk, S, E).astype(o_ref.dtype)


# ---------------------------------------------------------------------------
# wrapper helpers
# ---------------------------------------------------------------------------
def _default_target_rows():
    """Generation-aware activation-block row target."""
    try:
        vmem = pltpu.get_tpu_info().vmem_capacity_bytes
        # v5e/v6e (128 MiB VMEM): large blocks; v7x (64 MiB per TC): keep modest.
        return 768 if vmem >= (100 << 20) else 384
    except Exception:
        return 256


def _pick_block_b(B, S, target_rows):
    """Largest divisor of B with block_b*S <= target_rows, keeping >= 2 grid
    steps (v7x has 2 TensorCores on the 'parallel' axis), preferring an even
    step count so both cores get balanced work."""
    divs = [d for d in range(1, B + 1) if B % d == 0]
    cands = [d for d in divs if d * S <= target_rows] or [1]
    multi = [d for d in cands if B // d >= 2]
    if multi:
        even = [d for d in multi if (B // d) % 2 == 0]
        return max(even) if even else max(multi)
    return max(cands)


def pack_att_block_params(params, num_heads, compute_dtype=jnp.float32):
    """Host-side, one-time weight repack: fuse Q/K/V, cast matmul weights to the
    compute dtype.  Call once and reuse; do NOT call per forward."""
    del num_heads  # layout is head-agnostic (lane-dense)
    cdt = compute_dtype
    f32 = jnp.float32
    return {
        "ln1_g": params["ln1_g"].astype(f32), "ln1_b": params["ln1_b"].astype(f32),
        "wqkv": jnp.concatenate([params["wq"], params["wk"], params["wv"]],
                                axis=1).astype(cdt),          # (E, 3E) lane-dense
        "bqkv": jnp.concatenate([params["bq"], params["bk"], params["bv"]],
                                axis=1).astype(f32),          # (1, 3E)
        "wo": params["wo"].astype(cdt), "bo": params["bo"].astype(f32),
        "ln2_g": params["ln2_g"].astype(f32), "ln2_b": params["ln2_b"].astype(f32),
        "ln3_g": params["ln3_g"].astype(f32), "ln3_b": params["ln3_b"].astype(f32),
        "w1": params["w1"].astype(cdt), "b1": params["b1"].astype(f32),
        "ln4_g": params["ln4_g"].astype(f32), "ln4_b": params["ln4_b"].astype(f32),
        "w2": params["w2"].astype(cdt), "b2": params["b2"].astype(f32),
    }


def att_block_forward(x, packed, num_heads, *, compute_dtype=jnp.float32,
                      block_b=None, approx_reciprocal=None):
    B, S, E = x.shape
    H = num_heads
    assert E % H == 0
    out_dtype = x.dtype
    cdt = compute_dtype
    if approx_reciprocal is None:
        # exact reciprocal on the f32 validation path, EUP-approx on the fast path
        approx_reciprocal = (cdt != jnp.float32)
    if block_b is None:
        block_b = _pick_block_b(B, S, _default_target_rows())
    if B % block_b != 0:
        block_b = 1

    # bf16 path: cast the activation host-side -> halves the per-step input DMA.
    x_in = x if x.dtype == cdt else x.astype(cdt)

    weights = [
        packed["ln1_g"], packed["ln1_b"],
        packed["wqkv"], packed["bqkv"],
        packed["wo"], packed["bo"],
        packed["ln2_g"], packed["ln2_b"],
        packed["ln3_g"], packed["ln3_b"],
        packed["w1"], packed["b1"],
        packed["ln4_g"], packed["ln4_b"],
        packed["w2"], packed["b2"],
    ]

    # Single-buffered, VMEM-resident constants (not part of the pipeline).
    const_spec = pl.BlockSpec(memory_space=pltpu.MemorySpace.VMEM)
    in_specs = [pl.BlockSpec((block_b, S, E), lambda b: (b, 0, 0))]
    in_specs += [const_spec] * len(weights)

    # Explicit VMEM budget: weights (1 copy) + double-buffered activation blocks
    # + a generous intermediate estimate, clamped so it is valid on v7x (64 MiB)
    # and v5e (16 MiB default scoped limit would otherwise be too small).
    F = packed["w1"].shape[1]
    rows = block_b * S
    weight_bytes = sum(int(w.size) * w.dtype.itemsize for w in weights)
    act_bytes = 2 * rows * E * (jnp.dtype(cdt).itemsize + jnp.dtype(out_dtype).itemsize)
    inter_bytes = rows * (6 * E + 3 * F) * 4
    budget = weight_bytes + act_bytes + 2 * inter_bytes + (4 << 20)
    vmem_limit = int(min(max(budget, 32 << 20), 64 << 20))

    kernel = functools.partial(_att_block_kernel, H, cdt, approx_reciprocal)

    return pl.pallas_call(
        kernel,
        out_shape=jax.ShapeDtypeStruct((B, S, E), out_dtype),
        grid=(B // block_b,),
        in_specs=in_specs,
        out_specs=pl.BlockSpec((block_b, S, E), lambda b: (b, 0, 0)),
        compiler_params=pltpu.CompilerParams(
            dimension_semantics=("parallel",),
            vmem_limit_bytes=vmem_limit),
    )(x_in, *weights)


# ---------------------------------------------------------------------------
# pure-JAX reference (same math, for verification)
# ---------------------------------------------------------------------------
def ref_forward(x, params, num_heads):
    def ln(y, g, b, eps=1e-5):
        mu = jnp.mean(y, axis=-1, keepdims=True)
        var = jnp.mean((y - mu) ** 2, axis=-1, keepdims=True)
        return (y - mu) / jnp.sqrt(var + eps) * g + b

    B, S, E = x.shape
    H = num_heads
    Dh = E // H
    xn = ln(x, params["ln1_g"], params["ln1_b"])
    q = xn @ params["wq"] + params["bq"]
    k = xn @ params["wk"] + params["bk"]
    v = xn @ params["wv"] + params["bv"]
    q = q.reshape(B, S, H, Dh).transpose(0, 2, 1, 3)
    k = k.reshape(B, S, H, Dh).transpose(0, 2, 1, 3)
    v = v.reshape(B, S, H, Dh).transpose(0, 2, 1, 3)
    s = jnp.einsum("bhqd,bhkd->bhqk", q, k) / math.sqrt(Dh)
    p = jax.nn.softmax(s, axis=-1)
    att = jnp.einsum("bhqk,bhkd->bhqd", p, v).transpose(0, 2, 1, 3).reshape(B, S, E)
    att = att @ params["wo"] + params["bo"]
    att = ln(att, params["ln2_g"], params["ln2_b"])
    x2 = xn + att
    x3 = ln(x2, params["ln3_g"], params["ln3_b"])
    h1 = jax.nn.gelu(x3 @ params["w1"] + params["b1"], approximate=False)
    h1 = ln(h1, params["ln4_g"], params["ln4_b"])
    h2 = h1 @ params["w2"] + params["b2"]
    return x3 + h2


# ---------------------------------------------------------------------------
if __name__ == "__main__":
    # E=128 keeps everything lane-dense; B=4 -> block_b=2 -> grid of 2 steps.
    B, S, E, H, EXP = 4, 16, 128, 8, 2
    F = E * EXP

    key = jax.random.PRNGKey(0)
    keys = jax.random.split(key, 21)

    def rnd(k, shape, scale=0.1):
        return scale * jax.random.normal(k, shape, dtype=jnp.float32)

    # Weight matrices are stored already transposed (in_dim, out_dim) so the
    # kernel computes x @ W + b (same convention as the reference).
    params = {
        "ln1_g": 1.0 + rnd(keys[0], (1, E), 0.05), "ln1_b": rnd(keys[1], (1, E), 0.05),
        "wq": rnd(keys[2], (E, E)), "wk": rnd(keys[3], (E, E)), "wv": rnd(keys[4], (E, E)),
        "bq": rnd(keys[5], (1, E), 0.02), "bk": rnd(keys[6], (1, E), 0.02),
        "bv": rnd(keys[7], (1, E), 0.02),
        "wo": rnd(keys[8], (E, E)), "bo": rnd(keys[9], (1, E), 0.02),
        "ln2_g": 1.0 + rnd(keys[10], (1, E), 0.05), "ln2_b": rnd(keys[11], (1, E), 0.05),
        "ln3_g": 1.0 + rnd(keys[12], (1, E), 0.05), "ln3_b": rnd(keys[13], (1, E), 0.05),
        "w1": rnd(keys[14], (E, F)), "b1": rnd(keys[15], (1, F), 0.02),
        "ln4_g": 1.0 + rnd(keys[16], (1, F), 0.05), "ln4_b": rnd(keys[17], (1, F), 0.05),
        "w2": rnd(keys[18], (F, E)), "b2": rnd(keys[19], (1, E), 0.02),
    }

    x = jax.random.normal(keys[20], (B, S, E), dtype=jnp.float32)

    ref = jax.block_until_ready(ref_forward(x, params, num_heads=H))

    # One-time weight packing (hoisted out of the per-call path).
    packed_f32 = pack_att_block_params(params, H, compute_dtype=jnp.float32)
    packed_bf16 = pack_att_block_params(params, H, compute_dtype=jnp.bfloat16)

    # f32 matmul path: strict correctness check.
    out_f32 = jax.block_until_ready(
        att_block_forward(x, packed_f32, num_heads=H, compute_dtype=jnp.float32))
    assert out_f32.shape == (B, S, E)
    assert jnp.max(jnp.abs(out_f32 - ref)) < 5e-3, "f32 Pallas output mismatch vs reference"

    # bf16 matmul-operand path (bf16-native MXU on v5e/v6e/v7x): sanity check.
    # Note: softmax rows are only ~1e-3-close to summing to 1 on this path
    # (pl.reciprocal approx=True) and x/weights are bf16.
    out_bf16 = jax.block_until_ready(
        att_block_forward(x, packed_bf16, num_heads=H, compute_dtype=jnp.bfloat16))
    assert out_bf16.shape == (B, S, E)
    assert jnp.max(jnp.abs(out_bf16 - ref)) < 1e-1, "bf16 Pallas output mismatch vs reference"

    print("KERNEL_OK")
</pallas_src>

<mosaic_0001>
module attributes {stable_mosaic.version = 11 : i64} {
  func.func @_att_block_kernel(%arg0: i32, %arg1: memref<2x16x128xf32, #tpu.memory_space<vmem>>, %arg2: memref<1x128xf32, #tpu.memory_space<vmem>>, %arg3: memref<1x128xf32, #tpu.memory_space<vmem>>, %arg4: memref<128x384xf32, #tpu.memory_space<vmem>>, %arg5: memref<1x384xf32, #tpu.memory_space<vmem>>, %arg6: memref<128x128xf32, #tpu.memory_space<vmem>>, %arg7: memref<1x128xf32, #tpu.memory_space<vmem>>, %arg8: memref<1x128xf32, #tpu.memory_space<vmem>>, %arg9: memref<1x128xf32, #tpu.memory_space<vmem>>, %arg10: memref<1x128xf32, #tpu.memory_space<vmem>>, %arg11: memref<1x128xf32, #tpu.memory_space<vmem>>, %arg12: memref<128x256xf32, #tpu.memory_space<vmem>>, %arg13: memref<1x256xf32, #tpu.memory_space<vmem>>, %arg14: memref<1x256xf32, #tpu.memory_space<vmem>>, %arg15: memref<1x256xf32, #tpu.memory_space<vmem>>, %arg16: memref<256x128xf32, #tpu.memory_space<vmem>>, %arg17: memref<1x128xf32, #tpu.memory_space<vmem>>, %arg18: memref<2x16x128xf32, #tpu.memory_space<vmem>>) attributes {dimension_semantics = [#tpu.dimension_semantics<parallel>], iteration_bounds = array<i64: 2>, scalar_prefetch = 0 : i64, scratch_operands = 0 : i64, tpu.core_type = #tpu.core_type<tc>, window_params = [{transform_indices = @transform_0, window_bounds = array<i64: 2, 16, 128>}, {pipeline_mode = #tpu.pipeline_mode<synchronous>, transform_indices = @transform_1, window_bounds = array<i64: 1, 128>}, {pipeline_mode = #tpu.pipeline_mode<synchronous>, transform_indices = @transform_2, window_bounds = array<i64: 1, 128>}, {pipeline_mode = #tpu.pipeline_mode<synchronous>, transform_indices = @transform_3, window_bounds = array<i64: 128, 384>}, {pipeline_mode = #tpu.pipeline_mode<synchronous>, transform_indices = @transform_4, window_bounds = array<i64: 1, 384>}, {pipeline_mode = #tpu.pipeline_mode<synchronous>, transform_indices = @transform_5, window_bounds = array<i64: 128, 128>}, {pipeline_mode = #tpu.pipeline_mode<synchronous>, transform_indices = @transform_6, window_bounds = array<i64: 1, 128>}, {pipeline_mode = #tpu.pipeline_mode<synchronous>, transform_indices = @transform_7, window_bounds = array<i64: 1, 128>}, {pipeline_mode = #tpu.pipeline_mode<synchronous>, transform_indices = @transform_8, window_bounds = array<i64: 1, 128>}, {pipeline_mode = #tpu.pipeline_mode<synchronous>, transform_indices = @transform_9, window_bounds = array<i64: 1, 128>}, {pipeline_mode = #tpu.pipeline_mode<synchronous>, transform_indices = @transform_10, window_bounds = array<i64: 1, 128>}, {pipeline_mode = #tpu.pipeline_mode<synchronous>, transform_indices = @transform_11, window_bounds = array<i64: 128, 256>}, {pipeline_mode = #tpu.pipeline_mode<synchronous>, transform_indices = @transform_12, window_bounds = array<i64: 1, 256>}, {pipeline_mode = #tpu.pipeline_mode<synchronous>, transform_indices = @transform_13, window_bounds = array<i64: 1, 256>}, {pipeline_mode = #tpu.pipeline_mode<synchronous>, transform_indices = @transform_14, window_bounds = array<i64: 1, 256>}, {pipeline_mode = #tpu.pipeline_mode<synchronous>, transform_indices = @transform_15, window_bounds = array<i64: 256, 128>}, {pipeline_mode = #tpu.pipeline_mode<synchronous>, transform_indices = @transform_16, window_bounds = array<i64: 1, 128>}, {transform_indices = @transform_17, window_bounds = array<i64: 2, 16, 128>}]} {
    %c0 = arith.constant 0 : index
    %c0_0 = arith.constant 0 : index
    %c0_1 = arith.constant 0 : index
    %0 = vector.load %arg1[%c0, %c0_0, %c0_1] : memref<2x16x128xf32, #tpu.memory_space<vmem>>, vector<2x16x128xf32>
    %1 = vector.shape_cast %0 : vector<2x16x128xf32> to vector<32x128xf32>
    %c0_2 = arith.constant 0 : index
    %c0_3 = arith.constant 0 : index
    %2 = vector.load %arg2[%c0_2, %c0_3] : memref<1x128xf32, #tpu.memory_space<vmem>>, vector<1x128xf32>
    %c0_4 = arith.constant 0 : index
    %c0_5 = arith.constant 0 : index
    %3 = vector.load %arg3[%c0_4, %c0_5] : memref<1x128xf32, #tpu.memory_space<vmem>>, vector<1x128xf32>
    %cst = arith.constant dense<0.000000e+00> : vector<32xf32>
    %4 = vector.multi_reduction <add>, %1, %cst [1] : vector<32x128xf32> to vector<32xf32>
    %5 = vector.shape_cast %4 : vector<32xf32> to vector<32x1xf32>
    %cst_6 = arith.constant 1.280000e+02 : f32
    %6 = vector.broadcast %cst_6 : f32 to vector<32x1xf32>
    %7 = arith.divf %5, %6 : vector<32x1xf32>
    %8 = vector.broadcast %7 : vector<32x1xf32> to vector<32x128xf32>
    %9 = arith.subf %1, %8 : vector<32x128xf32>
    %10 = arith.mulf %9, %9 : vector<32x128xf32>
    %cst_7 = arith.constant dense<0.000000e+00> : vector<32xf32>
    %11 = vector.multi_reduction <add>, %10, %cst_7 [1] : vector<32x128xf32> to vector<32xf32>
    %12 = vector.shape_cast %11 : vector<32xf32> to vector<32x1xf32>
    %cst_8 = arith.constant 1.280000e+02 : f32
    %13 = vector.broadcast %cst_8 : f32 to vector<32x1xf32>
    %14 = arith.divf %12, %13 : vector<32x1xf32>
    %cst_9 = arith.constant 9.99999974E-6 : f32
    %15 = vector.broadcast %cst_9 : f32 to vector<32x1xf32>
    %16 = arith.addf %14, %15 : vector<32x1xf32>
    %17 = math.rsqrt %16 : vector<32x1xf32>
    %18 = vector.broadcast %17 : vector<32x1xf32> to vector<32x128xf32>
    %19 = arith.mulf %9, %18 : vector<32x128xf32>
    %20 = vector.broadcast %2 : vector<1x128xf32> to vector<32x128xf32>
    %21 = arith.mulf %19, %20 : vector<32x128xf32>
    %22 = vector.broadcast %3 : vector<1x128xf32> to vector<32x128xf32>
    %23 = arith.addf %21, %22 : vector<32x128xf32>
    %c0_10 = arith.constant 0 : index
    %c0_11 = arith.constant 0 : index
    %24 = vector.load %arg4[%c0_10, %c0_11] : memref<128x384xf32, #tpu.memory_space<vmem>>, vector<128x384xf32>
    %cst_12 = arith.constant dense<0.000000e+00> : vector<32x384xf32>
    %25 = tpu.matmul %23, %24, %cst_12 {dimension_numbers = #tpu.dot_dimension_numbers<[1], [0], [0], [1], [0, 0, 1, 1], [], []>} : vector<32x128xf32>, vector<128x384xf32>, vector<32x384xf32> -> vector<32x384xf32>
    %c0_13 = arith.constant 0 : index
    %c0_14 = arith.constant 0 : index
    %26 = vector.load %arg5[%c0_13, %c0_14] : memref<1x384xf32, #tpu.memory_space<vmem>>, vector<1x384xf32>
    %27 = vector.broadcast %26 : vector<1x384xf32> to vector<32x384xf32>
    %28 = arith.addf %25, %27 : vector<32x384xf32>
    %29 = vector.extract_strided_slice %28 {offsets = [0, 0], sizes = [32, 128], strides = [1, 1]} : vector<32x384xf32> to vector<32x128xf32>
    %30 = vector.extract_strided_slice %28 {offsets = [0, 128], sizes = [32, 128], strides = [1, 1]} : vector<32x384xf32> to vector<32x128xf32>
    %31 = vector.extract_strided_slice %28 {offsets = [0, 256], sizes = [32, 128], strides = [1, 1]} : vector<32x384xf32> to vector<32x128xf32>
    %cst_15 = arith.constant 0.000000e+00 : f32
    %32 = vector.broadcast %cst_15 : f32 to vector<32x128xf32>
    %33 = vector.extract_strided_slice %29 {offsets = [0, 0], sizes = [32, 16], strides = [1, 1]} : vector<32x128xf32> to vector<32x16xf32>
    %34 = vector.shape_cast %33 : vector<32x16xf32> to vector<2x16x16xf32>
    %35 = vector.extract_strided_slice %30 {offsets = [0, 0], sizes = [32, 16], strides = [1, 1]} : vector<32x128xf32> to vector<32x16xf32>
    %36 = vector.shape_cast %35 : vector<32x16xf32> to vector<2x16x16xf32>
    %37 = vector.extract_strided_slice %31 {offsets = [0, 0], sizes = [32, 16], strides = [1, 1]} : vector<32x128xf32> to vector<32x16xf32>
    %38 = vector.shape_cast %37 : vector<32x16xf32> to vector<2x16x16xf32>
    "tpu.trace_start"() <{level = 10 : i32, message = "bqd,bkd->bqk"}> : () -> ()
    %cst_16 = arith.constant dense<0.000000e+00> : vector<2x16x16xf32>
    %39 = tpu.matmul %34, %36, %cst_16 {dimension_numbers = #tpu.dot_dimension_numbers<[2], [2], [1], [1], [0, 0, 0, 1, 1, 1], [0], [0]>} : vector<2x16x16xf32>, vector<2x16x16xf32>, vector<2x16x16xf32> -> vector<2x16x16xf32>
    "tpu.trace_stop"() : () -> ()
    %cst_17 = arith.constant 2.500000e-01 : f32
    %40 = vector.broadcast %cst_17 : f32 to vector<2x16x16xf32>
    %41 = arith.mulf %39, %40 : vector<2x16x16xf32>
    %cst_18 = arith.constant dense<0xFF800000> : vector<2x16xf32>
    %42 = vector.multi_reduction <maximumf>, %41, %cst_18 [2] : vector<2x16x16xf32> to vector<2x16xf32>
    %43 = vector.shape_cast %42 : vector<2x16xf32> to vector<2x16x1xf32>
    %44 = vector.broadcast %43 : vector<2x16x1xf32> to vector<2x16x16xf32>
    %45 = arith.subf %41, %44 : vector<2x16x16xf32>
    %46 = math.exp %45 : vector<2x16x16xf32>
    %cst_19 = arith.constant dense<0.000000e+00> : vector<2x16xf32>
    %47 = vector.multi_reduction <add>, %46, %cst_19 [2] : vector<2x16x16xf32> to vector<2x16xf32>
    %48 = vector.shape_cast %47 : vector<2x16xf32> to vector<2x16x1xf32>
    %49 = tpu.reciprocal %48 : vector<2x16x1xf32> -> vector<2x16x1xf32>
    %50 = vector.broadcast %49 : vector<2x16x1xf32> to vector<2x16x16xf32>
    %51 = arith.mulf %46, %50 : vector<2x16x16xf32>
    "tpu.trace_start"() <{level = 10 : i32, message = "bqk,bkd->bqd"}> : () -> ()
    %cst_20 = arith.constant dense<0.000000e+00> : vector<2x16x16xf32>
    %52 = tpu.matmul %51, %38, %cst_20 {dimension_numbers = #tpu.dot_dimension_numbers<[2], [1], [1], [2], [0, 0, 0, 1, 1, 2], [0], [0]>} : vector<2x16x16xf32>, vector<2x16x16xf32>, vector<2x16x16xf32> -> vector<2x16x16xf32>
    "tpu.trace_stop"() : () -> ()
    %53 = vector.shape_cast %52 : vector<2x16x16xf32> to vector<32x16xf32>
    %c0_21 = arith.constant 0 : index
    %c0_22 = arith.constant 0 : index
    %54 = vector.load %arg6[%c0_21, %c0_22] : memref<128x128xf32, #tpu.memory_space<vmem>>, vector<16x128xf32>
    %cst_23 = arith.constant dense<0.000000e+00> : vector<32x128xf32>
    %55 = tpu.matmul %53, %54, %cst_23 {dimension_numbers = #tpu.dot_dimension_numbers<[1], [0], [0], [1], [0, 0, 1, 1], [], []>} : vector<32x16xf32>, vector<16x128xf32>, vector<32x128xf32> -> vector<32x128xf32>
    %56 = arith.addf %32, %55 : vector<32x128xf32>
    %57 = vector.extract_strided_slice %29 {offsets = [0, 16], sizes = [32, 16], strides = [1, 1]} : vector<32x128xf32> to vector<32x16xf32>
    %58 = vector.shape_cast %57 : vector<32x16xf32> to vector<2x16x16xf32>
    %59 = vector.extract_strided_slice %30 {offsets = [0, 16], sizes = [32, 16], strides = [1, 1]} : vector<32x128xf32> to vector<32x16xf32>
    %60 = vector.shape_cast %59 : vector<32x16xf32> to vector<2x16x16xf32>
    %61 = vector.extract_strided_slice %31 {offsets = [0, 16], sizes = [32, 16], strides = [1, 1]} : vector<32x128xf32> to vector<32x16xf32>
    %62 = vector.shape_cast %61 : vector<32x16xf32> to vector<2x16x16xf32>
    "tpu.trace_start"() <{level = 10 : i32, message = "bqd,bkd->bqk"}> : () -> ()
    %cst_24 = arith.constant dense<0.000000e+00> : vector<2x16x16xf32>
    %63 = tpu.matmul %58, %60, %cst_24 {dimension_numbers = #tpu.dot_dimension_numbers<[2], [2], [1], [1], [0, 0, 0, 1, 1, 1], [0], [0]>} : vector<2x16x16xf32>, vector<2x16x16xf32>, vector<2x16x16xf32> -> vector<2x16x16xf32>
    "tpu.trace_stop"() : () -> ()
    %cst_25 = arith.constant 2.500000e-01 : f32
    %64 = vector.broadcast %cst_25 : f32 to vector<2x16x16xf32>
    %65 = arith.mulf %63, %64 : vector<2x16x16xf32>
    %cst_26 = arith.constant dense<0xFF800000> : vector<2x16xf32>
    %66 = vector.multi_reduction <maximumf>, %65, %cst_26 [2] : vector<2x16x16xf32> to vector<2x16xf32>
    %67 = vector.shape_cast %66 : vector<2x16xf32> to vector<2x16x1xf32>
    %68 = vector.broadcast %67 : vector<2x16x1xf32> to vector<2x16x16xf32>
    %69 = arith.subf %65, %68 : vector<2x16x16xf32>
    %70 = math.exp %69 : vector<2x16x16xf32>
    %cst_27 = arith.constant dense<0.000000e+00> : vector<2x16xf32>
    %71 = vector.multi_reduction <add>, %70, %cst_27 [2] : vector<2x16x16xf32> to vector<2x16xf32>
    %72 = vector.shape_cast %71 : vector<2x16xf32> to vector<2x16x1xf32>
    %73 = tpu.reciprocal %72 : vector<2x16x1xf32> -> vector<2x16x1xf32>
    %74 = vector.broadcast %73 : vector<2x16x1xf32> to vector<2x16x16xf32>
    %75 = arith.mulf %70, %74 : vector<2x16x16xf32>
    "tpu.trace_start"() <{level = 10 : i32, message = "bqk,bkd->bqd"}> : () -> ()
    %cst_28 = arith.constant dense<0.000000e+00> : vector<2x16x16xf32>
    %76 = tpu.matmul %75, %62, %cst_28 {dimension_numbers = #tpu.dot_dimension_numbers<[2], [1], [1], [2], [0, 0, 0, 1, 1, 2], [0], [0]>} : vector<2x16x16xf32>, vector<2x16x16xf32>, vector<2x16x16xf32> -> vector<2x16x16xf32>
    "tpu.trace_stop"() : () -> ()
    %77 = vector.shape_cast %76 : vector<2x16x16xf32> to vector<32x16xf32>
    %c16 = arith.constant 16 : index
    %c0_29 = arith.constant 0 : index
    %78 = vector.load %arg6[%c16, %c0_29] : memref<128x128xf32, #tpu.memory_space<vmem>>, vector<16x128xf32>
    %cst_30 = arith.constant dense<0.000000e+00> : vector<32x128xf32>
    %79 = tpu.matmul %77, %78, %cst_30 {dimension_numbers = #tpu.dot_dimension_numbers<[1], [0], [0], [1], [0, 0, 1, 1], [], []>} : vector<32x16xf32>, vector<16x128xf32>, vector<32x128xf32> -> vector<32x128xf32>
    %80 = arith.addf %56, %79 : vector<32x128xf32>
    %81 = vector.extract_strided_slice %29 {offsets = [0, 32], sizes = [32, 16], strides = [1, 1]} : vector<32x128xf32> to vector<32x16xf32>
    %82 = vector.shape_cast %81 : vector<32x16xf32> to vector<2x16x16xf32>
    %83 = vector.extract_strided_slice %30 {offsets = [0, 32], sizes = [32, 16], strides = [1, 1]} : vector<32x128xf32> to vector<32x16xf32>
    %84 = vector.shape_cast %83 : vector<32x16xf32> to vector<2x16x16xf32>
    %85 = vector.extract_strided_slice %31 {offsets = [0, 32], sizes = [32, 16], strides = [1, 1]} : vector<32x128xf32> to vector<32x16xf32>
    %86 = vector.shape_cast %85 : vector<32x16xf32> to vector<2x16x16xf32>
    "tpu.trace_start"() <{level = 10 : i32, message = "bqd,bkd->bqk"}> : () -> ()
    %cst_31 = arith.constant dense<0.000000e+00> : vector<2x16x16xf32>
    %87 = tpu.matmul %82, %84, %cst_31 {dimension_numbers = #tpu.dot_dimension_numbers<[2], [2], [1], [1], [0, 0, 0, 1, 1, 1], [0], [0]>} : vector<2x16x16xf32>, vector<2x16x16xf32>, vector<2x16x16xf32> -> vector<2x16x16xf32>
    "tpu.trace_stop"() : () -> ()
    %cst_32 = arith.constant 2.500000e-01 : f32
    %88 = vector.broadcast %cst_32 : f32 to vector<2x16x16xf32>
    %89 = arith.mulf %87, %88 : vector<2x16x16xf32>
    %cst_33 = arith.constant dense<0xFF800000> : vector<2x16xf32>
    %90 = vector.multi_reduction <maximumf>, %89, %cst_33 [2] : vector<2x16x16xf32> to vector<2x16xf32>
    %91 = vector.shape_cast %90 : vector<2x16xf32> to vector<2x16x1xf32>
    %92 = vector.broadcast %91 : vector<2x16x1xf32> to vector<2x16x16xf32>
    %93 = arith.subf %89, %92 : vector<2x16x16xf32>
    %94 = math.exp %93 : vector<2x16x16xf32>
    %cst_34 = arith.constant dense<0.000000e+00> : vector<2x16xf32>
    %95 = vector.multi_reduction <add>, %94, %cst_34 [2] : vector<2x16x16xf32> to vector<2x16xf32>
    %96 = vector.shape_cast %95 : vector<2x16xf32> to vector<2x16x1xf32>
    %97 = tpu.reciprocal %96 : vector<2x16x1xf32> -> vector<2x16x1xf32>
    %98 = vector.broadcast %97 : vector<2x16x1xf32> to vector<2x16x16xf32>
    %99 = arith.mulf %94, %98 : vector<2x16x16xf32>
    "tpu.trace_start"() <{level = 10 : i32, message = "bqk,bkd->bqd"}> : () -> ()
    %cst_35 = arith.constant dense<0.000000e+00> : vector<2x16x16xf32>
    %100 = tpu.matmul %99, %86, %cst_35 {dimension_numbers = #tpu.dot_dimension_numbers<[2], [1], [1], [2], [0, 0, 0, 1, 1, 2], [0], [0]>} : vector<2x16x16xf32>, vector<2x16x16xf32>, vector<2x16x16xf32> -> vector<2x16x16xf32>
    "tpu.trace_stop"() : () -> ()
    %101 = vector.shape_cast %100 : vector<2x16x16xf32> to vector<32x16xf32>
    %c32 = arith.constant 32 : index
    %c0_36 = arith.constant 0 : index
    %102 = vector.load %arg6[%c32, %c0_36] : memref<128x128xf32, #tpu.memory_space<vmem>>, vector<16x128xf32>
    %cst_37 = arith.constant dense<0.000000e+00> : vector<32x128xf32>
    %103 = tpu.matmul %101, %102, %cst_37 {dimension_numbers = #tpu.dot_dimension_numbers<[1], [0], [0], [1], [0, 0, 1, 1], [], []>} : vector<32x16xf32>, vector<16x128xf32>, vector<32x128xf32> -> vector<32x128xf32>
    %104 = arith.addf %80, %103 : vector<32x128xf32>
    %105 = vector.extract_strided_slice %29 {offsets = [0, 48], sizes = [32, 16], strides = [1, 1]} : vector<32x128xf32> to vector<32x16xf32>
    %106 = vector.shape_cast %105 : vector<32x16xf32> to vector<2x16x16xf32>
    %107 = vector.extract_strided_slice %30 {offsets = [0, 48], sizes = [32, 16], strides = [1, 1]} : vector<32x128xf32> to vector<32x16xf32>
    %108 = vector.shape_cast %107 : vector<32x16xf32> to vector<2x16x16xf32>
    %109 = vector.extract_strided_slice %31 {offsets = [0, 48], sizes = [32, 16], strides = [1, 1]} : vector<32x128xf32> to vector<32x16xf32>
    %110 = vector.shape_cast %109 : vector<32x16xf32> to vector<2x16x16xf32>
    "tpu.trace_start"() <{level = 10 : i32, message = "bqd,bkd->bqk"}> : () -> ()
    %cst_38 = arith.constant dense<0.000000e+00> : vector<2x16x16xf32>
    %111 = tpu.matmul %106, %108, %cst_38 {dimension_numbers = #tpu.dot_dimension_numbers<[2], [2], [1], [1], [0, 0, 0, 1, 1, 1], [0], [0]>} : vector<2x16x16xf32>, vector<2x16x16xf32>, vector<2x16x16xf32> -> vector<2x16x16xf32>
    "tpu.trace_stop"() : () -> ()
    %cst_39 = arith.constant 2.500000e-01 : f32
    %112 = vector.broadcast %cst_39 : f32 to vector<2x16x16xf32>
    %113 = arith.mulf %111, %112 : vector<2x16x16xf32>
    %cst_40 = arith.constant dense<0xFF800000> : vector<2x16xf32>
    %114 = vector.multi_reduction <maximumf>, %113, %cst_40 [2] : vector<2x16x16xf32> to vector<2x16xf32>
    %115 = vector.shape_cast %114 : vector<2x16xf32> to vector<2x16x1xf32>
    %116 = vector.broadcast %115 : vector<2x16x1xf32> to vector<2x16x16xf32>
    %117 = arith.subf %113, %116 : vector<2x16x16xf32>
    %118 = math.exp %117 : vector<2x16x16xf32>
    %cst_41 = arith.constant dense<0.000000e+00> : vector<2x16xf32>
    %119 = vector.multi_reduction <add>, %118, %cst_41 [2] : vector<2x16x16xf32> to vector<2x16xf32>
    %120 = vector.shape_cast %119 : vector<2x16xf32> to vector<2x16x1xf32>
    %121 = tpu.reciprocal %120 : vector<2x16x1xf32> -> vector<2x16x1xf32>
    %122 = vector.broadcast %121 : vector<2x16x1xf32> to vector<2x16x16xf32>
    %123 = arith.mulf %118, %122 : vector<2x16x16xf32>
    "tpu.trace_start"() <{level = 10 : i32, message = "bqk,bkd->bqd"}> : () -> ()
    %cst_42 = arith.constant dense<0.000000e+00> : vector<2x16x16xf32>
    %124 = tpu.matmul %123, %110, %cst_42 {dimension_numbers = #tpu.dot_dimension_numbers<[2], [1], [1], [2], [0, 0, 0, 1, 1, 2], [0], [0]>} : vector<2x16x16xf32>, vector<2x16x16xf32>, vector<2x16x16xf32> -> vector<2x16x16xf32>
    "tpu.trace_stop"() : () -> ()
    %125 = vector.shape_cast %124 : vector<2x16x16xf32> to vector<32x16xf32>
    %c48 = arith.constant 48 : index
    %c0_43 = arith.constant 0 : index
    %126 = vector.load %arg6[%c48, %c0_43] : memref<128x128xf32, #tpu.memory_space<vmem>>, vector<16x128xf32>
    %cst_44 = arith.constant dense<0.000000e+00> : vector<32x128xf32>
    %127 = tpu.matmul %125, %126, %cst_44 {dimension_numbers = #tpu.dot_dimension_numbers<[1], [0], [0], [1], [0, 0, 1, 1], [], []>} : vector<32x16xf32>, vector<16x128xf32>, vector<32x128xf32> -> vector<32x128xf32>
    %128 = arith.addf %104, %127 : vector<32x128xf32>
    %129 = vector.extract_strided_slice %29 {offsets = [0, 64], sizes = [32, 16], strides = [1, 1]} : vector<32x128xf32> to vector<32x16xf32>
    %130 = vector.shape_cast %129 : vector<32x16xf32> to vector<2x16x16xf32>
    %131 = vector.extract_strided_slice %30 {offsets = [0, 64], sizes = [32, 16], strides = [1, 1]} : vector<32x128xf32> to vector<32x16xf32>
    %132 = vector.shape_cast %131 : vector<32x16xf32> to vector<2x16x16xf32>
    %133 = vector.extract_strided_slice %31 {offsets = [0, 64], sizes = [32, 16], strides = [1, 1]} : vector<32x128xf32> to vector<32x16xf32>
    %134 = vector.shape_cast %133 : vector<32x16xf32> to vector<2x16x16xf32>
    "tpu.trace_start"() <{level = 10 : i32, message = "bqd,bkd->bqk"}> : () -> ()
    %cst_45 = arith.constant dense<0.000000e+00> : vector<2x16x16xf32>
    %135 = tpu.matmul %130, %132, %cst_45 {dimension_numbers = #tpu.dot_dimension_numbers<[2], [2], [1], [1], [0, 0, 0, 1, 1, 1], [0], [0]>} : vector<2x16x16xf32>, vector<2x16x16xf32>, vector<2x16x16xf32> -> vector<2x16x16xf32>
    "tpu.trace_stop"() : () -> ()
    %cst_46 = arith.constant 2.500000e-01 : f32
    %136 = vector.broadcast %cst_46 : f32 to vector<2x16x16xf32>
    %137 = arith.mulf %135, %136 : vector<2x16x16xf32>
    %cst_47 = arith.constant dense<0xFF800000> : vector<2x16xf32>
    %138 = vector.multi_reduction <maximumf>, %137, %cst_47 [2] : vector<2x16x16xf32> to vector<2x16xf32>
    %139 = vector.shape_cast %138 : vector<2x16xf32> to vector<2x16x1xf32>
    %140 = vector.broadcast %139 : vector<2x16x1xf32> to vector<2x16x16xf32>
    %141 = arith.subf %137, %140 : vector<2x16x16xf32>
    %142 = math.exp %141 : vector<2x16x16xf32>
    %cst_48 = arith.constant dense<0.000000e+00> : vector<2x16xf32>
    %143 = vector.multi_reduction <add>, %142, %cst_48 [2] : vector<2x16x16xf32> to vector<2x16xf32>
    %144 = vector.shape_cast %143 : vector<2x16xf32> to vector<2x16x1xf32>
    %145 = tpu.reciprocal %144 : vector<2x16x1xf32> -> vector<2x16x1xf32>
    %146 = vector.broadcast %145 : vector<2x16x1xf32> to vector<2x16x16xf32>
    %147 = arith.mulf %142, %146 : vector<2x16x16xf32>
    "tpu.trace_start"() <{level = 10 : i32, message = "bqk,bkd->bqd"}> : () -> ()
    %cst_49 = arith.constant dense<0.000000e+00> : vector<2x16x16xf32>
    %148 = tpu.matmul %147, %134, %cst_49 {dimension_numbers = #tpu.dot_dimension_numbers<[2], [1], [1], [2], [0, 0, 0, 1, 1, 2], [0], [0]>} : vector<2x16x16xf32>, vector<2x16x16xf32>, vector<2x16x16xf32> -> vector<2x16x16xf32>
    "tpu.trace_stop"() : () -> ()
    %149 = vector.shape_cast %148 : vector<2x16x16xf32> to vector<32x16xf32>
    %c64 = arith.constant 64 : index
    %c0_50 = arith.constant 0 : index
    %150 = vector.load %arg6[%c64, %c0_50] : memref<128x128xf32, #tpu.memory_space<vmem>>, vector<16x128xf32>
    %cst_51 = arith.constant dense<0.000000e+00> : vector<32x128xf32>
    %151 = tpu.matmul %149, %150, %cst_51 {dimension_numbers = #tpu.dot_dimension_numbers<[1], [0], [0], [1], [0, 0, 1, 1], [], []>} : vector<32x16xf32>, vector<16x128xf32>, vector<32x128xf32> -> vector<32x128xf32>
    %152 = arith.addf %128, %151 : vector<32x128xf32>
    %153 = vector.extract_strided_slice %29 {offsets = [0, 80], sizes = [32, 16], strides = [1, 1]} : vector<32x128xf32> to vector<32x16xf32>
    %154 = vector.shape_cast %153 : vector<32x16xf32> to vector<2x16x16xf32>
    %155 = vector.extract_strided_slice %30 {offsets = [0, 80], sizes = [32, 16], strides = [1, 1]} : vector<32x128xf32> to vector<32x16xf32>
    %156 = vector.shape_cast %155 : vector<32x16xf32> to vector<2x16x16xf32>
    %157 = vector.extract_strided_slice %31 {offsets = [0, 80], sizes = [32, 16], strides = [1, 1]} : vector<32x128xf32> to vector<32x16xf32>
    %158 = vector.shape_cast %157 : vector<32x16xf32> to vector<2x16x16xf32>
    "tpu.trace_start"() <{level = 10 : i32, message = "bqd,bkd->bqk"}> : () -> ()
    %cst_52 = arith.constant dense<0.000000e+00> : vector<2x16x16xf32>
    %159 = tpu.matmul %154, %156, %cst_52 {dimension_numbers = #tpu.dot_dimension_numbers<[2], [2], [1], [1], [0, 0, 0, 1, 1, 1], [0], [0]>} : vector<2x16x16xf32>, vector<2x16x16xf32>, vector<2x16x16xf32> -> vector<2x16x16xf32>
    "tpu.trace_stop"() : () -> ()
    %cst_53 = arith.constant 2.500000e-01 : f32
    %160 = vector.broadcast %cst_53 : f32 to vector<2x16x16xf32>
    %161 = arith.mulf %159, %160 : vector<2x16x16xf32>
    %cst_54 = arith.constant dense<0xFF800000> : vector<2x16xf32>
    %162 = vector.multi_reduction <maximumf>, %161, %cst_54 [2] : vector<2x16x16xf32> to vector<2x16xf32>
    %163 = vector.shape_cast %162 : vector<2x16xf32> to vector<2x16x1xf32>
    %164 = vector.broadcast %163 : vector<2x16x1xf32> to vector<2x16x16xf32>
    %165 = arith.subf %161, %164 : vector<2x16x16xf32>
    %166 = math.exp %165 : vector<2x16x16xf32>
    %cst_55 = arith.constant dense<0.000000e+00> : vector<2x16xf32>
    %167 = vector.multi_reduction <add>, %166, %cst_55 [2] : vector<2x16x16xf32> to vector<2x16xf32>
    %168 = vector.shape_cast %167 : vector<2x16xf32> to vector<2x16x1xf32>
    %169 = tpu.reciprocal %168 : vector<2x16x1xf32> -> vector<2x16x1xf32>
    %170 = vector.broadcast %169 : vector<2x16x1xf32> to vector<2x16x16xf32>
    %171 = arith.mulf %166, %170 : vector<2x16x16xf32>
    "tpu.trace_start"() <{level = 10 : i32, message = "bqk,bkd->bqd"}> : () -> ()
    %cst_56 = arith.constant dense<0.000000e+00> : vector<2x16x16xf32>
    %172 = tpu.matmul %171, %158, %cst_56 {dimension_numbers = #tpu.dot_dimension_numbers<[2], [1], [1], [2], [0, 0, 0, 1, 1, 2], [0], [0]>} : vector<2x16x16xf32>, vector<2x16x16xf32>, vector<2x16x16xf32> -> vector<2x16x16xf32>
    "tpu.trace_stop"() : () -> ()
    %173 = vector.shape_cast %172 : vector<2x16x16xf32> to vector<32x16xf32>
    %c80 = arith.constant 80 : index
    %c0_57 = arith.constant 0 : index
    %174 = vector.load %arg6[%c80, %c0_57] : memref<128x128xf32, #tpu.memory_space<vmem>>, vector<16x128xf32>
    %cst_58 = arith.constant dense<0.000000e+00> : vector<32x128xf32>
    %175 = tpu.matmul %173, %174, %cst_58 {dimension_numbers = #tpu.dot_dimension_numbers<[1], [0], [0], [1], [0, 0, 1, 1], [], []>} : vector<32x16xf32>, vector<16x128xf32>, vector<32x128xf32> -> vector<32x128xf32>
    %176 = arith.addf %152, %175 : vector<32x128xf32>
    %177 = vector.extract_strided_slice %29 {offsets = [0, 96], sizes = [32, 16], strides = [1, 1]} : vector<32x128xf32> to vector<32x16xf32>
    %178 = vector.shape_cast %177 : vector<32x16xf32> to vector<2x16x16xf32>
    %179 = vector.extract_strided_slice %30 {offsets = [0, 96], sizes = [32, 16], strides = [1, 1]} : vector<32x128xf32> to vector<32x16xf32>
    %180 = vector.shape_cast %179 : vector<32x16xf32> to vector<2x16x16xf32>
    %181 = vector.extract_strided_slice %31 {offsets = [0, 96], sizes = [32, 16], strides = [1, 1]} : vector<32x128xf32> to vector<32x16xf32>
    %182 = vector.shape_cast %181 : vector<32x16xf32> to vector<2x16x16xf32>
    "tpu.trace_start"() <{level = 10 : i32, message = "bqd,bkd->bqk"}> : () -> ()
    %cst_59 = arith.constant dense<0.000000e+00> : vector<2x16x16xf32>
    %183 = tpu.matmul %178, %180, %cst_59 {dimension_numbers = #tpu.dot_dimension_numbers<[2], [2], [1], [1], [0, 0, 0, 1, 1, 1], [0], [0]>} : vector<2x16x16xf32>, vector<2x16x16xf32>, vector<2x16x16xf32> -> vector<2x16x16xf32>
    "tpu.trace_stop"() : () -> ()
    %cst_60 = arith.constant 2.500000e-01 : f32
    %184 = vector.broadcast %cst_60 : f32 to vector<2x16x16xf32>
    %185 = arith.mulf %183, %184 : vector<2x16x16xf32>
    %cst_61 = arith.constant dense<0xFF800000> : vector<2x16xf32>
    %186 = vector.multi_reduction <maximumf>, %185, %cst_61 [2] : vector<2x16x16xf32> to vector<2x16xf32>
    %187 = vector.shape_cast %186 : vector<2x16xf32> to vector<2x16x1xf32>
    %188 = vector.broadcast %187 : vector<2x16x1xf32> to vector<2x16x16xf32>
    %189 = arith.subf %185, %188 : vector<2x16x16xf32>
    %190 = math.exp %189 : vector<2x16x16xf32>
    %cst_62 = arith.constant dense<0.000000e+00> : vector<2x16xf32>
    %191 = vector.multi_reduction <add>, %190, %cst_62 [2] : vector<2x16x16xf32> to vector<2x16xf32>
    %192 = vector.shape_cast %191 : vector<2x16xf32> to vector<2x16x1xf32>
    %193 = tpu.reciprocal %192 : vector<2x16x1xf32> -> vector<2x16x1xf32>
    %194 = vector.broadcast %193 : vector<2x16x1xf32> to vector<2x16x16xf32>
    %195 = arith.mulf %190, %194 : vector<2x16x16xf32>
    "tpu.trace_start"() <{level = 10 : i32, message = "bqk,bkd->bqd"}> : () -> ()
    %cst_63 = arith.constant dense<0.000000e+00> : vector<2x16x16xf32>
    %196 = tpu.matmul %195, %182, %cst_63 {dimension_numbers = #tpu.dot_dimension_numbers<[2], [1], [1], [2], [0, 0, 0, 1, 1, 2], [0], [0]>} : vector<2x16x16xf32>, vector<2x16x16xf32>, vector<2x16x16xf32> -> vector<2x16x16xf32>
    "tpu.trace_stop"() : () -> ()
    %197 = vector.shape_cast %196 : vector<2x16x16xf32> to vector<32x16xf32>
    %c96 = arith.constant 96 : index
    %c0_64 = arith.constant 0 : index
    %198 = vector.load %arg6[%c96, %c0_64] : memref<128x128xf32, #tpu.memory_space<vmem>>, vector<16x128xf32>
    %cst_65 = arith.constant dense<0.000000e+00> : vector<32x128xf32>
    %199 = tpu.matmul %197, %198, %cst_65 {dimension_numbers = #tpu.dot_dimension_numbers<[1], [0], [0], [1], [0, 0, 1, 1], [], []>} : vector<32x16xf32>, vector<16x128xf32>, vector<32x128xf32> -> vector<32x128xf32>
    %200 = arith.addf %176, %199 : vector<32x128xf32>
    %201 = vector.extract_strided_slice %29 {offsets = [0, 112], sizes = [32, 16], strides = [1, 1]} : vector<32x128xf32> to vector<32x16xf32>
    %202 = vector.shape_cast %201 : vector<32x16xf32> to vector<2x16x16xf32>
    %203 = vector.extract_strided_slice %30 {offsets = [0, 112], sizes = [32, 16], strides = [1, 1]} : vector<32x128xf32> to vector<32x16xf32>
    %204 = vector.shape_cast %203 : vector<32x16xf32> to vector<2x16x16xf32>
    %205 = vector.extract_strided_slice %31 {offsets = [0, 112], sizes = [32, 16], strides = [1, 1]} : vector<32x128xf32> to vector<32x16xf32>
    %206 = vector.shape_cast %205 : vector<32x16xf32> to vector<2x16x16xf32>
    "tpu.trace_start"() <{level = 10 : i32, message = "bqd,bkd->bqk"}> : () -> ()
    %cst_66 = arith.constant dense<0.000000e+00> : vector<2x16x16xf32>
    %207 = tpu.matmul %202, %204, %cst_66 {dimension_numbers = #tpu.dot_dimension_numbers<[2], [2], [1], [1], [0, 0, 0, 1, 1, 1], [0], [0]>} : vector<2x16x16xf32>, vector<2x16x16xf32>, vector<2x16x16xf32> -> vector<2x16x16xf32>
    "tpu.trace_stop"() : () -> ()
    %cst_67 = arith.constant 2.500000e-01 : f32
    %208 = vector.broadcast %cst_67 : f32 to vector<2x16x16xf32>
    %209 = arith.mulf %207, %208 : vector<2x16x16xf32>
    %cst_68 = arith.constant dense<0xFF800000> : vector<2x16xf32>
    %210 = vector.multi_reduction <maximumf>, %209, %cst_68 [2] : vector<2x16x16xf32> to vector<2x16xf32>
    %211 = vector.shape_cast %210 : vector<2x16xf32> to vector<2x16x1xf32>
    %212 = vector.broadcast %211 : vector<2x16x1xf32> to vector<2x16x16xf32>
    %213 = arith.subf %209, %212 : vector<2x16x16xf32>
    %214 = math.exp %213 : vector<2x16x16xf32>
    %cst_69 = arith.constant dense<0.000000e+00> : vector<2x16xf32>
    %215 = vector.multi_reduction <add>, %214, %cst_69 [2] : vector<2x16x16xf32> to vector<2x16xf32>
    %216 = vector.shape_cast %215 : vector<2x16xf32> to vector<2x16x1xf32>
    %217 = tpu.reciprocal %216 : vector<2x16x1xf32> -> vector<2x16x1xf32>
    %218 = vector.broadcast %217 : vector<2x16x1xf32> to vector<2x16x16xf32>
    %219 = arith.mulf %214, %218 : vector<2x16x16xf32>
    "tpu.trace_start"() <{level = 10 : i32, message = "bqk,bkd->bqd"}> : () -> ()
    %cst_70 = arith.constant dense<0.000000e+00> : vector<2x16x16xf32>
    %220 = tpu.matmul %219, %206, %cst_70 {dimension_numbers = #tpu.dot_dimension_numbers<[2], [1], [1], [2], [0, 0, 0, 1, 1, 2], [0], [0]>} : vector<2x16x16xf32>, vector<2x16x16xf32>, vector<2x16x16xf32> -> vector<2x16x16xf32>
    "tpu.trace_stop"() : () -> ()
    %221 = vector.shape_cast %220 : vector<2x16x16xf32> to vector<32x16xf32>
    %c112 = arith.constant 112 : index
    %c0_71 = arith.constant 0 : index
    %222 = vector.load %arg6[%c112, %c0_71] : memref<128x128xf32, #tpu.memory_space<vmem>>, vector<16x128xf32>
    %cst_72 = arith.constant dense<0.000000e+00> : vector<32x128xf32>
    %223 = tpu.matmul %221, %222, %cst_72 {dimension_numbers = #tpu.dot_dimension_numbers<[1], [0], [0], [1], [0, 0, 1, 1], [], []>} : vector<32x16xf32>, vector<16x128xf32>, vector<32x128xf32> -> vector<32x128xf32>
    %224 = arith.addf %200, %223 : vector<32x128xf32>
    %c0_73 = arith.constant 0 : index
    %c0_74 = arith.constant 0 : index
    %225 = vector.load %arg7[%c0_73, %c0_74] : memref<1x128xf32, #tpu.memory_space<vmem>>, vector<1x128xf32>
    %226 = vector.broadcast %225 : vector<1x128xf32> to vector<32x128xf32>
    %227 = arith.addf %224, %226 : vector<32x128xf32>
    %c0_75 = arith.constant 0 : index
    %c0_76 = arith.constant 0 : index
    %228 = vector.load %arg8[%c0_75, %c0_76] : memref<1x128xf32, #tpu.memory_space<vmem>>, vector<1x128xf32>
    %c0_77 = arith.constant 0 : index
    %c0_78 = arith.constant 0 : index
    %229 = vector.load %arg9[%c0_77, %c0_78] : memref<1x128xf32, #tpu.memory_space<vmem>>, vector<1x128xf32>
    %cst_79 = arith.constant dense<0.000000e+00> : vector<32xf32>
    %230 = vector.multi_reduction <add>, %227, %cst_79 [1] : vector<32x128xf32> to vector<32xf32>
    %231 = vector.shape_cast %230 : vector<32xf32> to vector<32x1xf32>
    %cst_80 = arith.constant 1.280000e+02 : f32
    %232 = vector.broadcast %cst_80 : f32 to vector<32x1xf32>
    %233 = arith.divf %231, %232 : vector<32x1xf32>
    %234 = vector.broadcast %233 : vector<32x1xf32> to vector<32x128xf32>
    %235 = arith.subf %227, %234 : vector<32x128xf32>
    %236 = arith.mulf %235, %235 : vector<32x128xf32>
    %cst_81 = arith.constant dense<0.000000e+00> : vector<32xf32>
    %237 = vector.multi_reduction <add>, %236, %cst_81 [1] : vector<32x128xf32> to vector<32xf32>
    %238 = vector.shape_cast %237 : vector<32xf32> to vector<32x1xf32>
    %cst_82 = arith.constant 1.280000e+02 : f32
    %239 = vector.broadcast %cst_82 : f32 to vector<32x1xf32>
    %240 = arith.divf %238, %239 : vector<32x1xf32>
    %cst_83 = arith.constant 9.99999974E-6 : f32
    %241 = vector.broadcast %cst_83 : f32 to vector<32x1xf32>
    %242 = arith.addf %240, %241 : vector<32x1xf32>
    %243 = math.rsqrt %242 : vector<32x1xf32>
    %244 = vector.broadcast %243 : vector<32x1xf32> to vector<32x128xf32>
    %245 = arith.mulf %235, %244 : vector<32x128xf32>
    %246 = vector.broadcast %228 : vector<1x128xf32> to vector<32x128xf32>
    %247 = arith.mulf %245, %246 : vector<32x128xf32>
    %248 = vector.broadcast %229 : vector<1x128xf32> to vector<32x128xf32>
    %249 = arith.addf %247, %248 : vector<32x128xf32>
    %250 = arith.addf %23, %249 : vector<32x128xf32>
    %c0_84 = arith.constant 0 : index
    %c0_85 = arith.constant 0 : index
    %251 = vector.load %arg10[%c0_84, %c0_85] : memref<1x128xf32, #tpu.memory_space<vmem>>, vector<1x128xf32>
    %c0_86 = arith.constant 0 : index
    %c0_87 = arith.constant 0 : index
    %252 = vector.load %arg11[%c0_86, %c0_87] : memref<1x128xf32, #tpu.memory_space<vmem>>, vector<1x128xf32>
    %cst_88 = arith.constant dense<0.000000e+00> : vector<32xf32>
    %253 = vector.multi_reduction <add>, %250, %cst_88 [1] : vector<32x128xf32> to vector<32xf32>
    %254 = vector.shape_cast %253 : vector<32xf32> to vector<32x1xf32>
    %cst_89 = arith.constant 1.280000e+02 : f32
    %255 = vector.broadcast %cst_89 : f32 to vector<32x1xf32>
    %256 = arith.divf %254, %255 : vector<32x1xf32>
    %257 = vector.broadcast %256 : vector<32x1xf32> to vector<32x128xf32>
    %258 = arith.subf %250, %257 : vector<32x128xf32>
    %259 = arith.mulf %258, %258 : vector<32x128xf32>
    %cst_90 = arith.constant dense<0.000000e+00> : vector<32xf32>
    %260 = vector.multi_reduction <add>, %259, %cst_90 [1] : vector<32x128xf32> to vector<32xf32>
    %261 = vector.shape_cast %260 : vector<32xf32> to vector<32x1xf32>
    %cst_91 = arith.constant 1.280000e+02 : f32
    %262 = vector.broadcast %cst_91 : f32 to vector<32x1xf32>
    %263 = arith.divf %261, %262 : vector<32x1xf32>
    %cst_92 = arith.constant 9.99999974E-6 : f32
    %264 = vector.broadcast %cst_92 : f32 to vector<32x1xf32>
    %265 = arith.addf %263, %264 : vector<32x1xf32>
    %266 = math.rsqrt %265 : vector<32x1xf32>
    %267 = vector.broadcast %266 : vector<32x1xf32> to vector<32x128xf32>
    %268 = arith.mulf %258, %267 : vector<32x128xf32>
    %269 = vector.broadcast %251 : vector<1x128xf32> to vector<32x128xf32>
    %270 = arith.mulf %268, %269 : vector<32x128xf32>
    %271 = vector.broadcast %252 : vector<1x128xf32> to vector<32x128xf32>
    %272 = arith.addf %270, %271 : vector<32x128xf32>
    %c0_93 = arith.constant 0 : index
    %c0_94 = arith.constant 0 : index
    %273 = vector.load %arg12[%c0_93, %c0_94] : memref<128x256xf32, #tpu.memory_space<vmem>>, vector<128x256xf32>
    %cst_95 = arith.constant dense<0.000000e+00> : vector<32x256xf32>
    %274 = tpu.matmul %272, %273, %cst_95 {dimension_numbers = #tpu.dot_dimension_numbers<[1], [0], [0], [1], [0, 0, 1, 1], [], []>} : vector<32x128xf32>, vector<128x256xf32>, vector<32x256xf32> -> vector<32x256xf32>
    %c0_96 = arith.constant 0 : index
    %c0_97 = arith.constant 0 : index
    %275 = vector.load %arg13[%c0_96, %c0_97] : memref<1x256xf32, #tpu.memory_space<vmem>>, vector<1x256xf32>
    %276 = vector.broadcast %275 : vector<1x256xf32> to vector<32x256xf32>
    %277 = arith.addf %274, %276 : vector<32x256xf32>
    %cst_98 = arith.constant 5.000000e-01 : f32
    %278 = vector.broadcast %cst_98 : f32 to vector<32x256xf32>
    %279 = arith.mulf %278, %277 : vector<32x256xf32>
    %cst_99 = arith.constant 0.707106769 : f32
    %280 = vector.broadcast %cst_99 : f32 to vector<32x256xf32>
    %281 = arith.mulf %277, %280 : vector<32x256xf32>
    %cst_100 = arith.constant -4.000000e+00 : f32
    %cst_101 = arith.constant 4.000000e+00 : f32
    %282 = vector.broadcast %cst_100 : f32 to vector<32x256xf32>
    %283 = arith.maximumf %282, %281 : vector<32x256xf32>
    %284 = vector.broadcast %cst_101 : f32 to vector<32x256xf32>
    %285 = arith.minimumf %284, %283 : vector<32x256xf32>
    %286 = arith.mulf %285, %285 : vector<32x256xf32>
    %cst_102 = arith.constant -2.72614237E-10 : f32
    %287 = vector.broadcast %cst_102 : f32 to vector<32x256xf32>
    %288 = arith.mulf %287, %286 : vector<32x256xf32>
    %cst_103 = arith.constant 2.77068146E-8 : f32
    %289 = vector.broadcast %cst_103 : f32 to vector<32x256xf32>
    %290 = arith.addf %288, %289 : vector<32x256xf32>
    %291 = arith.mulf %290, %286 : vector<32x256xf32>
    %cst_104 = arith.constant -2.10102394E-6 : f32
    %292 = vector.broadcast %cst_104 : f32 to vector<32x256xf32>
    %293 = arith.addf %291, %292 : vector<32x256xf32>
    %294 = arith.mulf %293, %286 : vector<32x256xf32>
    %cst_105 = arith.constant -5.69250624E-5 : f32
    %295 = vector.broadcast %cst_105 : f32 to vector<32x256xf32>
    %296 = arith.addf %294, %295 : vector<32x256xf32>
    %297 = arith.mulf %296, %286 : vector<32x256xf32>
    %cst_106 = arith.constant -7.34990637E-4 : f32
    %298 = vector.broadcast %cst_106 : f32 to vector<32x256xf32>
    %299 = arith.addf %297, %298 : vector<32x256xf32>
    %300 = arith.mulf %299, %286 : vector<32x256xf32>
    %cst_107 = arith.constant -2.954600e-03 : f32
    %301 = vector.broadcast %cst_107 : f32 to vector<32x256xf32>
    %302 = arith.addf %300, %301 : vector<32x256xf32>
    %303 = arith.mulf %302, %286 : vector<32x256xf32>
    %cst_108 = arith.constant -0.0160960332 : f32
    %304 = vector.broadcast %cst_108 : f32 to vector<32x256xf32>
    %305 = arith.addf %303, %304 : vector<32x256xf32>
    %306 = arith.mulf %305, %285 : vector<32x256xf32>
    %cst_109 = arith.constant -1.45660715E-5 : f32
    %307 = vector.broadcast %cst_109 : f32 to vector<32x256xf32>
    %308 = arith.mulf %307, %286 : vector<32x256xf32>
    %cst_110 = arith.constant -2.13374049E-4 : f32
    %309 = vector.broadcast %cst_110 : f32 to vector<32x256xf32>
    %310 = arith.addf %308, %309 : vector<32x256xf32>
    %311 = arith.mulf %310, %286 : vector<32x256xf32>
    %cst_111 = arith.constant -0.00168282702 : f32
    %312 = vector.broadcast %cst_111 : f32 to vector<32x256xf32>
    %313 = arith.addf %311, %312 : vector<32x256xf32>
    %314 = arith.mulf %313, %286 : vector<32x256xf32>
    %cst_112 = arith.constant -0.00737332925 : f32
    %315 = vector.broadcast %cst_112 : f32 to vector<32x256xf32>
    %316 = arith.addf %314, %315 : vector<32x256xf32>
    %317 = arith.mulf %316, %286 : vector<32x256xf32>
    %cst_113 = arith.constant -0.0142647391 : f32
    %318 = vector.broadcast %cst_113 : f32 to vector<32x256xf32>
    %319 = arith.addf %317, %318 : vector<32x256xf32>
    %320 = arith.divf %306, %319 : vector<32x256xf32>
    %cst_114 = arith.constant 1.000000e+00 : f32
    %321 = vector.broadcast %cst_114 : f32 to vector<32x256xf32>
    %322 = arith.addf %321, %320 : vector<32x256xf32>
    %323 = arith.mulf %279, %322 : vector<32x256xf32>
    %c0_115 = arith.constant 0 : index
    %c0_116 = arith.constant 0 : index
    %324 = vector.load %arg14[%c0_115, %c0_116] : memref<1x256xf32, #tpu.memory_space<vmem>>, vector<1x256xf32>
    %c0_117 = arith.constant 0 : index
    %c0_118 = arith.constant 0 : index
    %325 = vector.load %arg15[%c0_117, %c0_118] : memref<1x256xf32, #tpu.memory_space<vmem>>, vector<1x256xf32>
    %cst_119 = arith.constant dense<0.000000e+00> : vector<32xf32>
    %326 = vector.multi_reduction <add>, %323, %cst_119 [1] : vector<32x256xf32> to vector<32xf32>
    %327 = vector.shape_cast %326 : vector<32xf32> to vector<32x1xf32>
    %cst_120 = arith.constant 2.560000e+02 : f32
    %328 = vector.broadcast %cst_120 : f32 to vector<32x1xf32>
    %329 = arith.divf %327, %328 : vector<32x1xf32>
    %330 = vector.broadcast %329 : vector<32x1xf32> to vector<32x256xf32>
    %331 = arith.subf %323, %330 : vector<32x256xf32>
    %332 = arith.mulf %331, %331 : vector<32x256xf32>
    %cst_121 = arith.constant dense<0.000000e+00> : vector<32xf32>
    %333 = vector.multi_reduction <add>, %332, %cst_121 [1] : vector<32x256xf32> to vector<32xf32>
    %334 = vector.shape_cast %333 : vector<32xf32> to vector<32x1xf32>
    %cst_122 = arith.constant 2.560000e+02 : f32
    %335 = vector.broadcast %cst_122 : f32 to vector<32x1xf32>
    %336 = arith.divf %334, %335 : vector<32x1xf32>
    %cst_123 = arith.constant 9.99999974E-6 : f32
    %337 = vector.broadcast %cst_123 : f32 to vector<32x1xf32>
    %338 = arith.addf %336, %337 : vector<32x1xf32>
    %339 = math.rsqrt %338 : vector<32x1xf32>
    %340 = vector.broadcast %339 : vector<32x1xf32> to vector<32x256xf32>
    %341 = arith.mulf %331, %340 : vector<32x256xf32>
    %342 = vector.broadcast %324 : vector<1x256xf32> to vector<32x256xf32>
    %343 = arith.mulf %341, %342 : vector<32x256xf32>
    %344 = vector.broadcast %325 : vector<1x256xf32> to vector<32x256xf32>
    %345 = arith.addf %343, %344 : vector<32x256xf32>
    %c0_124 = arith.constant 0 : index
    %c0_125 = arith.constant 0 : index
    %346 = vector.load %arg16[%c0_124, %c0_125] : memref<256x128xf32, #tpu.memory_space<vmem>>, vector<256x128xf32>
    %cst_126 = arith.constant dense<0.000000e+00> : vector<32x128xf32>
    %347 = tpu.matmul %345, %346, %cst_126 {dimension_numbers = #tpu.dot_dimension_numbers<[1], [0], [0], [1], [0, 0, 1, 1], [], []>} : vector<32x256xf32>, vector<256x128xf32>, vector<32x128xf32> -> vector<32x128xf32>
    %c0_127 = arith.constant 0 : index
    %c0_128 = arith.constant 0 : index
    %348 = vector.load %arg17[%c0_127, %c0_128] : memref<1x128xf32, #tpu.memory_space<vmem>>, vector<1x128xf32>
    %349 = vector.broadcast %348 : vector<1x128xf32> to vector<32x128xf32>
    %350 = arith.addf %347, %349 : vector<32x128xf32>
    %351 = arith.addf %272, %350 : vector<32x128xf32>
    %352 = vector.shape_cast %351 : vector<32x128xf32> to vector<2x16x128xf32>
    %c0_129 = arith.constant 0 : index
    %c0_130 = arith.constant 0 : index
    %c0_131 = arith.constant 0 : index
    %353 = vector.load %arg18[%c0_129, %c0_130, %c0_131] : memref<2x16x128xf32, #tpu.memory_space<vmem>>, vector<2x16x128xf32>
    tpu.vector_store %arg18[%c0_129, %c0_130, %c0_131], %352 {strides = array<i32>} : memref<2x16x128xf32, #tpu.memory_space<vmem>>, vector<2x16x128xf32>,
    return
  }
  func.func @transform_0(%arg0: i32) -> (i32, i32, i32) {
    %c0_i32 = arith.constant 0 : i32
    %c0_i32_0 = arith.constant 0 : i32
    %c0_i32_1 = arith.constant 0 : i32
    return %arg0, %c0_i32, %c0_i32_0 : i32, i32, i32
  }
  func.func @transform_1(%arg0: i32) -> (i32, i32) {
    %c0_i32 = arith.constant 0 : i32
    %c0_i32_0 = arith.constant 0 : i32
    %c0_i32_1 = arith.constant 0 : i32
    return %c0_i32, %c0_i32_0 : i32, i32
  }
  func.func @transform_2(%arg0: i32) -> (i32, i32) {
    %c0_i32 = arith.constant 0 : i32
    %c0_i32_0 = arith.constant 0 : i32
    %c0_i32_1 = arith.constant 0 : i32
    return %c0_i32, %c0_i32_0 : i32, i32
  }
  func.func @transform_3(%arg0: i32) -> (i32, i32) {
    %c0_i32 = arith.constant 0 : i32
    %c0_i32_0 = arith.constant 0 : i32
    %c0_i32_1 = arith.constant 0 : i32
    return %c0_i32, %c0_i32_0 : i32, i32
  }
  func.func @transform_4(%arg0: i32) -> (i32, i32) {
    %c0_i32 = arith.constant 0 : i32
    %c0_i32_0 = arith.constant 0 : i32
    %c0_i32_1 = arith.constant 0 : i32
    return %c0_i32, %c0_i32_0 : i32, i32
  }
  func.func @transform_5(%arg0: i32) -> (i32, i32) {
    %c0_i32 = arith.constant 0 : i32
    %c0_i32_0 = arith.constant 0 : i32
    %c0_i32_1 = arith.constant 0 : i32
    return %c0_i32, %c0_i32_0 : i32, i32
  }
  func.func @transform_6(%arg0: i32) -> (i32, i32) {
    %c0_i32 = arith.constant 0 : i32
    %c0_i32_0 = arith.constant 0 : i32
    %c0_i32_1 = arith.constant 0 : i32
    return %c0_i32, %c0_i32_0 : i32, i32
  }
  func.func @transform_7(%arg0: i32) -> (i32, i32) {
    %c0_i32 = arith.constant 0 : i32
    %c0_i32_0 = arith.constant 0 : i32
    %c0_i32_1 = arith.constant 0 : i32
    return %c0_i32, %c0_i32_0 : i32, i32
  }
  func.func @transform_8(%arg0: i32) -> (i32, i32) {
    %c0_i32 = arith.constant 0 : i32
    %c0_i32_0 = arith.constant 0 : i32
    %c0_i32_1 = arith.constant 0 : i32
    return %c0_i32, %c0_i32_0 : i32, i32
  }
  func.func @transform_9(%arg0: i32) -> (i32, i32) {
    %c0_i32 = arith.constant 0 : i32
    %c0_i32_0 = arith.constant 0 : i32
    %c0_i32_1 = arith.constant 0 : i32
    return %c0_i32, %c0_i32_0 : i32, i32
  }
  func.func @transform_10(%arg0: i32) -> (i32, i32) {
    %c0_i32 = arith.constant 0 : i32
    %c0_i32_0 = arith.constant 0 : i32
    %c0_i32_1 = arith.constant 0 : i32
    return %c0_i32, %c0_i32_0 : i32, i32
  }
  func.func @transform_11(%arg0: i32) -> (i32, i32) {
    %c0_i32 = arith.constant 0 : i32
    %c0_i32_0 = arith.constant 0 : i32
    %c0_i32_1 = arith.constant 0 : i32
    return %c0_i32, %c0_i32_0 : i32, i32
  }
  func.func @transform_12(%arg0: i32) -> (i32, i32) {
    %c0_i32 = arith.constant 0 : i32
    %c0_i32_0 = arith.constant 0 : i32
    %c0_i32_1 = arith.constant 0 : i32
    return %c0_i32, %c0_i32_0 : i32, i32
  }
  func.func @transform_13(%arg0: i32) -> (i32, i32) {
    %c0_i32 = arith.constant 0 : i32
    %c0_i32_0 = arith.constant 0 : i32
    %c0_i32_1 = arith.constant 0 : i32
    return %c0_i32, %c0_i32_0 : i32, i32
  }
  func.func @transform_14(%arg0: i32) -> (i32, i32) {
    %c0_i32 = arith.constant 0 : i32
    %c0_i32_0 = arith.constant 0 : i32
    %c0_i32_1 = arith.constant 0 : i32
    return %c0_i32, %c0_i32_0 : i32, i32
  }
  func.func @transform_15(%arg0: i32) -> (i32, i32) {
    %c0_i32 = arith.constant 0 : i32
    %c0_i32_0 = arith.constant 0 : i32
    %c0_i32_1 = arith.constant 0 : i32
    return %c0_i32, %c0_i32_0 : i32, i32
  }
  func.func @transform_16(%arg0: i32) -> (i32, i32) {
    %c0_i32 = arith.constant 0 : i32
    %c0_i32_0 = arith.constant 0 : i32
    %c0_i32_1 = arith.constant 0 : i32
    return %c0_i32, %c0_i32_0 : i32, i32
  }
  func.func @transform_17(%arg0: i32) -> (i32, i32, i32) {
    %c0_i32 = arith.constant 0 : i32
    %c0_i32_0 = arith.constant 0 : i32
    %c0_i32_1 = arith.constant 0 : i32
    return %arg0, %c0_i32, %c0_i32_0 : i32, i32, i32
  }
}

</mosaic_0001>

<llo_original>
// kernel: tpu_custom_call.1
$region0: #{tpu_custom_call.1}
  #allocation0 [shape = 'u32[]', space=smem, size = 0x4, offset = 0x4, fixed_abs, tag = 'smem constant byte address 0x4 - core index']
  #allocation1 [shape = 'u32[144,128]{1,0:T(1,128)}', space=vmem, size = 0x12000, scoped, tag = 'internal scratch']
  %s0 = inlined_call_operand.hbm [shape: f32[4,16,128], index: 0, kind: input, shape index: {}]
  %s1 = inlined_call_operand.hbm [shape: f32[1,128], index: 1, kind: input, shape index: {}]
  %s2 = inlined_call_operand.hbm [shape: f32[1,128], index: 2, kind: input, shape index: {}]
  %s3 = inlined_call_operand.hbm [shape: f32[128,384], index: 3, kind: input, shape index: {}]
  %s4 = inlined_call_operand.vmem [shape: f32[1,384], index: 4, kind: input, shape index: {}]
  %s5 = inlined_call_operand.hbm [shape: f32[128,128], index: 5, kind: input, shape index: {}]
  %s6 = inlined_call_operand.vmem [shape: f32[1,128], index: 6, kind: input, shape index: {}]
  %s7 = inlined_call_operand.vmem [shape: f32[1,128], index: 7, kind: input, shape index: {}]
  %s8 = inlined_call_operand.vmem [shape: f32[1,128], index: 8, kind: input, shape index: {}]
  %s9 = inlined_call_operand.vmem [shape: f32[1,128], index: 9, kind: input, shape index: {}]
  %s10 = inlined_call_operand.vmem [shape: f32[1,128], index: 10, kind: input, shape index: {}]
  %s11 = inlined_call_operand.hbm [shape: f32[128,256], index: 11, kind: input, shape index: {}]
  %s12 = inlined_call_operand.vmem [shape: f32[1,256], index: 12, kind: input, shape index: {}]
  %s13 = inlined_call_operand.vmem [shape: f32[1,256], index: 13, kind: input, shape index: {}]
  %s14 = inlined_call_operand.vmem [shape: f32[1,256], index: 14, kind: input, shape index: {}]
  %s15 = inlined_call_operand.hbm [shape: f32[256,128], index: 15, kind: input, shape index: {}]
  %s16 = inlined_call_operand.vmem [shape: f32[1,128], index: 16, kind: input, shape index: {}]
  %s17 = inlined_call_operand.hbm [shape: f32[4,16,128], index: 17, kind: output, shape index: {}]
  %s18 = sld [smem:[#allocation0]]
  $region129: #{tpu_custom_call.1} parent=0
    _
  %s20 = ssub.s32 1, %s18
  %s21 = scalar_select 0, %s20, %s18
  $region1: #{tpu_custom_call.1} parent=0
    #allocation2 [shape = 'u8[32768]{0}', space=vmem, size = 0x8000, scoped, tag = 'input window, operand 0']
    #allocation3 [shape = 's32[2]{0}', space=sflag, size = 0x8, scoped, tag = 'scoped memory for tpu_custom_call.1']
    #allocation4 [shape = 's32[2]{0}', space=sflag, size = 0x8, scoped, tag = 'scoped memory for tpu_custom_call.1']
    #allocation5 [shape = 'u8[512]{0}', space=vmem, size = 0x400, scoped, tag = 'input window, operand 1, single buffered']
    #allocation6 [shape = 's32[1]{0}', space=sflag, size = 0x4, scoped, tag = 'scoped memory for tpu_custom_call.1']
    #allocation7 [shape = 'u8[512]{0}', space=vmem, size = 0x400, scoped, tag = 'input window, operand 2, single buffered']
    #allocation8 [shape = 'u8[196608]{0}', space=vmem, size = 0x30000, scoped, tag = 'input window, operand 3, single buffered']
    #allocation9 [shape = 's32[1]{0}', space=sflag, size = 0x4, scoped, tag = 'scoped memory for tpu_custom_call.1']
    #allocation10 [shape = 'u8[65536]{0}', space=vmem, size = 0x10000, scoped, tag = 'input window, operand 5, single buffered']
    #allocation11 [shape = 'u8[131072]{0}', space=vmem, size = 0x20000, scoped, tag = 'input window, operand 11, single buffered']
    #allocation12 [shape = 's32[1]{0}', space=sflag, size = 0x4, scoped, tag = 'scoped memory for tpu_custom_call.1']
    #allocation13 [shape = 'u8[131072]{0}', space=vmem, size = 0x20000, scoped, tag = 'input window, operand 15, single buffered']
    #allocation14 [shape = 'u8[32768]{0}', space=vmem, size = 0x8000, scoped, tag = 'output window, operand 0']
    %22 = vsyncpa [#allocation3], 0
    %s23 = scalar_lea.sflag [#allocation3], 1
    %24 = vsyncpa %s23, 0
    %25 = vsyncpa [#allocation6], 0
    %26 = vsyncpa [#allocation9], 0
    %27 = vsyncpa [#allocation12], 0
    %28 = vsyncpa [#allocation4], 0
    %s29 = scalar_lea.sflag [#allocation4], 1
    %30 = vsyncpa %s29, 0
    loop: start=0, step=1, limit=4
    $region2: #{tpu_custom_call.1} parent=1 // loop_pre_header
      _
    $region3: #{tpu_custom_call.1} parent=1 // loop_header
      %s32 = sphi 0, %s36
      %p33 = scmp.ge.s32.totalorder %s32, 4
      %s42 = sphi 0, %s44
      %s45 = sphi 0, %s42
      %s46 = sphi 0, %s45
      %s62 = sphi 0, %s46
      %s66 = sphi 0, %s66
      %s68 = sphi 0, %s66
      %s69 = sphi 0, %s68
      %s83 = sphi 0, %s69
      %s87 = sphi 0, %s87
      %s89 = sphi 0, %s87
      %s90 = sphi 0, %s89
      %s104 = sphi 0, %s90
      %s108 = sphi 0, %s108
      %s110 = sphi 0, %s108
      %s111 = sphi 0, %s110
      %s125 = sphi 0, %s111
      %s129 = sphi 0, %s129
      %s131 = sphi 0, %s129
      %s132 = sphi 0, %s131
      %s146 = sphi 0, %s132
      %s150 = sphi 0, %s150
      %s152 = sphi 0, %s150
      %s153 = sphi 0, %s152
      %s167 = sphi 0, %s153
      %s171 = sphi 0, %s171
      %s173 = sphi 0, %s171
      %s174 = sphi 0, %s173
      %s188 = sphi 0, %s174
      %s192 = sphi 0, %s192
      %s194 = sphi 0, %s192
      %s195 = sphi 0, %s194
      %s209 = sphi 0, %s195
      %s213 = sphi 0, %s213
      %s215 = sphi 0, %s213
      %s216 = sphi 0, %s215
      %s230 = sphi 0, %s216
      %s234 = sphi 0, %s234
      %s236 = sphi 0, %s234
      %s237 = sphi 0, %s236
      %s251 = sphi 0, %s237
      %s255 = sphi 0, %s255
      %s257 = sphi 0, %s255
      %s258 = sphi 0, %s257
      %s272 = sphi 0, %s258
      %s276 = sphi 0, %s276
      %s278 = sphi 0, %s276
      %s279 = sphi 0, %s278
      %s293 = sphi 0, %s279
      %s297 = sphi 0, %s297
      %s299 = sphi 0, %s297
      %s300 = sphi 0, %s299
      %s314 = sphi 0, %s300
      %s318 = sphi 0, %s318
      %s320 = sphi 0, %s318
      %s321 = sphi 0, %s320
      %s335 = sphi 0, %s321
      %s339 = sphi 0, %s339
      %s341 = sphi 0, %s339
      %s342 = sphi 0, %s341
      %s356 = sphi 0, %s342
      %s360 = sphi 0, %s360
      %s362 = sphi 0, %s360
      %s363 = sphi 0, %s362
      %s377 = sphi 0, %s363
      %s381 = sphi 0, %s381
      %s383 = sphi 0, %s381
      %s384 = sphi 0, %s383
      %s398 = sphi 0, %s384
      %s404 = sphi 0, %s406
      %s407 = sphi 0, %s404
      %s408 = sphi 0, %s407
      %s424 = sphi 0, %s408
    $region4: #{tpu_custom_call.1} parent=1 // loop_header_branch
      %35 = sbr.rel (%p33) target = $region8
    $region5: #{tpu_custom_call.1} parent=1 // loop_body
      %s37 = ssub.s32 %s32, 1
      %s38 = ssub.s32 %s32, 2
      %s39 = sadd.s32 %s32, 1
      %s40 = ssub.s32 %s32, %s39
      %p41 = scmp.eq.s32.totalorder %s40, 0
      %s43 = sadd.s32 %s42, 1
      %s44 = scalar_select %p41, %s42, %s43
      %p47 = pneg %p41
      %p48 = scmp.eq.s32.totalorder %s32, 1
      %p49 = por %p47, %p48
      %p50 = scmp.ne.s32.totalorder %s42, %s45
      %p51 = scmp.eq.s32.totalorder %s32, 0
      %p52 = por %p50, %p51
      %p53 = scmp.ne.s32.totalorder %s42, %s45
      %p54 = scmp.eq.s32.totalorder %s37, 1
      %p55 = por %p53, %p54
      %p56 = scmp.ne.s32.totalorder %s45, %s46
      %p57 = scmp.eq.s32.totalorder %s37, 0
      %p58 = por %p56, %p57
      %p59 = scmp.ne.s32.totalorder %s45, %s46
      %p60 = scmp.eq.s32.totalorder %s38, 1
      %p61 = por %p59, %p60
      %p63 = scmp.ne.s32.totalorder %s46, %s62
      %p64 = scmp.eq.s32.totalorder %s38, 0
      %p65 = por %p63, %p64
      %s67 = sadd.s32 %s66, 1
      %p70 = scmp.eq.s32.totalorder %s32, 1
      %p71 = scmp.ne.s32.totalorder %s66, %s68
      %p72 = scmp.eq.s32.totalorder %s32, 0
      %p73 = por %p71, %p72
      %p74 = scmp.ne.s32.totalorder %s66, %s68
      %p75 = scmp.eq.s32.totalorder %s37, 1
      %p76 = por %p74, %p75
      %p77 = scmp.ne.s32.totalorder %s68, %s69
      %p78 = scmp.eq.s32.totalorder %s37, 0
      %p79 = por %p77, %p78
      %p80 = scmp.ne.s32.totalorder %s68, %s69
      %p81 = scmp.eq.s32.totalorder %s38, 1
      %p82 = por %p80, %p81
      %p84 = scmp.ne.s32.totalorder %s69, %s83
      %p85 = scmp.eq.s32.totalorder %s38, 0
      %p86 = por %p84, %p85
      %s88 = sadd.s32 %s87, 1
      %p91 = scmp.eq.s32.totalorder %s32, 1
      %p92 = scmp.ne.s32.totalorder %s87, %s89
      %p93 = scmp.eq.s32.totalorder %s32, 0
      %p94 = por %p92, %p93
      %p95 = scmp.ne.s32.totalorder %s87, %s89
      %p96 = scmp.eq.s32.totalorder %s37, 1
      %p97 = por %p95, %p96
      %p98 = scmp.ne.s32.totalorder %s89, %s90
      %p99 = scmp.eq.s32.totalorder %s37, 0
      %p100 = por %p98, %p99
      %p101 = scmp.ne.s32.totalorder %s89, %s90
      %p102 = scmp.eq.s32.totalorder %s38, 1
      %p103 = por %p101, %p102
      %p105 = scmp.ne.s32.totalorder %s90, %s104
      %p106 = scmp.eq.s32.totalorder %s38, 0
      %p107 = por %p105, %p106
      %s109 = sadd.s32 %s108, 1
      %p112 = scmp.eq.s32.totalorder %s32, 1
      %p113 = scmp.ne.s32.totalorder %s108, %s110
      %p114 = scmp.eq.s32.totalorder %s32, 0
      %p115 = por %p113, %p114
      %p116 = scmp.ne.s32.totalorder %s108, %s110
      %p117 = scmp.eq.s32.totalorder %s37, 1
      %p118 = por %p116, %p117
      %p119 = scmp.ne.s32.totalorder %s110, %s111
      %p120 = scmp.eq.s32.totalorder %s37, 0
      %p121 = por %p119, %p120
      %p122 = scmp.ne.s32.totalorder %s110, %s111
      %p123 = scmp.eq.s32.totalorder %s38, 1
      %p124 = por %p122, %p123
      %p126 = scmp.ne.s32.totalorder %s111, %s125
      %p127 = scmp.eq.s32.totalorder %s38, 0
      %p128 = por %p126, %p127
      %s130 = sadd.s32 %s129, 1
      %p133 = scmp.eq.s32.totalorder %s32, 1
      %p134 = scmp.ne.s32.totalorder %s129, %s131
      %p135 = scmp.eq.s32.totalorder %s32, 0
      %p136 = por %p134, %p135
      %p137 = scmp.ne.s32.totalorder %s129, %s131
      %p138 = scmp.eq.s32.totalorder %s37, 1
      %p139 = por %p137, %p138
      %p140 = scmp.ne.s32.totalorder %s131, %s132
      %p141 = scmp.eq.s32.totalorder %s37, 0
      %p142 = por %p140, %p141
      %p143 = scmp.ne.s32.totalorder %s131, %s132
      %p144 = scmp.eq.s32.totalorder %s38, 1
      %p145 = por %p143, %p144
      %p147 = scmp.ne.s32.totalorder %s132, %s146
      %p148 = scmp.eq.s32.totalorder %s38, 0
      %p149 = por %p147, %p148
      %s151 = sadd.s32 %s150, 1
      %p154 = scmp.eq.s32.totalorder %s32, 1
      %p155 = scmp.ne.s32.totalorder %s150, %s152
      %p156 = scmp.eq.s32.totalorder %s32, 0
      %p157 = por %p155, %p156
      %p158 = scmp.ne.s32.totalorder %s150, %s152
      %p159 = scmp.eq.s32.totalorder %s37, 1
      %p160 = por %p158, %p159
      %p161 = scmp.ne.s32.totalorder %s152, %s153
      %p162 = scmp.eq.s32.totalorder %s37, 0
      %p163 = por %p161, %p162
      %p164 = scmp.ne.s32.totalorder %s152, %s153
      %p165 = scmp.eq.s32.totalorder %s38, 1
      %p166 = por %p164, %p165
      %p168 = scmp.ne.s32.totalorder %s153, %s167
      %p169 = scmp.eq.s32.totalorder %s38, 0
      %p170 = por %p168, %p169
      %s172 = sadd.s32 %s171, 1
      %p175 = scmp.eq.s32.totalorder %s32, 1
      %p176 = scmp.ne.s32.totalorder %s171, %s173
      %p177 = scmp.eq.s32.totalorder %s32, 0
      %p178 = por %p176, %p177
      %p179 = scmp.ne.s32.totalorder %s171, %s173
      %p180 = scmp.eq.s32.totalorder %s37, 1
      %p181 = por %p179, %p180
      %p182 = scmp.ne.s32.totalorder %s173, %s174
      %p183 = scmp.eq.s32.totalorder %s37, 0
      %p184 = por %p182, %p183
      %p185 = scmp.ne.s32.totalorder %s173, %s174
      %p186 = scmp.eq.s32.totalorder %s38, 1
      %p187 = por %p185, %p186
      %p189 = scmp.ne.s32.totalorder %s174, %s188
      %p190 = scmp.eq.s32.totalorder %s38, 0
      %p191 = por %p189, %p190
      %s193 = sadd.s32 %s192, 1
      %p196 = scmp.eq.s32.totalorder %s32, 1
      %p197 = scmp.ne.s32.totalorder %s192, %s194
      %p198 = scmp.eq.s32.totalorder %s32, 0
      %p199 = por %p197, %p198
      %p200 = scmp.ne.s32.totalorder %s192, %s194
      %p201 = scmp.eq.s32.totalorder %s37, 1
      %p202 = por %p200, %p201
      %p203 = scmp.ne.s32.totalorder %s194, %s195
      %p204 = scmp.eq.s32.totalorder %s37, 0
      %p205 = por %p203, %p204
      %p206 = scmp.ne.s32.totalorder %s194, %s195
      %p207 = scmp.eq.s32.totalorder %s38, 1
      %p208 = por %p206, %p207
      %p210 = scmp.ne.s32.totalorder %s195, %s209
      %p211 = scmp.eq.s32.totalorder %s38, 0
      %p212 = por %p210, %p211
      %s214 = sadd.s32 %s213, 1
      %p217 = scmp.eq.s32.totalorder %s32, 1
      %p218 = scmp.ne.s32.totalorder %s213, %s215
      %p219 = scmp.eq.s32.totalorder %s32, 0
      %p220 = por %p218, %p219
      %p221 = scmp.ne.s32.totalorder %s213, %s215
      %p222 = scmp.eq.s32.totalorder %s37, 1
      %p223 = por %p221, %p222
      %p224 = scmp.ne.s32.totalorder %s215, %s216
      %p225 = scmp.eq.s32.totalorder %s37, 0
      %p226 = por %p224, %p225
      %p227 = scmp.ne.s32.totalorder %s215, %s216
      %p228 = scmp.eq.s32.totalorder %s38, 1
      %p229 = por %p227, %p228
      %p231 = scmp.ne.s32.totalorder %s216, %s230
      %p232 = scmp.eq.s32.totalorder %s38, 0
      %p233 = por %p231, %p232
      %s235 = sadd.s32 %s234, 1
      %p238 = scmp.eq.s32.totalorder %s32, 1
      %p239 = scmp.ne.s32.totalorder %s234, %s236
      %p240 = scmp.eq.s32.totalorder %s32, 0
      %p241 = por %p239, %p240
      %p242 = scmp.ne.s32.totalorder %s234, %s236
      %p243 = scmp.eq.s32.totalorder %s37, 1
      %p244 = por %p242, %p243
      %p245 = scmp.ne.s32.totalorder %s236, %s237
      %p246 = scmp.eq.s32.totalorder %s37, 0
      %p247 = por %p245, %p246
      %p248 = scmp.ne.s32.totalorder %s236, %s237
      %p249 = scmp.eq.s32.totalorder %s38, 1
      %p250 = por %p248, %p249
      %p252 = scmp.ne.s32.totalorder %s237, %s251
      %p253 = scmp.eq.s32.totalorder %s38, 0
      %p254 = por %p252, %p253
      %s256 = sadd.s32 %s255, 1
      %p259 = scmp.eq.s32.totalorder %s32, 1
      %p260 = scmp.ne.s32.totalorder %s255, %s257
      %p261 = scmp.eq.s32.totalorder %s32, 0
      %p262 = por %p260, %p261
      %p263 = scmp.ne.s32.totalorder %s255, %s257
      %p264 = scmp.eq.s32.totalorder %s37, 1
      %p265 = por %p263, %p264
      %p266 = scmp.ne.s32.totalorder %s257, %s258
      %p267 = scmp.eq.s32.totalorder %s37, 0
      %p268 = por %p266, %p267
      %p269 = scmp.ne.s32.totalorder %s257, %s258
      %p270 = scmp.eq.s32.totalorder %s38, 1
      %p271 = por %p269, %p270
      %p273 = scmp.ne.s32.totalorder %s258, %s272
      %p274 = scmp.eq.s32.totalorder %s38, 0
      %p275 = por %p273, %p274
      %s277 = sadd.s32 %s276, 1
      %p280 = scmp.eq.s32.totalorder %s32, 1
      %p281 = scmp.ne.s32.totalorder %s276, %s278
      %p282 = scmp.eq.s32.totalorder %s32, 0
      %p283 = por %p281, %p282
      %p284 = scmp.ne.s32.totalorder %s276, %s278
      %p285 = scmp.eq.s32.totalorder %s37, 1
      %p286 = por %p284, %p285
      %p287 = scmp.ne.s32.totalorder %s278, %s279
      %p288 = scmp.eq.s32.totalorder %s37, 0
      %p289 = por %p287, %p288
      %p290 = scmp.ne.s32.totalorder %s278, %s279
      %p291 = scmp.eq.s32.totalorder %s38, 1
      %p292 = por %p290, %p291
      %p294 = scmp.ne.s32.totalorder %s279, %s293
      %p295 = scmp.eq.s32.totalorder %s38, 0
      %p296 = por %p294, %p295
      %s298 = sadd.s32 %s297, 1
      %p301 = scmp.eq.s32.totalorder %s32, 1
      %p302 = scmp.ne.s32.totalorder %s297, %s299
      %p303 = scmp.eq.s32.totalorder %s32, 0
      %p304 = por %p302, %p303
      %p305 = scmp.ne.s32.totalorder %s297, %s299
      %p306 = scmp.eq.s32.totalorder %s37, 1
      %p307 = por %p305, %p306
      %p308 = scmp.ne.s32.totalorder %s299, %s300
      %p309 = scmp.eq.s32.totalorder %s37, 0
      %p310 = por %p308, %p309
      %p311 = scmp.ne.s32.totalorder %s299, %s300
      %p312 = scmp.eq.s32.totalorder %s38, 1
      %p313 = por %p311, %p312
      %p315 = scmp.ne.s32.totalorder %s300, %s314
      %p316 = scmp.eq.s32.totalorder %s38, 0
      %p317 = por %p315, %p316
      %s319 = sadd.s32 %s318, 1
      %p322 = scmp.eq.s32.totalorder %s32, 1
      %p323 = scmp.ne.s32.totalorder %s318, %s320
      %p324 = scmp.eq.s32.totalorder %s32, 0
      %p325 = por %p323, %p324
      %p326 = scmp.ne.s32.totalorder %s318, %s320
      %p327 = scmp.eq.s32.totalorder %s37, 1
      %p328 = por %p326, %p327
      %p329 = scmp.ne.s32.totalorder %s320, %s321
      %p330 = scmp.eq.s32.totalorder %s37, 0
      %p331 = por %p329, %p330
      %p332 = scmp.ne.s32.totalorder %s320, %s321
      %p333 = scmp.eq.s32.totalorder %s38, 1
      %p334 = por %p332, %p333
      %p336 = scmp.ne.s32.totalorder %s321, %s335
      %p337 = scmp.eq.s32.totalorder %s38, 0
      %p338 = por %p336, %p337
      %s340 = sadd.s32 %s339, 1
      %p343 = scmp.eq.s32.totalorder %s32, 1
      %p344 = scmp.ne.s32.totalorder %s339, %s341
      %p345 = scmp.eq.s32.totalorder %s32, 0
      %p346 = por %p344, %p345
      %p347 = scmp.ne.s32.totalorder %s339, %s341
      %p348 = scmp.eq.s32.totalorder %s37, 1
      %p349 = por %p347, %p348
      %p350 = scmp.ne.s32.totalorder %s341, %s342
      %p351 = scmp.eq.s32.totalorder %s37, 0
      %p352 = por %p350, %p351
      %p353 = scmp.ne.s32.totalorder %s341, %s342
      %p354 = scmp.eq.s32.totalorder %s38, 1
      %p355 = por %p353, %p354
      %p357 = scmp.ne.s32.totalorder %s342, %s356
      %p358 = scmp.eq.s32.totalorder %s38, 0
      %p359 = por %p357, %p358
      %s361 = sadd.s32 %s360, 1
      %p364 = scmp.eq.s32.totalorder %s32, 1
      %p365 = scmp.ne.s32.totalorder %s360, %s362
      %p366 = scmp.eq.s32.totalorder %s32, 0
      %p367 = por %p365, %p366
      %p368 = scmp.ne.s32.totalorder %s360, %s362
      %p369 = scmp.eq.s32.totalorder %s37, 1
      %p370 = por %p368, %p369
      %p371 = scmp.ne.s32.totalorder %s362, %s363
      %p372 = scmp.eq.s32.totalorder %s37, 0
      %p373 = por %p371, %p372
      %p374 = scmp.ne.s32.totalorder %s362, %s363
      %p375 = scmp.eq.s32.totalorder %s38, 1
      %p376 = por %p374, %p375
      %p378 = scmp.ne.s32.totalorder %s363, %s377
      %p379 = scmp.eq.s32.totalorder %s38, 0
      %p380 = por %p378, %p379
      %s382 = sadd.s32 %s381, 1
      %p385 = scmp.eq.s32.totalorder %s32, 1
      %p386 = scmp.ne.s32.totalorder %s381, %s383
      %p387 = scmp.eq.s32.totalorder %s32, 0
      %p388 = por %p386, %p387
      %p389 = scmp.ne.s32.totalorder %s381, %s383
      %p390 = scmp.eq.s32.totalorder %s37, 1
      %p391 = por %p389, %p390
      %p392 = scmp.ne.s32.totalorder %s383, %s384
      %p393 = scmp.eq.s32.totalorder %s37, 0
      %p394 = por %p392, %p393
      %p395 = scmp.ne.s32.totalorder %s383, %s384
      %p396 = scmp.eq.s32.totalorder %s38, 1
      %p397 = por %p395, %p396
      %p399 = scmp.ne.s32.totalorder %s384, %s398
      %p400 = scmp.eq.s32.totalorder %s38, 0
      %p401 = por %p399, %p400
      %s402 = ssub.s32 %s32, %s39
      %p403 = scmp.eq.s32.totalorder %s402, 0
      %s405 = sadd.s32 %s404, 1
      %s406 = scalar_select %p403, %s404, %s405
      %p409 = pneg %p403
      %p410 = scmp.eq.s32.totalorder %s32, 1
      %p411 = por %p409, %p410
      %p412 = scmp.ne.s32.totalorder %s404, %s407
      %p413 = scmp.eq.s32.totalorder %s32, 0
      %p414 = por %p412, %p413
      %p415 = scmp.ne.s32.totalorder %s404, %s407
      %p416 = scmp.eq.s32.totalorder %s37, 1
      %p417 = por %p415, %p416
      %p418 = scmp.ne.s32.totalorder %s407, %s408
      %p419 = scmp.eq.s32.totalorder %s37, 0
      %p420 = por %p418, %p419
      %p421 = scmp.ne.s32.totalorder %s407, %s408
      %p422 = scmp.eq.s32.totalorder %s38, 1
      %p423 = por %p421, %p422
      %p425 = scmp.ne.s32.totalorder %s408, %s424
      %p426 = scmp.eq.s32.totalorder %s38, 0
      %p427 = por %p425, %p426
      %p428 = scmp.le.s32.totalorder 1, %s32
      %p429 = scmp.lt.s32.totalorder %s32, 3
      %p430 = pnand %p428, %p429
      %p431 = pneg %p430
      // Predicated region
      $region9: #{tpu_custom_call.1} parent=5 // pred_check
        _
      $region10: #{tpu_custom_call.1} parent=5 // pred_check_branch
        %433 = sbr.rel (%p430) target = $region12
      $region11: #{tpu_custom_call.1} parent=5 // pred_region
        %s434 = ssub.s32 %s32, 1
        // Predicated region
        $region13: #{tpu_custom_call.1} parent=11 // pred_check
          %p435 = pneg %p79
        $region14: #{tpu_custom_call.1} parent=11 // pred_check_branch
          %437 = sbr.rel (%p435) target = $region16
        $region15: #{tpu_custom_call.1} parent=11 // pred_region
          %s439 = ssub.s32 16, 16
          %440 = vsyncadd [#allocation6], %s439
          %s442 = sshll.u32 [#allocation5], 4
          %s443 = int_to_ptr.vmem [resolvable:$true] %s442
          %445 = dma.hbm_to_vmem [thread:$0]  %s1, 16, %s443, [#allocation6]
        $region16: #{tpu_custom_call.1} parent=11 // pred_fallthru
          _
        // Predicated region
        $region17: #{tpu_custom_call.1} parent=11 // pred_check
          %p446 = pneg %p100
        $region18: #{tpu_custom_call.1} parent=11 // pred_check_branch
          %448 = sbr.rel (%p446) target = $region20
        $region19: #{tpu_custom_call.1} parent=11 // pred_region
          %s450 = ssub.s32 16, 16
          %451 = vsyncadd [#allocation6], %s450
          %s453 = sshll.u32 [#allocation7], 4
          %s454 = int_to_ptr.vmem [resolvable:$true] %s453
          %456 = dma.hbm_to_vmem [thread:$0]  %s2, 16, %s454, [#allocation6]
        $region20: #{tpu_custom_call.1} parent=11 // pred_fallthru
          _
        // Predicated region
        $region21: #{tpu_custom_call.1} parent=11 // pred_check
          %p457 = pneg %p121
        $region22: #{tpu_custom_call.1} parent=11 // pred_check_branch
          %459 = sbr.rel (%p457) target = $region24
        $region23: #{tpu_custom_call.1} parent=11 // pred_region
          %s461 = ssub.s32 6144, 6144
          %462 = vsyncadd [#allocation9], %s461
          %s463 = sshll.u32 [#allocation8], 4
          %s464 = int_to_ptr.vmem [resolvable:$true] %s463
          %469 = dma.hbm_to_vmem [thread:$0]  %s3, 6144, %s464, [#allocation9], 384, 384, 24
        $region24: #{tpu_custom_call.1} parent=11 // pred_fallthru
          _
        // Predicated region
        $region25: #{tpu_custom_call.1} parent=11 // pred_check
          %p470 = pneg %p142
        $region26: #{tpu_custom_call.1} parent=11 // pred_check_branch
          %472 = sbr.rel (%p470) target = $region28
        $region27: #{tpu_custom_call.1} parent=11 // pred_region
          _
        $region28: #{tpu_custom_call.1} parent=11 // pred_fallthru
          _
        // Predicated region
        $region29: #{tpu_custom_call.1} parent=11 // pred_check
          %p473 = pneg %p163
        $region30: #{tpu_custom_call.1} parent=11 // pred_check_branch
          %475 = sbr.rel (%p473) target = $region32
        $region31: #{tpu_custom_call.1} parent=11 // pred_region
          %s477 = ssub.s32 2048, 2048
          %478 = vsyncadd [#allocation9], %s477
          %s479 = sshll.u32 [#allocation10], 4
          %s480 = int_to_ptr.vmem [resolvable:$true] %s479
          %485 = dma.hbm_to_vmem [thread:$0]  %s5, 2048, %s480, [#allocation9], 128, 128, 8
        $region32: #{tpu_custom_call.1} parent=11 // pred_fallthru
          _
        // Predicated region
        $region33: #{tpu_custom_call.1} parent=11 // pred_check
          %p486 = pneg %p184
        $region34: #{tpu_custom_call.1} parent=11 // pred_check_branch
          %488 = sbr.rel (%p486) target = $region36
        $region35: #{tpu_custom_call.1} parent=11 // pred_region
          _
        $region36: #{tpu_custom_call.1} parent=11 // pred_fallthru
          _
        // Predicated region
        $region37: #{tpu_custom_call.1} parent=11 // pred_check
          %p489 = pneg %p205
        $region38: #{tpu_custom_call.1} parent=11 // pred_check_branch
          %491 = sbr.rel (%p489) target = $region40
        $region39: #{tpu_custom_call.1} parent=11 // pred_region
          _
        $region40: #{tpu_custom_call.1} parent=11 // pred_fallthru
          _
        // Predicated region
        $region41: #{tpu_custom_call.1} parent=11 // pred_check
          %p492 = pneg %p226
        $region42: #{tpu_custom_call.1} parent=11 // pred_check_branch
          %494 = sbr.rel (%p492) target = $region44
        $region43: #{tpu_custom_call.1} parent=11 // pred_region
          _
        $region44: #{tpu_custom_call.1} parent=11 // pred_fallthru
          _
        // Predicated region
        $region45: #{tpu_custom_call.1} parent=11 // pred_check
          %p495 = pneg %p247
        $region46: #{tpu_custom_call.1} parent=11 // pred_check_branch
          %497 = sbr.rel (%p495) target = $region48
        $region47: #{tpu_custom_call.1} parent=11 // pred_region
          _
        $region48: #{tpu_custom_call.1} parent=11 // pred_fallthru
          _
        // Predicated region
        $region49: #{tpu_custom_call.1} parent=11 // pred_check
          %p498 = pneg %p268
        $region50: #{tpu_custom_call.1} parent=11 // pred_check_branch
          %500 = sbr.rel (%p498) target = $region52
        $region51: #{tpu_custom_call.1} parent=11 // pred_region
          _
        $region52: #{tpu_custom_call.1} parent=11 // pred_fallthru
          _
        // Predicated region
        $region53: #{tpu_custom_call.1} parent=11 // pred_check
          %p501 = pneg %p289
        $region54: #{tpu_custom_call.1} parent=11 // pred_check_branch
          %503 = sbr.rel (%p501) target = $region56
        $region55: #{tpu_custom_call.1} parent=11 // pred_region
          %s505 = ssub.s32 4096, 4096
          %506 = vsyncadd [#allocation12], %s505
          %s507 = sshll.u32 [#allocation11], 4
          %s508 = int_to_ptr.vmem [resolvable:$true] %s507
          %513 = dma.hbm_to_vmem [thread:$0]  %s11, 4096, %s508, [#allocation12], 256, 256, 16
        $region56: #{tpu_custom_call.1} parent=11 // pred_fallthru
          _
        // Predicated region
        $region57: #{tpu_custom_call.1} parent=11 // pred_check
          %p514 = pneg %p310
        $region58: #{tpu_custom_call.1} parent=11 // pred_check_branch
          %516 = sbr.rel (%p514) target = $region60
        $region59: #{tpu_custom_call.1} parent=11 // pred_region
          _
        $region60: #{tpu_custom_call.1} parent=11 // pred_fallthru
          _
        // Predicated region
        $region61: #{tpu_custom_call.1} parent=11 // pred_check
          %p517 = pneg %p331
        $region62: #{tpu_custom_call.1} parent=11 // pred_check_branch
          %519 = sbr.rel (%p517) target = $region64
        $region63: #{tpu_custom_call.1} parent=11 // pred_region
          _
        $region64: #{tpu_custom_call.1} parent=11 // pred_fallthru
          _
        // Predicated region
        $region65: #{tpu_custom_call.1} parent=11 // pred_check
          %p520 = pneg %p352
        $region66: #{tpu_custom_call.1} parent=11 // pred_check_branch
          %522 = sbr.rel (%p520) target = $region68
        $region67: #{tpu_custom_call.1} parent=11 // pred_region
          _
        $region68: #{tpu_custom_call.1} parent=11 // pred_fallthru
          _
        // Predicated region
        $region69: #{tpu_custom_call.1} parent=11 // pred_check
          %p523 = pneg %p373
        $region70: #{tpu_custom_call.1} parent=11 // pred_check_branch
          %525 = sbr.rel (%p523) target = $region72
        $region71: #{tpu_custom_call.1} parent=11 // pred_region
          %s527 = ssub.s32 4096, 4096
          %528 = vsyncadd [#allocation12], %s527
          %s529 = sshll.u32 [#allocation13], 4
          %s530 = int_to_ptr.vmem [resolvable:$true] %s529
          %535 = dma.hbm_to_vmem [thread:$0]  %s15, 4096, %s530, [#allocation12], 128, 128, 8
        $region72: #{tpu_custom_call.1} parent=11 // pred_fallthru
          _
        // Predicated region
        $region73: #{tpu_custom_call.1} parent=11 // pred_check
          %p536 = pneg %p394
        $region74: #{tpu_custom_call.1} parent=11 // pred_check_branch
          %538 = sbr.rel (%p536) target = $region76
        $region75: #{tpu_custom_call.1} parent=11 // pred_region
          _
        $region76: #{tpu_custom_call.1} parent=11 // pred_fallthru
          _
      $region12: #{tpu_custom_call.1} parent=5 // pred_fallthru
        _
      %p539 = scmp.lt.s32.totalorder %s32, 2
      // Predicated region
      $region77: #{tpu_custom_call.1} parent=5 // pred_check
        %p540 = pneg %p539
      $region78: #{tpu_custom_call.1} parent=5 // pred_check_branch
        %542 = sbr.rel (%p540) target = $region80
      $region79: #{tpu_custom_call.1} parent=5 // pred_region
        // Predicated region
        $region81: #{tpu_custom_call.1} parent=79 // pred_check
          %p543 = pneg %p52
        $region82: #{tpu_custom_call.1} parent=79 // pred_check_branch
          %545 = sbr.rel (%p543) target = $region84
        $region83: #{tpu_custom_call.1} parent=79 // pred_region
          %s546 = sand.u32 %s42, 1
          %s547 = scalar_lea.sflag [#allocation3], %s546
          %s548 = sand.u32 %s42, 1
          %s549 = smul.addr %s548, 32
          %s550 = scalar_lea.vmem [#allocation2], %s549
          %s551 = smul.u32 2, %s32
          %s553 = ssub.s32 512, 512
          %554 = vsyncadd %s547, %s553
          %s555 = smul.addr %s551, 2
          %s556 = smul.addr %s555, 128
          %s557 = scalar_lea.hbm %s0, %s556
          %s558 = sshll.u32 %s550, 4
          %s559 = int_to_ptr.vmem [resolvable:$true] %s558
          %564 = dma.hbm_to_vmem [thread:$0]  %s557, 512, %s559, %s547, 128, 128, 8
        $region84: #{tpu_custom_call.1} parent=79 // pred_fallthru
          _
      $region80: #{tpu_custom_call.1} parent=5 // pred_fallthru
        _
      %p565 = scmp.le.s32.totalorder 1, %s32
      %p566 = scmp.lt.s32.totalorder %s32, 3
      %p567 = pnand %p565, %p566
      %p568 = pneg %p567
      // Predicated region
      $region85: #{tpu_custom_call.1} parent=5 // pred_check
        _
      $region86: #{tpu_custom_call.1} parent=5 // pred_check_branch
        %570 = sbr.rel (%p567) target = $region88
      $region87: #{tpu_custom_call.1} parent=5 // pred_region
        %s571 = ssub.s32 %s32, 1
        %s572 = sand.u32 %s45, 1
        %s573 = scalar_lea.sflag [#allocation3], %s572
        %s574 = sand.u32 %s45, 1
        %s575 = smul.addr %s574, 32
        %s576 = scalar_lea.vmem [#allocation2], %s575
        // Predicated region
        $region89: #{tpu_custom_call.1} parent=87 // pred_check
          %p577 = pneg %p58
        $region90: #{tpu_custom_call.1} parent=87 // pred_check_branch
          %579 = sbr.rel (%p577) target = $region92
        $region91: #{tpu_custom_call.1} parent=87 // pred_region
          %580 = dma.done %s573, 512
        $region92: #{tpu_custom_call.1} parent=87 // pred_fallthru
          _
        // Predicated region
        $region93: #{tpu_custom_call.1} parent=87 // pred_check
          %p581 = pneg %p79
        $region94: #{tpu_custom_call.1} parent=87 // pred_check_branch
          %583 = sbr.rel (%p581) target = $region96
        $region95: #{tpu_custom_call.1} parent=87 // pred_region
          %584 = dma.done [#allocation6], 16
        $region96: #{tpu_custom_call.1} parent=87 // pred_fallthru
          _
        // Predicated region
        $region97: #{tpu_custom_call.1} parent=87 // pred_check
          %p585 = pneg %p100
        $region98: #{tpu_custom_call.1} parent=87 // pred_check_branch
          %587 = sbr.rel (%p585) target = $region100
        $region99: #{tpu_custom_call.1} parent=87 // pred_region
          %588 = dma.done [#allocation6], 16
        $region100: #{tpu_custom_call.1} parent=87 // pred_fallthru
          _
        // Predicated region
        $region101: #{tpu_custom_call.1} parent=87 // pred_check
          %p589 = pneg %p121
        $region102: #{tpu_custom_call.1} parent=87 // pred_check_branch
          %591 = sbr.rel (%p589) target = $region104
        $region103: #{tpu_custom_call.1} parent=87 // pred_region
          %592 = dma.done [#allocation9], 6144
        $region104: #{tpu_custom_call.1} parent=87 // pred_fallthru
          _
        // Predicated region
        $region105: #{tpu_custom_call.1} parent=87 // pred_check
          %p593 = pneg %p163
        $region106: #{tpu_custom_call.1} parent=87 // pred_check_branch
          %595 = sbr.rel (%p593) target = $region108
        $region107: #{tpu_custom_call.1} parent=87 // pred_region
          %596 = dma.done [#allocation9], 2048
        $region108: #{tpu_custom_call.1} parent=87 // pred_fallthru
          _
        // Predicated region
        $region109: #{tpu_custom_call.1} parent=87 // pred_check
          %p597 = pneg %p289
        $region110: #{tpu_custom_call.1} parent=87 // pred_check_branch
          %599 = sbr.rel (%p597) target = $region112
        $region111: #{tpu_custom_call.1} parent=87 // pred_region
          %600 = dma.done [#allocation12], 4096
        $region112: #{tpu_custom_call.1} parent=87 // pred_fallthru
          _
        // Predicated region
        $region113: #{tpu_custom_call.1} parent=87 // pred_check
          %p601 = pneg %p373
        $region114: #{tpu_custom_call.1} parent=87 // pred_check_branch
          %603 = sbr.rel (%p601) target = $region116
        $region115: #{tpu_custom_call.1} parent=87 // pred_region
          %604 = dma.done [#allocation12], 4096
        $region116: #{tpu_custom_call.1} parent=87 // pred_fallthru
          _
        %s605 = sand.u32 %s45, 1
        %s606 = scalar_lea.sflag [#allocation3], %s605
        %s607 = sand.u32 %s45, 1
        %s608 = smul.addr %s607, 32
        %s609 = scalar_lea.vmem [#allocation2], %s608
        %p610 = pneg %p58
        %p611 = pneg %p55
        %p612 = pneg %p79
        %p613 = pneg %p76
        %p614 = pneg %p100
        %p615 = pneg %p97
        %p616 = pneg %p121
        %p617 = pneg %p118
        %p618 = pneg %p142
        %p619 = pneg %p139
        %p620 = pneg %p163
        %p621 = pneg %p160
        %p622 = pneg %p184
        %p623 = pneg %p181
        %p624 = pneg %p205
        %p625 = pneg %p202
        %p626 = pneg %p226
        %p627 = pneg %p223
        %p628 = pneg %p247
        %p629 = pneg %p244
        %p630 = pneg %p268
        %p631 = pneg %p265
        %p632 = pneg %p289
        %p633 = pneg %p286
        %p634 = pneg %p310
        %p635 = pneg %p307
        %p636 = pneg %p331
        %p637 = pneg %p328
        %p638 = pneg %p352
        %p639 = pneg %p349
        %p640 = pneg %p373
        %p641 = pneg %p370
        %p642 = pneg %p394
        %p643 = pneg %p391
        %p644 = pneg %p420
        %p645 = pneg %p417
        %s646 = sand.u32 %s407, 1
        %s647 = scalar_lea.sflag [#allocation4], %s646
        %s648 = sand.u32 %s407, 1
        %s649 = smul.addr %s648, 32
        %s650 = scalar_lea.vmem [#allocation14], %s649
        %s651 = smul.u32 2, %s37
        %s652 = smul.u32 2, %s37
        %v653 = vld [vmem:[%s576] sm:$0xff]
        %v654 = vld [vmem:[%s576 + $0x8] sm:$0xff]
        %v655 = vld [vmem:[%s576 + $0x10] sm:$0xff]
        %v656 = vld [vmem:[%s576 + $0x18] sm:$0xff]
        %v657 = vld [vmem:[#allocation5] sm:$0x1]
        %v658 = vld [vmem:[#allocation7] sm:$0x1]
        %659 = vadd.xlane.f32.xlu0 %v653
        %v660 = vpop.xlane.xlu0 %659
        %661 = vadd.xlane.f32.xlu0 %v654
        %v662 = vpop.xlane.xlu0 %661
        %663 = vadd.xlane.f32.xlu0 %v655
        %v664 = vpop.xlane.xlu0 %663
        %665 = vadd.xlane.f32.xlu0 %v656
        %v666 = vpop.xlane.xlu0 %665
        %v667 = vrcp.pop 128.0
        %v668 = vmul.f32 %v660, %v667
        %v669 = vmul.f32 %v662, %v667
        %v670 = vmul.f32 %v664, %v667
        %v671 = vmul.f32 %v666, %v667
        %v672 = vsub.f32 %v653, %v668
        %v673 = vsub.f32 %v654, %v669
        %v674 = vsub.f32 %v655, %v670
        %v675 = vsub.f32 %v656, %v671
        %v676 = vmul.f32 %v672, %v672
        %v677 = vmul.f32 %v673, %v673
        %v678 = vmul.f32 %v674, %v674
        %v679 = vmul.f32 %v675, %v675
        %680 = vadd.xlane.f32.xlu0 %v676
        %v681 = vpop.xlane.xlu0 %680
        %682 = vadd.xlane.f32.xlu0 %v677
        %v683 = vpop.xlane.xlu0 %682
        %684 = vadd.xlane.f32.xlu0 %v678
        %v685 = vpop.xlane.xlu0 %684
        %686 = vadd.xlane.f32.xlu0 %v679
        %v687 = vpop.xlane.xlu0 %686
        %v688 = vmul.f32 %v681, %v667
        %v689 = vmul.f32 %v683, %v667
        %v690 = vmul.f32 %v685, %v667
        %v691 = vmul.f32 %v687, %v667
        %v692 = vadd.f32 %v688, 1e-05
        %v693 = vadd.f32 %v689, 1e-05
        %v694 = vadd.f32 %v690, 1e-05
        %v695 = vadd.f32 %v691, 1e-05
        %v696 = vrsqrt.pop %v692
        %v697 = vrsqrt.pop %v693
        %v698 = vrsqrt.pop %v694
        %v699 = vrsqrt.pop %v695
        %v700 = vmul.f32 %v672, %v696
        %v701 = vmul.f32 %v673, %v697
        %v702 = vmul.f32 %v674, %v698
        %v703 = vmul.f32 %v675, %v699
        %v705 = vlaneseq
        %v706 = vshrl.u32 %v705, 7
        %v707 = vsub.s32 0, %v706
        %v708 = vrot.slane %v657, %v707
        %v710 = vmul.f32 %v700, %v708
        %v711 = vmul.f32 %v701, %v708
        %v712 = vmul.f32 %v702, %v708
        %v713 = vmul.f32 %v703, %v708
        %v715 = vlaneseq
        %v716 = vshrl.u32 %v715, 7
        %v717 = vsub.s32 0, %v716
        %v718 = vrot.slane %v658, %v717
        %v720 = vadd.f32 %v710, %v718
        %v721 = vadd.f32 %v711, %v718
        %v722 = vadd.f32 %v712, %v718
        %v723 = vadd.f32 %v713, %v718
        %v724 = vld [vmem:[#allocation8] sm:$0xff]
        %v725 = vld [vmem:[#allocation8 + $0x8] sm:$0xff]
        %v726 = vld [vmem:[#allocation8 + $0x10] sm:$0xff]
        %v727 = vld [vmem:[#allocation8 + $0x18] sm:$0xff]
        %v728 = vld [vmem:[#allocation8 + $0x20] sm:$0xff]
        %v729 = vld [vmem:[#allocation8 + $0x28] sm:$0xff]
        %v730 = vld [vmem:[#allocation8 + $0x30] sm:$0xff]
        %v731 = vld [vmem:[#allocation8 + $0x38] sm:$0xff]
        %v732 = vld [vmem:[#allocation8 + $0x40] sm:$0xff]
        %v733 = vld [vmem:[#allocation8 + $0x48] sm:$0xff]
        %v734 = vld [vmem:[#allocation8 + $0x50] sm:$0xff]
        %v735 = vld [vmem:[#allocation8 + $0x58] sm:$0xff]
        %v736 = vld [vmem:[#allocation8 + $0x60] sm:$0xff]
        %v737 = vld [vmem:[#allocation8 + $0x68] sm:$0xff]
        %v738 = vld [vmem:[#allocation8 + $0x70] sm:$0xff]
        %v739 = vld [vmem:[#allocation8 + $0x78] sm:$0xff]
        %v740 = vld [vmem:[#allocation8 + $0x80] sm:$0xff]
        %v741 = vld [vmem:[#allocation8 + $0x88] sm:$0xff]
        %v742 = vld [vmem:[#allocation8 + $0x90] sm:$0xff]
        %v743 = vld [vmem:[#allocation8 + $0x98] sm:$0xff]
        %v744 = vld [vmem:[#allocation8 + $0xa0] sm:$0xff]
        %v745 = vld [vmem:[#allocation8 + $0xa8] sm:$0xff]
        %v746 = vld [vmem:[#allocation8 + $0xb0] sm:$0xff]
        %v747 = vld [vmem:[#allocation8 + $0xb8] sm:$0xff]
        %v748 = vld [vmem:[#allocation8 + $0xc0] sm:$0xff]
        %v749 = vld [vmem:[#allocation8 + $0xc8] sm:$0xff]
        %v750 = vld [vmem:[#allocation8 + $0xd0] sm:$0xff]
        %v751 = vld [vmem:[#allocation8 + $0xd8] sm:$0xff]
        %v752 = vld [vmem:[#allocation8 + $0xe0] sm:$0xff]
        %v753 = vld [vmem:[#allocation8 + $0xe8] sm:$0xff]
        %v754 = vld [vmem:[#allocation8 + $0xf0] sm:$0xff]
        %v755 = vld [vmem:[#allocation8 + $0xf8] sm:$0xff]
        %v756 = vld [vmem:[#allocation8 + $0x100] sm:$0xff]
        %v757 = vld [vmem:[#allocation8 + $0x108] sm:$0xff]
        %v758 = vld [vmem:[#allocation8 + $0x110] sm:$0xff]
        %v759 = vld [vmem:[#allocation8 + $0x118] sm:$0xff]
        %v760 = vld [vmem:[#allocation8 + $0x120] sm:$0xff]
        %v761 = vld [vmem:[#allocation8 + $0x128] sm:$0xff]
        %v762 = vld [vmem:[#allocation8 + $0x130] sm:$0xff]
        %v763 = vld [vmem:[#allocation8 + $0x138] sm:$0xff]
        %v764 = vld [vmem:[#allocation8 + $0x140] sm:$0xff]
        %v765 = vld [vmem:[#allocation8 + $0x148] sm:$0xff]
        %v766 = vld [vmem:[#allocation8 + $0x150] sm:$0xff]
        %v767 = vld [vmem:[#allocation8 + $0x158] sm:$0xff]
        %v768 = vld [vmem:[#allocation8 + $0x160] sm:$0xff]
        %v769 = vld [vmem:[#allocation8 + $0x168] sm:$0xff]
        %v770 = vld [vmem:[#allocation8 + $0x170] sm:$0xff]
        %v771 = vld [vmem:[#allocation8 + $0x178] sm:$0xff]
        %v772 = vld [vmem:[%s4] sm:$0x7]
        %v774 = vlaneseq
        %v775 = vshrl.u32 %v774, 7
        %v776 = vsub.s32 0, %v775
        %v777 = vrot.slane %v772, %v776
        %v778 = vlaneseq
        %v779 = vshrl.u32 %v778, 7
        %v780 = vsub.s32 1, %v779
        %v781 = vrot.slane %v772, %v780
        %v782 = vlaneseq
        %v783 = vshrl.u32 %v782, 7
        %v784 = vsub.s32 2, %v783
        %v785 = vrot.slane %v772, %v784
        %789 = vmatprep.subr.mxu0 %v725
        %790 = vmatpush1.msra.mxu0 %v724
        %791 = vmatprep.subr.mxu0 %v728
        %792 = vmatpush1.msra.mxu0 %v727
        %793 = vmatprep.subr.mxu0 %v731
        %794 = vmatpush1.msra.mxu0 %v730
        %795 = vmatprep.subr.mxu0 %v734
        %796 = vmatpush1.msra.mxu0 %v733
        %797 = vmatprep.subr.mxu0 %v737
        %798 = vmatpush1.msra.mxu0 %v736
        %799 = vmatprep.subr.mxu0 %v740
        %800 = vmatpush1.msra.mxu0 %v739
        %801 = vmatprep.subr.mxu0 %v743
        %802 = vmatpush1.msra.mxu0 %v742
        %803 = vmatprep.subr.mxu0 %v746
        %804 = vmatpush1.msra.mxu0 %v745
        %805 = vmatprep.subr.mxu0 %v749
        %806 = vmatpush1.msra.mxu0 %v748
        %807 = vmatprep.subr.mxu0 %v752
        %808 = vmatpush1.msra.mxu0 %v751
        %809 = vmatprep.subr.mxu0 %v755
        %810 = vmatpush1.msra.mxu0 %v754
        %811 = vmatprep.subr.mxu0 %v758
        %812 = vmatpush1.msra.mxu0 %v757
        %813 = vmatprep.subr.mxu0 %v761
        %814 = vmatpush1.msra.mxu0 %v760
        %815 = vmatprep.subr.mxu0 %v764
        %816 = vmatpush1.msra.mxu0 %v763
        %817 = vmatprep.subr.mxu0 %v767
        %818 = vmatpush1.msra.mxu0 %v766
        %819 = vmatprep.subr.mxu0 %v770
        %820 = vmatpush1.msra.mxu0 %v769
        %821 = vmatprep.subr.mxu0 0.0
        %822 = vmatpush1.msra.mxu0 0.0
        %823 = vmatprep.subr.mxu0 0.0
        %824 = vmatpush1.msra.mxu0 0.0
        %825 = vmatprep.subr.mxu0 0.0
        %826 = vmatpush1.msra.mxu0 0.0
        %827 = vmatprep.subr.mxu0 0.0
        %828 = vmatpush1.msra.mxu0 0.0
        %829 = vmatprep.subr.mxu0 0.0
        %830 = vmatpush1.msra.mxu0 0.0
        %831 = vmatprep.subr.mxu0 0.0
        %832 = vmatpush1.msra.mxu0 0.0
        %833 = vmatprep.subr.mxu0 0.0
        %834 = vmatpush1.msra.mxu0 0.0
        %835 = vmatprep.subr.mxu0 0.0
        %836 = vmatpush1.msra.mxu0 0.0
        %837 = vmatprep.subr.mxu0 0.0
        %838 = vmatpush1.msra.mxu0 0.0
        %839 = vmatprep.subr.mxu0 0.0
        %840 = vmatpush1.msra.mxu0 0.0
        %841 = vmatprep.subr.mxu0 0.0
        %842 = vmatpush1.msra.mxu0 0.0
        %843 = vmatprep.subr.mxu0 0.0
        %844 = vmatpush1.msra.mxu0 0.0
        %845 = vmatprep.subr.mxu0 0.0
        %846 = vmatpush1.msra.mxu0 0.0
        %847 = vmatprep.subr.mxu0 0.0
        %848 = vmatpush1.msra.mxu0 0.0
        %849 = vmatprep.subr.mxu0 0.0
        %850 = vmatpush1.msra.mxu0 0.0
        %851 = vmatprep.subr.mxu0 0.0
        %852 = vmatpush1.msra.mxu0 0.0
        %853 = vmatprep.mubr.f32.mxu0 0.0
        %854 = vmatmul.mubr.f32.gmra.mrb[0].mxu0 %v720
        %v855 = vpop.f32.mrb[0].mxu0
        %v856 = vadd.f32 %v777, %v855
        %v857 = vpop.f32.mrb[0].mxu0
        %v858 = vadd.f32 %v781, %v857
        %859 = vmatprep.mubr.f32.mxu0 0.0
        %860 = vmatmul.mubr.f32.gmra.mrb[0].mxu0 %v721
        %v861 = vpop.f32.mrb[0].mxu0
        %v862 = vadd.f32 %v777, %v861
        %v863 = vpop.f32.mrb[0].mxu0
        %v864 = vadd.f32 %v781, %v863
        %865 = vmatprep.mubr.f32.mxu0 0.0
        %866 = vmatmul.mubr.f32.gmra.mrb[0].mxu0 %v722
        %v867 = vpop.f32.mrb[0].mxu0
        %v868 = vadd.f32 %v777, %v867
        %v869 = vpop.f32.mrb[0].mxu0
        %v870 = vadd.f32 %v781, %v869
        %871 = vmatprep.mubr.f32.mxu0 0.0
        %872 = vmatmul.mubr.f32.gmra.mrb[0].mxu0 %v723
        %v873 = vpop.f32.mrb[0].mxu0
        %v874 = vadd.f32 %v777, %v873
        %v875 = vpop.f32.mrb[0].mxu0
        %v876 = vadd.f32 %v781, %v875
        %877 = vdwg.mxu0
        %878 = vmatprep.subr.mxu0 0.0
        %879 = vmatpush1.msra.mxu0 %v726
        %880 = vmatprep.subr.mxu0 0.0
        %881 = vmatpush1.msra.mxu0 %v729
        %882 = vmatprep.subr.mxu0 0.0
        %883 = vmatpush1.msra.mxu0 %v732
        %884 = vmatprep.subr.mxu0 0.0
        %885 = vmatpush1.msra.mxu0 %v735
        %886 = vmatprep.subr.mxu0 0.0
        %887 = vmatpush1.msra.mxu0 %v738
        %888 = vmatprep.subr.mxu0 0.0
        %889 = vmatpush1.msra.mxu0 %v741
        %890 = vmatprep.subr.mxu0 0.0
        %891 = vmatpush1.msra.mxu0 %v744
        %892 = vmatprep.subr.mxu0 0.0
        %893 = vmatpush1.msra.mxu0 %v747
        %894 = vmatprep.subr.mxu0 0.0
        %895 = vmatpush1.msra.mxu0 %v750
        %896 = vmatprep.subr.mxu0 0.0
        %897 = vmatpush1.msra.mxu0 %v753
        %898 = vmatprep.subr.mxu0 0.0
        %899 = vmatpush1.msra.mxu0 %v756
        %900 = vmatprep.subr.mxu0 0.0
        %901 = vmatpush1.msra.mxu0 %v759
        %902 = vmatprep.subr.mxu0 0.0
        %903 = vmatpush1.msra.mxu0 %v762
        %904 = vmatprep.subr.mxu0 0.0
        %905 = vmatpush1.msra.mxu0 %v765
        %906 = vmatprep.subr.mxu0 0.0
        %907 = vmatpush1.msra.mxu0 %v768
        %908 = vmatprep.subr.mxu0 0.0
        %909 = vmatpush1.msra.mxu0 %v771
        %910 = vmatprep.subr.mxu0 0.0
        %911 = vmatpush1.msra.mxu0 0.0
        %912 = vmatprep.subr.mxu0 0.0
        %913 = vmatpush1.msra.mxu0 0.0
        %914 = vmatprep.subr.mxu0 0.0
        %915 = vmatpush1.msra.mxu0 0.0
        %916 = vmatprep.subr.mxu0 0.0
        %917 = vmatpush1.msra.mxu0 0.0
        %918 = vmatprep.subr.mxu0 0.0
        %919 = vmatpush1.msra.mxu0 0.0
        %920 = vmatprep.subr.mxu0 0.0
        %921 = vmatpush1.msra.mxu0 0.0
        %922 = vmatprep.subr.mxu0 0.0
        %923 = vmatpush1.msra.mxu0 0.0
        %924 = vmatprep.subr.mxu0 0.0
        %925 = vmatpush1.msra.mxu0 0.0
        %926 = vmatprep.subr.mxu0 0.0
        %927 = vmatpush1.msra.mxu0 0.0
        %928 = vmatprep.subr.mxu0 0.0
        %929 = vmatpush1.msra.mxu0 0.0
        %930 = vmatprep.subr.mxu0 0.0
        %931 = vmatpush1.msra.mxu0 0.0
        %932 = vmatprep.subr.mxu0 0.0
        %933 = vmatpush1.msra.mxu0 0.0
        %934 = vmatprep.subr.mxu0 0.0
        %935 = vmatpush1.msra.mxu0 0.0
        %936 = vmatprep.subr.mxu0 0.0
        %937 = vmatpush1.msra.mxu0 0.0
        %938 = vmatprep.subr.mxu0 0.0
        %939 = vmatpush1.msra.mxu0 0.0
        %940 = vmatprep.subr.mxu0 0.0
        %941 = vmatpush1.msra.mxu0 0.0
        %942 = vmatprep.mubr.f32.mxu0 0.0
        %943 = vmatmul.mubr.f32.gmra.mrb[0].mxu0 %v720
        %v944 = vpop.f32.mrb[0].mxu0
        %v945 = vadd.f32 %v785, %v944
        %v946 = vpop.f32.mrb[0].mxu0
        %947 = vmatprep.mubr.f32.mxu0 0.0
        %948 = vmatmul.mubr.f32.gmra.mrb[0].mxu0 %v721
        %v949 = vpop.f32.mrb[0].mxu0
        %v950 = vadd.f32 %v785, %v949
        %v951 = vpop.f32.mrb[0].mxu0
        %952 = vmatprep.mubr.f32.mxu0 0.0
        %953 = vmatmul.mubr.f32.gmra.mrb[0].mxu0 %v722
        %v954 = vpop.f32.mrb[0].mxu0
        %v955 = vadd.f32 %v785, %v954
        %v956 = vpop.f32.mrb[0].mxu0
        %957 = vmatprep.mubr.f32.mxu0 0.0
        %958 = vmatmul.mubr.f32.gmra.mrb[0].mxu0 %v723
        %v959 = vpop.f32.mrb[0].mxu0
        %v960 = vadd.f32 %v785, %v959
        %v961 = vpop.f32.mrb[0].mxu0
        %962 = vdwg.mxu0
        %vm963 = vcmask 130048
        %v965 = vsel %vm963, %v856, 0
        %v968 = vsel %vm963, %v862, 0
        %v971 = vsel %vm963, %v858, 0
        %v974 = vsel %vm963, %v864, 0
        %976 = vmatprep.subr.mxu0 0.0
        %977 = vmatpush1.xpose.msra.mxu0 %v971
        %978 = vmatprep.subr.mxu0 0.0
        %979 = vmatpush1.xpose.msra.mxu0 %v974
        %980 = vmatprep.subr.mxu0 0.0
        %981 = vmatpush1.xpose.msra.mxu0 0.0
        %982 = vmatprep.subr.mxu0 0.0
        %983 = vmatpush1.xpose.msra.mxu0 0.0
        %984 = vmatprep.subr.mxu0 0.0
        %985 = vmatpush1.xpose.msra.mxu0 0.0
        %986 = vmatprep.subr.mxu0 0.0
        %987 = vmatpush1.xpose.msra.mxu0 0.0
        %988 = vmatprep.subr.mxu0 0.0
        %989 = vmatpush1.xpose.msra.mxu0 0.0
        %990 = vmatprep.subr.mxu0 0.0
        %991 = vmatpush1.xpose.msra.mxu0 0.0
        %992 = vmatprep.subr.mxu0 0.0
        %993 = vmatpush1.xpose.msra.mxu0 0.0
        %994 = vmatprep.subr.mxu0 0.0
        %995 = vmatpush1.xpose.msra.mxu0 0.0
        %996 = vmatprep.subr.mxu0 0.0
        %997 = vmatpush1.xpose.msra.mxu0 0.0
        %998 = vmatprep.subr.mxu0 0.0
        %999 = vmatpush1.xpose.msra.mxu0 0.0
        %1000 = vmatprep.subr.mxu0 0.0
        %1001 = vmatpush1.xpose.msra.mxu0 0.0
        %1002 = vmatprep.subr.mxu0 0.0
        %1003 = vmatpush1.xpose.msra.mxu0 0.0
        %1004 = vmatprep.subr.mxu0 0.0
        %1005 = vmatpush1.xpose.msra.mxu0 0.0
        %1006 = vmatprep.subr.mxu0 0.0
        %1007 = vmatpush1.xpose.msra.mxu0 0.0
        %1008 = vmatprep.subr.mxu0 0.0
        %1009 = vmatpush1.xpose.msra.mxu0 0.0
        %1010 = vmatprep.subr.mxu0 0.0
        %1011 = vmatpush1.xpose.msra.mxu0 0.0
        %1012 = vmatprep.subr.mxu0 0.0
        %1013 = vmatpush1.xpose.msra.mxu0 0.0
        %1014 = vmatprep.subr.mxu0 0.0
        %1015 = vmatpush1.xpose.msra.mxu0 0.0
        %1016 = vmatprep.subr.mxu0 0.0
        %1017 = vmatpush1.xpose.msra.mxu0 0.0
        %1018 = vmatprep.subr.mxu0 0.0
        %1019 = vmatpush1.xpose.msra.mxu0 0.0
        %1020 = vmatprep.subr.mxu0 0.0
        %1021 = vmatpush1.xpose.msra.mxu0 0.0
        %1022 = vmatprep.subr.mxu0 0.0
        %1023 = vmatpush1.xpose.msra.mxu0 0.0
        %1024 = vmatprep.subr.mxu0 0.0
        %1025 = vmatpush1.xpose.msra.mxu0 0.0
        %1026 = vmatprep.subr.mxu0 0.0
        %1027 = vmatpush1.xpose.msra.mxu0 0.0
        %1028 = vmatprep.subr.mxu0 0.0
        %1029 = vmatpush1.xpose.msra.mxu0 0.0
        %1030 = vmatprep.subr.mxu0 0.0
        %1031 = vmatpush1.xpose.msra.mxu0 0.0
        %1032 = vmatprep.subr.mxu0 0.0
        %1033 = vmatpush1.xpose.msra.mxu0 0.0
        %1034 = vmatprep.subr.mxu0 0.0
        %1035 = vmatpush1.xpose.msra.mxu0 0.0
        %1036 = vmatprep.subr.mxu0 0.0
        %1037 = vmatpush1.xpose.msra.mxu0 0.0
        %1038 = vmatprep.subr.mxu0 0.0
        %1039 = vmatpush1.xpose.msra.mxu0 0.0
        %1040 = vmatprep.mubr.f32.mxu0 0.0
        %1041 = vmatmul.mubr.f32.gmra.mrb[0].mxu0 %v965
        %v1042 = vpop.f32.mrb[0].mxu0
        %v1043 = vadd.f32 0.0, %v1042
        %v1044 = vpop.f32.mrb[0].mxu0
        %1045 = vmatprep.mubr.f32.mxu0 0.0
        %1046 = vmatmul.mubr.f32.gmra.mrb[0].mxu0 %v968
        %v1047 = vpop.f32.mrb[0].mxu0
        %v1048 = vadd.f32 0.0, %v1047
        %v1049 = vpop.f32.mrb[0].mxu0
        %1050 = vdwg.mxu0
        %v1052 = vsel %vm963, %v868, 0
        %v1055 = vsel %vm963, %v874, 0
        %v1058 = vsel %vm963, %v870, 0
        %v1061 = vsel %vm963, %v876, 0
        %1063 = vmatprep.subr.mxu0 0.0
        %1064 = vmatpush1.xpose.msra.mxu0 %v1058
        %1065 = vmatprep.subr.mxu0 0.0
        %1066 = vmatpush1.xpose.msra.mxu0 %v1061
        %1067 = vmatprep.subr.mxu0 0.0
        %1068 = vmatpush1.xpose.msra.mxu0 0.0
        %1069 = vmatprep.subr.mxu0 0.0
        %1070 = vmatpush1.xpose.msra.mxu0 0.0
        %1071 = vmatprep.subr.mxu0 0.0
        %1072 = vmatpush1.xpose.msra.mxu0 0.0
        %1073 = vmatprep.subr.mxu0 0.0
        %1074 = vmatpush1.xpose.msra.mxu0 0.0
        %1075 = vmatprep.subr.mxu0 0.0
        %1076 = vmatpush1.xpose.msra.mxu0 0.0
        %1077 = vmatprep.subr.mxu0 0.0
        %1078 = vmatpush1.xpose.msra.mxu0 0.0
        %1079 = vmatprep.subr.mxu0 0.0
        %1080 = vmatpush1.xpose.msra.mxu0 0.0
        %1081 = vmatprep.subr.mxu0 0.0
        %1082 = vmatpush1.xpose.msra.mxu0 0.0
        %1083 = vmatprep.subr.mxu0 0.0
        %1084 = vmatpush1.xpose.msra.mxu0 0.0
        %1085 = vmatprep.subr.mxu0 0.0
        %1086 = vmatpush1.xpose.msra.mxu0 0.0
        %1087 = vmatprep.subr.mxu0 0.0
        %1088 = vmatpush1.xpose.msra.mxu0 0.0
        %1089 = vmatprep.subr.mxu0 0.0
        %1090 = vmatpush1.xpose.msra.mxu0 0.0
        %1091 = vmatprep.subr.mxu0 0.0
        %1092 = vmatpush1.xpose.msra.mxu0 0.0
        %1093 = vmatprep.subr.mxu0 0.0
        %1094 = vmatpush1.xpose.msra.mxu0 0.0
        %1095 = vmatprep.subr.mxu0 0.0
        %1096 = vmatpush1.xpose.msra.mxu0 0.0
        %1097 = vmatprep.subr.mxu0 0.0
        %1098 = vmatpush1.xpose.msra.mxu0 0.0
        %1099 = vmatprep.subr.mxu0 0.0
        %1100 = vmatpush1.xpose.msra.mxu0 0.0
        %1101 = vmatprep.subr.mxu0 0.0
        %1102 = vmatpush1.xpose.msra.mxu0 0.0
        %1103 = vmatprep.subr.mxu0 0.0
        %1104 = vmatpush1.xpose.msra.mxu0 0.0
        %1105 = vmatprep.subr.mxu0 0.0
        %1106 = vmatpush1.xpose.msra.mxu0 0.0
        %1107 = vmatprep.subr.mxu0 0.0
        %1108 = vmatpush1.xpose.msra.mxu0 0.0
        %1109 = vmatprep.subr.mxu0 0.0
        %1110 = vmatpush1.xpose.msra.mxu0 0.0
        %1111 = vmatprep.subr.mxu0 0.0
        %1112 = vmatpush1.xpose.msra.mxu0 0.0
        %1113 = vmatprep.subr.mxu0 0.0
        %1114 = vmatpush1.xpose.msra.mxu0 0.0
        %1115 = vmatprep.subr.mxu0 0.0
        %1116 = vmatpush1.xpose.msra.mxu0 0.0
        %1117 = vmatprep.subr.mxu0 0.0
        %1118 = vmatpush1.xpose.msra.mxu0 0.0
        %1119 = vmatprep.subr.mxu0 0.0
        %1120 = vmatpush1.xpose.msra.mxu0 0.0
        %1121 = vmatprep.subr.mxu0 0.0
        %1122 = vmatpush1.xpose.msra.mxu0 0.0
        %1123 = vmatprep.subr.mxu0 0.0
        %1124 = vmatpush1.xpose.msra.mxu0 0.0
        %1125 = vmatprep.subr.mxu0 0.0
        %1126 = vmatpush1.xpose.msra.mxu0 0.0
        %1127 = vmatprep.mubr.f32.mxu0 0.0
        %1128 = vmatmul.mubr.f32.gmra.mrb[0].mxu0 %v1052
        %v1129 = vpop.f32.mrb[0].mxu0
        %v1130 = vadd.f32 0.0, %v1129
        %v1131 = vpop.f32.mrb[0].mxu0
        %1132 = vmatprep.mubr.f32.mxu0 0.0
        %1133 = vmatmul.mubr.f32.gmra.mrb[0].mxu0 %v1055
        %v1134 = vpop.f32.mrb[0].mxu0
        %v1135 = vadd.f32 0.0, %v1134
        %v1136 = vpop.f32.mrb[0].mxu0
        %1137 = vdwg.mxu0
        %v1138 = vmul.f32 %v1043, 0.25
        %v1139 = vmul.f32 %v1048, 0.25
        %v1140 = vmul.f32 %v1130, 0.25
        %v1141 = vmul.f32 %v1135, 0.25
        %v1142 = vsel %vm963, %v1138, -inf
        %1143 = vmax.xlane.f32.xlu0 %v1142
        %v1144 = vpop.xlane.xlu0 %1143
        %v1145 = vsel %vm963, %v1139, -inf
        %1146 = vmax.xlane.f32.xlu0 %v1145
        %v1147 = vpop.xlane.xlu0 %1146
        %v1148 = vsel %vm963, %v1140, -inf
        %1149 = vmax.xlane.f32.xlu0 %v1148
        %v1150 = vpop.xlane.xlu0 %1149
        %v1151 = vsel %vm963, %v1141, -inf
        %1152 = vmax.xlane.f32.xlu0 %v1151
        %v1153 = vpop.xlane.xlu0 %1152
        %v1154 = vsub.f32 %v1138, %v1144
        %v1155 = vsub.f32 %v1139, %v1147
        %v1156 = vsub.f32 %v1140, %v1150
        %v1157 = vsub.f32 %v1141, %v1153
        %v1158 = vmul.f32 %v1154, 1.442695
        %v1159 = vpow.pop %v1158
        %v1160 = vmul.f32 %v1155, 1.442695
        %v1161 = vpow.pop %v1160
        %v1162 = vmul.f32 %v1156, 1.442695
        %v1163 = vpow.pop %v1162
        %v1164 = vmul.f32 %v1157, 1.442695
        %v1165 = vpow.pop %v1164
        %v1166 = vsel %vm963, %v1159, 0.0
        %1167 = vadd.xlane.f32.xlu0 %v1166
        %v1168 = vpop.xlane.xlu0 %1167
        %v1169 = vsel %vm963, %v1161, 0.0
        %1170 = vadd.xlane.f32.xlu0 %v1169
        %v1171 = vpop.xlane.xlu0 %1170
        %v1172 = vsel %vm963, %v1163, 0.0
        %1173 = vadd.xlane.f32.xlu0 %v1172
        %v1174 = vpop.xlane.xlu0 %1173
        %v1175 = vsel %vm963, %v1165, 0.0
        %1176 = vadd.xlane.f32.xlu0 %v1175
        %v1177 = vpop.xlane.xlu0 %1176
        %v1178 = vrcp.pop %v1168
        %v1179 = vrcp.pop %v1171
        %v1180 = vrcp.pop %v1174
        %v1181 = vrcp.pop %v1177
        %v1182 = vmul.f32 %v1159, %v1178
        %v1183 = vmul.f32 %v1161, %v1179
        %v1184 = vmul.f32 %v1163, %v1180
        %v1185 = vmul.f32 %v1165, %v1181
        %v1187 = vsel %vm963, %v1182, 0
        %v1190 = vsel %vm963, %v1183, 0
        %1192 = vmatprep.subr.mxu0 0.0
        %1193 = vmatpush1.msra.mxu0 %v945
        %1194 = vmatprep.subr.mxu0 0.0
        %1195 = vmatpush1.msra.mxu0 %v950
        %1196 = vmatprep.subr.mxu0 0.0
        %1197 = vmatpush1.msra.mxu0 0.0
        %1198 = vmatprep.subr.mxu0 0.0
        %1199 = vmatpush1.msra.mxu0 0.0
        %1200 = vmatprep.subr.mxu0 0.0
        %1201 = vmatpush1.msra.mxu0 0.0
        %1202 = vmatprep.subr.mxu0 0.0
        %1203 = vmatpush1.msra.mxu0 0.0
        %1204 = vmatprep.subr.mxu0 0.0
        %1205 = vmatpush1.msra.mxu0 0.0
        %1206 = vmatprep.subr.mxu0 0.0
        %1207 = vmatpush1.msra.mxu0 0.0
        %1208 = vmatprep.subr.mxu0 0.0
        %1209 = vmatpush1.msra.mxu0 0.0
        %1210 = vmatprep.subr.mxu0 0.0
        %1211 = vmatpush1.msra.mxu0 0.0
        %1212 = vmatprep.subr.mxu0 0.0
        %1213 = vmatpush1.msra.mxu0 0.0
        %1214 = vmatprep.subr.mxu0 0.0
        %1215 = vmatpush1.msra.mxu0 0.0
        %1216 = vmatprep.subr.mxu0 0.0
        %1217 = vmatpush1.msra.mxu0 0.0
        %1218 = vmatprep.subr.mxu0 0.0
        %1219 = vmatpush1.msra.mxu0 0.0
        %1220 = vmatprep.subr.mxu0 0.0
        %1221 = vmatpush1.msra.mxu0 0.0
        %1222 = vmatprep.subr.mxu0 0.0
        %1223 = vmatpush1.msra.mxu0 0.0
        %1224 = vmatprep.subr.mxu0 0.0
        %1225 = vmatpush1.msra.mxu0 0.0
        %1226 = vmatprep.subr.mxu0 0.0
        %1227 = vmatpush1.msra.mxu0 0.0
        %1228 = vmatprep.subr.mxu0 0.0
        %1229 = vmatpush1.msra.mxu0 0.0
        %1230 = vmatprep.subr.mxu0 0.0
        %1231 = vmatpush1.msra.mxu0 0.0
        %1232 = vmatprep.subr.mxu0 0.0
        %1233 = vmatpush1.msra.mxu0 0.0
        %1234 = vmatprep.subr.mxu0 0.0
        %1235 = vmatpush1.msra.mxu0 0.0
        %1236 = vmatprep.subr.mxu0 0.0
        %1237 = vmatpush1.msra.mxu0 0.0
        %1238 = vmatprep.subr.mxu0 0.0
        %1239 = vmatpush1.msra.mxu0 0.0
        %1240 = vmatprep.subr.mxu0 0.0
        %1241 = vmatpush1.msra.mxu0 0.0
        %1242 = vmatprep.subr.mxu0 0.0
        %1243 = vmatpush1.msra.mxu0 0.0
        %1244 = vmatprep.subr.mxu0 0.0
        %1245 = vmatpush1.msra.mxu0 0.0
        %1246 = vmatprep.subr.mxu0 0.0
        %1247 = vmatpush1.msra.mxu0 0.0
        %1248 = vmatprep.subr.mxu0 0.0
        %1249 = vmatpush1.msra.mxu0 0.0
        %1250 = vmatprep.subr.mxu0 0.0
        %1251 = vmatpush1.msra.mxu0 0.0
        %1252 = vmatprep.subr.mxu0 0.0
        %1253 = vmatpush1.msra.mxu0 0.0
        %1254 = vmatprep.subr.mxu0 0.0
        %1255 = vmatpush1.msra.mxu0 0.0
        %1256 = vmatprep.mubr.f32.mxu0 0.0
        %1257 = vmatmul.mubr.f32.gmra.mrb[0].mxu0 %v1187
        %v1258 = vpop.f32.mrb[0].mxu0
        %v1259 = vadd.f32 0.0, %v1258
        %v1260 = vpop.f32.mrb[0].mxu0
        %1261 = vmatprep.mubr.f32.mxu0 0.0
        %1262 = vmatmul.mubr.f32.gmra.mrb[0].mxu0 %v1190
        %v1263 = vpop.f32.mrb[0].mxu0
        %v1264 = vadd.f32 0.0, %v1263
        %v1265 = vpop.f32.mrb[0].mxu0
        %1266 = vdwg.mxu0
        %v1268 = vsel %vm963, %v1184, 0
        %v1271 = vsel %vm963, %v1185, 0
        %1273 = vmatprep.subr.mxu0 0.0
        %1274 = vmatpush1.msra.mxu0 %v955
        %1275 = vmatprep.subr.mxu0 0.0
        %1276 = vmatpush1.msra.mxu0 %v960
        %1277 = vmatprep.subr.mxu0 0.0
        %1278 = vmatpush1.msra.mxu0 0.0
        %1279 = vmatprep.subr.mxu0 0.0
        %1280 = vmatpush1.msra.mxu0 0.0
        %1281 = vmatprep.subr.mxu0 0.0
        %1282 = vmatpush1.msra.mxu0 0.0
        %1283 = vmatprep.subr.mxu0 0.0
        %1284 = vmatpush1.msra.mxu0 0.0
        %1285 = vmatprep.subr.mxu0 0.0
        %1286 = vmatpush1.msra.mxu0 0.0
        %1287 = vmatprep.subr.mxu0 0.0
        %1288 = vmatpush1.msra.mxu0 0.0
        %1289 = vmatprep.subr.mxu0 0.0
        %1290 = vmatpush1.msra.mxu0 0.0
        %1291 = vmatprep.subr.mxu0 0.0
        %1292 = vmatpush1.msra.mxu0 0.0
        %1293 = vmatprep.subr.mxu0 0.0
        %1294 = vmatpush1.msra.mxu0 0.0
        %1295 = vmatprep.subr.mxu0 0.0
        %1296 = vmatpush1.msra.mxu0 0.0
        %1297 = vmatprep.subr.mxu0 0.0
        %1298 = vmatpush1.msra.mxu0 0.0
        %1299 = vmatprep.subr.mxu0 0.0
        %1300 = vmatpush1.msra.mxu0 0.0
        %1301 = vmatprep.subr.mxu0 0.0
        %1302 = vmatpush1.msra.mxu0 0.0
        %1303 = vmatprep.subr.mxu0 0.0
        %1304 = vmatpush1.msra.mxu0 0.0
        %1305 = vmatprep.subr.mxu0 0.0
        %1306 = vmatpush1.msra.mxu0 0.0
        %1307 = vmatprep.subr.mxu0 0.0
        %1308 = vmatpush1.msra.mxu0 0.0
        %1309 = vmatprep.subr.mxu0 0.0
        %1310 = vmatpush1.msra.mxu0 0.0
        %1311 = vmatprep.subr.mxu0 0.0
        %1312 = vmatpush1.msra.mxu0 0.0
        %1313 = vmatprep.subr.mxu0 0.0
        %1314 = vmatpush1.msra.mxu0 0.0
        %1315 = vmatprep.subr.mxu0 0.0
        %1316 = vmatpush1.msra.mxu0 0.0
        %1317 = vmatprep.subr.mxu0 0.0
        %1318 = vmatpush1.msra.mxu0 0.0
        %1319 = vmatprep.subr.mxu0 0.0
        %1320 = vmatpush1.msra.mxu0 0.0
        %1321 = vmatprep.subr.mxu0 0.0
        %1322 = vmatpush1.msra.mxu0 0.0
        %1323 = vmatprep.subr.mxu0 0.0
        %1324 = vmatpush1.msra.mxu0 0.0
        %1325 = vmatprep.subr.mxu0 0.0
        %1326 = vmatpush1.msra.mxu0 0.0
        %1327 = vmatprep.subr.mxu0 0.0
        %1328 = vmatpush1.msra.mxu0 0.0
        %1329 = vmatprep.subr.mxu0 0.0
        %1330 = vmatpush1.msra.mxu0 0.0
        %1331 = vmatprep.subr.mxu0 0.0
        %1332 = vmatpush1.msra.mxu0 0.0
        %1333 = vmatprep.subr.mxu0 0.0
        %1334 = vmatpush1.msra.mxu0 0.0
        %1335 = vmatprep.subr.mxu0 0.0
        %1336 = vmatpush1.msra.mxu0 0.0
        %1337 = vmatprep.mubr.f32.mxu0 0.0
        %1338 = vmatmul.mubr.f32.gmra.mrb[0].mxu0 %v1268
        %v1339 = vpop.f32.mrb[0].mxu0
        %v1340 = vadd.f32 0.0, %v1339
        %v1341 = vpop.f32.mrb[0].mxu0
        %1342 = vmatprep.mubr.f32.mxu0 0.0
        %1343 = vmatmul.mubr.f32.gmra.mrb[0].mxu0 %v1271
        %v1344 = vpop.f32.mrb[0].mxu0
        %v1345 = vadd.f32 0.0, %v1344
        %v1346 = vpop.f32.mrb[0].mxu0
        %1347 = vdwg.mxu0
        %v1348 = vld [vmem:[#allocation10] sm:$0xff]
        %v1349 = vld [vmem:[#allocation10 + $0x8] sm:$0xff]
        %1350 = vrot.lane.b32.xlu0 %v856, 112
        %v1351 = vpop.permute.xlu0 %1350
        %1352 = vrot.lane.b32.xlu0 %v862, 112
        %v1353 = vpop.permute.xlu0 %1352
        %1354 = vrot.lane.b32.xlu0 %v858, 112
        %v1355 = vpop.permute.xlu0 %1354
        %1356 = vrot.lane.b32.xlu0 %v864, 112
        %v1357 = vpop.permute.xlu0 %1356
        %v1358 = vsel %vm963, %v1351, 0
        %v1360 = vsel %vm963, %v1353, 0
        %v1362 = vsel %vm963, %v1355, 0
        %v1364 = vsel %vm963, %v1357, 0
        %1366 = vmatprep.subr.mxu0 0.0
        %1367 = vmatpush1.xpose.msra.mxu0 %v1362
        %1368 = vmatprep.subr.mxu0 0.0
        %1369 = vmatpush1.xpose.msra.mxu0 %v1364
        %1370 = vmatprep.subr.mxu0 0.0
        %1371 = vmatpush1.xpose.msra.mxu0 0.0
        %1372 = vmatprep.subr.mxu0 0.0
        %1373 = vmatpush1.xpose.msra.mxu0 0.0
        %1374 = vmatprep.subr.mxu0 0.0
        %1375 = vmatpush1.xpose.msra.mxu0 0.0
        %1376 = vmatprep.subr.mxu0 0.0
        %1377 = vmatpush1.xpose.msra.mxu0 0.0
        %1378 = vmatprep.subr.mxu0 0.0
        %1379 = vmatpush1.xpose.msra.mxu0 0.0
        %1380 = vmatprep.subr.mxu0 0.0
        %1381 = vmatpush1.xpose.msra.mxu0 0.0
        %1382 = vmatprep.subr.mxu0 0.0
        %1383 = vmatpush1.xpose.msra.mxu0 0.0
        %1384 = vmatprep.subr.mxu0 0.0
        %1385 = vmatpush1.xpose.msra.mxu0 0.0
        %1386 = vmatprep.subr.mxu0 0.0
        %1387 = vmatpush1.xpose.msra.mxu0 0.0
        %1388 = vmatprep.subr.mxu0 0.0
        %1389 = vmatpush1.xpose.msra.mxu0 0.0
        %1390 = vmatprep.subr.mxu0 0.0
        %1391 = vmatpush1.xpose.msra.mxu0 0.0
        %1392 = vmatprep.subr.mxu0 0.0
        %1393 = vmatpush1.xpose.msra.mxu0 0.0
        %1394 = vmatprep.subr.mxu0 0.0
        %1395 = vmatpush1.xpose.msra.mxu0 0.0
        %1396 = vmatprep.subr.mxu0 0.0
        %1397 = vmatpush1.xpose.msra.mxu0 0.0
        %1398 = vmatprep.subr.mxu0 0.0
        %1399 = vmatpush1.xpose.msra.mxu0 0.0
        %1400 = vmatprep.subr.mxu0 0.0
        %1401 = vmatpush1.xpose.msra.mxu0 0.0
        %1402 = vmatprep.subr.mxu0 0.0
        %1403 = vmatpush1.xpose.msra.mxu0 0.0
        %1404 = vmatprep.subr.mxu0 0.0
        %1405 = vmatpush1.xpose.msra.mxu0 0.0
        %1406 = vmatprep.subr.mxu0 0.0
        %1407 = vmatpush1.xpose.msra.mxu0 0.0
        %1408 = vmatprep.subr.mxu0 0.0
        %1409 = vmatpush1.xpose.msra.mxu0 0.0
        %1410 = vmatprep.subr.mxu0 0.0
        %1411 = vmatpush1.xpose.msra.mxu0 0.0
        %1412 = vmatprep.subr.mxu0 0.0
        %1413 = vmatpush1.xpose.msra.mxu0 0.0
        %1414 = vmatprep.subr.mxu0 0.0
        %1415 = vmatpush1.xpose.msra.mxu0 0.0
        %1416 = vmatprep.subr.mxu0 0.0
        %1417 = vmatpush1.xpose.msra.mxu0 0.0
        %1418 = vmatprep.subr.mxu0 0.0
        %1419 = vmatpush1.xpose.msra.mxu0 0.0
        %1420 = vmatprep.subr.mxu0 0.0
        %1421 = vmatpush1.xpose.msra.mxu0 0.0
        %1422 = vmatprep.subr.mxu0 0.0
        %1423 = vmatpush1.xpose.msra.mxu0 0.0
        %1424 = vmatprep.subr.mxu0 0.0
        %1425 = vmatpush1.xpose.msra.mxu0 0.0
        %1426 = vmatprep.subr.mxu0 0.0
        %1427 = vmatpush1.xpose.msra.mxu0 0.0
        %1428 = vmatprep.subr.mxu0 0.0
        %1429 = vmatpush1.xpose.msra.mxu0 0.0
        %1430 = vmatprep.mubr.f32.mxu0 0.0
        %1431 = vmatmul.mubr.f32.gmra.mrb[0].mxu0 %v1358
        %v1432 = vpop.f32.mrb[0].mxu0
        %v1433 = vadd.f32 0.0, %v1432
        %v1434 = vpop.f32.mrb[0].mxu0
        %1435 = vmatprep.mubr.f32.mxu0 0.0
        %1436 = vmatmul.mubr.f32.gmra.mrb[0].mxu0 %v1360
        %v1437 = vpop.f32.mrb[0].mxu0
        %v1438 = vadd.f32 0.0, %v1437
        %v1439 = vpop.f32.mrb[0].mxu0
        %1440 = vdwg.mxu0
        %1441 = vrot.lane.b32.xlu0 %v868, 112
        %v1442 = vpop.permute.xlu0 %1441
        %1443 = vrot.lane.b32.xlu0 %v874, 112
        %v1444 = vpop.permute.xlu0 %1443
        %1445 = vrot.lane.b32.xlu0 %v870, 112
        %v1446 = vpop.permute.xlu0 %1445
        %1447 = vrot.lane.b32.xlu0 %v876, 112
        %v1448 = vpop.permute.xlu0 %1447
        %v1449 = vsel %vm963, %v1442, 0
        %v1451 = vsel %vm963, %v1444, 0
        %v1453 = vsel %vm963, %v1446, 0
        %v1455 = vsel %vm963, %v1448, 0
        %1457 = vmatprep.subr.mxu0 0.0
        %1458 = vmatpush1.xpose.msra.mxu0 %v1453
        %1459 = vmatprep.subr.mxu0 0.0
        %1460 = vmatpush1.xpose.msra.mxu0 %v1455
        %1461 = vmatprep.subr.mxu0 0.0
        %1462 = vmatpush1.xpose.msra.mxu0 0.0
        %1463 = vmatprep.subr.mxu0 0.0
        %1464 = vmatpush1.xpose.msra.mxu0 0.0
        %1465 = vmatprep.subr.mxu0 0.0
        %1466 = vmatpush1.xpose.msra.mxu0 0.0
        %1467 = vmatprep.subr.mxu0 0.0
        %1468 = vmatpush1.xpose.msra.mxu0 0.0
        %1469 = vmatprep.subr.mxu0 0.0
        %1470 = vmatpush1.xpose.msra.mxu0 0.0
        %1471 = vmatprep.subr.mxu0 0.0
        %1472 = vmatpush1.xpose.msra.mxu0 0.0
        %1473 = vmatprep.subr.mxu0 0.0
        %1474 = vmatpush1.xpose.msra.mxu0 0.0
        %1475 = vmatprep.subr.mxu0 0.0
        %1476 = vmatpush1.xpose.msra.mxu0 0.0
        %1477 = vmatprep.subr.mxu0 0.0
        %1478 = vmatpush1.xpose.msra.mxu0 0.0
        %1479 = vmatprep.subr.mxu0 0.0
        %1480 = vmatpush1.xpose.msra.mxu0 0.0
        %1481 = vmatprep.subr.mxu0 0.0
        %1482 = vmatpush1.xpose.msra.mxu0 0.0
        %1483 = vmatprep.subr.mxu0 0.0
        %1484 = vmatpush1.xpose.msra.mxu0 0.0
        %1485 = vmatprep.subr.mxu0 0.0
        %1486 = vmatpush1.xpose.msra.mxu0 0.0
        %1487 = vmatprep.subr.mxu0 0.0
        %1488 = vmatpush1.xpose.msra.mxu0 0.0
        %1489 = vmatprep.subr.mxu0 0.0
        %1490 = vmatpush1.xpose.msra.mxu0 0.0
        %1491 = vmatprep.subr.mxu0 0.0
        %1492 = vmatpush1.xpose.msra.mxu0 0.0
        %1493 = vmatprep.subr.mxu0 0.0
        %1494 = vmatpush1.xpose.msra.mxu0 0.0
        %1495 = vmatprep.subr.mxu0 0.0
        %1496 = vmatpush1.xpose.msra.mxu0 0.0
        %1497 = vmatprep.subr.mxu0 0.0
        %1498 = vmatpush1.xpose.msra.mxu0 0.0
        %1499 = vmatprep.subr.mxu0 0.0
        %1500 = vmatpush1.xpose.msra.mxu0 0.0
        %1501 = vmatprep.subr.mxu0 0.0
        %1502 = vmatpush1.xpose.msra.mxu0 0.0
        %1503 = vmatprep.subr.mxu0 0.0
        %1504 = vmatpush1.xpose.msra.mxu0 0.0
        %1505 = vmatprep.subr.mxu0 0.0
        %1506 = vmatpush1.xpose.msra.mxu0 0.0
        %1507 = vmatprep.subr.mxu0 0.0
        %1508 = vmatpush1.xpose.msra.mxu0 0.0
        %1509 = vmatprep.subr.mxu0 0.0
        %1510 = vmatpush1.xpose.msra.mxu0 0.0
        %1511 = vmatprep.subr.mxu0 0.0
        %1512 = vmatpush1.xpose.msra.mxu0 0.0
        %1513 = vmatprep.subr.mxu0 0.0
        %1514 = vmatpush1.xpose.msra.mxu0 0.0
        %1515 = vmatprep.subr.mxu0 0.0
        %1516 = vmatpush1.xpose.msra.mxu0 0.0
        %1517 = vmatprep.subr.mxu0 0.0
        %1518 = vmatpush1.xpose.msra.mxu0 0.0
        %1519 = vmatprep.subr.mxu0 0.0
        %1520 = vmatpush1.xpose.msra.mxu0 0.0
        %1521 = vmatprep.mubr.f32.mxu0 0.0
        %1522 = vmatmul.mubr.f32.gmra.mrb[0].mxu0 %v1449
        %v1523 = vpop.f32.mrb[0].mxu0
        %v1524 = vadd.f32 0.0, %v1523
        %v1525 = vpop.f32.mrb[0].mxu0
        %1526 = vmatprep.mubr.f32.mxu0 0.0
        %1527 = vmatmul.mubr.f32.gmra.mrb[0].mxu0 %v1451
        %v1528 = vpop.f32.mrb[0].mxu0
        %v1529 = vadd.f32 0.0, %v1528
        %v1530 = vpop.f32.mrb[0].mxu0
        %1531 = vdwg.mxu0
        %v1532 = vmul.f32 %v1433, 0.25
        %v1533 = vmul.f32 %v1438, 0.25
        %v1534 = vmul.f32 %v1524, 0.25
        %v1535 = vmul.f32 %v1529, 0.25
        %v1536 = vsel %vm963, %v1532, -inf
        %1537 = vmax.xlane.f32.xlu0 %v1536
        %v1538 = vpop.xlane.xlu0 %1537
        %v1539 = vsel %vm963, %v1533, -inf
        %1540 = vmax.xlane.f32.xlu0 %v1539
        %v1541 = vpop.xlane.xlu0 %1540
        %v1542 = vsel %vm963, %v1534, -inf
        %1543 = vmax.xlane.f32.xlu0 %v1542
        %v1544 = vpop.xlane.xlu0 %1543
        %v1545 = vsel %vm963, %v1535, -inf
        %1546 = vmax.xlane.f32.xlu0 %v1545
        %v1547 = vpop.xlane.xlu0 %1546
        %v1548 = vsub.f32 %v1532, %v1538
        %v1549 = vsub.f32 %v1533, %v1541
        %v1550 = vsub.f32 %v1534, %v1544
        %v1551 = vsub.f32 %v1535, %v1547
        %v1552 = vmul.f32 %v1548, 1.442695
        %v1553 = vpow.pop %v1552
        %v1554 = vmul.f32 %v1549, 1.442695
        %v1555 = vpow.pop %v1554
        %v1556 = vmul.f32 %v1550, 1.442695
        %v1557 = vpow.pop %v1556
        %v1558 = vmul.f32 %v1551, 1.442695
        %v1559 = vpow.pop %v1558
        %v1560 = vsel %vm963, %v1553, 0.0
        %1561 = vadd.xlane.f32.xlu0 %v1560
        %v1562 = vpop.xlane.xlu0 %1561
        %v1563 = vsel %vm963, %v1555, 0.0
        %1564 = vadd.xlane.f32.xlu0 %v1563
        %v1565 = vpop.xlane.xlu0 %1564
        %v1566 = vsel %vm963, %v1557, 0.0
        %1567 = vadd.xlane.f32.xlu0 %v1566
        %v1568 = vpop.xlane.xlu0 %1567
        %v1569 = vsel %vm963, %v1559, 0.0
        %1570 = vadd.xlane.f32.xlu0 %v1569
        %v1571 = vpop.xlane.xlu0 %1570
        %v1572 = vrcp.pop %v1562
        %v1573 = vrcp.pop %v1565
        %v1574 = vrcp.pop %v1568
        %v1575 = vrcp.pop %v1571
        %v1576 = vmul.f32 %v1553, %v1572
        %v1577 = vmul.f32 %v1555, %v1573
        %v1578 = vmul.f32 %v1557, %v1574
        %v1579 = vmul.f32 %v1559, %v1575
        %1582 = vrot.lane.b32.xlu0 %v945, 112
        %v1583 = vpop.permute.xlu0 %1582
        %1584 = vrot.lane.b32.xlu0 %v950, 112
        %v1585 = vpop.permute.xlu0 %1584
        %v1589 = vsel %vm963, %v1576, 0
        %v1592 = vsel %vm963, %v1577, 0
        %1594 = vmatprep.subr.mxu0 0.0
        %1595 = vmatpush1.msra.mxu0 %v1583
        %1596 = vmatprep.subr.mxu0 0.0
        %1597 = vmatpush1.msra.mxu0 %v1585
        %1598 = vmatprep.subr.mxu0 0.0
        %1599 = vmatpush1.msra.mxu0 0.0
        %1600 = vmatprep.subr.mxu0 0.0
        %1601 = vmatpush1.msra.mxu0 0.0
        %1602 = vmatprep.subr.mxu0 0.0
        %1603 = vmatpush1.msra.mxu0 0.0
        %1604 = vmatprep.subr.mxu0 0.0
        %1605 = vmatpush1.msra.mxu0 0.0
        %1606 = vmatprep.subr.mxu0 0.0
        %1607 = vmatpush1.msra.mxu0 0.0
        %1608 = vmatprep.subr.mxu0 0.0
        %1609 = vmatpush1.msra.mxu0 0.0
        %1610 = vmatprep.subr.mxu0 0.0
        %1611 = vmatpush1.msra.mxu0 0.0
        %1612 = vmatprep.subr.mxu0 0.0
        %1613 = vmatpush1.msra.mxu0 0.0
        %1614 = vmatprep.subr.mxu0 0.0
        %1615 = vmatpush1.msra.mxu0 0.0
        %1616 = vmatprep.subr.mxu0 0.0
        %1617 = vmatpush1.msra.mxu0 0.0
        %1618 = vmatprep.subr.mxu0 0.0
        %1619 = vmatpush1.msra.mxu0 0.0
        %1620 = vmatprep.subr.mxu0 0.0
        %1621 = vmatpush1.msra.mxu0 0.0
        %1622 = vmatprep.subr.mxu0 0.0
        %1623 = vmatpush1.msra.mxu0 0.0
        %1624 = vmatprep.subr.mxu0 0.0
        %1625 = vmatpush1.msra.mxu0 0.0
        %1626 = vmatprep.subr.mxu0 0.0
        %1627 = vmatpush1.msra.mxu0 0.0
        %1628 = vmatprep.subr.mxu0 0.0
        %1629 = vmatpush1.msra.mxu0 0.0
        %1630 = vmatprep.subr.mxu0 0.0
        %1631 = vmatpush1.msra.mxu0 0.0
        %1632 = vmatprep.subr.mxu0 0.0
        %1633 = vmatpush1.msra.mxu0 0.0
        %1634 = vmatprep.subr.mxu0 0.0
        %1635 = vmatpush1.msra.mxu0 0.0
        %1636 = vmatprep.subr.mxu0 0.0
        %1637 = vmatpush1.msra.mxu0 0.0
        %1638 = vmatprep.subr.mxu0 0.0
        %1639 = vmatpush1.msra.mxu0 0.0
        %1640 = vmatprep.subr.mxu0 0.0
        %1641 = vmatpush1.msra.mxu0 0.0
        %1642 = vmatprep.subr.mxu0 0.0
        %1643 = vmatpush1.msra.mxu0 0.0
        %1644 = vmatprep.subr.mxu0 0.0
        %1645 = vmatpush1.msra.mxu0 0.0
        %1646 = vmatprep.subr.mxu0 0.0
        %1647 = vmatpush1.msra.mxu0 0.0
        %1648 = vmatprep.subr.mxu0 0.0
        %1649 = vmatpush1.msra.mxu0 0.0
        %1650 = vmatprep.subr.mxu0 0.0
        %1651 = vmatpush1.msra.mxu0 0.0
        %1652 = vmatprep.subr.mxu0 0.0
        %1653 = vmatpush1.msra.mxu0 0.0
        %1654 = vmatprep.subr.mxu0 0.0
        %1655 = vmatpush1.msra.mxu0 0.0
        %1656 = vmatprep.subr.mxu0 0.0
        %1657 = vmatpush1.msra.mxu0 0.0
        %1658 = vmatprep.mubr.f32.mxu0 0.0
        %1659 = vmatmul.mubr.f32.gmra.mrb[0].mxu0 %v1589
        %v1660 = vpop.f32.mrb[0].mxu0
        %v1661 = vadd.f32 0.0, %v1660
        %v1662 = vpop.f32.mrb[0].mxu0
        %1663 = vmatprep.mubr.f32.mxu0 0.0
        %1664 = vmatmul.mubr.f32.gmra.mrb[0].mxu0 %v1592
        %v1665 = vpop.f32.mrb[0].mxu0
        %v1666 = vadd.f32 0.0, %v1665
        %v1667 = vpop.f32.mrb[0].mxu0
        %1668 = vdwg.mxu0
        %1671 = vrot.lane.b32.xlu0 %v955, 112
        %v1672 = vpop.permute.xlu0 %1671
        %1673 = vrot.lane.b32.xlu0 %v960, 112
        %v1674 = vpop.permute.xlu0 %1673
        %v1678 = vsel %vm963, %v1578, 0
        %v1681 = vsel %vm963, %v1579, 0
        %1683 = vmatprep.subr.mxu0 0.0
        %1684 = vmatpush1.msra.mxu0 %v1672
        %1685 = vmatprep.subr.mxu0 0.0
        %1686 = vmatpush1.msra.mxu0 %v1674
        %1687 = vmatprep.subr.mxu0 0.0
        %1688 = vmatpush1.msra.mxu0 0.0
        %1689 = vmatprep.subr.mxu0 0.0
        %1690 = vmatpush1.msra.mxu0 0.0
        %1691 = vmatprep.subr.mxu0 0.0
        %1692 = vmatpush1.msra.mxu0 0.0
        %1693 = vmatprep.subr.mxu0 0.0
        %1694 = vmatpush1.msra.mxu0 0.0
        %1695 = vmatprep.subr.mxu0 0.0
        %1696 = vmatpush1.msra.mxu0 0.0
        %1697 = vmatprep.subr.mxu0 0.0
        %1698 = vmatpush1.msra.mxu0 0.0
        %1699 = vmatprep.subr.mxu0 0.0
        %1700 = vmatpush1.msra.mxu0 0.0
        %1701 = vmatprep.subr.mxu0 0.0
        %1702 = vmatpush1.msra.mxu0 0.0
        %1703 = vmatprep.subr.mxu0 0.0
        %1704 = vmatpush1.msra.mxu0 0.0
        %1705 = vmatprep.subr.mxu0 0.0
        %1706 = vmatpush1.msra.mxu0 0.0
        %1707 = vmatprep.subr.mxu0 0.0
        %1708 = vmatpush1.msra.mxu0 0.0
        %1709 = vmatprep.subr.mxu0 0.0
        %1710 = vmatpush1.msra.mxu0 0.0
        %1711 = vmatprep.subr.mxu0 0.0
        %1712 = vmatpush1.msra.mxu0 0.0
        %1713 = vmatprep.subr.mxu0 0.0
        %1714 = vmatpush1.msra.mxu0 0.0
        %1715 = vmatprep.subr.mxu0 0.0
        %1716 = vmatpush1.msra.mxu0 0.0
        %1717 = vmatprep.subr.mxu0 0.0
        %1718 = vmatpush1.msra.mxu0 0.0
        %1719 = vmatprep.subr.mxu0 0.0
        %1720 = vmatpush1.msra.mxu0 0.0
        %1721 = vmatprep.subr.mxu0 0.0
        %1722 = vmatpush1.msra.mxu0 0.0
        %1723 = vmatprep.subr.mxu0 0.0
        %1724 = vmatpush1.msra.mxu0 0.0
        %1725 = vmatprep.subr.mxu0 0.0
        %1726 = vmatpush1.msra.mxu0 0.0
        %1727 = vmatprep.subr.mxu0 0.0
        %1728 = vmatpush1.msra.mxu0 0.0
        %1729 = vmatprep.subr.mxu0 0.0
        %1730 = vmatpush1.msra.mxu0 0.0
        %1731 = vmatprep.subr.mxu0 0.0
        %1732 = vmatpush1.msra.mxu0 0.0
        %1733 = vmatprep.subr.mxu0 0.0
        %1734 = vmatpush1.msra.mxu0 0.0
        %1735 = vmatprep.subr.mxu0 0.0
        %1736 = vmatpush1.msra.mxu0 0.0
        %1737 = vmatprep.subr.mxu0 0.0
        %1738 = vmatpush1.msra.mxu0 0.0
        %1739 = vmatprep.subr.mxu0 0.0
        %1740 = vmatpush1.msra.mxu0 0.0
        %1741 = vmatprep.subr.mxu0 0.0
        %1742 = vmatpush1.msra.mxu0 0.0
        %1743 = vmatprep.subr.mxu0 0.0
        %1744 = vmatpush1.msra.mxu0 0.0
        %1745 = vmatprep.subr.mxu0 0.0
        %1746 = vmatpush1.msra.mxu0 0.0
        %1747 = vmatprep.mubr.f32.mxu0 0.0
        %1748 = vmatmul.mubr.f32.gmra.mrb[0].mxu0 %v1678
        %v1749 = vpop.f32.mrb[0].mxu0
        %v1750 = vadd.f32 0.0, %v1749
        %v1751 = vpop.f32.mrb[0].mxu0
        %1752 = vmatprep.mubr.f32.mxu0 0.0
        %1753 = vmatmul.mubr.f32.gmra.mrb[0].mxu0 %v1681
        %v1754 = vpop.f32.mrb[0].mxu0
        %v1755 = vadd.f32 0.0, %v1754
        %v1756 = vpop.f32.mrb[0].mxu0
        %1757 = vdwg.mxu0
        %v1758 = vld [vmem:[#allocation10 + $0x10] sm:$0xff]
        %v1759 = vld [vmem:[#allocation10 + $0x18] sm:$0xff]
        %v1761 = vsel %vm963, %v1661, 0
        %v1764 = vsel %vm963, %v1666, 0
        %v1767 = vsel %vm963, %v1750, 0
        %v1770 = vsel %vm963, %v1755, 0
        %1772 = vmatprep.subr.mxu0 0.0
        %1773 = vmatpush1.msra.mxu0 %v1758
        %1774 = vmatprep.subr.mxu0 0.0
        %1775 = vmatpush1.msra.mxu0 %v1759
        %1776 = vmatprep.subr.mxu0 0.0
        %1777 = vmatpush1.msra.mxu0 0.0
        %1778 = vmatprep.subr.mxu0 0.0
        %1779 = vmatpush1.msra.mxu0 0.0
        %1780 = vmatprep.subr.mxu0 0.0
        %1781 = vmatpush1.msra.mxu0 0.0
        %1782 = vmatprep.subr.mxu0 0.0
        %1783 = vmatpush1.msra.mxu0 0.0
        %1784 = vmatprep.subr.mxu0 0.0
        %1785 = vmatpush1.msra.mxu0 0.0
        %1786 = vmatprep.subr.mxu0 0.0
        %1787 = vmatpush1.msra.mxu0 0.0
        %1788 = vmatprep.subr.mxu0 0.0
        %1789 = vmatpush1.msra.mxu0 0.0
        %1790 = vmatprep.subr.mxu0 0.0
        %1791 = vmatpush1.msra.mxu0 0.0
        %1792 = vmatprep.subr.mxu0 0.0
        %1793 = vmatpush1.msra.mxu0 0.0
        %1794 = vmatprep.subr.mxu0 0.0
        %1795 = vmatpush1.msra.mxu0 0.0
        %1796 = vmatprep.subr.mxu0 0.0
        %1797 = vmatpush1.msra.mxu0 0.0
        %1798 = vmatprep.subr.mxu0 0.0
        %1799 = vmatpush1.msra.mxu0 0.0
        %1800 = vmatprep.subr.mxu0 0.0
        %1801 = vmatpush1.msra.mxu0 0.0
        %1802 = vmatprep.subr.mxu0 0.0
        %1803 = vmatpush1.msra.mxu0 0.0
        %1804 = vmatprep.subr.mxu0 0.0
        %1805 = vmatpush1.msra.mxu0 0.0
        %1806 = vmatprep.subr.mxu0 0.0
        %1807 = vmatpush1.msra.mxu0 0.0
        %1808 = vmatprep.subr.mxu0 0.0
        %1809 = vmatpush1.msra.mxu0 0.0
        %1810 = vmatprep.subr.mxu0 0.0
        %1811 = vmatpush1.msra.mxu0 0.0
        %1812 = vmatprep.subr.mxu0 0.0
        %1813 = vmatpush1.msra.mxu0 0.0
        %1814 = vmatprep.subr.mxu0 0.0
        %1815 = vmatpush1.msra.mxu0 0.0
        %1816 = vmatprep.subr.mxu0 0.0
        %1817 = vmatpush1.msra.mxu0 0.0
        %1818 = vmatprep.subr.mxu0 0.0
        %1819 = vmatpush1.msra.mxu0 0.0
        %1820 = vmatprep.subr.mxu0 0.0
        %1821 = vmatpush1.msra.mxu0 0.0
        %1822 = vmatprep.subr.mxu0 0.0
        %1823 = vmatpush1.msra.mxu0 0.0
        %1824 = vmatprep.subr.mxu0 0.0
        %1825 = vmatpush1.msra.mxu0 0.0
        %1826 = vmatprep.subr.mxu0 0.0
        %1827 = vmatpush1.msra.mxu0 0.0
        %1828 = vmatprep.subr.mxu0 0.0
        %1829 = vmatpush1.msra.mxu0 0.0
        %1830 = vmatprep.subr.mxu0 0.0
        %1831 = vmatpush1.msra.mxu0 0.0
        %1832 = vmatprep.subr.mxu0 0.0
        %1833 = vmatpush1.msra.mxu0 0.0
        %1834 = vmatprep.subr.mxu0 0.0
        %1835 = vmatpush1.msra.mxu0 0.0
        %1836 = vmatprep.mubr.f32.mxu0 0.0
        %1837 = vmatmul.mubr.f32.gmra.mrb[0].mxu0 %v1761
        %v1838 = vpop.f32.mrb[0].mxu0
        %v1839 = vadd.f32 0.0, %v1838
        %v1840 = vpop.f32.mrb[0].mxu0
        %1841 = vmatprep.mubr.f32.mxu0 0.0
        %1842 = vmatmul.mubr.f32.gmra.mrb[0].mxu0 %v1764
        %v1843 = vpop.f32.mrb[0].mxu0
        %v1844 = vadd.f32 0.0, %v1843
        %v1845 = vpop.f32.mrb[0].mxu0
        %1846 = vmatprep.mubr.f32.mxu0 0.0
        %1847 = vmatmul.mubr.f32.gmra.mrb[0].mxu0 %v1767
        %v1848 = vpop.f32.mrb[0].mxu0
        %v1849 = vadd.f32 0.0, %v1848
        %v1850 = vpop.f32.mrb[0].mxu0
        %1851 = vmatprep.mubr.f32.mxu0 0.0
        %1852 = vmatmul.mubr.f32.gmra.mrb[0].mxu0 %v1770
        %v1853 = vpop.f32.mrb[0].mxu0
        %v1854 = vadd.f32 0.0, %v1853
        %v1855 = vpop.f32.mrb[0].mxu0
        %1856 = vdwg.mxu0
        %v1858 = vsel %vm963, %v1259, 0
        %v1861 = vsel %vm963, %v1264, 0
        %v1864 = vsel %vm963, %v1340, 0
        %v1867 = vsel %vm963, %v1345, 0
        %1869 = vmatprep.subr.mxu0 0.0
        %1870 = vmatpush1.msra.mxu0 %v1348
        %1871 = vmatprep.subr.mxu0 0.0
        %1872 = vmatpush1.msra.mxu0 %v1349
        %1873 = vmatprep.subr.mxu0 0.0
        %1874 = vmatpush1.msra.mxu0 0.0
        %1875 = vmatprep.subr.mxu0 0.0
        %1876 = vmatpush1.msra.mxu0 0.0
        %1877 = vmatprep.subr.mxu0 0.0
        %1878 = vmatpush1.msra.mxu0 0.0
        %1879 = vmatprep.subr.mxu0 0.0
        %1880 = vmatpush1.msra.mxu0 0.0
        %1881 = vmatprep.subr.mxu0 0.0
        %1882 = vmatpush1.msra.mxu0 0.0
        %1883 = vmatprep.subr.mxu0 0.0
        %1884 = vmatpush1.msra.mxu0 0.0
        %1885 = vmatprep.subr.mxu0 0.0
        %1886 = vmatpush1.msra.mxu0 0.0
        %1887 = vmatprep.subr.mxu0 0.0
        %1888 = vmatpush1.msra.mxu0 0.0
        %1889 = vmatprep.subr.mxu0 0.0
        %1890 = vmatpush1.msra.mxu0 0.0
        %1891 = vmatprep.subr.mxu0 0.0
        %1892 = vmatpush1.msra.mxu0 0.0
        %1893 = vmatprep.subr.mxu0 0.0
        %1894 = vmatpush1.msra.mxu0 0.0
        %1895 = vmatprep.subr.mxu0 0.0
        %1896 = vmatpush1.msra.mxu0 0.0
        %1897 = vmatprep.subr.mxu0 0.0
        %1898 = vmatpush1.msra.mxu0 0.0
        %1899 = vmatprep.subr.mxu0 0.0
        %1900 = vmatpush1.msra.mxu0 0.0
        %1901 = vmatprep.subr.mxu0 0.0
        %1902 = vmatpush1.msra.mxu0 0.0
        %1903 = vmatprep.subr.mxu0 0.0
        %1904 = vmatpush1.msra.mxu0 0.0
        %1905 = vmatprep.subr.mxu0 0.0
        %1906 = vmatpush1.msra.mxu0 0.0
        %1907 = vmatprep.subr.mxu0 0.0
        %1908 = vmatpush1.msra.mxu0 0.0
        %1909 = vmatprep.subr.mxu0 0.0
        %1910 = vmatpush1.msra.mxu0 0.0
        %1911 = vmatprep.subr.mxu0 0.0
        %1912 = vmatpush1.msra.mxu0 0.0
        %1913 = vmatprep.subr.mxu0 0.0
        %1914 = vmatpush1.msra.mxu0 0.0
        %1915 = vmatprep.subr.mxu0 0.0
        %1916 = vmatpush1.msra.mxu0 0.0
        %1917 = vmatprep.subr.mxu0 0.0
        %1918 = vmatpush1.msra.mxu0 0.0
        %1919 = vmatprep.subr.mxu0 0.0
        %1920 = vmatpush1.msra.mxu0 0.0
        %1921 = vmatprep.subr.mxu0 0.0
        %1922 = vmatpush1.msra.mxu0 0.0
        %1923 = vmatprep.subr.mxu0 0.0
        %1924 = vmatpush1.msra.mxu0 0.0
        %1925 = vmatprep.subr.mxu0 0.0
        %1926 = vmatpush1.msra.mxu0 0.0
        %1927 = vmatprep.subr.mxu0 0.0
        %1928 = vmatpush1.msra.mxu0 0.0
        %1929 = vmatprep.subr.mxu0 0.0
        %1930 = vmatpush1.msra.mxu0 0.0
        %1931 = vmatprep.subr.mxu0 0.0
        %1932 = vmatpush1.msra.mxu0 0.0
        %1933 = vmatprep.mubr.f32.mxu0 0.0
        %1934 = vmatmul.mubr.f32.gmra.mrb[0].mxu0 %v1858
        %v1935 = vpop.f32.mrb[0].mxu0
        %v1936 = vadd.f32 %v1839, %v1935
        %v1937 = vpop.f32.mrb[0].mxu0
        %1938 = vmatprep.mubr.f32.mxu0 0.0
        %1939 = vmatmul.mubr.f32.gmra.mrb[0].mxu0 %v1861
        %v1940 = vpop.f32.mrb[0].mxu0
        %v1941 = vadd.f32 %v1844, %v1940
        %v1942 = vpop.f32.mrb[0].mxu0
        %1943 = vmatprep.mubr.f32.mxu0 0.0
        %1944 = vmatmul.mubr.f32.gmra.mrb[0].mxu0 %v1864
        %v1945 = vpop.f32.mrb[0].mxu0
        %v1946 = vadd.f32 %v1849, %v1945
        %v1947 = vpop.f32.mrb[0].mxu0
        %1948 = vmatprep.mubr.f32.mxu0 0.0
        %1949 = vmatmul.mubr.f32.gmra.mrb[0].mxu0 %v1867
        %v1950 = vpop.f32.mrb[0].mxu0
        %v1951 = vadd.f32 %v1854, %v1950
        %v1952 = vpop.f32.mrb[0].mxu0
        %1953 = vdwg.mxu0
        %1954 = vrot.lane.b32.xlu0 %v856, 96
        %v1955 = vpop.permute.xlu0 %1954
        %1956 = vrot.lane.b32.xlu0 %v862, 96
        %v1957 = vpop.permute.xlu0 %1956
        %1958 = vrot.lane.b32.xlu0 %v858, 96
        %v1959 = vpop.permute.xlu0 %1958
        %1960 = vrot.lane.b32.xlu0 %v864, 96
        %v1961 = vpop.permute.xlu0 %1960
        %v1962 = vsel %vm963, %v1955, 0
        %v1964 = vsel %vm963, %v1957, 0
        %v1966 = vsel %vm963, %v1959, 0
        %v1968 = vsel %vm963, %v1961, 0
        %1970 = vmatprep.subr.mxu0 0.0
        %1971 = vmatpush1.xpose.msra.mxu0 %v1966
        %1972 = vmatprep.subr.mxu0 0.0
        %1973 = vmatpush1.xpose.msra.mxu0 %v1968
        %1974 = vmatprep.subr.mxu0 0.0
        %1975 = vmatpush1.xpose.msra.mxu0 0.0
        %1976 = vmatprep.subr.mxu0 0.0
        %1977 = vmatpush1.xpose.msra.mxu0 0.0
        %1978 = vmatprep.subr.mxu0 0.0
        %1979 = vmatpush1.xpose.msra.mxu0 0.0
        %1980 = vmatprep.subr.mxu0 0.0
        %1981 = vmatpush1.xpose.msra.mxu0 0.0
        %1982 = vmatprep.subr.mxu0 0.0
        %1983 = vmatpush1.xpose.msra.mxu0 0.0
        %1984 = vmatprep.subr.mxu0 0.0
        %1985 = vmatpush1.xpose.msra.mxu0 0.0
        %1986 = vmatprep.subr.mxu0 0.0
        %1987 = vmatpush1.xpose.msra.mxu0 0.0
        %1988 = vmatprep.subr.mxu0 0.0
        %1989 = vmatpush1.xpose.msra.mxu0 0.0
        %1990 = vmatprep.subr.mxu0 0.0
        %1991 = vmatpush1.xpose.msra.mxu0 0.0
        %1992 = vmatprep.subr.mxu0 0.0
        %1993 = vmatpush1.xpose.msra.mxu0 0.0
        %1994 = vmatprep.subr.mxu0 0.0
        %1995 = vmatpush1.xpose.msra.mxu0 0.0
        %1996 = vmatprep.subr.mxu0 0.0
        %1997 = vmatpush1.xpose.msra.mxu0 0.0
        %1998 = vmatprep.subr.mxu0 0.0
        %1999 = vmatpush1.xpose.msra.mxu0 0.0
        %2000 = vmatprep.subr.mxu0 0.0
        %2001 = vmatpush1.xpose.msra.mxu0 0.0
        %2002 = vmatprep.subr.mxu0 0.0
        %2003 = vmatpush1.xpose.msra.mxu0 0.0
        %2004 = vmatprep.subr.mxu0 0.0
        %2005 = vmatpush1.xpose.msra.mxu0 0.0
        %2006 = vmatprep.subr.mxu0 0.0
        %2007 = vmatpush1.xpose.msra.mxu0 0.0
        %2008 = vmatprep.subr.mxu0 0.0
        %2009 = vmatpush1.xpose.msra.mxu0 0.0
        %2010 = vmatprep.subr.mxu0 0.0
        %2011 = vmatpush1.xpose.msra.mxu0 0.0
        %2012 = vmatprep.subr.mxu0 0.0
        %2013 = vmatpush1.xpose.msra.mxu0 0.0
        %2014 = vmatprep.subr.mxu0 0.0
        %2015 = vmatpush1.xpose.msra.mxu0 0.0
        %2016 = vmatprep.subr.mxu0 0.0
        %2017 = vmatpush1.xpose.msra.mxu0 0.0
        %2018 = vmatprep.subr.mxu0 0.0
        %2019 = vmatpush1.xpose.msra.mxu0 0.0
        %2020 = vmatprep.subr.mxu0 0.0
        %2021 = vmatpush1.xpose.msra.mxu0 0.0
        %2022 = vmatprep.subr.mxu0 0.0
        %2023 = vmatpush1.xpose.msra.mxu0 0.0
        %2024 = vmatprep.subr.mxu0 0.0
        %2025 = vmatpush1.xpose.msra.mxu0 0.0
        %2026 = vmatprep.subr.mxu0 0.0
        %2027 = vmatpush1.xpose.msra.mxu0 0.0
        %2028 = vmatprep.subr.mxu0 0.0
        %2029 = vmatpush1.xpose.msra.mxu0 0.0
        %2030 = vmatprep.subr.mxu0 0.0
        %2031 = vmatpush1.xpose.msra.mxu0 0.0
        %2032 = vmatprep.subr.mxu0 0.0
        %2033 = vmatpush1.xpose.msra.mxu0 0.0
        %2034 = vmatprep.mubr.f32.mxu0 0.0
        %2035 = vmatmul.mubr.f32.gmra.mrb[0].mxu0 %v1962
        %v2036 = vpop.f32.mrb[0].mxu0
        %v2037 = vadd.f32 0.0, %v2036
        %v2038 = vpop.f32.mrb[0].mxu0
        %2039 = vmatprep.mubr.f32.mxu0 0.0
        %2040 = vmatmul.mubr.f32.gmra.mrb[0].mxu0 %v1964
        %v2041 = vpop.f32.mrb[0].mxu0
        %v2042 = vadd.f32 0.0, %v2041
        %v2043 = vpop.f32.mrb[0].mxu0
        %2044 = vdwg.mxu0
        %2045 = vrot.lane.b32.xlu0 %v868, 96
        %v2046 = vpop.permute.xlu0 %2045
        %2047 = vrot.lane.b32.xlu0 %v874, 96
        %v2048 = vpop.permute.xlu0 %2047
        %2049 = vrot.lane.b32.xlu0 %v870, 96
        %v2050 = vpop.permute.xlu0 %2049
        %2051 = vrot.lane.b32.xlu0 %v876, 96
        %v2052 = vpop.permute.xlu0 %2051
        %v2053 = vsel %vm963, %v2046, 0
        %v2055 = vsel %vm963, %v2048, 0
        %v2057 = vsel %vm963, %v2050, 0
        %v2059 = vsel %vm963, %v2052, 0
        %2061 = vmatprep.subr.mxu0 0.0
        %2062 = vmatpush1.xpose.msra.mxu0 %v2057
        %2063 = vmatprep.subr.mxu0 0.0
        %2064 = vmatpush1.xpose.msra.mxu0 %v2059
        %2065 = vmatprep.subr.mxu0 0.0
        %2066 = vmatpush1.xpose.msra.mxu0 0.0
        %2067 = vmatprep.subr.mxu0 0.0
        %2068 = vmatpush1.xpose.msra.mxu0 0.0
        %2069 = vmatprep.subr.mxu0 0.0
        %2070 = vmatpush1.xpose.msra.mxu0 0.0
        %2071 = vmatprep.subr.mxu0 0.0
        %2072 = vmatpush1.xpose.msra.mxu0 0.0
        %2073 = vmatprep.subr.mxu0 0.0
        %2074 = vmatpush1.xpose.msra.mxu0 0.0
        %2075 = vmatprep.subr.mxu0 0.0
        %2076 = vmatpush1.xpose.msra.mxu0 0.0
        %2077 = vmatprep.subr.mxu0 0.0
        %2078 = vmatpush1.xpose.msra.mxu0 0.0
        %2079 = vmatprep.subr.mxu0 0.0
        %2080 = vmatpush1.xpose.msra.mxu0 0.0
        %2081 = vmatprep.subr.mxu0 0.0
        %2082 = vmatpush1.xpose.msra.mxu0 0.0
        %2083 = vmatprep.subr.mxu0 0.0
        %2084 = vmatpush1.xpose.msra.mxu0 0.0
        %2085 = vmatprep.subr.mxu0 0.0
        %2086 = vmatpush1.xpose.msra.mxu0 0.0
        %2087 = vmatprep.subr.mxu0 0.0
        %2088 = vmatpush1.xpose.msra.mxu0 0.0
        %2089 = vmatprep.subr.mxu0 0.0
        %2090 = vmatpush1.xpose.msra.mxu0 0.0
        %2091 = vmatprep.subr.mxu0 0.0
        %2092 = vmatpush1.xpose.msra.mxu0 0.0
        %2093 = vmatprep.subr.mxu0 0.0
        %2094 = vmatpush1.xpose.msra.mxu0 0.0
        %2095 = vmatprep.subr.mxu0 0.0
        %2096 = vmatpush1.xpose.msra.mxu0 0.0
        %2097 = vmatprep.subr.mxu0 0.0
        %2098 = vmatpush1.xpose.msra.mxu0 0.0
        %2099 = vmatprep.subr.mxu0 0.0
        %2100 = vmatpush1.xpose.msra.mxu0 0.0
        %2101 = vmatprep.subr.mxu0 0.0
        %2102 = vmatpush1.xpose.msra.mxu0 0.0
        %2103 = vmatprep.subr.mxu0 0.0
        %2104 = vmatpush1.xpose.msra.mxu0 0.0
        %2105 = vmatprep.subr.mxu0 0.0
        %2106 = vmatpush1.xpose.msra.mxu0 0.0
        %2107 = vmatprep.subr.mxu0 0.0
        %2108 = vmatpush1.xpose.msra.mxu0 0.0
        %2109 = vmatprep.subr.mxu0 0.0
        %2110 = vmatpush1.xpose.msra.mxu0 0.0
        %2111 = vmatprep.subr.mxu0 0.0
        %2112 = vmatpush1.xpose.msra.mxu0 0.0
        %2113 = vmatprep.subr.mxu0 0.0
        %2114 = vmatpush1.xpose.msra.mxu0 0.0
        %2115 = vmatprep.subr.mxu0 0.0
        %2116 = vmatpush1.xpose.msra.mxu0 0.0
        %2117 = vmatprep.subr.mxu0 0.0
        %2118 = vmatpush1.xpose.msra.mxu0 0.0
        %2119 = vmatprep.subr.mxu0 0.0
        %2120 = vmatpush1.xpose.msra.mxu0 0.0
        %2121 = vmatprep.subr.mxu0 0.0
        %2122 = vmatpush1.xpose.msra.mxu0 0.0
        %2123 = vmatprep.subr.mxu0 0.0
        %2124 = vmatpush1.xpose.msra.mxu0 0.0
        %2125 = vmatprep.mubr.f32.mxu0 0.0
        %2126 = vmatmul.mubr.f32.gmra.mrb[0].mxu0 %v2053
        %v2127 = vpop.f32.mrb[0].mxu0
        %v2128 = vadd.f32 0.0, %v2127
        %v2129 = vpop.f32.mrb[0].mxu0
        %2130 = vmatprep.mubr.f32.mxu0 0.0
        %2131 = vmatmul.mubr.f32.gmra.mrb[0].mxu0 %v2055
        %v2132 = vpop.f32.mrb[0].mxu0
        %v2133 = vadd.f32 0.0, %v2132
        %v2134 = vpop.f32.mrb[0].mxu0
        %2135 = vdwg.mxu0
        %v2136 = vmul.f32 %v2037, 0.25
        %v2137 = vmul.f32 %v2042, 0.25
        %v2138 = vmul.f32 %v2128, 0.25
        %v2139 = vmul.f32 %v2133, 0.25
        %v2140 = vsel %vm963, %v2136, -inf
        %2141 = vmax.xlane.f32.xlu0 %v2140
        %v2142 = vpop.xlane.xlu0 %2141
        %v2143 = vsel %vm963, %v2137, -inf
        %2144 = vmax.xlane.f32.xlu0 %v2143
        %v2145 = vpop.xlane.xlu0 %2144
        %v2146 = vsel %vm963, %v2138, -inf
        %2147 = vmax.xlane.f32.xlu0 %v2146
        %v2148 = vpop.xlane.xlu0 %2147
        %v2149 = vsel %vm963, %v2139, -inf
        %2150 = vmax.xlane.f32.xlu0 %v2149
        %v2151 = vpop.xlane.xlu0 %2150
        %v2152 = vsub.f32 %v2136, %v2142
        %v2153 = vsub.f32 %v2137, %v2145
        %v2154 = vsub.f32 %v2138, %v2148
        %v2155 = vsub.f32 %v2139, %v2151
        %v2156 = vmul.f32 %v2152, 1.442695
        %v2157 = vpow.pop %v2156
        %v2158 = vmul.f32 %v2153, 1.442695
        %v2159 = vpow.pop %v2158
        %v2160 = vmul.f32 %v2154, 1.442695
        %v2161 = vpow.pop %v2160
        %v2162 = vmul.f32 %v2155, 1.442695
        %v2163 = vpow.pop %v2162
        %v2164 = vsel %vm963, %v2157, 0.0
        %2165 = vadd.xlane.f32.xlu0 %v2164
        %v2166 = vpop.xlane.xlu0 %2165
        %v2167 = vsel %vm963, %v2159, 0.0
        %2168 = vadd.xlane.f32.xlu0 %v2167
        %v2169 = vpop.xlane.xlu0 %2168
        %v2170 = vsel %vm963, %v2161, 0.0
        %2171 = vadd.xlane.f32.xlu0 %v2170
        %v2172 = vpop.xlane.xlu0 %2171
        %v2173 = vsel %vm963, %v2163, 0.0
        %2174 = vadd.xlane.f32.xlu0 %v2173
        %v2175 = vpop.xlane.xlu0 %2174
        %v2176 = vrcp.pop %v2166
        %v2177 = vrcp.pop %v2169
        %v2178 = vrcp.pop %v2172
        %v2179 = vrcp.pop %v2175
        %v2180 = vmul.f32 %v2157, %v2176
        %v2181 = vmul.f32 %v2159, %v2177
        %v2182 = vmul.f32 %v2161, %v2178
        %v2183 = vmul.f32 %v2163, %v2179
        %2184 = vrot.lane.b32.xlu0 %v945, 96
        %v2185 = vpop.permute.xlu0 %2184
        %2186 = vrot.lane.b32.xlu0 %v950, 96
        %v2187 = vpop.permute.xlu0 %2186
        %v2191 = vsel %vm963, %v2180, 0
        %v2194 = vsel %vm963, %v2181, 0
        %2196 = vmatprep.subr.mxu0 0.0
        %2197 = vmatpush1.msra.mxu0 %v2185
        %2198 = vmatprep.subr.mxu0 0.0
        %2199 = vmatpush1.msra.mxu0 %v2187
        %2200 = vmatprep.subr.mxu0 0.0
        %2201 = vmatpush1.msra.mxu0 0.0
        %2202 = vmatprep.subr.mxu0 0.0
        %2203 = vmatpush1.msra.mxu0 0.0
        %2204 = vmatprep.subr.mxu0 0.0
        %2205 = vmatpush1.msra.mxu0 0.0
        %2206 = vmatprep.subr.mxu0 0.0
        %2207 = vmatpush1.msra.mxu0 0.0
        %2208 = vmatprep.subr.mxu0 0.0
        %2209 = vmatpush1.msra.mxu0 0.0
        %2210 = vmatprep.subr.mxu0 0.0
        %2211 = vmatpush1.msra.mxu0 0.0
        %2212 = vmatprep.subr.mxu0 0.0
        %2213 = vmatpush1.msra.mxu0 0.0
        %2214 = vmatprep.subr.mxu0 0.0
        %2215 = vmatpush1.msra.mxu0 0.0
        %2216 = vmatprep.subr.mxu0 0.0
        %2217 = vmatpush1.msra.mxu0 0.0
        %2218 = vmatprep.subr.mxu0 0.0
        %2219 = vmatpush1.msra.mxu0 0.0
        %2220 = vmatprep.subr.mxu0 0.0
        %2221 = vmatpush1.msra.mxu0 0.0
        %2222 = vmatprep.subr.mxu0 0.0
        %2223 = vmatpush1.msra.mxu0 0.0
        %2224 = vmatprep.subr.mxu0 0.0
        %2225 = vmatpush1.msra.mxu0 0.0
        %2226 = vmatprep.subr.mxu0 0.0
        %2227 = vmatpush1.msra.mxu0 0.0
        %2228 = vmatprep.subr.mxu0 0.0
        %2229 = vmatpush1.msra.mxu0 0.0
        %2230 = vmatprep.subr.mxu0 0.0
        %2231 = vmatpush1.msra.mxu0 0.0
        %2232 = vmatprep.subr.mxu0 0.0
        %2233 = vmatpush1.msra.mxu0 0.0
        %2234 = vmatprep.subr.mxu0 0.0
        %2235 = vmatpush1.msra.mxu0 0.0
        %2236 = vmatprep.subr.mxu0 0.0
        %2237 = vmatpush1.msra.mxu0 0.0
        %2238 = vmatprep.subr.mxu0 0.0
        %2239 = vmatpush1.msra.mxu0 0.0
        %2240 = vmatprep.subr.mxu0 0.0
        %2241 = vmatpush1.msra.mxu0 0.0
        %2242 = vmatprep.subr.mxu0 0.0
        %2243 = vmatpush1.msra.mxu0 0.0
        %2244 = vmatprep.subr.mxu0 0.0
        %2245 = vmatpush1.msra.mxu0 0.0
        %2246 = vmatprep.subr.mxu0 0.0
        %2247 = vmatpush1.msra.mxu0 0.0
        %2248 = vmatprep.subr.mxu0 0.0
        %2249 = vmatpush1.msra.mxu0 0.0
        %2250 = vmatprep.subr.mxu0 0.0
        %2251 = vmatpush1.msra.mxu0 0.0
        %2252 = vmatprep.subr.mxu0 0.0
        %2253 = vmatpush1.msra.mxu0 0.0
        %2254 = vmatprep.subr.mxu0 0.0
        %2255 = vmatpush1.msra.mxu0 0.0
        %2256 = vmatprep.subr.mxu0 0.0
        %2257 = vmatpush1.msra.mxu0 0.0
        %2258 = vmatprep.subr.mxu0 0.0
        %2259 = vmatpush1.msra.mxu0 0.0
        %2260 = vmatprep.mubr.f32.mxu0 0.0
        %2261 = vmatmul.mubr.f32.gmra.mrb[0].mxu0 %v2191
        %v2262 = vpop.f32.mrb[0].mxu0
        %v2263 = vadd.f32 0.0, %v2262
        %v2264 = vpop.f32.mrb[0].mxu0
        %2265 = vmatprep.mubr.f32.mxu0 0.0
        %2266 = vmatmul.mubr.f32.gmra.mrb[0].mxu0 %v2194
        %v2267 = vpop.f32.mrb[0].mxu0
        %v2268 = vadd.f32 0.0, %v2267
        %v2269 = vpop.f32.mrb[0].mxu0
        %2270 = vdwg.mxu0
        %2271 = vrot.lane.b32.xlu0 %v955, 96
        %v2272 = vpop.permute.xlu0 %2271
        %2273 = vrot.lane.b32.xlu0 %v960, 96
        %v2274 = vpop.permute.xlu0 %2273
        %v2278 = vsel %vm963, %v2182, 0
        %v2281 = vsel %vm963, %v2183, 0
        %2283 = vmatprep.subr.mxu0 0.0
        %2284 = vmatpush1.msra.mxu0 %v2272
        %2285 = vmatprep.subr.mxu0 0.0
        %2286 = vmatpush1.msra.mxu0 %v2274
        %2287 = vmatprep.subr.mxu0 0.0
        %2288 = vmatpush1.msra.mxu0 0.0
        %2289 = vmatprep.subr.mxu0 0.0
        %2290 = vmatpush1.msra.mxu0 0.0
        %2291 = vmatprep.subr.mxu0 0.0
        %2292 = vmatpush1.msra.mxu0 0.0
        %2293 = vmatprep.subr.mxu0 0.0
        %2294 = vmatpush1.msra.mxu0 0.0
        %2295 = vmatprep.subr.mxu0 0.0
        %2296 = vmatpush1.msra.mxu0 0.0
        %2297 = vmatprep.subr.mxu0 0.0
        %2298 = vmatpush1.msra.mxu0 0.0
        %2299 = vmatprep.subr.mxu0 0.0
        %2300 = vmatpush1.msra.mxu0 0.0
        %2301 = vmatprep.subr.mxu0 0.0
        %2302 = vmatpush1.msra.mxu0 0.0
        %2303 = vmatprep.subr.mxu0 0.0
        %2304 = vmatpush1.msra.mxu0 0.0
        %2305 = vmatprep.subr.mxu0 0.0
        %2306 = vmatpush1.msra.mxu0 0.0
        %2307 = vmatprep.subr.mxu0 0.0
        %2308 = vmatpush1.msra.mxu0 0.0
        %2309 = vmatprep.subr.mxu0 0.0
        %2310 = vmatpush1.msra.mxu0 0.0
        %2311 = vmatprep.subr.mxu0 0.0
        %2312 = vmatpush1.msra.mxu0 0.0
        %2313 = vmatprep.subr.mxu0 0.0
        %2314 = vmatpush1.msra.mxu0 0.0
        %2315 = vmatprep.subr.mxu0 0.0
        %2316 = vmatpush1.msra.mxu0 0.0
        %2317 = vmatprep.subr.mxu0 0.0
        %2318 = vmatpush1.msra.mxu0 0.0
        %2319 = vmatprep.subr.mxu0 0.0
        %2320 = vmatpush1.msra.mxu0 0.0
        %2321 = vmatprep.subr.mxu0 0.0
        %2322 = vmatpush1.msra.mxu0 0.0
        %2323 = vmatprep.subr.mxu0 0.0
        %2324 = vmatpush1.msra.mxu0 0.0
        %2325 = vmatprep.subr.mxu0 0.0
        %2326 = vmatpush1.msra.mxu0 0.0
        %2327 = vmatprep.subr.mxu0 0.0
        %2328 = vmatpush1.msra.mxu0 0.0
        %2329 = vmatprep.subr.mxu0 0.0
        %2330 = vmatpush1.msra.mxu0 0.0
        %2331 = vmatprep.subr.mxu0 0.0
        %2332 = vmatpush1.msra.mxu0 0.0
        %2333 = vmatprep.subr.mxu0 0.0
        %2334 = vmatpush1.msra.mxu0 0.0
        %2335 = vmatprep.subr.mxu0 0.0
        %2336 = vmatpush1.msra.mxu0 0.0
        %2337 = vmatprep.subr.mxu0 0.0
        %2338 = vmatpush1.msra.mxu0 0.0
        %2339 = vmatprep.subr.mxu0 0.0
        %2340 = vmatpush1.msra.mxu0 0.0
        %2341 = vmatprep.subr.mxu0 0.0
        %2342 = vmatpush1.msra.mxu0 0.0
        %2343 = vmatprep.subr.mxu0 0.0
        %2344 = vmatpush1.msra.mxu0 0.0
        %2345 = vmatprep.subr.mxu0 0.0
        %2346 = vmatpush1.msra.mxu0 0.0
        %2347 = vmatprep.mubr.f32.mxu0 0.0
        %2348 = vmatmul.mubr.f32.gmra.mrb[0].mxu0 %v2278
        %v2349 = vpop.f32.mrb[0].mxu0
        %v2350 = vadd.f32 0.0, %v2349
        %v2351 = vpop.f32.mrb[0].mxu0
        %2352 = vmatprep.mubr.f32.mxu0 0.0
        %2353 = vmatmul.mubr.f32.gmra.mrb[0].mxu0 %v2281
        %v2354 = vpop.f32.mrb[0].mxu0
        %v2355 = vadd.f32 0.0, %v2354
        %v2356 = vpop.f32.mrb[0].mxu0
        %2357 = vdwg.mxu0
        %v2358 = vld [vmem:[#allocation10 + $0x20] sm:$0xff]
        %v2359 = vld [vmem:[#allocation10 + $0x28] sm:$0xff]
        %v2361 = vsel %vm963, %v2263, 0
        %v2364 = vsel %vm963, %v2268, 0
        %v2367 = vsel %vm963, %v2350, 0
        %v2370 = vsel %vm963, %v2355, 0
        %2372 = vmatprep.subr.mxu0 0.0
        %2373 = vmatpush1.msra.mxu0 %v2358
        %2374 = vmatprep.subr.mxu0 0.0
        %2375 = vmatpush1.msra.mxu0 %v2359
        %2376 = vmatprep.subr.mxu0 0.0
        %2377 = vmatpush1.msra.mxu0 0.0
        %2378 = vmatprep.subr.mxu0 0.0
        %2379 = vmatpush1.msra.mxu0 0.0
        %2380 = vmatprep.subr.mxu0 0.0
        %2381 = vmatpush1.msra.mxu0 0.0
        %2382 = vmatprep.subr.mxu0 0.0
        %2383 = vmatpush1.msra.mxu0 0.0
        %2384 = vmatprep.subr.mxu0 0.0
        %2385 = vmatpush1.msra.mxu0 0.0
        %2386 = vmatprep.subr.mxu0 0.0
        %2387 = vmatpush1.msra.mxu0 0.0
        %2388 = vmatprep.subr.mxu0 0.0
        %2389 = vmatpush1.msra.mxu0 0.0
        %2390 = vmatprep.subr.mxu0 0.0
        %2391 = vmatpush1.msra.mxu0 0.0
        %2392 = vmatprep.subr.mxu0 0.0
        %2393 = vmatpush1.msra.mxu0 0.0
        %2394 = vmatprep.subr.mxu0 0.0
        %2395 = vmatpush1.msra.mxu0 0.0
        %2396 = vmatprep.subr.mxu0 0.0
        %2397 = vmatpush1.msra.mxu0 0.0
        %2398 = vmatprep.subr.mxu0 0.0
        %2399 = vmatpush1.msra.mxu0 0.0
        %2400 = vmatprep.subr.mxu0 0.0
        %2401 = vmatpush1.msra.mxu0 0.0
        %2402 = vmatprep.subr.mxu0 0.0
        %2403 = vmatpush1.msra.mxu0 0.0
        %2404 = vmatprep.subr.mxu0 0.0
        %2405 = vmatpush1.msra.mxu0 0.0
        %2406 = vmatprep.subr.mxu0 0.0
        %2407 = vmatpush1.msra.mxu0 0.0
        %2408 = vmatprep.subr.mxu0 0.0
        %2409 = vmatpush1.msra.mxu0 0.0
        %2410 = vmatprep.subr.mxu0 0.0
        %2411 = vmatpush1.msra.mxu0 0.0
        %2412 = vmatprep.subr.mxu0 0.0
        %2413 = vmatpush1.msra.mxu0 0.0
        %2414 = vmatprep.subr.mxu0 0.0
        %2415 = vmatpush1.msra.mxu0 0.0
        %2416 = vmatprep.subr.mxu0 0.0
        %2417 = vmatpush1.msra.mxu0 0.0
        %2418 = vmatprep.subr.mxu0 0.0
        %2419 = vmatpush1.msra.mxu0 0.0
        %2420 = vmatprep.subr.mxu0 0.0
        %2421 = vmatpush1.msra.mxu0 0.0
        %2422 = vmatprep.subr.mxu0 0.0
        %2423 = vmatpush1.msra.mxu0 0.0
        %2424 = vmatprep.subr.mxu0 0.0
        %2425 = vmatpush1.msra.mxu0 0.0
        %2426 = vmatprep.subr.mxu0 0.0
        %2427 = vmatpush1.msra.mxu0 0.0
        %2428 = vmatprep.subr.mxu0 0.0
        %2429 = vmatpush1.msra.mxu0 0.0
        %2430 = vmatprep.subr.mxu0 0.0
        %2431 = vmatpush1.msra.mxu0 0.0
        %2432 = vmatprep.subr.mxu0 0.0
        %2433 = vmatpush1.msra.mxu0 0.0
        %2434 = vmatprep.subr.mxu0 0.0
        %2435 = vmatpush1.msra.mxu0 0.0
        %2436 = vmatprep.mubr.f32.mxu0 0.0
        %2437 = vmatmul.mubr.f32.gmra.mrb[0].mxu0 %v2361
        %v2438 = vpop.f32.mrb[0].mxu0
        %v2439 = vadd.f32 0.0, %v2438
        %v2440 = vpop.f32.mrb[0].mxu0
        %2441 = vmatprep.mubr.f32.mxu0 0.0
        %2442 = vmatmul.mubr.f32.gmra.mrb[0].mxu0 %v2364
        %v2443 = vpop.f32.mrb[0].mxu0
        %v2444 = vadd.f32 0.0, %v2443
        %v2445 = vpop.f32.mrb[0].mxu0
        %2446 = vmatprep.mubr.f32.mxu0 0.0
        %2447 = vmatmul.mubr.f32.gmra.mrb[0].mxu0 %v2367
        %v2448 = vpop.f32.mrb[0].mxu0
        %v2449 = vadd.f32 0.0, %v2448
        %v2450 = vpop.f32.mrb[0].mxu0
        %2451 = vmatprep.mubr.f32.mxu0 0.0
        %2452 = vmatmul.mubr.f32.gmra.mrb[0].mxu0 %v2370
        %v2453 = vpop.f32.mrb[0].mxu0
        %v2454 = vadd.f32 0.0, %v2453
        %v2455 = vpop.f32.mrb[0].mxu0
        %2456 = vdwg.mxu0
        %v2457 = vadd.f32 %v1936, %v2439
        %v2458 = vadd.f32 %v1941, %v2444
        %v2459 = vadd.f32 %v1946, %v2449
        %v2460 = vadd.f32 %v1951, %v2454
        %2461 = vrot.lane.b32.xlu0 %v856, 80
        %v2462 = vpop.permute.xlu0 %2461
        %2463 = vrot.lane.b32.xlu0 %v862, 80
        %v2464 = vpop.permute.xlu0 %2463
        %2465 = vrot.lane.b32.xlu0 %v858, 80
        %v2466 = vpop.permute.xlu0 %2465
        %2467 = vrot.lane.b32.xlu0 %v864, 80
        %v2468 = vpop.permute.xlu0 %2467
        %v2469 = vsel %vm963, %v2462, 0
        %v2471 = vsel %vm963, %v2464, 0
        %v2473 = vsel %vm963, %v2466, 0
        %v2475 = vsel %vm963, %v2468, 0
        %2477 = vmatprep.subr.mxu0 0.0
        %2478 = vmatpush1.xpose.msra.mxu0 %v2473
        %2479 = vmatprep.subr.mxu0 0.0
        %2480 = vmatpush1.xpose.msra.mxu0 %v2475
        %2481 = vmatprep.subr.mxu0 0.0
        %2482 = vmatpush1.xpose.msra.mxu0 0.0
        %2483 = vmatprep.subr.mxu0 0.0
        %2484 = vmatpush1.xpose.msra.mxu0 0.0
        %2485 = vmatprep.subr.mxu0 0.0
        %2486 = vmatpush1.xpose.msra.mxu0 0.0
        %2487 = vmatprep.subr.mxu0 0.0
        %2488 = vmatpush1.xpose.msra.mxu0 0.0
        %2489 = vmatprep.subr.mxu0 0.0
        %2490 = vmatpush1.xpose.msra.mxu0 0.0
        %2491 = vmatprep.subr.mxu0 0.0
        %2492 = vmatpush1.xpose.msra.mxu0 0.0
        %2493 = vmatprep.subr.mxu0 0.0
        %2494 = vmatpush1.xpose.msra.mxu0 0.0
        %2495 = vmatprep.subr.mxu0 0.0
        %2496 = vmatpush1.xpose.msra.mxu0 0.0
        %2497 = vmatprep.subr.mxu0 0.0
        %2498 = vmatpush1.xpose.msra.mxu0 0.0
        %2499 = vmatprep.subr.mxu0 0.0
        %2500 = vmatpush1.xpose.msra.mxu0 0.0
        %2501 = vmatprep.subr.mxu0 0.0
        %2502 = vmatpush1.xpose.msra.mxu0 0.0
        %2503 = vmatprep.subr.mxu0 0.0
        %2504 = vmatpush1.xpose.msra.mxu0 0.0
        %2505 = vmatprep.subr.mxu0 0.0
        %2506 = vmatpush1.xpose.msra.mxu0 0.0
        %2507 = vmatprep.subr.mxu0 0.0
        %2508 = vmatpush1.xpose.msra.mxu0 0.0
        %2509 = vmatprep.subr.mxu0 0.0
        %2510 = vmatpush1.xpose.msra.mxu0 0.0
        %2511 = vmatprep.subr.mxu0 0.0
        %2512 = vmatpush1.xpose.msra.mxu0 0.0
        %2513 = vmatprep.subr.mxu0 0.0
        %2514 = vmatpush1.xpose.msra.mxu0 0.0
        %2515 = vmatprep.subr.mxu0 0.0
        %2516 = vmatpush1.xpose.msra.mxu0 0.0
        %2517 = vmatprep.subr.mxu0 0.0
        %2518 = vmatpush1.xpose.msra.mxu0 0.0
        %2519 = vmatprep.subr.mxu0 0.0
        %2520 = vmatpush1.xpose.msra.mxu0 0.0
        %2521 = vmatprep.subr.mxu0 0.0
        %2522 = vmatpush1.xpose.msra.mxu0 0.0
        %2523 = vmatprep.subr.mxu0 0.0
        %2524 = vmatpush1.xpose.msra.mxu0 0.0
        %2525 = vmatprep.subr.mxu0 0.0
        %2526 = vmatpush1.xpose.msra.mxu0 0.0
        %2527 = vmatprep.subr.mxu0 0.0
        %2528 = vmatpush1.xpose.msra.mxu0 0.0
        %2529 = vmatprep.subr.mxu0 0.0
        %2530 = vmatpush1.xpose.msra.mxu0 0.0
        %2531 = vmatprep.subr.mxu0 0.0
        %2532 = vmatpush1.xpose.msra.mxu0 0.0
        %2533 = vmatprep.subr.mxu0 0.0
        %2534 = vmatpush1.xpose.msra.mxu0 0.0
        %2535 = vmatprep.subr.mxu0 0.0
        %2536 = vmatpush1.xpose.msra.mxu0 0.0
        %2537 = vmatprep.subr.mxu0 0.0
        %2538 = vmatpush1.xpose.msra.mxu0 0.0
        %2539 = vmatprep.subr.mxu0 0.0
        %2540 = vmatpush1.xpose.msra.mxu0 0.0
        %2541 = vmatprep.mubr.f32.mxu0 0.0
        %2542 = vmatmul.mubr.f32.gmra.mrb[0].mxu0 %v2469
        %v2543 = vpop.f32.mrb[0].mxu0
        %v2544 = vadd.f32 0.0, %v2543
        %v2545 = vpop.f32.mrb[0].mxu0
        %2546 = vmatprep.mubr.f32.mxu0 0.0
        %2547 = vmatmul.mubr.f32.gmra.mrb[0].mxu0 %v2471
        %v2548 = vpop.f32.mrb[0].mxu0
        %v2549 = vadd.f32 0.0, %v2548
        %v2550 = vpop.f32.mrb[0].mxu0
        %2551 = vdwg.mxu0
        %2552 = vrot.lane.b32.xlu0 %v868, 80
        %v2553 = vpop.permute.xlu0 %2552
        %2554 = vrot.lane.b32.xlu0 %v874, 80
        %v2555 = vpop.permute.xlu0 %2554
        %2556 = vrot.lane.b32.xlu0 %v870, 80
        %v2557 = vpop.permute.xlu0 %2556
        %2558 = vrot.lane.b32.xlu0 %v876, 80
        %v2559 = vpop.permute.xlu0 %2558
        %v2560 = vsel %vm963, %v2553, 0
        %v2562 = vsel %vm963, %v2555, 0
        %v2564 = vsel %vm963, %v2557, 0
        %v2566 = vsel %vm963, %v2559, 0
        %2568 = vmatprep.subr.mxu0 0.0
        %2569 = vmatpush1.xpose.msra.mxu0 %v2564
        %2570 = vmatprep.subr.mxu0 0.0
        %2571 = vmatpush1.xpose.msra.mxu0 %v2566
        %2572 = vmatprep.subr.mxu0 0.0
        %2573 = vmatpush1.xpose.msra.mxu0 0.0
        %2574 = vmatprep.subr.mxu0 0.0
        %2575 = vmatpush1.xpose.msra.mxu0 0.0
        %2576 = vmatprep.subr.mxu0 0.0
        %2577 = vmatpush1.xpose.msra.mxu0 0.0
        %2578 = vmatprep.subr.mxu0 0.0
        %2579 = vmatpush1.xpose.msra.mxu0 0.0
        %2580 = vmatprep.subr.mxu0 0.0
        %2581 = vmatpush1.xpose.msra.mxu0 0.0
        %2582 = vmatprep.subr.mxu0 0.0
        %2583 = vmatpush1.xpose.msra.mxu0 0.0
        %2584 = vmatprep.subr.mxu0 0.0
        %2585 = vmatpush1.xpose.msra.mxu0 0.0
        %2586 = vmatprep.subr.mxu0 0.0
        %2587 = vmatpush1.xpose.msra.mxu0 0.0
        %2588 = vmatprep.subr.mxu0 0.0
        %2589 = vmatpush1.xpose.msra.mxu0 0.0
        %2590 = vmatprep.subr.mxu0 0.0
        %2591 = vmatpush1.xpose.msra.mxu0 0.0
        %2592 = vmatprep.subr.mxu0 0.0
        %2593 = vmatpush1.xpose.msra.mxu0 0.0
        %2594 = vmatprep.subr.mxu0 0.0
        %2595 = vmatpush1.xpose.msra.mxu0 0.0
        %2596 = vmatprep.subr.mxu0 0.0
        %2597 = vmatpush1.xpose.msra.mxu0 0.0
        %2598 = vmatprep.subr.mxu0 0.0
        %2599 = vmatpush1.xpose.msra.mxu0 0.0
        %2600 = vmatprep.subr.mxu0 0.0
        %2601 = vmatpush1.xpose.msra.mxu0 0.0
        %2602 = vmatprep.subr.mxu0 0.0
        %2603 = vmatpush1.xpose.msra.mxu0 0.0
        %2604 = vmatprep.subr.mxu0 0.0
        %2605 = vmatpush1.xpose.msra.mxu0 0.0
        %2606 = vmatprep.subr.mxu0 0.0
        %2607 = vmatpush1.xpose.msra.mxu0 0.0
        %2608 = vmatprep.subr.mxu0 0.0
        %2609 = vmatpush1.xpose.msra.mxu0 0.0
        %2610 = vmatprep.subr.mxu0 0.0
        %2611 = vmatpush1.xpose.msra.mxu0 0.0
        %2612 = vmatprep.subr.mxu0 0.0
        %2613 = vmatpush1.xpose.msra.mxu0 0.0
        %2614 = vmatprep.subr.mxu0 0.0
        %2615 = vmatpush1.xpose.msra.mxu0 0.0
        %2616 = vmatprep.subr.mxu0 0.0
        %2617 = vmatpush1.xpose.msra.mxu0 0.0
        %2618 = vmatprep.subr.mxu0 0.0
        %2619 = vmatpush1.xpose.msra.mxu0 0.0
        %2620 = vmatprep.subr.mxu0 0.0
        %2621 = vmatpush1.xpose.msra.mxu0 0.0
        %2622 = vmatprep.subr.mxu0 0.0
        %2623 = vmatpush1.xpose.msra.mxu0 0.0
        %2624 = vmatprep.subr.mxu0 0.0
        %2625 = vmatpush1.xpose.msra.mxu0 0.0
        %2626 = vmatprep.subr.mxu0 0.0
        %2627 = vmatpush1.xpose.msra.mxu0 0.0
        %2628 = vmatprep.subr.mxu0 0.0
        %2629 = vmatpush1.xpose.msra.mxu0 0.0
        %2630 = vmatprep.subr.mxu0 0.0
        %2631 = vmatpush1.xpose.msra.mxu0 0.0
        %2632 = vmatprep.mubr.f32.mxu0 0.0
        %2633 = vmatmul.mubr.f32.gmra.mrb[0].mxu0 %v2560
        %v2634 = vpop.f32.mrb[0].mxu0
        %v2635 = vadd.f32 0.0, %v2634
        %v2636 = vpop.f32.mrb[0].mxu0
        %2637 = vmatprep.mubr.f32.mxu0 0.0
        %2638 = vmatmul.mubr.f32.gmra.mrb[0].mxu0 %v2562
        %v2639 = vpop.f32.mrb[0].mxu0
        %v2640 = vadd.f32 0.0, %v2639
        %v2641 = vpop.f32.mrb[0].mxu0
        %2642 = vdwg.mxu0
        %v2643 = vmul.f32 %v2544, 0.25
        %v2644 = vmul.f32 %v2549, 0.25
        %v2645 = vmul.f32 %v2635, 0.25
        %v2646 = vmul.f32 %v2640, 0.25
        %v2647 = vsel %vm963, %v2643, -inf
        %2648 = vmax.xlane.f32.xlu0 %v2647
        %v2649 = vpop.xlane.xlu0 %2648
        %v2650 = vsel %vm963, %v2644, -inf
        %2651 = vmax.xlane.f32.xlu0 %v2650
        %v2652 = vpop.xlane.xlu0 %2651
        %v2653 = vsel %vm963, %v2645, -inf
        %2654 = vmax.xlane.f32.xlu0 %v2653
        %v2655 = vpop.xlane.xlu0 %2654
        %v2656 = vsel %vm963, %v2646, -inf
        %2657 = vmax.xlane.f32.xlu0 %v2656
        %v2658 = vpop.xlane.xlu0 %2657
        %v2659 = vsub.f32 %v2643, %v2649
        %v2660 = vsub.f32 %v2644, %v2652
        %v2661 = vsub.f32 %v2645, %v2655
        %v2662 = vsub.f32 %v2646, %v2658
        %v2663 = vmul.f32 %v2659, 1.442695
        %v2664 = vpow.pop %v2663
        %v2665 = vmul.f32 %v2660, 1.442695
        %v2666 = vpow.pop %v2665
        %v2667 = vmul.f32 %v2661, 1.442695
        %v2668 = vpow.pop %v2667
        %v2669 = vmul.f32 %v2662, 1.442695
        %v2670 = vpow.pop %v2669
        %v2671 = vsel %vm963, %v2664, 0.0
        %2672 = vadd.xlane.f32.xlu0 %v2671
        %v2673 = vpop.xlane.xlu0 %2672
        %v2674 = vsel %vm963, %v2666, 0.0
        %2675 = vadd.xlane.f32.xlu0 %v2674
        %v2676 = vpop.xlane.xlu0 %2675
        %v2677 = vsel %vm963, %v2668, 0.0
        %2678 = vadd.xlane.f32.xlu0 %v2677
        %v2679 = vpop.xlane.xlu0 %2678
        %v2680 = vsel %vm963, %v2670, 0.0
        %2681 = vadd.xlane.f32.xlu0 %v2680
        %v2682 = vpop.xlane.xlu0 %2681
        %v2683 = vrcp.pop %v2673
        %v2684 = vrcp.pop %v2676
        %v2685 = vrcp.pop %v2679
        %v2686 = vrcp.pop %v2682
        %v2687 = vmul.f32 %v2664, %v2683
        %v2688 = vmul.f32 %v2666, %v2684
        %v2689 = vmul.f32 %v2668, %v2685
        %v2690 = vmul.f32 %v2670, %v2686
        %2691 = vrot.lane.b32.xlu0 %v945, 80
        %v2692 = vpop.permute.xlu0 %2691
        %2693 = vrot.lane.b32.xlu0 %v950, 80
        %v2694 = vpop.permute.xlu0 %2693
        %v2698 = vsel %vm963, %v2687, 0
        %v2701 = vsel %vm963, %v2688, 0
        %2703 = vmatprep.subr.mxu0 0.0
        %2704 = vmatpush1.msra.mxu0 %v2692
        %2705 = vmatprep.subr.mxu0 0.0
        %2706 = vmatpush1.msra.mxu0 %v2694
        %2707 = vmatprep.subr.mxu0 0.0
        %2708 = vmatpush1.msra.mxu0 0.0
        %2709 = vmatprep.subr.mxu0 0.0
        %2710 = vmatpush1.msra.mxu0 0.0
        %2711 = vmatprep.subr.mxu0 0.0
        %2712 = vmatpush1.msra.mxu0 0.0
        %2713 = vmatprep.subr.mxu0 0.0
        %2714 = vmatpush1.msra.mxu0 0.0
        %2715 = vmatprep.subr.mxu0 0.0
        %2716 = vmatpush1.msra.mxu0 0.0
        %2717 = vmatprep.subr.mxu0 0.0
        %2718 = vmatpush1.msra.mxu0 0.0
        %2719 = vmatprep.subr.mxu0 0.0
        %2720 = vmatpush1.msra.mxu0 0.0
        %2721 = vmatprep.subr.mxu0 0.0
        %2722 = vmatpush1.msra.mxu0 0.0
        %2723 = vmatprep.subr.mxu0 0.0
        %2724 = vmatpush1.msra.mxu0 0.0
        %2725 = vmatprep.subr.mxu0 0.0
        %2726 = vmatpush1.msra.mxu0 0.0
        %2727 = vmatprep.subr.mxu0 0.0
        %2728 = vmatpush1.msra.mxu0 0.0
        %2729 = vmatprep.subr.mxu0 0.0
        %2730 = vmatpush1.msra.mxu0 0.0
        %2731 = vmatprep.subr.mxu0 0.0
        %2732 = vmatpush1.msra.mxu0 0.0
        %2733 = vmatprep.subr.mxu0 0.0
        %2734 = vmatpush1.msra.mxu0 0.0
        %2735 = vmatprep.subr.mxu0 0.0
        %2736 = vmatpush1.msra.mxu0 0.0
        %2737 = vmatprep.subr.mxu0 0.0
        %2738 = vmatpush1.msra.mxu0 0.0
        %2739 = vmatprep.subr.mxu0 0.0
        %2740 = vmatpush1.msra.mxu0 0.0
        %2741 = vmatprep.subr.mxu0 0.0
        %2742 = vmatpush1.msra.mxu0 0.0
        %2743 = vmatprep.subr.mxu0 0.0
        %2744 = vmatpush1.msra.mxu0 0.0
        %2745 = vmatprep.subr.mxu0 0.0
        %2746 = vmatpush1.msra.mxu0 0.0
        %2747 = vmatprep.subr.mxu0 0.0
        %2748 = vmatpush1.msra.mxu0 0.0
        %2749 = vmatprep.subr.mxu0 0.0
        %2750 = vmatpush1.msra.mxu0 0.0
        %2751 = vmatprep.subr.mxu0 0.0
        %2752 = vmatpush1.msra.mxu0 0.0
        %2753 = vmatprep.subr.mxu0 0.0
        %2754 = vmatpush1.msra.mxu0 0.0
        %2755 = vmatprep.subr.mxu0 0.0
        %2756 = vmatpush1.msra.mxu0 0.0
        %2757 = vmatprep.subr.mxu0 0.0
        %2758 = vmatpush1.msra.mxu0 0.0
        %2759 = vmatprep.subr.mxu0 0.0
        %2760 = vmatpush1.msra.mxu0 0.0
        %2761 = vmatprep.subr.mxu0 0.0
        %2762 = vmatpush1.msra.mxu0 0.0
        %2763 = vmatprep.subr.mxu0 0.0
        %2764 = vmatpush1.msra.mxu0 0.0
        %2765 = vmatprep.subr.mxu0 0.0
        %2766 = vmatpush1.msra.mxu0 0.0
        %2767 = vmatprep.mubr.f32.mxu0 0.0
        %2768 = vmatmul.mubr.f32.gmra.mrb[0].mxu0 %v2698
        %v2769 = vpop.f32.mrb[0].mxu0
        %v2770 = vadd.f32 0.0, %v2769
        %v2771 = vpop.f32.mrb[0].mxu0
        %2772 = vmatprep.mubr.f32.mxu0 0.0
        %2773 = vmatmul.mubr.f32.gmra.mrb[0].mxu0 %v2701
        %v2774 = vpop.f32.mrb[0].mxu0
        %v2775 = vadd.f32 0.0, %v2774
        %v2776 = vpop.f32.mrb[0].mxu0
        %2777 = vdwg.mxu0
        %2778 = vrot.lane.b32.xlu0 %v955, 80
        %v2779 = vpop.permute.xlu0 %2778
        %2780 = vrot.lane.b32.xlu0 %v960, 80
        %v2781 = vpop.permute.xlu0 %2780
        %v2785 = vsel %vm963, %v2689, 0
        %v2788 = vsel %vm963, %v2690, 0
        %2790 = vmatprep.subr.mxu0 0.0
        %2791 = vmatpush1.msra.mxu0 %v2779
        %2792 = vmatprep.subr.mxu0 0.0
        %2793 = vmatpush1.msra.mxu0 %v2781
        %2794 = vmatprep.subr.mxu0 0.0
        %2795 = vmatpush1.msra.mxu0 0.0
        %2796 = vmatprep.subr.mxu0 0.0
        %2797 = vmatpush1.msra.mxu0 0.0
        %2798 = vmatprep.subr.mxu0 0.0
        %2799 = vmatpush1.msra.mxu0 0.0
        %2800 = vmatprep.subr.mxu0 0.0
        %2801 = vmatpush1.msra.mxu0 0.0
        %2802 = vmatprep.subr.mxu0 0.0
        %2803 = vmatpush1.msra.mxu0 0.0
        %2804 = vmatprep.subr.mxu0 0.0
        %2805 = vmatpush1.msra.mxu0 0.0
        %2806 = vmatprep.subr.mxu0 0.0
        %2807 = vmatpush1.msra.mxu0 0.0
        %2808 = vmatprep.subr.mxu0 0.0
        %2809 = vmatpush1.msra.mxu0 0.0
        %2810 = vmatprep.subr.mxu0 0.0
        %2811 = vmatpush1.msra.mxu0 0.0
        %2812 = vmatprep.subr.mxu0 0.0
        %2813 = vmatpush1.msra.mxu0 0.0
        %2814 = vmatprep.subr.mxu0 0.0
        %2815 = vmatpush1.msra.mxu0 0.0
        %2816 = vmatprep.subr.mxu0 0.0
        %2817 = vmatpush1.msra.mxu0 0.0
        %2818 = vmatprep.subr.mxu0 0.0
        %2819 = vmatpush1.msra.mxu0 0.0
        %2820 = vmatprep.subr.mxu0 0.0
        %2821 = vmatpush1.msra.mxu0 0.0
        %2822 = vmatprep.subr.mxu0 0.0
        %2823 = vmatpush1.msra.mxu0 0.0
        %2824 = vmatprep.subr.mxu0 0.0
        %2825 = vmatpush1.msra.mxu0 0.0
        %2826 = vmatprep.subr.mxu0 0.0
        %2827 = vmatpush1.msra.mxu0 0.0
        %2828 = vmatprep.subr.mxu0 0.0
        %2829 = vmatpush1.msra.mxu0 0.0
        %2830 = vmatprep.subr.mxu0 0.0
        %2831 = vmatpush1.msra.mxu0 0.0
        %2832 = vmatprep.subr.mxu0 0.0
        %2833 = vmatpush1.msra.mxu0 0.0
        %2834 = vmatprep.subr.mxu0 0.0
        %2835 = vmatpush1.msra.mxu0 0.0
        %2836 = vmatprep.subr.mxu0 0.0
        %2837 = vmatpush1.msra.mxu0 0.0
        %2838 = vmatprep.subr.mxu0 0.0
        %2839 = vmatpush1.msra.mxu0 0.0
        %2840 = vmatprep.subr.mxu0 0.0
        %2841 = vmatpush1.msra.mxu0 0.0
        %2842 = vmatprep.subr.mxu0 0.0
        %2843 = vmatpush1.msra.mxu0 0.0
        %2844 = vmatprep.subr.mxu0 0.0
        %2845 = vmatpush1.msra.mxu0 0.0
        %2846 = vmatprep.subr.mxu0 0.0
        %2847 = vmatpush1.msra.mxu0 0.0
        %2848 = vmatprep.subr.mxu0 0.0
        %2849 = vmatpush1.msra.mxu0 0.0
        %2850 = vmatprep.subr.mxu0 0.0
        %2851 = vmatpush1.msra.mxu0 0.0
        %2852 = vmatprep.subr.mxu0 0.0
        %2853 = vmatpush1.msra.mxu0 0.0
        %2854 = vmatprep.mubr.f32.mxu0 0.0
        %2855 = vmatmul.mubr.f32.gmra.mrb[0].mxu0 %v2785
        %v2856 = vpop.f32.mrb[0].mxu0
        %v2857 = vadd.f32 0.0, %v2856
        %v2858 = vpop.f32.mrb[0].mxu0
        %2859 = vmatprep.mubr.f32.mxu0 0.0
        %2860 = vmatmul.mubr.f32.gmra.mrb[0].mxu0 %v2788
        %v2861 = vpop.f32.mrb[0].mxu0
        %v2862 = vadd.f32 0.0, %v2861
        %v2863 = vpop.f32.mrb[0].mxu0
        %2864 = vdwg.mxu0
        %v2865 = vld [vmem:[#allocation10 + $0x30] sm:$0xff]
        %v2866 = vld [vmem:[#allocation10 + $0x38] sm:$0xff]
        %v2868 = vsel %vm963, %v2770, 0
        %v2871 = vsel %vm963, %v2775, 0
        %v2874 = vsel %vm963, %v2857, 0
        %v2877 = vsel %vm963, %v2862, 0
        %2879 = vmatprep.subr.mxu0 0.0
        %2880 = vmatpush1.msra.mxu0 %v2865
        %2881 = vmatprep.subr.mxu0 0.0
        %2882 = vmatpush1.msra.mxu0 %v2866
        %2883 = vmatprep.subr.mxu0 0.0
        %2884 = vmatpush1.msra.mxu0 0.0
        %2885 = vmatprep.subr.mxu0 0.0
        %2886 = vmatpush1.msra.mxu0 0.0
        %2887 = vmatprep.subr.mxu0 0.0
        %2888 = vmatpush1.msra.mxu0 0.0
        %2889 = vmatprep.subr.mxu0 0.0
        %2890 = vmatpush1.msra.mxu0 0.0
        %2891 = vmatprep.subr.mxu0 0.0
        %2892 = vmatpush1.msra.mxu0 0.0
        %2893 = vmatprep.subr.mxu0 0.0
        %2894 = vmatpush1.msra.mxu0 0.0
        %2895 = vmatprep.subr.mxu0 0.0
        %2896 = vmatpush1.msra.mxu0 0.0
        %2897 = vmatprep.subr.mxu0 0.0
        %2898 = vmatpush1.msra.mxu0 0.0
        %2899 = vmatprep.subr.mxu0 0.0
        %2900 = vmatpush1.msra.mxu0 0.0
        %2901 = vmatprep.subr.mxu0 0.0
        %2902 = vmatpush1.msra.mxu0 0.0
        %2903 = vmatprep.subr.mxu0 0.0
        %2904 = vmatpush1.msra.mxu0 0.0
        %2905 = vmatprep.subr.mxu0 0.0
        %2906 = vmatpush1.msra.mxu0 0.0
        %2907 = vmatprep.subr.mxu0 0.0
        %2908 = vmatpush1.msra.mxu0 0.0
        %2909 = vmatprep.subr.mxu0 0.0
        %2910 = vmatpush1.msra.mxu0 0.0
        %2911 = vmatprep.subr.mxu0 0.0
        %2912 = vmatpush1.msra.mxu0 0.0
        %2913 = vmatprep.subr.mxu0 0.0
        %2914 = vmatpush1.msra.mxu0 0.0
        %2915 = vmatprep.subr.mxu0 0.0
        %2916 = vmatpush1.msra.mxu0 0.0
        %2917 = vmatprep.subr.mxu0 0.0
        %2918 = vmatpush1.msra.mxu0 0.0
        %2919 = vmatprep.subr.mxu0 0.0
        %2920 = vmatpush1.msra.mxu0 0.0
        %2921 = vmatprep.subr.mxu0 0.0
        %2922 = vmatpush1.msra.mxu0 0.0
        %2923 = vmatprep.subr.mxu0 0.0
        %2924 = vmatpush1.msra.mxu0 0.0
        %2925 = vmatprep.subr.mxu0 0.0
        %2926 = vmatpush1.msra.mxu0 0.0
        %2927 = vmatprep.subr.mxu0 0.0
        %2928 = vmatpush1.msra.mxu0 0.0
        %2929 = vmatprep.subr.mxu0 0.0
        %2930 = vmatpush1.msra.mxu0 0.0
        %2931 = vmatprep.subr.mxu0 0.0
        %2932 = vmatpush1.msra.mxu0 0.0
        %2933 = vmatprep.subr.mxu0 0.0
        %2934 = vmatpush1.msra.mxu0 0.0
        %2935 = vmatprep.subr.mxu0 0.0
        %2936 = vmatpush1.msra.mxu0 0.0
        %2937 = vmatprep.subr.mxu0 0.0
        %2938 = vmatpush1.msra.mxu0 0.0
        %2939 = vmatprep.subr.mxu0 0.0
        %2940 = vmatpush1.msra.mxu0 0.0
        %2941 = vmatprep.subr.mxu0 0.0
        %2942 = vmatpush1.msra.mxu0 0.0
        %2943 = vmatprep.mubr.f32.mxu0 0.0
        %2944 = vmatmul.mubr.f32.gmra.mrb[0].mxu0 %v2868
        %v2945 = vpop.f32.mrb[0].mxu0
        %v2946 = vadd.f32 0.0, %v2945
        %v2947 = vpop.f32.mrb[0].mxu0
        %2948 = vmatprep.mubr.f32.mxu0 0.0
        %2949 = vmatmul.mubr.f32.gmra.mrb[0].mxu0 %v2871
        %v2950 = vpop.f32.mrb[0].mxu0
        %v2951 = vadd.f32 0.0, %v2950
        %v2952 = vpop.f32.mrb[0].mxu0
        %2953 = vmatprep.mubr.f32.mxu0 0.0
        %2954 = vmatmul.mubr.f32.gmra.mrb[0].mxu0 %v2874
        %v2955 = vpop.f32.mrb[0].mxu0
        %v2956 = vadd.f32 0.0, %v2955
        %v2957 = vpop.f32.mrb[0].mxu0
        %2958 = vmatprep.mubr.f32.mxu0 0.0
        %2959 = vmatmul.mubr.f32.gmra.mrb[0].mxu0 %v2877
        %v2960 = vpop.f32.mrb[0].mxu0
        %v2961 = vadd.f32 0.0, %v2960
        %v2962 = vpop.f32.mrb[0].mxu0
        %2963 = vdwg.mxu0
        %v2964 = vadd.f32 %v2457, %v2946
        %v2965 = vadd.f32 %v2458, %v2951
        %v2966 = vadd.f32 %v2459, %v2956
        %v2967 = vadd.f32 %v2460, %v2961
        %2968 = vrot.lane.b32.xlu0 %v856, 64
        %v2969 = vpop.permute.xlu0 %2968
        %2970 = vrot.lane.b32.xlu0 %v862, 64
        %v2971 = vpop.permute.xlu0 %2970
        %2972 = vrot.lane.b32.xlu0 %v858, 64
        %v2973 = vpop.permute.xlu0 %2972
        %2974 = vrot.lane.b32.xlu0 %v864, 64
        %v2975 = vpop.permute.xlu0 %2974
        %v2976 = vsel %vm963, %v2969, 0
        %v2978 = vsel %vm963, %v2971, 0
        %v2980 = vsel %vm963, %v2973, 0
        %v2982 = vsel %vm963, %v2975, 0
        %2984 = vmatprep.subr.mxu0 0.0
        %2985 = vmatpush1.xpose.msra.mxu0 %v2980
        %2986 = vmatprep.subr.mxu0 0.0
        %2987 = vmatpush1.xpose.msra.mxu0 %v2982
        %2988 = vmatprep.subr.mxu0 0.0
        %2989 = vmatpush1.xpose.msra.mxu0 0.0
        %2990 = vmatprep.subr.mxu0 0.0
        %2991 = vmatpush1.xpose.msra.mxu0 0.0
        %2992 = vmatprep.subr.mxu0 0.0
        %2993 = vmatpush1.xpose.msra.mxu0 0.0
        %2994 = vmatprep.subr.mxu0 0.0
        %2995 = vmatpush1.xpose.msra.mxu0 0.0
        %2996 = vmatprep.subr.mxu0 0.0
        %2997 = vmatpush1.xpose.msra.mxu0 0.0
        %2998 = vmatprep.subr.mxu0 0.0
        %2999 = vmatpush1.xpose.msra.mxu0 0.0
        %3000 = vmatprep.subr.mxu0 0.0
        %3001 = vmatpush1.xpose.msra.mxu0 0.0
        %3002 = vmatprep.subr.mxu0 0.0
        %3003 = vmatpush1.xpose.msra.mxu0 0.0
        %3004 = vmatprep.subr.mxu0 0.0
        %3005 = vmatpush1.xpose.msra.mxu0 0.0
        %3006 = vmatprep.subr.mxu0 0.0
        %3007 = vmatpush1.xpose.msra.mxu0 0.0
        %3008 = vmatprep.subr.mxu0 0.0
        %3009 = vmatpush1.xpose.msra.mxu0 0.0
        %3010 = vmatprep.subr.mxu0 0.0
        %3011 = vmatpush1.xpose.msra.mxu0 0.0
        %3012 = vmatprep.subr.mxu0 0.0
        %3013 = vmatpush1.xpose.msra.mxu0 0.0
        %3014 = vmatprep.subr.mxu0 0.0
        %3015 = vmatpush1.xpose.msra.mxu0 0.0
        %3016 = vmatprep.subr.mxu0 0.0
        %3017 = vmatpush1.xpose.msra.mxu0 0.0
        %3018 = vmatprep.subr.mxu0 0.0
        %3019 = vmatpush1.xpose.msra.mxu0 0.0
        %3020 = vmatprep.subr.mxu0 0.0
        %3021 = vmatpush1.xpose.msra.mxu0 0.0
        %3022 = vmatprep.subr.mxu0 0.0
        %3023 = vmatpush1.xpose.msra.mxu0 0.0
        %3024 = vmatprep.subr.mxu0 0.0
        %3025 = vmatpush1.xpose.msra.mxu0 0.0
        %3026 = vmatprep.subr.mxu0 0.0
        %3027 = vmatpush1.xpose.msra.mxu0 0.0
        %3028 = vmatprep.subr.mxu0 0.0
        %3029 = vmatpush1.xpose.msra.mxu0 0.0
        %3030 = vmatprep.subr.mxu0 0.0
        %3031 = vmatpush1.xpose.msra.mxu0 0.0
        %3032 = vmatprep.subr.mxu0 0.0
        %3033 = vmatpush1.xpose.msra.mxu0 0.0
        %3034 = vmatprep.subr.mxu0 0.0
        %3035 = vmatpush1.xpose.msra.mxu0 0.0
        %3036 = vmatprep.subr.mxu0 0.0
        %3037 = vmatpush1.xpose.msra.mxu0 0.0
        %3038 = vmatprep.subr.mxu0 0.0
        %3039 = vmatpush1.xpose.msra.mxu0 0.0
        %3040 = vmatprep.subr.mxu0 0.0
        %3041 = vmatpush1.xpose.msra.mxu0 0.0
        %3042 = vmatprep.subr.mxu0 0.0
        %3043 = vmatpush1.xpose.msra.mxu0 0.0
        %3044 = vmatprep.subr.mxu0 0.0
        %3045 = vmatpush1.xpose.msra.mxu0 0.0
        %3046 = vmatprep.subr.mxu0 0.0
        %3047 = vmatpush1.xpose.msra.mxu0 0.0
        %3048 = vmatprep.mubr.f32.mxu0 0.0
        %3049 = vmatmul.mubr.f32.gmra.mrb[0].mxu0 %v2976
        %v3050 = vpop.f32.mrb[0].mxu0
        %v3051 = vadd.f32 0.0, %v3050
        %v3052 = vpop.f32.mrb[0].mxu0
        %3053 = vmatprep.mubr.f32.mxu0 0.0
        %3054 = vmatmul.mubr.f32.gmra.mrb[0].mxu0 %v2978
        %v3055 = vpop.f32.mrb[0].mxu0
        %v3056 = vadd.f32 0.0, %v3055
        %v3057 = vpop.f32.mrb[0].mxu0
        %3058 = vdwg.mxu0
        %3059 = vrot.lane.b32.xlu0 %v868, 64
        %v3060 = vpop.permute.xlu0 %3059
        %3061 = vrot.lane.b32.xlu0 %v874, 64
        %v3062 = vpop.permute.xlu0 %3061
        %3063 = vrot.lane.b32.xlu0 %v870, 64
        %v3064 = vpop.permute.xlu0 %3063
        %3065 = vrot.lane.b32.xlu0 %v876, 64
        %v3066 = vpop.permute.xlu0 %3065
        %v3067 = vsel %vm963, %v3060, 0
        %v3069 = vsel %vm963, %v3062, 0
        %v3071 = vsel %vm963, %v3064, 0
        %v3073 = vsel %vm963, %v3066, 0
        %3075 = vmatprep.subr.mxu0 0.0
        %3076 = vmatpush1.xpose.msra.mxu0 %v3071
        %3077 = vmatprep.subr.mxu0 0.0
        %3078 = vmatpush1.xpose.msra.mxu0 %v3073
        %3079 = vmatprep.subr.mxu0 0.0
        %3080 = vmatpush1.xpose.msra.mxu0 0.0
        %3081 = vmatprep.subr.mxu0 0.0
        %3082 = vmatpush1.xpose.msra.mxu0 0.0
        %3083 = vmatprep.subr.mxu0 0.0
        %3084 = vmatpush1.xpose.msra.mxu0 0.0
        %3085 = vmatprep.subr.mxu0 0.0
        %3086 = vmatpush1.xpose.msra.mxu0 0.0
        %3087 = vmatprep.subr.mxu0 0.0
        %3088 = vmatpush1.xpose.msra.mxu0 0.0
        %3089 = vmatprep.subr.mxu0 0.0
        %3090 = vmatpush1.xpose.msra.mxu0 0.0
        %3091 = vmatprep.subr.mxu0 0.0
        %3092 = vmatpush1.xpose.msra.mxu0 0.0
        %3093 = vmatprep.subr.mxu0 0.0
        %3094 = vmatpush1.xpose.msra.mxu0 0.0
        %3095 = vmatprep.subr.mxu0 0.0
        %3096 = vmatpush1.xpose.msra.mxu0 0.0
        %3097 = vmatprep.subr.mxu0 0.0
        %3098 = vmatpush1.xpose.msra.mxu0 0.0
        %3099 = vmatprep.subr.mxu0 0.0
        %3100 = vmatpush1.xpose.msra.mxu0 0.0
        %3101 = vmatprep.subr.mxu0 0.0
        %3102 = vmatpush1.xpose.msra.mxu0 0.0
        %3103 = vmatprep.subr.mxu0 0.0
        %3104 = vmatpush1.xpose.msra.mxu0 0.0
        %3105 = vmatprep.subr.mxu0 0.0
        %3106 = vmatpush1.xpose.msra.mxu0 0.0
        %3107 = vmatprep.subr.mxu0 0.0
        %3108 = vmatpush1.xpose.msra.mxu0 0.0
        %3109 = vmatprep.subr.mxu0 0.0
        %3110 = vmatpush1.xpose.msra.mxu0 0.0
        %3111 = vmatprep.subr.mxu0 0.0
        %3112 = vmatpush1.xpose.msra.mxu0 0.0
        %3113 = vmatprep.subr.mxu0 0.0
        %3114 = vmatpush1.xpose.msra.mxu0 0.0
        %3115 = vmatprep.subr.mxu0 0.0
        %3116 = vmatpush1.xpose.msra.mxu0 0.0
        %3117 = vmatprep.subr.mxu0 0.0
        %3118 = vmatpush1.xpose.msra.mxu0 0.0
        %3119 = vmatprep.subr.mxu0 0.0
        %3120 = vmatpush1.xpose.msra.mxu0 0.0
        %3121 = vmatprep.subr.mxu0 0.0
        %3122 = vmatpush1.xpose.msra.mxu0 0.0
        %3123 = vmatprep.subr.mxu0 0.0
        %3124 = vmatpush1.xpose.msra.mxu0 0.0
        %3125 = vmatprep.subr.mxu0 0.0
        %3126 = vmatpush1.xpose.msra.mxu0 0.0
        %3127 = vmatprep.subr.mxu0 0.0
        %3128 = vmatpush1.xpose.msra.mxu0 0.0
        %3129 = vmatprep.subr.mxu0 0.0
        %3130 = vmatpush1.xpose.msra.mxu0 0.0
        %3131 = vmatprep.subr.mxu0 0.0
        %3132 = vmatpush1.xpose.msra.mxu0 0.0
        %3133 = vmatprep.subr.mxu0 0.0
        %3134 = vmatpush1.xpose.msra.mxu0 0.0
        %3135 = vmatprep.subr.mxu0 0.0
        %3136 = vmatpush1.xpose.msra.mxu0 0.0
        %3137 = vmatprep.subr.mxu0 0.0
        %3138 = vmatpush1.xpose.msra.mxu0 0.0
        %3139 = vmatprep.mubr.f32.mxu0 0.0
        %3140 = vmatmul.mubr.f32.gmra.mrb[0].mxu0 %v3067
        %v3141 = vpop.f32.mrb[0].mxu0
        %v3142 = vadd.f32 0.0, %v3141
        %v3143 = vpop.f32.mrb[0].mxu0
        %3144 = vmatprep.mubr.f32.mxu0 0.0
        %3145 = vmatmul.mubr.f32.gmra.mrb[0].mxu0 %v3069
        %v3146 = vpop.f32.mrb[0].mxu0
        %v3147 = vadd.f32 0.0, %v3146
        %v3148 = vpop.f32.mrb[0].mxu0
        %3149 = vdwg.mxu0
        %v3150 = vmul.f32 %v3051, 0.25
        %v3151 = vmul.f32 %v3056, 0.25
        %v3152 = vmul.f32 %v3142, 0.25
        %v3153 = vmul.f32 %v3147, 0.25
        %v3154 = vsel %vm963, %v3150, -inf
        %3155 = vmax.xlane.f32.xlu0 %v3154
        %v3156 = vpop.xlane.xlu0 %3155
        %v3157 = vsel %vm963, %v3151, -inf
        %3158 = vmax.xlane.f32.xlu0 %v3157
        %v3159 = vpop.xlane.xlu0 %3158
        %v3160 = vsel %vm963, %v3152, -inf
        %3161 = vmax.xlane.f32.xlu0 %v3160
        %v3162 = vpop.xlane.xlu0 %3161
        %v3163 = vsel %vm963, %v3153, -inf
        %3164 = vmax.xlane.f32.xlu0 %v3163
        %v3165 = vpop.xlane.xlu0 %3164
        %v3166 = vsub.f32 %v3150, %v3156
        %v3167 = vsub.f32 %v3151, %v3159
        %v3168 = vsub.f32 %v3152, %v3162
        %v3169 = vsub.f32 %v3153, %v3165
        %v3170 = vmul.f32 %v3166, 1.442695
        %v3171 = vpow.pop %v3170
        %v3172 = vmul.f32 %v3167, 1.442695
        %v3173 = vpow.pop %v3172
        %v3174 = vmul.f32 %v3168, 1.442695
        %v3175 = vpow.pop %v3174
        %v3176 = vmul.f32 %v3169, 1.442695
        %v3177 = vpow.pop %v3176
        %v3178 = vsel %vm963, %v3171, 0.0
        %3179 = vadd.xlane.f32.xlu0 %v3178
        %v3180 = vpop.xlane.xlu0 %3179
        %v3181 = vsel %vm963, %v3173, 0.0
        %3182 = vadd.xlane.f32.xlu0 %v3181
        %v3183 = vpop.xlane.xlu0 %3182
        %v3184 = vsel %vm963, %v3175, 0.0
        %3185 = vadd.xlane.f32.xlu0 %v3184
        %v3186 = vpop.xlane.xlu0 %3185
        %v3187 = vsel %vm963, %v3177, 0.0
        %3188 = vadd.xlane.f32.xlu0 %v3187
        %v3189 = vpop.xlane.xlu0 %3188
        %v3190 = vrcp.pop %v3180
        %v3191 = vrcp.pop %v3183
        %v3192 = vrcp.pop %v3186
        %v3193 = vrcp.pop %v3189
        %v3194 = vmul.f32 %v3171, %v3190
        %v3195 = vmul.f32 %v3173, %v3191
        %v3196 = vmul.f32 %v3175, %v3192
        %v3197 = vmul.f32 %v3177, %v3193
        %3198 = vrot.lane.b32.xlu0 %v945, 64
        %v3199 = vpop.permute.xlu0 %3198
        %3200 = vrot.lane.b32.xlu0 %v950, 64
        %v3201 = vpop.permute.xlu0 %3200
        %v3205 = vsel %vm963, %v3194, 0
        %v3208 = vsel %vm963, %v3195, 0
        %3210 = vmatprep.subr.mxu0 0.0
        %3211 = vmatpush1.msra.mxu0 %v3199
        %3212 = vmatprep.subr.mxu0 0.0
        %3213 = vmatpush1.msra.mxu0 %v3201
        %3214 = vmatprep.subr.mxu0 0.0
        %3215 = vmatpush1.msra.mxu0 0.0
        %3216 = vmatprep.subr.mxu0 0.0
        %3217 = vmatpush1.msra.mxu0 0.0
        %3218 = vmatprep.subr.mxu0 0.0
        %3219 = vmatpush1.msra.mxu0 0.0
        %3220 = vmatprep.subr.mxu0 0.0
        %3221 = vmatpush1.msra.mxu0 0.0
        %3222 = vmatprep.subr.mxu0 0.0
        %3223 = vmatpush1.msra.mxu0 0.0
        %3224 = vmatprep.subr.mxu0 0.0
        %3225 = vmatpush1.msra.mxu0 0.0
        %3226 = vmatprep.subr.mxu0 0.0
        %3227 = vmatpush1.msra.mxu0 0.0
        %3228 = vmatprep.subr.mxu0 0.0
        %3229 = vmatpush1.msra.mxu0 0.0
        %3230 = vmatprep.subr.mxu0 0.0
        %3231 = vmatpush1.msra.mxu0 0.0
        %3232 = vmatprep.subr.mxu0 0.0
        %3233 = vmatpush1.msra.mxu0 0.0
        %3234 = vmatprep.subr.mxu0 0.0
        %3235 = vmatpush1.msra.mxu0 0.0
        %3236 = vmatprep.subr.mxu0 0.0
        %3237 = vmatpush1.msra.mxu0 0.0
        %3238 = vmatprep.subr.mxu0 0.0
        %3239 = vmatpush1.msra.mxu0 0.0
        %3240 = vmatprep.subr.mxu0 0.0
        %3241 = vmatpush1.msra.mxu0 0.0
        %3242 = vmatprep.subr.mxu0 0.0
        %3243 = vmatpush1.msra.mxu0 0.0
        %3244 = vmatprep.subr.mxu0 0.0
        %3245 = vmatpush1.msra.mxu0 0.0
        %3246 = vmatprep.subr.mxu0 0.0
        %3247 = vmatpush1.msra.mxu0 0.0
        %3248 = vmatprep.subr.mxu0 0.0
        %3249 = vmatpush1.msra.mxu0 0.0
        %3250 = vmatprep.subr.mxu0 0.0
        %3251 = vmatpush1.msra.mxu0 0.0
        %3252 = vmatprep.subr.mxu0 0.0
        %3253 = vmatpush1.msra.mxu0 0.0
        %3254 = vmatprep.subr.mxu0 0.0
        %3255 = vmatpush1.msra.mxu0 0.0
        %3256 = vmatprep.subr.mxu0 0.0
        %3257 = vmatpush1.msra.mxu0 0.0
        %3258 = vmatprep.subr.mxu0 0.0
        %3259 = vmatpush1.msra.mxu0 0.0
        %3260 = vmatprep.subr.mxu0 0.0
        %3261 = vmatpush1.msra.mxu0 0.0
        %3262 = vmatprep.subr.mxu0 0.0
        %3263 = vmatpush1.msra.mxu0 0.0
        %3264 = vmatprep.subr.mxu0 0.0
        %3265 = vmatpush1.msra.mxu0 0.0
        %3266 = vmatprep.subr.mxu0 0.0
        %3267 = vmatpush1.msra.mxu0 0.0
        %3268 = vmatprep.subr.mxu0 0.0
        %3269 = vmatpush1.msra.mxu0 0.0
        %3270 = vmatprep.subr.mxu0 0.0
        %3271 = vmatpush1.msra.mxu0 0.0
        %3272 = vmatprep.subr.mxu0 0.0
        %3273 = vmatpush1.msra.mxu0 0.0
        %3274 = vmatprep.mubr.f32.mxu0 0.0
        %3275 = vmatmul.mubr.f32.gmra.mrb[0].mxu0 %v3205
        %v3276 = vpop.f32.mrb[0].mxu0
        %v3277 = vadd.f32 0.0, %v3276
        %v3278 = vpop.f32.mrb[0].mxu0
        %3279 = vmatprep.mubr.f32.mxu0 0.0
        %3280 = vmatmul.mubr.f32.gmra.mrb[0].mxu0 %v3208
        %v3281 = vpop.f32.mrb[0].mxu0
        %v3282 = vadd.f32 0.0, %v3281
        %v3283 = vpop.f32.mrb[0].mxu0
        %3284 = vdwg.mxu0
        %3285 = vrot.lane.b32.xlu0 %v955, 64
        %v3286 = vpop.permute.xlu0 %3285
        %3287 = vrot.lane.b32.xlu0 %v960, 64
        %v3288 = vpop.permute.xlu0 %3287
        %v3292 = vsel %vm963, %v3196, 0
        %v3295 = vsel %vm963, %v3197, 0
        %3297 = vmatprep.subr.mxu0 0.0
        %3298 = vmatpush1.msra.mxu0 %v3286
        %3299 = vmatprep.subr.mxu0 0.0
        %3300 = vmatpush1.msra.mxu0 %v3288
        %3301 = vmatprep.subr.mxu0 0.0
        %3302 = vmatpush1.msra.mxu0 0.0
        %3303 = vmatprep.subr.mxu0 0.0
        %3304 = vmatpush1.msra.mxu0 0.0
        %3305 = vmatprep.subr.mxu0 0.0
        %3306 = vmatpush1.msra.mxu0 0.0
        %3307 = vmatprep.subr.mxu0 0.0
        %3308 = vmatpush1.msra.mxu0 0.0
        %3309 = vmatprep.subr.mxu0 0.0
        %3310 = vmatpush1.msra.mxu0 0.0
        %3311 = vmatprep.subr.mxu0 0.0
        %3312 = vmatpush1.msra.mxu0 0.0
        %3313 = vmatprep.subr.mxu0 0.0
        %3314 = vmatpush1.msra.mxu0 0.0
        %3315 = vmatprep.subr.mxu0 0.0
        %3316 = vmatpush1.msra.mxu0 0.0
        %3317 = vmatprep.subr.mxu0 0.0
        %3318 = vmatpush1.msra.mxu0 0.0
        %3319 = vmatprep.subr.mxu0 0.0
        %3320 = vmatpush1.msra.mxu0 0.0
        %3321 = vmatprep.subr.mxu0 0.0
        %3322 = vmatpush1.msra.mxu0 0.0
        %3323 = vmatprep.subr.mxu0 0.0
        %3324 = vmatpush1.msra.mxu0 0.0
        %3325 = vmatprep.subr.mxu0 0.0
        %3326 = vmatpush1.msra.mxu0 0.0
        %3327 = vmatprep.subr.mxu0 0.0
        %3328 = vmatpush1.msra.mxu0 0.0
        %3329 = vmatprep.subr.mxu0 0.0
        %3330 = vmatpush1.msra.mxu0 0.0
        %3331 = vmatprep.subr.mxu0 0.0
        %3332 = vmatpush1.msra.mxu0 0.0
        %3333 = vmatprep.subr.mxu0 0.0
        %3334 = vmatpush1.msra.mxu0 0.0
        %3335 = vmatprep.subr.mxu0 0.0
        %3336 = vmatpush1.msra.mxu0 0.0
        %3337 = vmatprep.subr.mxu0 0.0
        %3338 = vmatpush1.msra.mxu0 0.0
        %3339 = vmatprep.subr.mxu0 0.0
        %3340 = vmatpush1.msra.mxu0 0.0
        %3341 = vmatprep.subr.mxu0 0.0
        %3342 = vmatpush1.msra.mxu0 0.0
        %3343 = vmatprep.subr.mxu0 0.0
        %3344 = vmatpush1.msra.mxu0 0.0
        %3345 = vmatprep.subr.mxu0 0.0
        %3346 = vmatpush1.msra.mxu0 0.0
        %3347 = vmatprep.subr.mxu0 0.0
        %3348 = vmatpush1.msra.mxu0 0.0
        %3349 = vmatprep.subr.mxu0 0.0
        %3350 = vmatpush1.msra.mxu0 0.0
        %3351 = vmatprep.subr.mxu0 0.0
        %3352 = vmatpush1.msra.mxu0 0.0
        %3353 = vmatprep.subr.mxu0 0.0
        %3354 = vmatpush1.msra.mxu0 0.0
        %3355 = vmatprep.subr.mxu0 0.0
        %3356 = vmatpush1.msra.mxu0 0.0
        %3357 = vmatprep.subr.mxu0 0.0
        %3358 = vmatpush1.msra.mxu0 0.0
        %3359 = vmatprep.subr.mxu0 0.0
        %3360 = vmatpush1.msra.mxu0 0.0
        %3361 = vmatprep.mubr.f32.mxu0 0.0
        %3362 = vmatmul.mubr.f32.gmra.mrb[0].mxu0 %v3292
        %v3363 = vpop.f32.mrb[0].mxu0
        %v3364 = vadd.f32 0.0, %v3363
        %v3365 = vpop.f32.mrb[0].mxu0
        %3366 = vmatprep.mubr.f32.mxu0 0.0
        %3367 = vmatmul.mubr.f32.gmra.mrb[0].mxu0 %v3295
        %v3368 = vpop.f32.mrb[0].mxu0
        %v3369 = vadd.f32 0.0, %v3368
        %v3370 = vpop.f32.mrb[0].mxu0
        %3371 = vdwg.mxu0
        %v3372 = vld [vmem:[#allocation10 + $0x40] sm:$0xff]
        %v3373 = vld [vmem:[#allocation10 + $0x48] sm:$0xff]
        %v3375 = vsel %vm963, %v3277, 0
        %v3378 = vsel %vm963, %v3282, 0
        %v3381 = vsel %vm963, %v3364, 0
        %v3384 = vsel %vm963, %v3369, 0
        %3386 = vmatprep.subr.mxu0 0.0
        %3387 = vmatpush1.msra.mxu0 %v3372
        %3388 = vmatprep.subr.mxu0 0.0
        %3389 = vmatpush1.msra.mxu0 %v3373
        %3390 = vmatprep.subr.mxu0 0.0
        %3391 = vmatpush1.msra.mxu0 0.0
        %3392 = vmatprep.subr.mxu0 0.0
        %3393 = vmatpush1.msra.mxu0 0.0
        %3394 = vmatprep.subr.mxu0 0.0
        %3395 = vmatpush1.msra.mxu0 0.0
        %3396 = vmatprep.subr.mxu0 0.0
        %3397 = vmatpush1.msra.mxu0 0.0
        %3398 = vmatprep.subr.mxu0 0.0
        %3399 = vmatpush1.msra.mxu0 0.0
        %3400 = vmatprep.subr.mxu0 0.0
        %3401 = vmatpush1.msra.mxu0 0.0
        %3402 = vmatprep.subr.mxu0 0.0
        %3403 = vmatpush1.msra.mxu0 0.0
        %3404 = vmatprep.subr.mxu0 0.0
        %3405 = vmatpush1.msra.mxu0 0.0
        %3406 = vmatprep.subr.mxu0 0.0
        %3407 = vmatpush1.msra.mxu0 0.0
        %3408 = vmatprep.subr.mxu0 0.0
        %3409 = vmatpush1.msra.mxu0 0.0
        %3410 = vmatprep.subr.mxu0 0.0
        %3411 = vmatpush1.msra.mxu0 0.0
        %3412 = vmatprep.subr.mxu0 0.0
        %3413 = vmatpush1.msra.mxu0 0.0
        %3414 = vmatprep.subr.mxu0 0.0
        %3415 = vmatpush1.msra.mxu0 0.0
        %3416 = vmatprep.subr.mxu0 0.0
        %3417 = vmatpush1.msra.mxu0 0.0
        %3418 = vmatprep.subr.mxu0 0.0
        %3419 = vmatpush1.msra.mxu0 0.0
        %3420 = vmatprep.subr.mxu0 0.0
        %3421 = vmatpush1.msra.mxu0 0.0
        %3422 = vmatprep.subr.mxu0 0.0
        %3423 = vmatpush1.msra.mxu0 0.0
        %3424 = vmatprep.subr.mxu0 0.0
        %3425 = vmatpush1.msra.mxu0 0.0
        %3426 = vmatprep.subr.mxu0 0.0
        %3427 = vmatpush1.msra.mxu0 0.0
        %3428 = vmatprep.subr.mxu0 0.0
        %3429 = vmatpush1.msra.mxu0 0.0
        %3430 = vmatprep.subr.mxu0 0.0
        %3431 = vmatpush1.msra.mxu0 0.0
        %3432 = vmatprep.subr.mxu0 0.0
        %3433 = vmatpush1.msra.mxu0 0.0
        %3434 = vmatprep.subr.mxu0 0.0
        %3435 = vmatpush1.msra.mxu0 0.0
        %3436 = vmatprep.subr.mxu0 0.0
        %3437 = vmatpush1.msra.mxu0 0.0
        %3438 = vmatprep.subr.mxu0 0.0
        %3439 = vmatpush1.msra.mxu0 0.0
        %3440 = vmatprep.subr.mxu0 0.0
        %3441 = vmatpush1.msra.mxu0 0.0
        %3442 = vmatprep.subr.mxu0 0.0
        %3443 = vmatpush1.msra.mxu0 0.0
        %3444 = vmatprep.subr.mxu0 0.0
        %3445 = vmatpush1.msra.mxu0 0.0
        %3446 = vmatprep.subr.mxu0 0.0
        %3447 = vmatpush1.msra.mxu0 0.0
        %3448 = vmatprep.subr.mxu0 0.0
        %3449 = vmatpush1.msra.mxu0 0.0
        %3450 = vmatprep.mubr.f32.mxu0 0.0
        %3451 = vmatmul.mubr.f32.gmra.mrb[0].mxu0 %v3375
        %v3452 = vpop.f32.mrb[0].mxu0
        %v3453 = vadd.f32 0.0, %v3452
        %v3454 = vpop.f32.mrb[0].mxu0
        %3455 = vmatprep.mubr.f32.mxu0 0.0
        %3456 = vmatmul.mubr.f32.gmra.mrb[0].mxu0 %v3378
        %v3457 = vpop.f32.mrb[0].mxu0
        %v3458 = vadd.f32 0.0, %v3457
        %v3459 = vpop.f32.mrb[0].mxu0
        %3460 = vmatprep.mubr.f32.mxu0 0.0
        %3461 = vmatmul.mubr.f32.gmra.mrb[0].mxu0 %v3381
        %v3462 = vpop.f32.mrb[0].mxu0
        %v3463 = vadd.f32 0.0, %v3462
        %v3464 = vpop.f32.mrb[0].mxu0
        %3465 = vmatprep.mubr.f32.mxu0 0.0
        %3466 = vmatmul.mubr.f32.gmra.mrb[0].mxu0 %v3384
        %v3467 = vpop.f32.mrb[0].mxu0
        %v3468 = vadd.f32 0.0, %v3467
        %v3469 = vpop.f32.mrb[0].mxu0
        %3470 = vdwg.mxu0
        %v3471 = vadd.f32 %v2964, %v3453
        %v3472 = vadd.f32 %v2965, %v3458
        %v3473 = vadd.f32 %v2966, %v3463
        %v3474 = vadd.f32 %v2967, %v3468
        %3475 = vrot.lane.b32.xlu0 %v856, 48
        %v3476 = vpop.permute.xlu0 %3475
        %3477 = vrot.lane.b32.xlu0 %v862, 48
        %v3478 = vpop.permute.xlu0 %3477
        %3479 = vrot.lane.b32.xlu0 %v858, 48
        %v3480 = vpop.permute.xlu0 %3479
        %3481 = vrot.lane.b32.xlu0 %v864, 48
        %v3482 = vpop.permute.xlu0 %3481
        %v3483 = vsel %vm963, %v3476, 0
        %v3485 = vsel %vm963, %v3478, 0
        %v3487 = vsel %vm963, %v3480, 0
        %v3489 = vsel %vm963, %v3482, 0
        %3491 = vmatprep.subr.mxu0 0.0
        %3492 = vmatpush1.xpose.msra.mxu0 %v3487
        %3493 = vmatprep.subr.mxu0 0.0
        %3494 = vmatpush1.xpose.msra.mxu0 %v3489
        %3495 = vmatprep.subr.mxu0 0.0
        %3496 = vmatpush1.xpose.msra.mxu0 0.0
        %3497 = vmatprep.subr.mxu0 0.0
        %3498 = vmatpush1.xpose.msra.mxu0 0.0
        %3499 = vmatprep.subr.mxu0 0.0
        %3500 = vmatpush1.xpose.msra.mxu0 0.0
        %3501 = vmatprep.subr.mxu0 0.0
        %3502 = vmatpush1.xpose.msra.mxu0 0.0
        %3503 = vmatprep.subr.mxu0 0.0
        %3504 = vmatpush1.xpose.msra.mxu0 0.0
        %3505 = vmatprep.subr.mxu0 0.0
        %3506 = vmatpush1.xpose.msra.mxu0 0.0
        %3507 = vmatprep.subr.mxu0 0.0
        %3508 = vmatpush1.xpose.msra.mxu0 0.0
        %3509 = vmatprep.subr.mxu0 0.0
        %3510 = vmatpush1.xpose.msra.mxu0 0.0
        %3511 = vmatprep.subr.mxu0 0.0
        %3512 = vmatpush1.xpose.msra.mxu0 0.0
        %3513 = vmatprep.subr.mxu0 0.0
        %3514 = vmatpush1.xpose.msra.mxu0 0.0
        %3515 = vmatprep.subr.mxu0 0.0
        %3516 = vmatpush1.xpose.msra.mxu0 0.0
        %3517 = vmatprep.subr.mxu0 0.0
        %3518 = vmatpush1.xpose.msra.mxu0 0.0
        %3519 = vmatprep.subr.mxu0 0.0
        %3520 = vmatpush1.xpose.msra.mxu0 0.0
        %3521 = vmatprep.subr.mxu0 0.0
        %3522 = vmatpush1.xpose.msra.mxu0 0.0
        %3523 = vmatprep.subr.mxu0 0.0
        %3524 = vmatpush1.xpose.msra.mxu0 0.0
        %3525 = vmatprep.subr.mxu0 0.0
        %3526 = vmatpush1.xpose.msra.mxu0 0.0
        %3527 = vmatprep.subr.mxu0 0.0
        %3528 = vmatpush1.xpose.msra.mxu0 0.0
        %3529 = vmatprep.subr.mxu0 0.0
        %3530 = vmatpush1.xpose.msra.mxu0 0.0
        %3531 = vmatprep.subr.mxu0 0.0
        %3532 = vmatpush1.xpose.msra.mxu0 0.0
        %3533 = vmatprep.subr.mxu0 0.0
        %3534 = vmatpush1.xpose.msra.mxu0 0.0
        %3535 = vmatprep.subr.mxu0 0.0
        %3536 = vmatpush1.xpose.msra.mxu0 0.0
        %3537 = vmatprep.subr.mxu0 0.0
        %3538 = vmatpush1.xpose.msra.mxu0 0.0
        %3539 = vmatprep.subr.mxu0 0.0
        %3540 = vmatpush1.xpose.msra.mxu0 0.0
        %3541 = vmatprep.subr.mxu0 0.0
        %3542 = vmatpush1.xpose.msra.mxu0 0.0
        %3543 = vmatprep.subr.mxu0 0.0
        %3544 = vmatpush1.xpose.msra.mxu0 0.0
        %3545 = vmatprep.subr.mxu0 0.0
        %3546 = vmatpush1.xpose.msra.mxu0 0.0
        %3547 = vmatprep.subr.mxu0 0.0
        %3548 = vmatpush1.xpose.msra.mxu0 0.0
        %3549 = vmatprep.subr.mxu0 0.0
        %3550 = vmatpush1.xpose.msra.mxu0 0.0
        %3551 = vmatprep.subr.mxu0 0.0
        %3552 = vmatpush1.xpose.msra.mxu0 0.0
        %3553 = vmatprep.subr.mxu0 0.0
        %3554 = vmatpush1.xpose.msra.mxu0 0.0
        %3555 = vmatprep.mubr.f32.mxu0 0.0
        %3556 = vmatmul.mubr.f32.gmra.mrb[0].mxu0 %v3483
        %v3557 = vpop.f32.mrb[0].mxu0
        %v3558 = vadd.f32 0.0, %v3557
        %v3559 = vpop.f32.mrb[0].mxu0
        %3560 = vmatprep.mubr.f32.mxu0 0.0
        %3561 = vmatmul.mubr.f32.gmra.mrb[0].mxu0 %v3485
        %v3562 = vpop.f32.mrb[0].mxu0
        %v3563 = vadd.f32 0.0, %v3562
        %v3564 = vpop.f32.mrb[0].mxu0
        %3565 = vdwg.mxu0
        %3566 = vrot.lane.b32.xlu0 %v868, 48
        %v3567 = vpop.permute.xlu0 %3566
        %3568 = vrot.lane.b32.xlu0 %v874, 48
        %v3569 = vpop.permute.xlu0 %3568
        %3570 = vrot.lane.b32.xlu0 %v870, 48
        %v3571 = vpop.permute.xlu0 %3570
        %3572 = vrot.lane.b32.xlu0 %v876, 48
        %v3573 = vpop.permute.xlu0 %3572
        %v3574 = vsel %vm963, %v3567, 0
        %v3576 = vsel %vm963, %v3569, 0
        %v3578 = vsel %vm963, %v3571, 0
        %v3580 = vsel %vm963, %v3573, 0
        %3582 = vmatprep.subr.mxu0 0.0
        %3583 = vmatpush1.xpose.msra.mxu0 %v3578
        %3584 = vmatprep.subr.mxu0 0.0
        %3585 = vmatpush1.xpose.msra.mxu0 %v3580
        %3586 = vmatprep.subr.mxu0 0.0
        %3587 = vmatpush1.xpose.msra.mxu0 0.0
        %3588 = vmatprep.subr.mxu0 0.0
        %3589 = vmatpush1.xpose.msra.mxu0 0.0
        %3590 = vmatprep.subr.mxu0 0.0
        %3591 = vmatpush1.xpose.msra.mxu0 0.0
        %3592 = vmatprep.subr.mxu0 0.0
        %3593 = vmatpush1.xpose.msra.mxu0 0.0
        %3594 = vmatprep.subr.mxu0 0.0
        %3595 = vmatpush1.xpose.msra.mxu0 0.0
        %3596 = vmatprep.subr.mxu0 0.0
        %3597 = vmatpush1.xpose.msra.mxu0 0.0
        %3598 = vmatprep.subr.mxu0 0.0
        %3599 = vmatpush1.xpose.msra.mxu0 0.0
        %3600 = vmatprep.subr.mxu0 0.0
        %3601 = vmatpush1.xpose.msra.mxu0 0.0
        %3602 = vmatprep.subr.mxu0 0.0
        %3603 = vmatpush1.xpose.msra.mxu0 0.0
        %3604 = vmatprep.subr.mxu0 0.0
        %3605 = vmatpush1.xpose.msra.mxu0 0.0
        %3606 = vmatprep.subr.mxu0 0.0
        %3607 = vmatpush1.xpose.msra.mxu0 0.0
        %3608 = vmatprep.subr.mxu0 0.0
        %3609 = vmatpush1.xpose.msra.mxu0 0.0
        %3610 = vmatprep.subr.mxu0 0.0
        %3611 = vmatpush1.xpose.msra.mxu0 0.0
        %3612 = vmatprep.subr.mxu0 0.0
        %3613 = vmatpush1.xpose.msra.mxu0 0.0
        %3614 = vmatprep.subr.mxu0 0.0
        %3615 = vmatpush1.xpose.msra.mxu0 0.0
        %3616 = vmatprep.subr.mxu0 0.0
        %3617 = vmatpush1.xpose.msra.mxu0 0.0
        %3618 = vmatprep.subr.mxu0 0.0
        %3619 = vmatpush1.xpose.msra.mxu0 0.0
        %3620 = vmatprep.subr.mxu0 0.0
        %3621 = vmatpush1.xpose.msra.mxu0 0.0
        %3622 = vmatprep.subr.mxu0 0.0
        %3623 = vmatpush1.xpose.msra.mxu0 0.0
        %3624 = vmatprep.subr.mxu0 0.0
        %3625 = vmatpush1.xpose.msra.mxu0 0.0
        %3626 = vmatprep.subr.mxu0 0.0
        %3627 = vmatpush1.xpose.msra.mxu0 0.0
        %3628 = vmatprep.subr.mxu0 0.0
        %3629 = vmatpush1.xpose.msra.mxu0 0.0
        %3630 = vmatprep.subr.mxu0 0.0
        %3631 = vmatpush1.xpose.msra.mxu0 0.0
        %3632 = vmatprep.subr.mxu0 0.0
        %3633 = vmatpush1.xpose.msra.mxu0 0.0
        %3634 = vmatprep.subr.mxu0 0.0
        %3635 = vmatpush1.xpose.msra.mxu0 0.0
        %3636 = vmatprep.subr.mxu0 0.0
        %3637 = vmatpush1.xpose.msra.mxu0 0.0
        %3638 = vmatprep.subr.mxu0 0.0
        %3639 = vmatpush1.xpose.msra.mxu0 0.0
        %3640 = vmatprep.subr.mxu0 0.0
        %3641 = vmatpush1.xpose.msra.mxu0 0.0
        %3642 = vmatprep.subr.mxu0 0.0
        %3643 = vmatpush1.xpose.msra.mxu0 0.0
        %3644 = vmatprep.subr.mxu0 0.0
        %3645 = vmatpush1.xpose.msra.mxu0 0.0
        %3646 = vmatprep.mubr.f32.mxu0 0.0
        %3647 = vmatmul.mubr.f32.gmra.mrb[0].mxu0 %v3574
        %v3648 = vpop.f32.mrb[0].mxu0
        %v3649 = vadd.f32 0.0, %v3648
        %v3650 = vpop.f32.mrb[0].mxu0
        %3651 = vmatprep.mubr.f32.mxu0 0.0
        %3652 = vmatmul.mubr.f32.gmra.mrb[0].mxu0 %v3576
        %v3653 = vpop.f32.mrb[0].mxu0
        %v3654 = vadd.f32 0.0, %v3653
        %v3655 = vpop.f32.mrb[0].mxu0
        %3656 = vdwg.mxu0
        %v3657 = vmul.f32 %v3558, 0.25
        %v3658 = vmul.f32 %v3563, 0.25
        %v3659 = vmul.f32 %v3649, 0.25
        %v3660 = vmul.f32 %v3654, 0.25
        %v3661 = vsel %vm963, %v3657, -inf
        %3662 = vmax.xlane.f32.xlu0 %v3661
        %v3663 = vpop.xlane.xlu0 %3662
        %v3664 = vsel %vm963, %v3658, -inf
        %3665 = vmax.xlane.f32.xlu0 %v3664
        %v3666 = vpop.xlane.xlu0 %3665
        %v3667 = vsel %vm963, %v3659, -inf
        %3668 = vmax.xlane.f32.xlu0 %v3667
        %v3669 = vpop.xlane.xlu0 %3668
        %v3670 = vsel %vm963, %v3660, -inf
        %3671 = vmax.xlane.f32.xlu0 %v3670
        %v3672 = vpop.xlane.xlu0 %3671
        %v3673 = vsub.f32 %v3657, %v3663
        %v3674 = vsub.f32 %v3658, %v3666
        %v3675 = vsub.f32 %v3659, %v3669
        %v3676 = vsub.f32 %v3660, %v3672
        %v3677 = vmul.f32 %v3673, 1.442695
        %v3678 = vpow.pop %v3677
        %v3679 = vmul.f32 %v3674, 1.442695
        %v3680 = vpow.pop %v3679
        %v3681 = vmul.f32 %v3675, 1.442695
        %v3682 = vpow.pop %v3681
        %v3683 = vmul.f32 %v3676, 1.442695
        %v3684 = vpow.pop %v3683
        %v3685 = vsel %vm963, %v3678, 0.0
        %3686 = vadd.xlane.f32.xlu0 %v3685
        %v3687 = vpop.xlane.xlu0 %3686
        %v3688 = vsel %vm963, %v3680, 0.0
        %3689 = vadd.xlane.f32.xlu0 %v3688
        %v3690 = vpop.xlane.xlu0 %3689
        %v3691 = vsel %vm963, %v3682, 0.0
        %3692 = vadd.xlane.f32.xlu0 %v3691
        %v3693 = vpop.xlane.xlu0 %3692
        %v3694 = vsel %vm963, %v3684, 0.0
        %3695 = vadd.xlane.f32.xlu0 %v3694
        %v3696 = vpop.xlane.xlu0 %3695
        %v3697 = vrcp.pop %v3687
        %v3698 = vrcp.pop %v3690
        %v3699 = vrcp.pop %v3693
        %v3700 = vrcp.pop %v3696
        %v3701 = vmul.f32 %v3678, %v3697
        %v3702 = vmul.f32 %v3680, %v3698
        %v3703 = vmul.f32 %v3682, %v3699
        %v3704 = vmul.f32 %v3684, %v3700
        %3705 = vrot.lane.b32.xlu0 %v945, 48
        %v3706 = vpop.permute.xlu0 %3705
        %3707 = vrot.lane.b32.xlu0 %v950, 48
        %v3708 = vpop.permute.xlu0 %3707
        %v3712 = vsel %vm963, %v3701, 0
        %v3715 = vsel %vm963, %v3702, 0
        %3717 = vmatprep.subr.mxu0 0.0
        %3718 = vmatpush1.msra.mxu0 %v3706
        %3719 = vmatprep.subr.mxu0 0.0
        %3720 = vmatpush1.msra.mxu0 %v3708
        %3721 = vmatprep.subr.mxu0 0.0
        %3722 = vmatpush1.msra.mxu0 0.0
        %3723 = vmatprep.subr.mxu0 0.0
        %3724 = vmatpush1.msra.mxu0 0.0
        %3725 = vmatprep.subr.mxu0 0.0
        %3726 = vmatpush1.msra.mxu0 0.0
        %3727 = vmatprep.subr.mxu0 0.0
        %3728 = vmatpush1.msra.mxu0 0.0
        %3729 = vmatprep.subr.mxu0 0.0
        %3730 = vmatpush1.msra.mxu0 0.0
        %3731 = vmatprep.subr.mxu0 0.0
        %3732 = vmatpush1.msra.mxu0 0.0
        %3733 = vmatprep.subr.mxu0 0.0
        %3734 = vmatpush1.msra.mxu0 0.0
        %3735 = vmatprep.subr.mxu0 0.0
        %3736 = vmatpush1.msra.mxu0 0.0
        %3737 = vmatprep.subr.mxu0 0.0
        %3738 = vmatpush1.msra.mxu0 0.0
        %3739 = vmatprep.subr.mxu0 0.0
        %3740 = vmatpush1.msra.mxu0 0.0
        %3741 = vmatprep.subr.mxu0 0.0
        %3742 = vmatpush1.msra.mxu0 0.0
        %3743 = vmatprep.subr.mxu0 0.0
        %3744 = vmatpush1.msra.mxu0 0.0
        %3745 = vmatprep.subr.mxu0 0.0
        %3746 = vmatpush1.msra.mxu0 0.0
        %3747 = vmatprep.subr.mxu0 0.0
        %3748 = vmatpush1.msra.mxu0 0.0
        %3749 = vmatprep.subr.mxu0 0.0
        %3750 = vmatpush1.msra.mxu0 0.0
        %3751 = vmatprep.subr.mxu0 0.0
        %3752 = vmatpush1.msra.mxu0 0.0
        %3753 = vmatprep.subr.mxu0 0.0
        %3754 = vmatpush1.msra.mxu0 0.0
        %3755 = vmatprep.subr.mxu0 0.0
        %3756 = vmatpush1.msra.mxu0 0.0
        %3757 = vmatprep.subr.mxu0 0.0
        %3758 = vmatpush1.msra.mxu0 0.0
        %3759 = vmatprep.subr.mxu0 0.0
        %3760 = vmatpush1.msra.mxu0 0.0
        %3761 = vmatprep.subr.mxu0 0.0
        %3762 = vmatpush1.msra.mxu0 0.0
        %3763 = vmatprep.subr.mxu0 0.0
        %3764 = vmatpush1.msra.mxu0 0.0
        %3765 = vmatprep.subr.mxu0 0.0
        %3766 = vmatpush1.msra.mxu0 0.0
        %3767 = vmatprep.subr.mxu0 0.0
        %3768 = vmatpush1.msra.mxu0 0.0
        %3769 = vmatprep.subr.mxu0 0.0
        %3770 = vmatpush1.msra.mxu0 0.0
        %3771 = vmatprep.subr.mxu0 0.0
        %3772 = vmatpush1.msra.mxu0 0.0
        %3773 = vmatprep.subr.mxu0 0.0
        %3774 = vmatpush1.msra.mxu0 0.0
        %3775 = vmatprep.subr.mxu0 0.0
        %3776 = vmatpush1.msra.mxu0 0.0
        %3777 = vmatprep.subr.mxu0 0.0
        %3778 = vmatpush1.msra.mxu0 0.0
        %3779 = vmatprep.subr.mxu0 0.0
        %3780 = vmatpush1.msra.mxu0 0.0
        %3781 = vmatprep.mubr.f32.mxu0 0.0
        %3782 = vmatmul.mubr.f32.gmra.mrb[0].mxu0 %v3712
        %v3783 = vpop.f32.mrb[0].mxu0
        %v3784 = vadd.f32 0.0, %v3783
        %v3785 = vpop.f32.mrb[0].mxu0
        %3786 = vmatprep.mubr.f32.mxu0 0.0
        %3787 = vmatmul.mubr.f32.gmra.mrb[0].mxu0 %v3715
        %v3788 = vpop.f32.mrb[0].mxu0
        %v3789 = vadd.f32 0.0, %v3788
        %v3790 = vpop.f32.mrb[0].mxu0
        %3791 = vdwg.mxu0
        %3792 = vrot.lane.b32.xlu0 %v955, 48
        %v3793 = vpop.permute.xlu0 %3792
        %3794 = vrot.lane.b32.xlu0 %v960, 48
        %v3795 = vpop.permute.xlu0 %3794
        %v3799 = vsel %vm963, %v3703, 0
        %v3802 = vsel %vm963, %v3704, 0
        %3804 = vmatprep.subr.mxu0 0.0
        %3805 = vmatpush1.msra.mxu0 %v3793
        %3806 = vmatprep.subr.mxu0 0.0
        %3807 = vmatpush1.msra.mxu0 %v3795
        %3808 = vmatprep.subr.mxu0 0.0
        %3809 = vmatpush1.msra.mxu0 0.0
        %3810 = vmatprep.subr.mxu0 0.0
        %3811 = vmatpush1.msra.mxu0 0.0
        %3812 = vmatprep.subr.mxu0 0.0
        %3813 = vmatpush1.msra.mxu0 0.0
        %3814 = vmatprep.subr.mxu0 0.0
        %3815 = vmatpush1.msra.mxu0 0.0
        %3816 = vmatprep.subr.mxu0 0.0
        %3817 = vmatpush1.msra.mxu0 0.0
        %3818 = vmatprep.subr.mxu0 0.0
        %3819 = vmatpush1.msra.mxu0 0.0
        %3820 = vmatprep.subr.mxu0 0.0
        %3821 = vmatpush1.msra.mxu0 0.0
        %3822 = vmatprep.subr.mxu0 0.0
        %3823 = vmatpush1.msra.mxu0 0.0
        %3824 = vmatprep.subr.mxu0 0.0
        %3825 = vmatpush1.msra.mxu0 0.0
        %3826 = vmatprep.subr.mxu0 0.0
        %3827 = vmatpush1.msra.mxu0 0.0
        %3828 = vmatprep.subr.mxu0 0.0
        %3829 = vmatpush1.msra.mxu0 0.0
        %3830 = vmatprep.subr.mxu0 0.0
        %3831 = vmatpush1.msra.mxu0 0.0
        %3832 = vmatprep.subr.mxu0 0.0
        %3833 = vmatpush1.msra.mxu0 0.0
        %3834 = vmatprep.subr.mxu0 0.0
        %3835 = vmatpush1.msra.mxu0 0.0
        %3836 = vmatprep.subr.mxu0 0.0
        %3837 = vmatpush1.msra.mxu0 0.0
        %3838 = vmatprep.subr.mxu0 0.0
        %3839 = vmatpush1.msra.mxu0 0.0
        %3840 = vmatprep.subr.mxu0 0.0
        %3841 = vmatpush1.msra.mxu0 0.0
        %3842 = vmatprep.subr.mxu0 0.0
        %3843 = vmatpush1.msra.mxu0 0.0
        %3844 = vmatprep.subr.mxu0 0.0
        %3845 = vmatpush1.msra.mxu0 0.0
        %3846 = vmatprep.subr.mxu0 0.0
        %3847 = vmatpush1.msra.mxu0 0.0
        %3848 = vmatprep.subr.mxu0 0.0
        %3849 = vmatpush1.msra.mxu0 0.0
        %3850 = vmatprep.subr.mxu0 0.0
        %3851 = vmatpush1.msra.mxu0 0.0
        %3852 = vmatprep.subr.mxu0 0.0
        %3853 = vmatpush1.msra.mxu0 0.0
        %3854 = vmatprep.subr.mxu0 0.0
        %3855 = vmatpush1.msra.mxu0 0.0
        %3856 = vmatprep.subr.mxu0 0.0
        %3857 = vmatpush1.msra.mxu0 0.0
        %3858 = vmatprep.subr.mxu0 0.0
        %3859 = vmatpush1.msra.mxu0 0.0
        %3860 = vmatprep.subr.mxu0 0.0
        %3861 = vmatpush1.msra.mxu0 0.0
        %3862 = vmatprep.subr.mxu0 0.0
        %3863 = vmatpush1.msra.mxu0 0.0
        %3864 = vmatprep.subr.mxu0 0.0
        %3865 = vmatpush1.msra.mxu0 0.0
        %3866 = vmatprep.subr.mxu0 0.0
        %3867 = vmatpush1.msra.mxu0 0.0
        %3868 = vmatprep.mubr.f32.mxu0 0.0
        %3869 = vmatmul.mubr.f32.gmra.mrb[0].mxu0 %v3799
        %v3870 = vpop.f32.mrb[0].mxu0
        %v3871 = vadd.f32 0.0, %v3870
        %v3872 = vpop.f32.mrb[0].mxu0
        %3873 = vmatprep.mubr.f32.mxu0 0.0
        %3874 = vmatmul.mubr.f32.gmra.mrb[0].mxu0 %v3802
        %v3875 = vpop.f32.mrb[0].mxu0
        %v3876 = vadd.f32 0.0, %v3875
        %v3877 = vpop.f32.mrb[0].mxu0
        %3878 = vdwg.mxu0
        %v3879 = vld [vmem:[#allocation10 + $0x50] sm:$0xff]
        %v3880 = vld [vmem:[#allocation10 + $0x58] sm:$0xff]
        %v3882 = vsel %vm963, %v3784, 0
        %v3885 = vsel %vm963, %v3789, 0
        %v3888 = vsel %vm963, %v3871, 0
        %v3891 = vsel %vm963, %v3876, 0
        %3893 = vmatprep.subr.mxu0 0.0
        %3894 = vmatpush1.msra.mxu0 %v3879
        %3895 = vmatprep.subr.mxu0 0.0
        %3896 = vmatpush1.msra.mxu0 %v3880
        %3897 = vmatprep.subr.mxu0 0.0
        %3898 = vmatpush1.msra.mxu0 0.0
        %3899 = vmatprep.subr.mxu0 0.0
        %3900 = vmatpush1.msra.mxu0 0.0
        %3901 = vmatprep.subr.mxu0 0.0
        %3902 = vmatpush1.msra.mxu0 0.0
        %3903 = vmatprep.subr.mxu0 0.0
        %3904 = vmatpush1.msra.mxu0 0.0
        %3905 = vmatprep.subr.mxu0 0.0
        %3906 = vmatpush1.msra.mxu0 0.0
        %3907 = vmatprep.subr.mxu0 0.0
        %3908 = vmatpush1.msra.mxu0 0.0
        %3909 = vmatprep.subr.mxu0 0.0
        %3910 = vmatpush1.msra.mxu0 0.0
        %3911 = vmatprep.subr.mxu0 0.0
        %3912 = vmatpush1.msra.mxu0 0.0
        %3913 = vmatprep.subr.mxu0 0.0
        %3914 = vmatpush1.msra.mxu0 0.0
        %3915 = vmatprep.subr.mxu0 0.0
        %3916 = vmatpush1.msra.mxu0 0.0
        %3917 = vmatprep.subr.mxu0 0.0
        %3918 = vmatpush1.msra.mxu0 0.0
        %3919 = vmatprep.subr.mxu0 0.0
        %3920 = vmatpush1.msra.mxu0 0.0
        %3921 = vmatprep.subr.mxu0 0.0
        %3922 = vmatpush1.msra.mxu0 0.0
        %3923 = vmatprep.subr.mxu0 0.0
        %3924 = vmatpush1.msra.mxu0 0.0
        %3925 = vmatprep.subr.mxu0 0.0
        %3926 = vmatpush1.msra.mxu0 0.0
        %3927 = vmatprep.subr.mxu0 0.0
        %3928 = vmatpush1.msra.mxu0 0.0
        %3929 = vmatprep.subr.mxu0 0.0
        %3930 = vmatpush1.msra.mxu0 0.0
        %3931 = vmatprep.subr.mxu0 0.0
        %3932 = vmatpush1.msra.mxu0 0.0
        %3933 = vmatprep.subr.mxu0 0.0
        %3934 = vmatpush1.msra.mxu0 0.0
        %3935 = vmatprep.subr.mxu0 0.0
        %3936 = vmatpush1.msra.mxu0 0.0
        %3937 = vmatprep.subr.mxu0 0.0
        %3938 = vmatpush1.msra.mxu0 0.0
        %3939 = vmatprep.subr.mxu0 0.0
        %3940 = vmatpush1.msra.mxu0 0.0
        %3941 = vmatprep.subr.mxu0 0.0
        %3942 = vmatpush1.msra.mxu0 0.0
        %3943 = vmatprep.subr.mxu0 0.0
        %3944 = vmatpush1.msra.mxu0 0.0
        %3945 = vmatprep.subr.mxu0 0.0
        %3946 = vmatpush1.msra.mxu0 0.0
        %3947 = vmatprep.subr.mxu0 0.0
        %3948 = vmatpush1.msra.mxu0 0.0
        %3949 = vmatprep.subr.mxu0 0.0
        %3950 = vmatpush1.msra.mxu0 0.0
        %3951 = vmatprep.subr.mxu0 0.0
        %3952 = vmatpush1.msra.mxu0 0.0
        %3953 = vmatprep.subr.mxu0 0.0
        %3954 = vmatpush1.msra.mxu0 0.0
        %3955 = vmatprep.subr.mxu0 0.0
        %3956 = vmatpush1.msra.mxu0 0.0
        %3957 = vmatprep.mubr.f32.mxu0 0.0
        %3958 = vmatmul.mubr.f32.gmra.mrb[0].mxu0 %v3882
        %v3959 = vpop.f32.mrb[0].mxu0
        %v3960 = vadd.f32 0.0, %v3959
        %v3961 = vpop.f32.mrb[0].mxu0
        %3962 = vmatprep.mubr.f32.mxu0 0.0
        %3963 = vmatmul.mubr.f32.gmra.mrb[0].mxu0 %v3885
        %v3964 = vpop.f32.mrb[0].mxu0
        %v3965 = vadd.f32 0.0, %v3964
        %v3966 = vpop.f32.mrb[0].mxu0
        %3967 = vmatprep.mubr.f32.mxu0 0.0
        %3968 = vmatmul.mubr.f32.gmra.mrb[0].mxu0 %v3888
        %v3969 = vpop.f32.mrb[0].mxu0
        %v3970 = vadd.f32 0.0, %v3969
        %v3971 = vpop.f32.mrb[0].mxu0
        %3972 = vmatprep.mubr.f32.mxu0 0.0
        %3973 = vmatmul.mubr.f32.gmra.mrb[0].mxu0 %v3891
        %v3974 = vpop.f32.mrb[0].mxu0
        %v3975 = vadd.f32 0.0, %v3974
        %v3976 = vpop.f32.mrb[0].mxu0
        %3977 = vdwg.mxu0
        %v3978 = vadd.f32 %v3471, %v3960
        %v3979 = vadd.f32 %v3472, %v3965
        %v3980 = vadd.f32 %v3473, %v3970
        %v3981 = vadd.f32 %v3474, %v3975
        %3982 = vrot.lane.b32.xlu0 %v856, 32
        %v3983 = vpop.permute.xlu0 %3982
        %3984 = vrot.lane.b32.xlu0 %v862, 32
        %v3985 = vpop.permute.xlu0 %3984
        %3986 = vrot.lane.b32.xlu0 %v858, 32
        %v3987 = vpop.permute.xlu0 %3986
        %3988 = vrot.lane.b32.xlu0 %v864, 32
        %v3989 = vpop.permute.xlu0 %3988
        %v3990 = vsel %vm963, %v3983, 0
        %v3992 = vsel %vm963, %v3985, 0
        %v3994 = vsel %vm963, %v3987, 0
        %v3996 = vsel %vm963, %v3989, 0
        %3998 = vmatprep.subr.mxu0 0.0
        %3999 = vmatpush1.xpose.msra.mxu0 %v3994
        %4000 = vmatprep.subr.mxu0 0.0
        %4001 = vmatpush1.xpose.msra.mxu0 %v3996
        %4002 = vmatprep.subr.mxu0 0.0
        %4003 = vmatpush1.xpose.msra.mxu0 0.0
        %4004 = vmatprep.subr.mxu0 0.0
        %4005 = vmatpush1.xpose.msra.mxu0 0.0
        %4006 = vmatprep.subr.mxu0 0.0
        %4007 = vmatpush1.xpose.msra.mxu0 0.0
        %4008 = vmatprep.subr.mxu0 0.0
        %4009 = vmatpush1.xpose.msra.mxu0 0.0
        %4010 = vmatprep.subr.mxu0 0.0
        %4011 = vmatpush1.xpose.msra.mxu0 0.0
        %4012 = vmatprep.subr.mxu0 0.0
        %4013 = vmatpush1.xpose.msra.mxu0 0.0
        %4014 = vmatprep.subr.mxu0 0.0
        %4015 = vmatpush1.xpose.msra.mxu0 0.0
        %4016 = vmatprep.subr.mxu0 0.0
        %4017 = vmatpush1.xpose.msra.mxu0 0.0
        %4018 = vmatprep.subr.mxu0 0.0
        %4019 = vmatpush1.xpose.msra.mxu0 0.0
        %4020 = vmatprep.subr.mxu0 0.0
        %4021 = vmatpush1.xpose.msra.mxu0 0.0
        %4022 = vmatprep.subr.mxu0 0.0
        %4023 = vmatpush1.xpose.msra.mxu0 0.0
        %4024 = vmatprep.subr.mxu0 0.0
        %4025 = vmatpush1.xpose.msra.mxu0 0.0
        %4026 = vmatprep.subr.mxu0 0.0
        %4027 = vmatpush1.xpose.msra.mxu0 0.0
        %4028 = vmatprep.subr.mxu0 0.0
        %4029 = vmatpush1.xpose.msra.mxu0 0.0
        %4030 = vmatprep.subr.mxu0 0.0
        %4031 = vmatpush1.xpose.msra.mxu0 0.0
        %4032 = vmatprep.subr.mxu0 0.0
        %4033 = vmatpush1.xpose.msra.mxu0 0.0
        %4034 = vmatprep.subr.mxu0 0.0
        %4035 = vmatpush1.xpose.msra.mxu0 0.0
        %4036 = vmatprep.subr.mxu0 0.0
        %4037 = vmatpush1.xpose.msra.mxu0 0.0
        %4038 = vmatprep.subr.mxu0 0.0
        %4039 = vmatpush1.xpose.msra.mxu0 0.0
        %4040 = vmatprep.subr.mxu0 0.0
        %4041 = vmatpush1.xpose.msra.mxu0 0.0
        %4042 = vmatprep.subr.mxu0 0.0
        %4043 = vmatpush1.xpose.msra.mxu0 0.0
        %4044 = vmatprep.subr.mxu0 0.0
        %4045 = vmatpush1.xpose.msra.mxu0 0.0
        %4046 = vmatprep.subr.mxu0 0.0
        %4047 = vmatpush1.xpose.msra.mxu0 0.0
        %4048 = vmatprep.subr.mxu0 0.0
        %4049 = vmatpush1.xpose.msra.mxu0 0.0
        %4050 = vmatprep.subr.mxu0 0.0
        %4051 = vmatpush1.xpose.msra.mxu0 0.0
        %4052 = vmatprep.subr.mxu0 0.0
        %4053 = vmatpush1.xpose.msra.mxu0 0.0
        %4054 = vmatprep.subr.mxu0 0.0
        %4055 = vmatpush1.xpose.msra.mxu0 0.0
        %4056 = vmatprep.subr.mxu0 0.0
        %4057 = vmatpush1.xpose.msra.mxu0 0.0
        %4058 = vmatprep.subr.mxu0 0.0
        %4059 = vmatpush1.xpose.msra.mxu0 0.0
        %4060 = vmatprep.subr.mxu0 0.0
        %4061 = vmatpush1.xpose.msra.mxu0 0.0
        %4062 = vmatprep.mubr.f32.mxu0 0.0
        %4063 = vmatmul.mubr.f32.gmra.mrb[0].mxu0 %v3990
        %v4064 = vpop.f32.mrb[0].mxu0
        %v4065 = vadd.f32 0.0, %v4064
        %v4066 = vpop.f32.mrb[0].mxu0
        %4067 = vmatprep.mubr.f32.mxu0 0.0
        %4068 = vmatmul.mubr.f32.gmra.mrb[0].mxu0 %v3992
        %v4069 = vpop.f32.mrb[0].mxu0
        %v4070 = vadd.f32 0.0, %v4069
        %v4071 = vpop.f32.mrb[0].mxu0
        %4072 = vdwg.mxu0
        %4073 = vrot.lane.b32.xlu0 %v868, 32
        %v4074 = vpop.permute.xlu0 %4073
        %4075 = vrot.lane.b32.xlu0 %v874, 32
        %v4076 = vpop.permute.xlu0 %4075
        %4077 = vrot.lane.b32.xlu0 %v870, 32
        %v4078 = vpop.permute.xlu0 %4077
        %4079 = vrot.lane.b32.xlu0 %v876, 32
        %v4080 = vpop.permute.xlu0 %4079
        %v4081 = vsel %vm963, %v4074, 0
        %v4083 = vsel %vm963, %v4076, 0
        %v4085 = vsel %vm963, %v4078, 0
        %v4087 = vsel %vm963, %v4080, 0
        %4089 = vmatprep.subr.mxu0 0.0
        %4090 = vmatpush1.xpose.msra.mxu0 %v4085
        %4091 = vmatprep.subr.mxu0 0.0
        %4092 = vmatpush1.xpose.msra.mxu0 %v4087
        %4093 = vmatprep.subr.mxu0 0.0
        %4094 = vmatpush1.xpose.msra.mxu0 0.0
        %4095 = vmatprep.subr.mxu0 0.0
        %4096 = vmatpush1.xpose.msra.mxu0 0.0
        %4097 = vmatprep.subr.mxu0 0.0
        %4098 = vmatpush1.xpose.msra.mxu0 0.0
        %4099 = vmatprep.subr.mxu0 0.0
        %4100 = vmatpush1.xpose.msra.mxu0 0.0
        %4101 = vmatprep.subr.mxu0 0.0
        %4102 = vmatpush1.xpose.msra.mxu0 0.0
        %4103 = vmatprep.subr.mxu0 0.0
        %4104 = vmatpush1.xpose.msra.mxu0 0.0
        %4105 = vmatprep.subr.mxu0 0.0
        %4106 = vmatpush1.xpose.msra.mxu0 0.0
        %4107 = vmatprep.subr.mxu0 0.0
        %4108 = vmatpush1.xpose.msra.mxu0 0.0
        %4109 = vmatprep.subr.mxu0 0.0
        %4110 = vmatpush1.xpose.msra.mxu0 0.0
        %4111 = vmatprep.subr.mxu0 0.0
        %4112 = vmatpush1.xpose.msra.mxu0 0.0
        %4113 = vmatprep.subr.mxu0 0.0
        %4114 = vmatpush1.xpose.msra.mxu0 0.0
        %4115 = vmatprep.subr.mxu0 0.0
        %4116 = vmatpush1.xpose.msra.mxu0 0.0
        %4117 = vmatprep.subr.mxu0 0.0
        %4118 = vmatpush1.xpose.msra.mxu0 0.0
        %4119 = vmatprep.subr.mxu0 0.0
        %4120 = vmatpush1.xpose.msra.mxu0 0.0
        %4121 = vmatprep.subr.mxu0 0.0
        %4122 = vmatpush1.xpose.msra.mxu0 0.0
        %4123 = vmatprep.subr.mxu0 0.0
        %4124 = vmatpush1.xpose.msra.mxu0 0.0
        %4125 = vmatprep.subr.mxu0 0.0
        %4126 = vmatpush1.xpose.msra.mxu0 0.0
        %4127 = vmatprep.subr.mxu0 0.0
        %4128 = vmatpush1.xpose.msra.mxu0 0.0
        %4129 = vmatprep.subr.mxu0 0.0
        %4130 = vmatpush1.xpose.msra.mxu0 0.0
        %4131 = vmatprep.subr.mxu0 0.0
        %4132 = vmatpush1.xpose.msra.mxu0 0.0
        %4133 = vmatprep.subr.mxu0 0.0
        %4134 = vmatpush1.xpose.msra.mxu0 0.0
        %4135 = vmatprep.subr.mxu0 0.0
        %4136 = vmatpush1.xpose.msra.mxu0 0.0
        %4137 = vmatprep.subr.mxu0 0.0
        %4138 = vmatpush1.xpose.msra.mxu0 0.0
        %4139 = vmatprep.subr.mxu0 0.0
        %4140 = vmatpush1.xpose.msra.mxu0 0.0
        %4141 = vmatprep.subr.mxu0 0.0
        %4142 = vmatpush1.xpose.msra.mxu0 0.0
        %4143 = vmatprep.subr.mxu0 0.0
        %4144 = vmatpush1.xpose.msra.mxu0 0.0
        %4145 = vmatprep.subr.mxu0 0.0
        %4146 = vmatpush1.xpose.msra.mxu0 0.0
        %4147 = vmatprep.subr.mxu0 0.0
        %4148 = vmatpush1.xpose.msra.mxu0 0.0
        %4149 = vmatprep.subr.mxu0 0.0
        %4150 = vmatpush1.xpose.msra.mxu0 0.0
        %4151 = vmatprep.subr.mxu0 0.0
        %4152 = vmatpush1.xpose.msra.mxu0 0.0
        %4153 = vmatprep.mubr.f32.mxu0 0.0
        %4154 = vmatmul.mubr.f32.gmra.mrb[0].mxu0 %v4081
        %v4155 = vpop.f32.mrb[0].mxu0
        %v4156 = vadd.f32 0.0, %v4155
        %v4157 = vpop.f32.mrb[0].mxu0
        %4158 = vmatprep.mubr.f32.mxu0 0.0
        %4159 = vmatmul.mubr.f32.gmra.mrb[0].mxu0 %v4083
        %v4160 = vpop.f32.mrb[0].mxu0
        %v4161 = vadd.f32 0.0, %v4160
        %v4162 = vpop.f32.mrb[0].mxu0
        %4163 = vdwg.mxu0
        %v4164 = vmul.f32 %v4065, 0.25
        %v4165 = vmul.f32 %v4070, 0.25
        %v4166 = vmul.f32 %v4156, 0.25
        %v4167 = vmul.f32 %v4161, 0.25
        %v4168 = vsel %vm963, %v4164, -inf
        %4169 = vmax.xlane.f32.xlu0 %v4168
        %v4170 = vpop.xlane.xlu0 %4169
        %v4171 = vsel %vm963, %v4165, -inf
        %4172 = vmax.xlane.f32.xlu0 %v4171
        %v4173 = vpop.xlane.xlu0 %4172
        %v4174 = vsel %vm963, %v4166, -inf
        %4175 = vmax.xlane.f32.xlu0 %v4174
        %v4176 = vpop.xlane.xlu0 %4175
        %v4177 = vsel %vm963, %v4167, -inf
        %4178 = vmax.xlane.f32.xlu0 %v4177
        %v4179 = vpop.xlane.xlu0 %4178
        %v4180 = vsub.f32 %v4164, %v4170
        %v4181 = vsub.f32 %v4165, %v4173
        %v4182 = vsub.f32 %v4166, %v4176
        %v4183 = vsub.f32 %v4167, %v4179
        %v4184 = vmul.f32 %v4180, 1.442695
        %v4185 = vpow.pop %v4184
        %v4186 = vmul.f32 %v4181, 1.442695
        %v4187 = vpow.pop %v4186
        %v4188 = vmul.f32 %v4182, 1.442695
        %v4189 = vpow.pop %v4188
        %v4190 = vmul.f32 %v4183, 1.442695
        %v4191 = vpow.pop %v4190
        %v4192 = vsel %vm963, %v4185, 0.0
        %4193 = vadd.xlane.f32.xlu0 %v4192
        %v4194 = vpop.xlane.xlu0 %4193
        %v4195 = vsel %vm963, %v4187, 0.0
        %4196 = vadd.xlane.f32.xlu0 %v4195
        %v4197 = vpop.xlane.xlu0 %4196
        %v4198 = vsel %vm963, %v4189, 0.0
        %4199 = vadd.xlane.f32.xlu0 %v4198
        %v4200 = vpop.xlane.xlu0 %4199
        %v4201 = vsel %vm963, %v4191, 0.0
        %4202 = vadd.xlane.f32.xlu0 %v4201
        %v4203 = vpop.xlane.xlu0 %4202
        %v4204 = vrcp.pop %v4194
        %v4205 = vrcp.pop %v4197
        %v4206 = vrcp.pop %v4200
        %v4207 = vrcp.pop %v4203
        %v4208 = vmul.f32 %v4185, %v4204
        %v4209 = vmul.f32 %v4187, %v4205
        %v4210 = vmul.f32 %v4189, %v4206
        %v4211 = vmul.f32 %v4191, %v4207
        %4212 = vrot.lane.b32.xlu0 %v945, 32
        %v4213 = vpop.permute.xlu0 %4212
        %4214 = vrot.lane.b32.xlu0 %v950, 32
        %v4215 = vpop.permute.xlu0 %4214
        %v4219 = vsel %vm963, %v4208, 0
        %v4222 = vsel %vm963, %v4209, 0
        %4224 = vmatprep.subr.mxu0 0.0
        %4225 = vmatpush1.msra.mxu0 %v4213
        %4226 = vmatprep.subr.mxu0 0.0
        %4227 = vmatpush1.msra.mxu0 %v4215
        %4228 = vmatprep.subr.mxu0 0.0
        %4229 = vmatpush1.msra.mxu0 0.0
        %4230 = vmatprep.subr.mxu0 0.0
        %4231 = vmatpush1.msra.mxu0 0.0
        %4232 = vmatprep.subr.mxu0 0.0
        %4233 = vmatpush1.msra.mxu0 0.0
        %4234 = vmatprep.subr.mxu0 0.0
        %4235 = vmatpush1.msra.mxu0 0.0
        %4236 = vmatprep.subr.mxu0 0.0
        %4237 = vmatpush1.msra.mxu0 0.0
        %4238 = vmatprep.subr.mxu0 0.0
        %4239 = vmatpush1.msra.mxu0 0.0
        %4240 = vmatprep.subr.mxu0 0.0
        %4241 = vmatpush1.msra.mxu0 0.0
        %4242 = vmatprep.subr.mxu0 0.0
        %4243 = vmatpush1.msra.mxu0 0.0
        %4244 = vmatprep.subr.mxu0 0.0
        %4245 = vmatpush1.msra.mxu0 0.0
        %4246 = vmatprep.subr.mxu0 0.0
        %4247 = vmatpush1.msra.mxu0 0.0
        %4248 = vmatprep.subr.mxu0 0.0
        %4249 = vmatpush1.msra.mxu0 0.0
        %4250 = vmatprep.subr.mxu0 0.0
        %4251 = vmatpush1.msra.mxu0 0.0
        %4252 = vmatprep.subr.mxu0 0.0
        %4253 = vmatpush1.msra.mxu0 0.0
        %4254 = vmatprep.subr.mxu0 0.0
        %4255 = vmatpush1.msra.mxu0 0.0
        %4256 = vmatprep.subr.mxu0 0.0
        %4257 = vmatpush1.msra.mxu0 0.0
        %4258 = vmatprep.subr.mxu0 0.0
        %4259 = vmatpush1.msra.mxu0 0.0
        %4260 = vmatprep.subr.mxu0 0.0
        %4261 = vmatpush1.msra.mxu0 0.0
        %4262 = vmatprep.subr.mxu0 0.0
        %4263 = vmatpush1.msra.mxu0 0.0
        %4264 = vmatprep.subr.mxu0 0.0
        %4265 = vmatpush1.msra.mxu0 0.0
        %4266 = vmatprep.subr.mxu0 0.0
        %4267 = vmatpush1.msra.mxu0 0.0
        %4268 = vmatprep.subr.mxu0 0.0
        %4269 = vmatpush1.msra.mxu0 0.0
        %4270 = vmatprep.subr.mxu0 0.0
        %4271 = vmatpush1.msra.mxu0 0.0
        %4272 = vmatprep.subr.mxu0 0.0
        %4273 = vmatpush1.msra.mxu0 0.0
        %4274 = vmatprep.subr.mxu0 0.0
        %4275 = vmatpush1.msra.mxu0 0.0
        %4276 = vmatprep.subr.mxu0 0.0
        %4277 = vmatpush1.msra.mxu0 0.0
        %4278 = vmatprep.subr.mxu0 0.0
        %4279 = vmatpush1.msra.mxu0 0.0
        %4280 = vmatprep.subr.mxu0 0.0
        %4281 = vmatpush1.msra.mxu0 0.0
        %4282 = vmatprep.subr.mxu0 0.0
        %4283 = vmatpush1.msra.mxu0 0.0
        %4284 = vmatprep.subr.mxu0 0.0
        %4285 = vmatpush1.msra.mxu0 0.0
        %4286 = vmatprep.subr.mxu0 0.0
        %4287 = vmatpush1.msra.mxu0 0.0
        %4288 = vmatprep.mubr.f32.mxu0 0.0
        %4289 = vmatmul.mubr.f32.gmra.mrb[0].mxu0 %v4219
        %v4290 = vpop.f32.mrb[0].mxu0
        %v4291 = vadd.f32 0.0, %v4290
        %v4292 = vpop.f32.mrb[0].mxu0
        %4293 = vmatprep.mubr.f32.mxu0 0.0
        %4294 = vmatmul.mubr.f32.gmra.mrb[0].mxu0 %v4222
        %v4295 = vpop.f32.mrb[0].mxu0
        %v4296 = vadd.f32 0.0, %v4295
        %v4297 = vpop.f32.mrb[0].mxu0
        %4298 = vdwg.mxu0
        %4299 = vrot.lane.b32.xlu0 %v955, 32
        %v4300 = vpop.permute.xlu0 %4299
        %4301 = vrot.lane.b32.xlu0 %v960, 32
        %v4302 = vpop.permute.xlu0 %4301
        %v4306 = vsel %vm963, %v4210, 0
        %v4309 = vsel %vm963, %v4211, 0
        %4311 = vmatprep.subr.mxu0 0.0
        %4312 = vmatpush1.msra.mxu0 %v4300
        %4313 = vmatprep.subr.mxu0 0.0
        %4314 = vmatpush1.msra.mxu0 %v4302
        %4315 = vmatprep.subr.mxu0 0.0
        %4316 = vmatpush1.msra.mxu0 0.0
        %4317 = vmatprep.subr.mxu0 0.0
        %4318 = vmatpush1.msra.mxu0 0.0
        %4319 = vmatprep.subr.mxu0 0.0
        %4320 = vmatpush1.msra.mxu0 0.0
        %4321 = vmatprep.subr.mxu0 0.0
        %4322 = vmatpush1.msra.mxu0 0.0
        %4323 = vmatprep.subr.mxu0 0.0
        %4324 = vmatpush1.msra.mxu0 0.0
        %4325 = vmatprep.subr.mxu0 0.0
        %4326 = vmatpush1.msra.mxu0 0.0
        %4327 = vmatprep.subr.mxu0 0.0
        %4328 = vmatpush1.msra.mxu0 0.0
        %4329 = vmatprep.subr.mxu0 0.0
        %4330 = vmatpush1.msra.mxu0 0.0
        %4331 = vmatprep.subr.mxu0 0.0
        %4332 = vmatpush1.msra.mxu0 0.0
        %4333 = vmatprep.subr.mxu0 0.0
        %4334 = vmatpush1.msra.mxu0 0.0
        %4335 = vmatprep.subr.mxu0 0.0
        %4336 = vmatpush1.msra.mxu0 0.0
        %4337 = vmatprep.subr.mxu0 0.0
        %4338 = vmatpush1.msra.mxu0 0.0
        %4339 = vmatprep.subr.mxu0 0.0
        %4340 = vmatpush1.msra.mxu0 0.0
        %4341 = vmatprep.subr.mxu0 0.0
        %4342 = vmatpush1.msra.mxu0 0.0
        %4343 = vmatprep.subr.mxu0 0.0
        %4344 = vmatpush1.msra.mxu0 0.0
        %4345 = vmatprep.subr.mxu0 0.0
        %4346 = vmatpush1.msra.mxu0 0.0
        %4347 = vmatprep.subr.mxu0 0.0
        %4348 = vmatpush1.msra.mxu0 0.0
        %4349 = vmatprep.subr.mxu0 0.0
        %4350 = vmatpush1.msra.mxu0 0.0
        %4351 = vmatprep.subr.mxu0 0.0
        %4352 = vmatpush1.msra.mxu0 0.0
        %4353 = vmatprep.subr.mxu0 0.0
        %4354 = vmatpush1.msra.mxu0 0.0
        %4355 = vmatprep.subr.mxu0 0.0
        %4356 = vmatpush1.msra.mxu0 0.0
        %4357 = vmatprep.subr.mxu0 0.0
        %4358 = vmatpush1.msra.mxu0 0.0
        %4359 = vmatprep.subr.mxu0 0.0
        %4360 = vmatpush1.msra.mxu0 0.0
        %4361 = vmatprep.subr.mxu0 0.0
        %4362 = vmatpush1.msra.mxu0 0.0
        %4363 = vmatprep.subr.mxu0 0.0
        %4364 = vmatpush1.msra.mxu0 0.0
        %4365 = vmatprep.subr.mxu0 0.0
        %4366 = vmatpush1.msra.mxu0 0.0
        %4367 = vmatprep.subr.mxu0 0.0
        %4368 = vmatpush1.msra.mxu0 0.0
        %4369 = vmatprep.subr.mxu0 0.0
        %4370 = vmatpush1.msra.mxu0 0.0
        %4371 = vmatprep.subr.mxu0 0.0
        %4372 = vmatpush1.msra.mxu0 0.0
        %4373 = vmatprep.subr.mxu0 0.0
        %4374 = vmatpush1.msra.mxu0 0.0
        %4375 = vmatprep.mubr.f32.mxu0 0.0
        %4376 = vmatmul.mubr.f32.gmra.mrb[0].mxu0 %v4306
        %v4377 = vpop.f32.mrb[0].mxu0
        %v4378 = vadd.f32 0.0, %v4377
        %v4379 = vpop.f32.mrb[0].mxu0
        %4380 = vmatprep.mubr.f32.mxu0 0.0
        %4381 = vmatmul.mubr.f32.gmra.mrb[0].mxu0 %v4309
        %v4382 = vpop.f32.mrb[0].mxu0
        %v4383 = vadd.f32 0.0, %v4382
        %v4384 = vpop.f32.mrb[0].mxu0
        %4385 = vdwg.mxu0
        %v4386 = vld [vmem:[#allocation10 + $0x60] sm:$0xff]
        %v4387 = vld [vmem:[#allocation10 + $0x68] sm:$0xff]
        %v4389 = vsel %vm963, %v4291, 0
        %v4392 = vsel %vm963, %v4296, 0
        %v4395 = vsel %vm963, %v4378, 0
        %v4398 = vsel %vm963, %v4383, 0
        %4400 = vmatprep.subr.mxu0 0.0
        %4401 = vmatpush1.msra.mxu0 %v4386
        %4402 = vmatprep.subr.mxu0 0.0
        %4403 = vmatpush1.msra.mxu0 %v4387
        %4404 = vmatprep.subr.mxu0 0.0
        %4405 = vmatpush1.msra.mxu0 0.0
        %4406 = vmatprep.subr.mxu0 0.0
        %4407 = vmatpush1.msra.mxu0 0.0
        %4408 = vmatprep.subr.mxu0 0.0
        %4409 = vmatpush1.msra.mxu0 0.0
        %4410 = vmatprep.subr.mxu0 0.0
        %4411 = vmatpush1.msra.mxu0 0.0
        %4412 = vmatprep.subr.mxu0 0.0
        %4413 = vmatpush1.msra.mxu0 0.0
        %4414 = vmatprep.subr.mxu0 0.0
        %4415 = vmatpush1.msra.mxu0 0.0
        %4416 = vmatprep.subr.mxu0 0.0
        %4417 = vmatpush1.msra.mxu0 0.0
        %4418 = vmatprep.subr.mxu0 0.0
        %4419 = vmatpush1.msra.mxu0 0.0
        %4420 = vmatprep.subr.mxu0 0.0
        %4421 = vmatpush1.msra.mxu0 0.0
        %4422 = vmatprep.subr.mxu0 0.0
        %4423 = vmatpush1.msra.mxu0 0.0
        %4424 = vmatprep.subr.mxu0 0.0
        %4425 = vmatpush1.msra.mxu0 0.0
        %4426 = vmatprep.subr.mxu0 0.0
        %4427 = vmatpush1.msra.mxu0 0.0
        %4428 = vmatprep.subr.mxu0 0.0
        %4429 = vmatpush1.msra.mxu0 0.0
        %4430 = vmatprep.subr.mxu0 0.0
        %4431 = vmatpush1.msra.mxu0 0.0
        %4432 = vmatprep.subr.mxu0 0.0
        %4433 = vmatpush1.msra.mxu0 0.0
        %4434 = vmatprep.subr.mxu0 0.0
        %4435 = vmatpush1.msra.mxu0 0.0
        %4436 = vmatprep.subr.mxu0 0.0
        %4437 = vmatpush1.msra.mxu0 0.0
        %4438 = vmatprep.subr.mxu0 0.0
        %4439 = vmatpush1.msra.mxu0 0.0
        %4440 = vmatprep.subr.mxu0 0.0
        %4441 = vmatpush1.msra.mxu0 0.0
        %4442 = vmatprep.subr.mxu0 0.0
        %4443 = vmatpush1.msra.mxu0 0.0
        %4444 = vmatprep.subr.mxu0 0.0
        %4445 = vmatpush1.msra.mxu0 0.0
        %4446 = vmatprep.subr.mxu0 0.0
        %4447 = vmatpush1.msra.mxu0 0.0
        %4448 = vmatprep.subr.mxu0 0.0
        %4449 = vmatpush1.msra.mxu0 0.0
        %4450 = vmatprep.subr.mxu0 0.0
        %4451 = vmatpush1.msra.mxu0 0.0
        %4452 = vmatprep.subr.mxu0 0.0
        %4453 = vmatpush1.msra.mxu0 0.0
        %4454 = vmatprep.subr.mxu0 0.0
        %4455 = vmatpush1.msra.mxu0 0.0
        %4456 = vmatprep.subr.mxu0 0.0
        %4457 = vmatpush1.msra.mxu0 0.0
        %4458 = vmatprep.subr.mxu0 0.0
        %4459 = vmatpush1.msra.mxu0 0.0
        %4460 = vmatprep.subr.mxu0 0.0
        %4461 = vmatpush1.msra.mxu0 0.0
        %4462 = vmatprep.subr.mxu0 0.0
        %4463 = vmatpush1.msra.mxu0 0.0
        %4464 = vmatprep.mubr.f32.mxu0 0.0
        %4465 = vmatmul.mubr.f32.gmra.mrb[0].mxu0 %v4389
        %v4466 = vpop.f32.mrb[0].mxu0
        %v4467 = vadd.f32 0.0, %v4466
        %v4468 = vpop.f32.mrb[0].mxu0
        %4469 = vmatprep.mubr.f32.mxu0 0.0
        %4470 = vmatmul.mubr.f32.gmra.mrb[0].mxu0 %v4392
        %v4471 = vpop.f32.mrb[0].mxu0
        %v4472 = vadd.f32 0.0, %v4471
        %v4473 = vpop.f32.mrb[0].mxu0
        %4474 = vmatprep.mubr.f32.mxu0 0.0
        %4475 = vmatmul.mubr.f32.gmra.mrb[0].mxu0 %v4395
        %v4476 = vpop.f32.mrb[0].mxu0
        %v4477 = vadd.f32 0.0, %v4476
        %v4478 = vpop.f32.mrb[0].mxu0
        %4479 = vmatprep.mubr.f32.mxu0 0.0
        %4480 = vmatmul.mubr.f32.gmra.mrb[0].mxu0 %v4398
        %v4481 = vpop.f32.mrb[0].mxu0
        %v4482 = vadd.f32 0.0, %v4481
        %v4483 = vpop.f32.mrb[0].mxu0
        %4484 = vdwg.mxu0
        %v4485 = vadd.f32 %v3978, %v4467
        %v4486 = vadd.f32 %v3979, %v4472
        %v4487 = vadd.f32 %v3980, %v4477
        %v4488 = vadd.f32 %v3981, %v4482
        %4489 = vrot.lane.b32.xlu0 %v856, 16
        %v4490 = vpop.permute.xlu0 %4489
        %4491 = vrot.lane.b32.xlu0 %v862, 16
        %v4492 = vpop.permute.xlu0 %4491
        %4493 = vrot.lane.b32.xlu0 %v858, 16
        %v4494 = vpop.permute.xlu0 %4493
        %4495 = vrot.lane.b32.xlu0 %v864, 16
        %v4496 = vpop.permute.xlu0 %4495
        %v4497 = vsel %vm963, %v4490, 0
        %v4499 = vsel %vm963, %v4492, 0
        %v4501 = vsel %vm963, %v4494, 0
        %v4503 = vsel %vm963, %v4496, 0
        %4505 = vmatprep.subr.mxu0 0.0
        %4506 = vmatpush1.xpose.msra.mxu0 %v4501
        %4507 = vmatprep.subr.mxu0 0.0
        %4508 = vmatpush1.xpose.msra.mxu0 %v4503
        %4509 = vmatprep.subr.mxu0 0.0
        %4510 = vmatpush1.xpose.msra.mxu0 0.0
        %4511 = vmatprep.subr.mxu0 0.0
        %4512 = vmatpush1.xpose.msra.mxu0 0.0
        %4513 = vmatprep.subr.mxu0 0.0
        %4514 = vmatpush1.xpose.msra.mxu0 0.0
        %4515 = vmatprep.subr.mxu0 0.0
        %4516 = vmatpush1.xpose.msra.mxu0 0.0
        %4517 = vmatprep.subr.mxu0 0.0
        %4518 = vmatpush1.xpose.msra.mxu0 0.0
        %4519 = vmatprep.subr.mxu0 0.0
        %4520 = vmatpush1.xpose.msra.mxu0 0.0
        %4521 = vmatprep.subr.mxu0 0.0
        %4522 = vmatpush1.xpose.msra.mxu0 0.0
        %4523 = vmatprep.subr.mxu0 0.0
        %4524 = vmatpush1.xpose.msra.mxu0 0.0
        %4525 = vmatprep.subr.mxu0 0.0
        %4526 = vmatpush1.xpose.msra.mxu0 0.0
        %4527 = vmatprep.subr.mxu0 0.0
        %4528 = vmatpush1.xpose.msra.mxu0 0.0
        %4529 = vmatprep.subr.mxu0 0.0
        %4530 = vmatpush1.xpose.msra.mxu0 0.0
        %4531 = vmatprep.subr.mxu0 0.0
        %4532 = vmatpush1.xpose.msra.mxu0 0.0
        %4533 = vmatprep.subr.mxu0 0.0
        %4534 = vmatpush1.xpose.msra.mxu0 0.0
        %4535 = vmatprep.subr.mxu0 0.0
        %4536 = vmatpush1.xpose.msra.mxu0 0.0
        %4537 = vmatprep.subr.mxu0 0.0
        %4538 = vmatpush1.xpose.msra.mxu0 0.0
        %4539 = vmatprep.subr.mxu0 0.0
        %4540 = vmatpush1.xpose.msra.mxu0 0.0
        %4541 = vmatprep.subr.mxu0 0.0
        %4542 = vmatpush1.xpose.msra.mxu0 0.0
        %4543 = vmatprep.subr.mxu0 0.0
        %4544 = vmatpush1.xpose.msra.mxu0 0.0
        %4545 = vmatprep.subr.mxu0 0.0
        %4546 = vmatpush1.xpose.msra.mxu0 0.0
        %4547 = vmatprep.subr.mxu0 0.0
        %4548 = vmatpush1.xpose.msra.mxu0 0.0
        %4549 = vmatprep.subr.mxu0 0.0
        %4550 = vmatpush1.xpose.msra.mxu0 0.0
        %4551 = vmatprep.subr.mxu0 0.0
        %4552 = vmatpush1.xpose.msra.mxu0 0.0
        %4553 = vmatprep.subr.mxu0 0.0
        %4554 = vmatpush1.xpose.msra.mxu0 0.0
        %4555 = vmatprep.subr.mxu0 0.0
        %4556 = vmatpush1.xpose.msra.mxu0 0.0
        %4557 = vmatprep.subr.mxu0 0.0
        %4558 = vmatpush1.xpose.msra.mxu0 0.0
        %4559 = vmatprep.subr.mxu0 0.0
        %4560 = vmatpush1.xpose.msra.mxu0 0.0
        %4561 = vmatprep.subr.mxu0 0.0
        %4562 = vmatpush1.xpose.msra.mxu0 0.0
        %4563 = vmatprep.subr.mxu0 0.0
        %4564 = vmatpush1.xpose.msra.mxu0 0.0
        %4565 = vmatprep.subr.mxu0 0.0
        %4566 = vmatpush1.xpose.msra.mxu0 0.0
        %4567 = vmatprep.subr.mxu0 0.0
        %4568 = vmatpush1.xpose.msra.mxu0 0.0
        %4569 = vmatprep.mubr.f32.mxu0 0.0
        %4570 = vmatmul.mubr.f32.gmra.mrb[0].mxu0 %v4497
        %v4571 = vpop.f32.mrb[0].mxu0
        %v4572 = vadd.f32 0.0, %v4571
        %v4573 = vpop.f32.mrb[0].mxu0
        %4574 = vmatprep.mubr.f32.mxu0 0.0
        %4575 = vmatmul.mubr.f32.gmra.mrb[0].mxu0 %v4499
        %v4576 = vpop.f32.mrb[0].mxu0
        %v4577 = vadd.f32 0.0, %v4576
        %v4578 = vpop.f32.mrb[0].mxu0
        %4579 = vdwg.mxu0
        %4580 = vrot.lane.b32.xlu0 %v868, 16
        %v4581 = vpop.permute.xlu0 %4580
        %4582 = vrot.lane.b32.xlu0 %v874, 16
        %v4583 = vpop.permute.xlu0 %4582
        %4584 = vrot.lane.b32.xlu0 %v870, 16
        %v4585 = vpop.permute.xlu0 %4584
        %4586 = vrot.lane.b32.xlu0 %v876, 16
        %v4587 = vpop.permute.xlu0 %4586
        %v4588 = vsel %vm963, %v4581, 0
        %v4590 = vsel %vm963, %v4583, 0
        %v4592 = vsel %vm963, %v4585, 0
        %v4594 = vsel %vm963, %v4587, 0
        %4596 = vmatprep.subr.mxu0 0.0
        %4597 = vmatpush1.xpose.msra.mxu0 %v4592
        %4598 = vmatprep.subr.mxu0 0.0
        %4599 = vmatpush1.xpose.msra.mxu0 %v4594
        %4600 = vmatprep.subr.mxu0 0.0
        %4601 = vmatpush1.xpose.msra.mxu0 0.0
        %4602 = vmatprep.subr.mxu0 0.0
        %4603 = vmatpush1.xpose.msra.mxu0 0.0
        %4604 = vmatprep.subr.mxu0 0.0
        %4605 = vmatpush1.xpose.msra.mxu0 0.0
        %4606 = vmatprep.subr.mxu0 0.0
        %4607 = vmatpush1.xpose.msra.mxu0 0.0
        %4608 = vmatprep.subr.mxu0 0.0
        %4609 = vmatpush1.xpose.msra.mxu0 0.0
        %4610 = vmatprep.subr.mxu0 0.0
        %4611 = vmatpush1.xpose.msra.mxu0 0.0
        %4612 = vmatprep.subr.mxu0 0.0
        %4613 = vmatpush1.xpose.msra.mxu0 0.0
        %4614 = vmatprep.subr.mxu0 0.0
        %4615 = vmatpush1.xpose.msra.mxu0 0.0
        %4616 = vmatprep.subr.mxu0 0.0
        %4617 = vmatpush1.xpose.msra.mxu0 0.0
        %4618 = vmatprep.subr.mxu0 0.0
        %4619 = vmatpush1.xpose.msra.mxu0 0.0
        %4620 = vmatprep.subr.mxu0 0.0
        %4621 = vmatpush1.xpose.msra.mxu0 0.0
        %4622 = vmatprep.subr.mxu0 0.0
        %4623 = vmatpush1.xpose.msra.mxu0 0.0
        %4624 = vmatprep.subr.mxu0 0.0
        %4625 = vmatpush1.xpose.msra.mxu0 0.0
        %4626 = vmatprep.subr.mxu0 0.0
        %4627 = vmatpush1.xpose.msra.mxu0 0.0
        %4628 = vmatprep.subr.mxu0 0.0
        %4629 = vmatpush1.xpose.msra.mxu0 0.0
        %4630 = vmatprep.subr.mxu0 0.0
        %4631 = vmatpush1.xpose.msra.mxu0 0.0
        %4632 = vmatprep.subr.mxu0 0.0
        %4633 = vmatpush1.xpose.msra.mxu0 0.0
        %4634 = vmatprep.subr.mxu0 0.0
        %4635 = vmatpush1.xpose.msra.mxu0 0.0
        %4636 = vmatprep.subr.mxu0 0.0
        %4637 = vmatpush1.xpose.msra.mxu0 0.0
        %4638 = vmatprep.subr.mxu0 0.0
        %4639 = vmatpush1.xpose.msra.mxu0 0.0
        %4640 = vmatprep.subr.mxu0 0.0
        %4641 = vmatpush1.xpose.msra.mxu0 0.0
        %4642 = vmatprep.subr.mxu0 0.0
        %4643 = vmatpush1.xpose.msra.mxu0 0.0
        %4644 = vmatprep.subr.mxu0 0.0
        %4645 = vmatpush1.xpose.msra.mxu0 0.0
        %4646 = vmatprep.subr.mxu0 0.0
        %4647 = vmatpush1.xpose.msra.mxu0 0.0
        %4648 = vmatprep.subr.mxu0 0.0
        %4649 = vmatpush1.xpose.msra.mxu0 0.0
        %4650 = vmatprep.subr.mxu0 0.0
        %4651 = vmatpush1.xpose.msra.mxu0 0.0
        %4652 = vmatprep.subr.mxu0 0.0
        %4653 = vmatpush1.xpose.msra.mxu0 0.0
        %4654 = vmatprep.subr.mxu0 0.0
        %4655 = vmatpush1.xpose.msra.mxu0 0.0
        %4656 = vmatprep.subr.mxu0 0.0
        %4657 = vmatpush1.xpose.msra.mxu0 0.0
        %4658 = vmatprep.subr.mxu0 0.0
        %4659 = vmatpush1.xpose.msra.mxu0 0.0
        %4660 = vmatprep.mubr.f32.mxu0 0.0
        %4661 = vmatmul.mubr.f32.gmra.mrb[0].mxu0 %v4588
        %v4662 = vpop.f32.mrb[0].mxu0
        %v4663 = vadd.f32 0.0, %v4662
        %v4664 = vpop.f32.mrb[0].mxu0
        %4665 = vmatprep.mubr.f32.mxu0 0.0
        %4666 = vmatmul.mubr.f32.gmra.mrb[0].mxu0 %v4590
        %v4667 = vpop.f32.mrb[0].mxu0
        %v4668 = vadd.f32 0.0, %v4667
        %v4669 = vpop.f32.mrb[0].mxu0
        %4670 = vdwg.mxu0
        %v4671 = vmul.f32 %v4572, 0.25
        %v4672 = vmul.f32 %v4577, 0.25
        %v4673 = vmul.f32 %v4663, 0.25
        %v4674 = vmul.f32 %v4668, 0.25
        %v4675 = vsel %vm963, %v4671, -inf
        %4676 = vmax.xlane.f32.xlu0 %v4675
        %v4677 = vpop.xlane.xlu0 %4676
        %v4678 = vsel %vm963, %v4672, -inf
        %4679 = vmax.xlane.f32.xlu0 %v4678
        %v4680 = vpop.xlane.xlu0 %4679
        %v4681 = vsel %vm963, %v4673, -inf
        %4682 = vmax.xlane.f32.xlu0 %v4681
        %v4683 = vpop.xlane.xlu0 %4682
        %v4684 = vsel %vm963, %v4674, -inf
        %4685 = vmax.xlane.f32.xlu0 %v4684
        %v4686 = vpop.xlane.xlu0 %4685
        %v4687 = vsub.f32 %v4671, %v4677
        %v4688 = vsub.f32 %v4672, %v4680
        %v4689 = vsub.f32 %v4673, %v4683
        %v4690 = vsub.f32 %v4674, %v4686
        %v4691 = vmul.f32 %v4687, 1.442695
        %v4692 = vpow.pop %v4691
        %v4693 = vmul.f32 %v4688, 1.442695
        %v4694 = vpow.pop %v4693
        %v4695 = vmul.f32 %v4689, 1.442695
        %v4696 = vpow.pop %v4695
        %v4697 = vmul.f32 %v4690, 1.442695
        %v4698 = vpow.pop %v4697
        %v4699 = vsel %vm963, %v4692, 0.0
        %4700 = vadd.xlane.f32.xlu0 %v4699
        %v4701 = vpop.xlane.xlu0 %4700
        %v4702 = vsel %vm963, %v4694, 0.0
        %4703 = vadd.xlane.f32.xlu0 %v4702
        %v4704 = vpop.xlane.xlu0 %4703
        %v4705 = vsel %vm963, %v4696, 0.0
        %4706 = vadd.xlane.f32.xlu0 %v4705
        %v4707 = vpop.xlane.xlu0 %4706
        %v4708 = vsel %vm963, %v4698, 0.0
        %4709 = vadd.xlane.f32.xlu0 %v4708
        %v4710 = vpop.xlane.xlu0 %4709
        %v4711 = vrcp.pop %v4701
        %v4712 = vrcp.pop %v4704
        %v4713 = vrcp.pop %v4707
        %v4714 = vrcp.pop %v4710
        %v4715 = vmul.f32 %v4692, %v4711
        %v4716 = vmul.f32 %v4694, %v4712
        %v4717 = vmul.f32 %v4696, %v4713
        %v4718 = vmul.f32 %v4698, %v4714
        %4719 = vrot.lane.b32.xlu0 %v945, 16
        %v4720 = vpop.permute.xlu0 %4719
        %4721 = vrot.lane.b32.xlu0 %v950, 16
        %v4722 = vpop.permute.xlu0 %4721
        %v4726 = vsel %vm963, %v4715, 0
        %v4729 = vsel %vm963, %v4716, 0
        %4731 = vmatprep.subr.mxu0 0.0
        %4732 = vmatpush1.msra.mxu0 %v4720
        %4733 = vmatprep.subr.mxu0 0.0
        %4734 = vmatpush1.msra.mxu0 %v4722
        %4735 = vmatprep.subr.mxu0 0.0
        %4736 = vmatpush1.msra.mxu0 0.0
        %4737 = vmatprep.subr.mxu0 0.0
        %4738 = vmatpush1.msra.mxu0 0.0
        %4739 = vmatprep.subr.mxu0 0.0
        %4740 = vmatpush1.msra.mxu0 0.0
        %4741 = vmatprep.subr.mxu0 0.0
        %4742 = vmatpush1.msra.mxu0 0.0
        %4743 = vmatprep.subr.mxu0 0.0
        %4744 = vmatpush1.msra.mxu0 0.0
        %4745 = vmatprep.subr.mxu0 0.0
        %4746 = vmatpush1.msra.mxu0 0.0
        %4747 = vmatprep.subr.mxu0 0.0
        %4748 = vmatpush1.msra.mxu0 0.0
        %4749 = vmatprep.subr.mxu0 0.0
        %4750 = vmatpush1.msra.mxu0 0.0
        %4751 = vmatprep.subr.mxu0 0.0
        %4752 = vmatpush1.msra.mxu0 0.0
        %4753 = vmatprep.subr.mxu0 0.0
        %4754 = vmatpush1.msra.mxu0 0.0
        %4755 = vmatprep.subr.mxu0 0.0
        %4756 = vmatpush1.msra.mxu0 0.0
        %4757 = vmatprep.subr.mxu0 0.0
        %4758 = vmatpush1.msra.mxu0 0.0
        %4759 = vmatprep.subr.mxu0 0.0
        %4760 = vmatpush1.msra.mxu0 0.0
        %4761 = vmatprep.subr.mxu0 0.0
        %4762 = vmatpush1.msra.mxu0 0.0
        %4763 = vmatprep.subr.mxu0 0.0
        %4764 = vmatpush1.msra.mxu0 0.0
        %4765 = vmatprep.subr.mxu0 0.0
        %4766 = vmatpush1.msra.mxu0 0.0
        %4767 = vmatprep.subr.mxu0 0.0
        %4768 = vmatpush1.msra.mxu0 0.0
        %4769 = vmatprep.subr.mxu0 0.0
        %4770 = vmatpush1.msra.mxu0 0.0
        %4771 = vmatprep.subr.mxu0 0.0
        %4772 = vmatpush1.msra.mxu0 0.0
        %4773 = vmatprep.subr.mxu0 0.0
        %4774 = vmatpush1.msra.mxu0 0.0
        %4775 = vmatprep.subr.mxu0 0.0
        %4776 = vmatpush1.msra.mxu0 0.0
        %4777 = vmatprep.subr.mxu0 0.0
        %4778 = vmatpush1.msra.mxu0 0.0
        %4779 = vmatprep.subr.mxu0 0.0
        %4780 = vmatpush1.msra.mxu0 0.0
        %4781 = vmatprep.subr.mxu0 0.0
        %4782 = vmatpush1.msra.mxu0 0.0
        %4783 = vmatprep.subr.mxu0 0.0
        %4784 = vmatpush1.msra.mxu0 0.0
        %4785 = vmatprep.subr.mxu0 0.0
        %4786 = vmatpush1.msra.mxu0 0.0
        %4787 = vmatprep.subr.mxu0 0.0
        %4788 = vmatpush1.msra.mxu0 0.0
        %4789 = vmatprep.subr.mxu0 0.0
        %4790 = vmatpush1.msra.mxu0 0.0
        %4791 = vmatprep.subr.mxu0 0.0
        %4792 = vmatpush1.msra.mxu0 0.0
        %4793 = vmatprep.subr.mxu0 0.0
        %4794 = vmatpush1.msra.mxu0 0.0
        %4795 = vmatprep.mubr.f32.mxu0 0.0
        %4796 = vmatmul.mubr.f32.gmra.mrb[0].mxu0 %v4726
        %v4797 = vpop.f32.mrb[0].mxu0
        %v4798 = vadd.f32 0.0, %v4797
        %v4799 = vpop.f32.mrb[0].mxu0
        %4800 = vmatprep.mubr.f32.mxu0 0.0
        %4801 = vmatmul.mubr.f32.gmra.mrb[0].mxu0 %v4729
        %v4802 = vpop.f32.mrb[0].mxu0
        %v4803 = vadd.f32 0.0, %v4802
        %v4804 = vpop.f32.mrb[0].mxu0
        %4805 = vdwg.mxu0
        %4806 = vrot.lane.b32.xlu0 %v955, 16
        %v4807 = vpop.permute.xlu0 %4806
        %4808 = vrot.lane.b32.xlu0 %v960, 16
        %v4809 = vpop.permute.xlu0 %4808
        %v4813 = vsel %vm963, %v4717, 0
        %v4816 = vsel %vm963, %v4718, 0
        %4818 = vmatprep.subr.mxu0 0.0
        %4819 = vmatpush1.msra.mxu0 %v4807
        %4820 = vmatprep.subr.mxu0 0.0
        %4821 = vmatpush1.msra.mxu0 %v4809
        %4822 = vmatprep.subr.mxu0 0.0
        %4823 = vmatpush1.msra.mxu0 0.0
        %4824 = vmatprep.subr.mxu0 0.0
        %4825 = vmatpush1.msra.mxu0 0.0
        %4826 = vmatprep.subr.mxu0 0.0
        %4827 = vmatpush1.msra.mxu0 0.0
        %4828 = vmatprep.subr.mxu0 0.0
        %4829 = vmatpush1.msra.mxu0 0.0
        %4830 = vmatprep.subr.mxu0 0.0
        %4831 = vmatpush1.msra.mxu0 0.0
        %4832 = vmatprep.subr.mxu0 0.0
        %4833 = vmatpush1.msra.mxu0 0.0
        %4834 = vmatprep.subr.mxu0 0.0
        %4835 = vmatpush1.msra.mxu0 0.0
        %4836 = vmatprep.subr.mxu0 0.0
        %4837 = vmatpush1.msra.mxu0 0.0
        %4838 = vmatprep.subr.mxu0 0.0
        %4839 = vmatpush1.msra.mxu0 0.0
        %4840 = vmatprep.subr.mxu0 0.0
        %4841 = vmatpush1.msra.mxu0 0.0
        %4842 = vmatprep.subr.mxu0 0.0
        %4843 = vmatpush1.msra.mxu0 0.0
        %4844 = vmatprep.subr.mxu0 0.0
        %4845 = vmatpush1.msra.mxu0 0.0
        %4846 = vmatprep.subr.mxu0 0.0
        %4847 = vmatpush1.msra.mxu0 0.0
        %4848 = vmatprep.subr.mxu0 0.0
        %4849 = vmatpush1.msra.mxu0 0.0
        %4850 = vmatprep.subr.mxu0 0.0
        %4851 = vmatpush1.msra.mxu0 0.0
        %4852 = vmatprep.subr.mxu0 0.0
        %4853 = vmatpush1.msra.mxu0 0.0
        %4854 = vmatprep.subr.mxu0 0.0
        %4855 = vmatpush1.msra.mxu0 0.0
        %4856 = vmatprep.subr.mxu0 0.0
        %4857 = vmatpush1.msra.mxu0 0.0
        %4858 = vmatprep.subr.mxu0 0.0
        %4859 = vmatpush1.msra.mxu0 0.0
        %4860 = vmatprep.subr.mxu0 0.0
        %4861 = vmatpush1.msra.mxu0 0.0
        %4862 = vmatprep.subr.mxu0 0.0
        %4863 = vmatpush1.msra.mxu0 0.0
        %4864 = vmatprep.subr.mxu0 0.0
        %4865 = vmatpush1.msra.mxu0 0.0
        %4866 = vmatprep.subr.mxu0 0.0
        %4867 = vmatpush1.msra.mxu0 0.0
        %4868 = vmatprep.subr.mxu0 0.0
        %4869 = vmatpush1.msra.mxu0 0.0
        %4870 = vmatprep.subr.mxu0 0.0
        %4871 = vmatpush1.msra.mxu0 0.0
        %4872 = vmatprep.subr.mxu0 0.0
        %4873 = vmatpush1.msra.mxu0 0.0
        %4874 = vmatprep.subr.mxu0 0.0
        %4875 = vmatpush1.msra.mxu0 0.0
        %4876 = vmatprep.subr.mxu0 0.0
        %4877 = vmatpush1.msra.mxu0 0.0
        %4878 = vmatprep.subr.mxu0 0.0
        %4879 = vmatpush1.msra.mxu0 0.0
        %4880 = vmatprep.subr.mxu0 0.0
        %4881 = vmatpush1.msra.mxu0 0.0
        %4882 = vmatprep.mubr.f32.mxu0 0.0
        %4883 = vmatmul.mubr.f32.gmra.mrb[0].mxu0 %v4813
        %v4884 = vpop.f32.mrb[0].mxu0
        %v4885 = vadd.f32 0.0, %v4884
        %v4886 = vpop.f32.mrb[0].mxu0
        %4887 = vmatprep.mubr.f32.mxu0 0.0
        %4888 = vmatmul.mubr.f32.gmra.mrb[0].mxu0 %v4816
        %v4889 = vpop.f32.mrb[0].mxu0
        %v4890 = vadd.f32 0.0, %v4889
        %v4891 = vpop.f32.mrb[0].mxu0
        %4892 = vdwg.mxu0
        %v4893 = vld [vmem:[#allocation10 + $0x70] sm:$0xff]
        %v4894 = vld [vmem:[#allocation10 + $0x78] sm:$0xff]
        %v4896 = vsel %vm963, %v4798, 0
        %v4899 = vsel %vm963, %v4803, 0
        %v4902 = vsel %vm963, %v4885, 0
        %v4905 = vsel %vm963, %v4890, 0
        %4907 = vmatprep.subr.mxu0 0.0
        %4908 = vmatpush1.msra.mxu0 %v4893
        %4909 = vmatprep.subr.mxu0 0.0
        %4910 = vmatpush1.msra.mxu0 %v4894
        %4911 = vmatprep.subr.mxu0 0.0
        %4912 = vmatpush1.msra.mxu0 0.0
        %4913 = vmatprep.subr.mxu0 0.0
        %4914 = vmatpush1.msra.mxu0 0.0
        %4915 = vmatprep.subr.mxu0 0.0
        %4916 = vmatpush1.msra.mxu0 0.0
        %4917 = vmatprep.subr.mxu0 0.0
        %4918 = vmatpush1.msra.mxu0 0.0
        %4919 = vmatprep.subr.mxu0 0.0
        %4920 = vmatpush1.msra.mxu0 0.0
        %4921 = vmatprep.subr.mxu0 0.0
        %4922 = vmatpush1.msra.mxu0 0.0
        %4923 = vmatprep.subr.mxu0 0.0
        %4924 = vmatpush1.msra.mxu0 0.0
        %4925 = vmatprep.subr.mxu0 0.0
        %4926 = vmatpush1.msra.mxu0 0.0
        %4927 = vmatprep.subr.mxu0 0.0
        %4928 = vmatpush1.msra.mxu0 0.0
        %4929 = vmatprep.subr.mxu0 0.0
        %4930 = vmatpush1.msra.mxu0 0.0
        %4931 = vmatprep.subr.mxu0 0.0
        %4932 = vmatpush1.msra.mxu0 0.0
        %4933 = vmatprep.subr.mxu0 0.0
        %4934 = vmatpush1.msra.mxu0 0.0
        %4935 = vmatprep.subr.mxu0 0.0
        %4936 = vmatpush1.msra.mxu0 0.0
        %4937 = vmatprep.subr.mxu0 0.0
        %4938 = vmatpush1.msra.mxu0 0.0
        %4939 = vmatprep.subr.mxu0 0.0
        %4940 = vmatpush1.msra.mxu0 0.0
        %4941 = vmatprep.subr.mxu0 0.0
        %4942 = vmatpush1.msra.mxu0 0.0
        %4943 = vmatprep.subr.mxu0 0.0
        %4944 = vmatpush1.msra.mxu0 0.0
        %4945 = vmatprep.subr.mxu0 0.0
        %4946 = vmatpush1.msra.mxu0 0.0
        %4947 = vmatprep.subr.mxu0 0.0
        %4948 = vmatpush1.msra.mxu0 0.0
        %4949 = vmatprep.subr.mxu0 0.0
        %4950 = vmatpush1.msra.mxu0 0.0
        %4951 = vmatprep.subr.mxu0 0.0
        %4952 = vmatpush1.msra.mxu0 0.0
        %4953 = vmatprep.subr.mxu0 0.0
        %4954 = vmatpush1.msra.mxu0 0.0
        %4955 = vmatprep.subr.mxu0 0.0
        %4956 = vmatpush1.msra.mxu0 0.0
        %4957 = vmatprep.subr.mxu0 0.0
        %4958 = vmatpush1.msra.mxu0 0.0
        %4959 = vmatprep.subr.mxu0 0.0
        %4960 = vmatpush1.msra.mxu0 0.0
        %4961 = vmatprep.subr.mxu0 0.0
        %4962 = vmatpush1.msra.mxu0 0.0
        %4963 = vmatprep.subr.mxu0 0.0
        %4964 = vmatpush1.msra.mxu0 0.0
        %4965 = vmatprep.subr.mxu0 0.0
        %4966 = vmatpush1.msra.mxu0 0.0
        %4967 = vmatprep.subr.mxu0 0.0
        %4968 = vmatpush1.msra.mxu0 0.0
        %4969 = vmatprep.subr.mxu0 0.0
        %4970 = vmatpush1.msra.mxu0 0.0
        %4971 = vmatprep.mubr.f32.mxu0 0.0
        %4972 = vmatmul.mubr.f32.gmra.mrb[0].mxu0 %v4896
        %v4973 = vpop.f32.mrb[0].mxu0
        %v4974 = vadd.f32 0.0, %v4973
        %v4975 = vpop.f32.mrb[0].mxu0
        %4976 = vmatprep.mubr.f32.mxu0 0.0
        %4977 = vmatmul.mubr.f32.gmra.mrb[0].mxu0 %v4899
        %v4978 = vpop.f32.mrb[0].mxu0
        %v4979 = vadd.f32 0.0, %v4978
        %v4980 = vpop.f32.mrb[0].mxu0
        %4981 = vmatprep.mubr.f32.mxu0 0.0
        %4982 = vmatmul.mubr.f32.gmra.mrb[0].mxu0 %v4902
        %v4983 = vpop.f32.mrb[0].mxu0
        %v4984 = vadd.f32 0.0, %v4983
        %v4985 = vpop.f32.mrb[0].mxu0
        %4986 = vmatprep.mubr.f32.mxu0 0.0
        %4987 = vmatmul.mubr.f32.gmra.mrb[0].mxu0 %v4905
        %v4988 = vpop.f32.mrb[0].mxu0
        %v4989 = vadd.f32 0.0, %v4988
        %v4990 = vpop.f32.mrb[0].mxu0
        %4991 = vdwg.mxu0
        %v4992 = vadd.f32 %v4485, %v4974
        %v4993 = vadd.f32 %v4486, %v4979
        %v4994 = vadd.f32 %v4487, %v4984
        %v4995 = vadd.f32 %v4488, %v4989
        %v4996 = vld [vmem:[%s6] sm:$0x1]
        %v4998 = vlaneseq
        %v4999 = vshrl.u32 %v4998, 7
        %v5000 = vsub.s32 0, %v4999
        %v5001 = vrot.slane %v4996, %v5000
        %v5003 = vadd.f32 %v4992, %v5001
        %v5004 = vadd.f32 %v4993, %v5001
        %v5005 = vadd.f32 %v4994, %v5001
        %v5006 = vadd.f32 %v4995, %v5001
        %v5007 = vld [vmem:[%s7] sm:$0x1]
        %v5008 = vld [vmem:[%s8] sm:$0x1]
        %5009 = vadd.xlane.f32.xlu0 %v5003
        %v5010 = vpop.xlane.xlu0 %5009
        %5011 = vadd.xlane.f32.xlu0 %v5004
        %v5012 = vpop.xlane.xlu0 %5011
        %5013 = vadd.xlane.f32.xlu0 %v5005
        %v5014 = vpop.xlane.xlu0 %5013
        %5015 = vadd.xlane.f32.xlu0 %v5006
        %v5016 = vpop.xlane.xlu0 %5015
        %v5017 = vmul.f32 %v5010, %v667
        %v5018 = vmul.f32 %v5012, %v667
        %v5019 = vmul.f32 %v5014, %v667
        %v5020 = vmul.f32 %v5016, %v667
        %v5021 = vsub.f32 %v5003, %v5017
        %v5022 = vsub.f32 %v5004, %v5018
        %v5023 = vsub.f32 %v5005, %v5019
        %v5024 = vsub.f32 %v5006, %v5020
        %v5025 = vmul.f32 %v5021, %v5021
        %v5026 = vmul.f32 %v5022, %v5022
        %v5027 = vmul.f32 %v5023, %v5023
        %v5028 = vmul.f32 %v5024, %v5024
        %5029 = vadd.xlane.f32.xlu0 %v5025
        %v5030 = vpop.xlane.xlu0 %5029
        %5031 = vadd.xlane.f32.xlu0 %v5026
        %v5032 = vpop.xlane.xlu0 %5031
        %5033 = vadd.xlane.f32.xlu0 %v5027
        %v5034 = vpop.xlane.xlu0 %5033
        %5035 = vadd.xlane.f32.xlu0 %v5028
        %v5036 = vpop.xlane.xlu0 %5035
        %v5037 = vmul.f32 %v5030, %v667
        %v5038 = vmul.f32 %v5032, %v667
        %v5039 = vmul.f32 %v5034, %v667
        %v5040 = vmul.f32 %v5036, %v667
        %v5041 = vadd.f32 %v5037, 1e-05
        %v5042 = vadd.f32 %v5038, 1e-05
        %v5043 = vadd.f32 %v5039, 1e-05
        %v5044 = vadd.f32 %v5040, 1e-05
        %v5045 = vrsqrt.pop %v5041
        %v5046 = vrsqrt.pop %v5042
        %v5047 = vrsqrt.pop %v5043
        %v5048 = vrsqrt.pop %v5044
        %v5049 = vmul.f32 %v5021, %v5045
        %v5050 = vmul.f32 %v5022, %v5046
        %v5051 = vmul.f32 %v5023, %v5047
        %v5052 = vmul.f32 %v5024, %v5048
        %v5054 = vlaneseq
        %v5055 = vshrl.u32 %v5054, 7
        %v5056 = vsub.s32 0, %v5055
        %v5057 = vrot.slane %v5007, %v5056
        %v5059 = vmul.f32 %v5049, %v5057
        %v5060 = vmul.f32 %v5050, %v5057
        %v5061 = vmul.f32 %v5051, %v5057
        %v5062 = vmul.f32 %v5052, %v5057
        %v5064 = vlaneseq
        %v5065 = vshrl.u32 %v5064, 7
        %v5066 = vsub.s32 0, %v5065
        %v5067 = vrot.slane %v5008, %v5066
        %v5069 = vadd.f32 %v5059, %v5067
        %v5070 = vadd.f32 %v5060, %v5067
        %v5071 = vadd.f32 %v5061, %v5067
        %v5072 = vadd.f32 %v5062, %v5067
        %v5073 = vadd.f32 %v720, %v5069
        %v5074 = vadd.f32 %v721, %v5070
        %v5075 = vadd.f32 %v722, %v5071
        %v5076 = vadd.f32 %v723, %v5072
        %v5077 = vld [vmem:[%s9] sm:$0x1]
        %v5078 = vld [vmem:[%s10] sm:$0x1]
        %5079 = vadd.xlane.f32.xlu0 %v5073
        %v5080 = vpop.xlane.xlu0 %5079
        %5081 = vadd.xlane.f32.xlu0 %v5074
        %v5082 = vpop.xlane.xlu0 %5081
        %5083 = vadd.xlane.f32.xlu0 %v5075
        %v5084 = vpop.xlane.xlu0 %5083
        %5085 = vadd.xlane.f32.xlu0 %v5076
        %v5086 = vpop.xlane.xlu0 %5085
        %v5087 = vmul.f32 %v5080, %v667
        %v5088 = vmul.f32 %v5082, %v667
        %v5089 = vmul.f32 %v5084, %v667
        %v5090 = vmul.f32 %v5086, %v667
        %v5091 = vsub.f32 %v5073, %v5087
        %v5092 = vsub.f32 %v5074, %v5088
        %v5093 = vsub.f32 %v5075, %v5089
        %v5094 = vsub.f32 %v5076, %v5090
        %v5095 = vmul.f32 %v5091, %v5091
        %v5096 = vmul.f32 %v5092, %v5092
        %v5097 = vmul.f32 %v5093, %v5093
        %v5098 = vmul.f32 %v5094, %v5094
        %5099 = vadd.xlane.f32.xlu0 %v5095
        %v5100 = vpop.xlane.xlu0 %5099
        %5101 = vadd.xlane.f32.xlu0 %v5096
        %v5102 = vpop.xlane.xlu0 %5101
        %5103 = vadd.xlane.f32.xlu0 %v5097
        %v5104 = vpop.xlane.xlu0 %5103
        %5105 = vadd.xlane.f32.xlu0 %v5098
        %v5106 = vpop.xlane.xlu0 %5105
        %v5107 = vmul.f32 %v5100, %v667
        %v5108 = vmul.f32 %v5102, %v667
        %v5109 = vmul.f32 %v5104, %v667
        %v5110 = vmul.f32 %v5106, %v667
        %v5111 = vadd.f32 %v5107, 1e-05
        %v5112 = vadd.f32 %v5108, 1e-05
        %v5113 = vadd.f32 %v5109, 1e-05
        %v5114 = vadd.f32 %v5110, 1e-05
        %v5115 = vrsqrt.pop %v5111
        %v5116 = vrsqrt.pop %v5112
        %v5117 = vrsqrt.pop %v5113
        %v5118 = vrsqrt.pop %v5114
        %v5119 = vmul.f32 %v5091, %v5115
        %v5120 = vmul.f32 %v5092, %v5116
        %v5121 = vmul.f32 %v5093, %v5117
        %v5122 = vmul.f32 %v5094, %v5118
        %v5124 = vlaneseq
        %v5125 = vshrl.u32 %v5124, 7
        %v5126 = vsub.s32 0, %v5125
        %v5127 = vrot.slane %v5077, %v5126
        %v5129 = vmul.f32 %v5119, %v5127
        %v5130 = vmul.f32 %v5120, %v5127
        %v5131 = vmul.f32 %v5121, %v5127
        %v5132 = vmul.f32 %v5122, %v5127
        %v5134 = vlaneseq
        %v5135 = vshrl.u32 %v5134, 7
        %v5136 = vsub.s32 0, %v5135
        %v5137 = vrot.slane %v5078, %v5136
        %v5139 = vadd.f32 %v5129, %v5137
        %v5140 = vadd.f32 %v5130, %v5137
        %v5141 = vadd.f32 %v5131, %v5137
        %v5142 = vadd.f32 %v5132, %v5137
        %v5143 = vld [vmem:[#allocation11] sm:$0xff]
        %v5144 = vld [vmem:[#allocation11 + $0x8] sm:$0xff]
        %v5145 = vld [vmem:[#allocation11 + $0x10] sm:$0xff]
        %v5146 = vld [vmem:[#allocation11 + $0x18] sm:$0xff]
        %v5147 = vld [vmem:[#allocation11 + $0x20] sm:$0xff]
        %v5148 = vld [vmem:[#allocation11 + $0x28] sm:$0xff]
        %v5149 = vld [vmem:[#allocation11 + $0x30] sm:$0xff]
        %v5150 = vld [vmem:[#allocation11 + $0x38] sm:$0xff]
        %v5151 = vld [vmem:[#allocation11 + $0x40] sm:$0xff]
        %v5152 = vld [vmem:[#allocation11 + $0x48] sm:$0xff]
        %v5153 = vld [vmem:[#allocation11 + $0x50] sm:$0xff]
        %v5154 = vld [vmem:[#allocation11 + $0x58] sm:$0xff]
        %v5155 = vld [vmem:[#allocation11 + $0x60] sm:$0xff]
        %v5156 = vld [vmem:[#allocation11 + $0x68] sm:$0xff]
        %v5157 = vld [vmem:[#allocation11 + $0x70] sm:$0xff]
        %v5158 = vld [vmem:[#allocation11 + $0x78] sm:$0xff]
        %v5159 = vld [vmem:[#allocation11 + $0x80] sm:$0xff]
        %v5160 = vld [vmem:[#allocation11 + $0x88] sm:$0xff]
        %v5161 = vld [vmem:[#allocation11 + $0x90] sm:$0xff]
        %v5162 = vld [vmem:[#allocation11 + $0x98] sm:$0xff]
        %v5163 = vld [vmem:[#allocation11 + $0xa0] sm:$0xff]
        %v5164 = vld [vmem:[#allocation11 + $0xa8] sm:$0xff]
        %v5165 = vld [vmem:[#allocation11 + $0xb0] sm:$0xff]
        %v5166 = vld [vmem:[#allocation11 + $0xb8] sm:$0xff]
        %v5167 = vld [vmem:[#allocation11 + $0xc0] sm:$0xff]
        %v5168 = vld [vmem:[#allocation11 + $0xc8] sm:$0xff]
        %v5169 = vld [vmem:[#allocation11 + $0xd0] sm:$0xff]
        %v5170 = vld [vmem:[#allocation11 + $0xd8] sm:$0xff]
        %v5171 = vld [vmem:[#allocation11 + $0xe0] sm:$0xff]
        %v5172 = vld [vmem:[#allocation11 + $0xe8] sm:$0xff]
        %v5173 = vld [vmem:[#allocation11 + $0xf0] sm:$0xff]
        %v5174 = vld [vmem:[#allocation11 + $0xf8] sm:$0xff]
        %v5175 = vld [vmem:[%s12] sm:$0x3]
        %v5177 = vlaneseq
        %v5178 = vshrl.u32 %v5177, 7
        %v5179 = vsub.s32 0, %v5178
        %v5180 = vrot.slane %v5175, %v5179
        %v5181 = vlaneseq
        %v5182 = vshrl.u32 %v5181, 7
        %v5183 = vsub.s32 1, %v5182
        %v5184 = vrot.slane %v5175, %v5183
        %5187 = vmatprep.subr.mxu0 %v5144
        %5188 = vmatpush1.msra.mxu0 %v5143
        %5189 = vmatprep.subr.mxu0 %v5146
        %5190 = vmatpush1.msra.mxu0 %v5145
        %5191 = vmatprep.subr.mxu0 %v5148
        %5192 = vmatpush1.msra.mxu0 %v5147
        %5193 = vmatprep.subr.mxu0 %v5150
        %5194 = vmatpush1.msra.mxu0 %v5149
        %5195 = vmatprep.subr.mxu0 %v5152
        %5196 = vmatpush1.msra.mxu0 %v5151
        %5197 = vmatprep.subr.mxu0 %v5154
        %5198 = vmatpush1.msra.mxu0 %v5153
        %5199 = vmatprep.subr.mxu0 %v5156
        %5200 = vmatpush1.msra.mxu0 %v5155
        %5201 = vmatprep.subr.mxu0 %v5158
        %5202 = vmatpush1.msra.mxu0 %v5157
        %5203 = vmatprep.subr.mxu0 %v5160
        %5204 = vmatpush1.msra.mxu0 %v5159
        %5205 = vmatprep.subr.mxu0 %v5162
        %5206 = vmatpush1.msra.mxu0 %v5161
        %5207 = vmatprep.subr.mxu0 %v5164
        %5208 = vmatpush1.msra.mxu0 %v5163
        %5209 = vmatprep.subr.mxu0 %v5166
        %5210 = vmatpush1.msra.mxu0 %v5165
        %5211 = vmatprep.subr.mxu0 %v5168
        %5212 = vmatpush1.msra.mxu0 %v5167
        %5213 = vmatprep.subr.mxu0 %v5170
        %5214 = vmatpush1.msra.mxu0 %v5169
        %5215 = vmatprep.subr.mxu0 %v5172
        %5216 = vmatpush1.msra.mxu0 %v5171
        %5217 = vmatprep.subr.mxu0 %v5174
        %5218 = vmatpush1.msra.mxu0 %v5173
        %5219 = vmatprep.subr.mxu0 0.0
        %5220 = vmatpush1.msra.mxu0 0.0
        %5221 = vmatprep.subr.mxu0 0.0
        %5222 = vmatpush1.msra.mxu0 0.0
        %5223 = vmatprep.subr.mxu0 0.0
        %5224 = vmatpush1.msra.mxu0 0.0
        %5225 = vmatprep.subr.mxu0 0.0
        %5226 = vmatpush1.msra.mxu0 0.0
        %5227 = vmatprep.subr.mxu0 0.0
        %5228 = vmatpush1.msra.mxu0 0.0
        %5229 = vmatprep.subr.mxu0 0.0
        %5230 = vmatpush1.msra.mxu0 0.0
        %5231 = vmatprep.subr.mxu0 0.0
        %5232 = vmatpush1.msra.mxu0 0.0
        %5233 = vmatprep.subr.mxu0 0.0
        %5234 = vmatpush1.msra.mxu0 0.0
        %5235 = vmatprep.subr.mxu0 0.0
        %5236 = vmatpush1.msra.mxu0 0.0
        %5237 = vmatprep.subr.mxu0 0.0
        %5238 = vmatpush1.msra.mxu0 0.0
        %5239 = vmatprep.subr.mxu0 0.0
        %5240 = vmatpush1.msra.mxu0 0.0
        %5241 = vmatprep.subr.mxu0 0.0
        %5242 = vmatpush1.msra.mxu0 0.0
        %5243 = vmatprep.subr.mxu0 0.0
        %5244 = vmatpush1.msra.mxu0 0.0
        %5245 = vmatprep.subr.mxu0 0.0
        %5246 = vmatpush1.msra.mxu0 0.0
        %5247 = vmatprep.subr.mxu0 0.0
        %5248 = vmatpush1.msra.mxu0 0.0
        %5249 = vmatprep.subr.mxu0 0.0
        %5250 = vmatpush1.msra.mxu0 0.0
        %5251 = vmatprep.mubr.f32.mxu0 0.0
        %5252 = vmatmul.mubr.f32.gmra.mrb[0].mxu0 %v5139
        %v5253 = vpop.f32.mrb[0].mxu0
        %v5254 = vadd.f32 %v5180, %v5253
        %v5255 = vpop.f32.mrb[0].mxu0
        %v5256 = vadd.f32 %v5184, %v5255
        %5257 = vmatprep.mubr.f32.mxu0 0.0
        %5258 = vmatmul.mubr.f32.gmra.mrb[0].mxu0 %v5140
        %v5259 = vpop.f32.mrb[0].mxu0
        %v5260 = vadd.f32 %v5180, %v5259
        %v5261 = vpop.f32.mrb[0].mxu0
        %v5262 = vadd.f32 %v5184, %v5261
        %5263 = vmatprep.mubr.f32.mxu0 0.0
        %5264 = vmatmul.mubr.f32.gmra.mrb[0].mxu0 %v5141
        %v5265 = vpop.f32.mrb[0].mxu0
        %v5266 = vadd.f32 %v5180, %v5265
        %v5267 = vpop.f32.mrb[0].mxu0
        %v5268 = vadd.f32 %v5184, %v5267
        %5269 = vmatprep.mubr.f32.mxu0 0.0
        %5270 = vmatmul.mubr.f32.gmra.mrb[0].mxu0 %v5142
        %v5271 = vpop.f32.mrb[0].mxu0
        %v5272 = vadd.f32 %v5180, %v5271
        %v5273 = vpop.f32.mrb[0].mxu0
        %v5274 = vadd.f32 %v5184, %v5273
        %5275 = vdwg.mxu0
        %v5276 = vmul.f32 %v5254, 0.5
        %v5277 = vmul.f32 %v5256, 0.5
        %v5278 = vmul.f32 %v5260, 0.5
        %v5279 = vmul.f32 %v5262, 0.5
        %v5280 = vmul.f32 %v5266, 0.5
        %v5281 = vmul.f32 %v5268, 0.5
        %v5282 = vmul.f32 %v5272, 0.5
        %v5283 = vmul.f32 %v5274, 0.5
        %v5284 = vmul.f32 %v5254, 0.70710677
        %v5285 = vmul.f32 %v5256, 0.70710677
        %v5286 = vmul.f32 %v5260, 0.70710677
        %v5287 = vmul.f32 %v5262, 0.70710677
        %v5288 = vmul.f32 %v5266, 0.70710677
        %v5289 = vmul.f32 %v5268, 0.70710677
        %v5290 = vmul.f32 %v5272, 0.70710677
        %v5291 = vmul.f32 %v5274, 0.70710677
        %v5292 = vmax.f32 %v5284, -4.0
        %v5293 = vmax.f32 %v5285, -4.0
        %v5294 = vmax.f32 %v5286, -4.0
        %v5295 = vmax.f32 %v5287, -4.0
        %v5296 = vmax.f32 %v5288, -4.0
        %v5297 = vmax.f32 %v5289, -4.0
        %v5298 = vmax.f32 %v5290, -4.0
        %v5299 = vmax.f32 %v5291, -4.0
        %v5300 = vmin.f32 %v5292, 4.0
        %v5301 = vmin.f32 %v5293, 4.0
        %v5302 = vmin.f32 %v5294, 4.0
        %v5303 = vmin.f32 %v5295, 4.0
        %v5304 = vmin.f32 %v5296, 4.0
        %v5305 = vmin.f32 %v5297, 4.0
        %v5306 = vmin.f32 %v5298, 4.0
        %v5307 = vmin.f32 %v5299, 4.0
        %v5308 = vmul.f32 %v5300, %v5300
        %v5309 = vmul.f32 %v5301, %v5301
        %v5310 = vmul.f32 %v5302, %v5302
        %v5311 = vmul.f32 %v5303, %v5303
        %v5312 = vmul.f32 %v5304, %v5304
        %v5313 = vmul.f32 %v5305, %v5305
        %v5314 = vmul.f32 %v5306, %v5306
        %v5315 = vmul.f32 %v5307, %v5307
        %v5316 = vmul.f32 %v5308, -2.7261424e-10
        %v5317 = vmul.f32 %v5309, -2.7261424e-10
        %v5318 = vmul.f32 %v5310, -2.7261424e-10
        %v5319 = vmul.f32 %v5311, -2.7261424e-10
        %v5320 = vmul.f32 %v5312, -2.7261424e-10
        %v5321 = vmul.f32 %v5313, -2.7261424e-10
        %v5322 = vmul.f32 %v5314, -2.7261424e-10
        %v5323 = vmul.f32 %v5315, -2.7261424e-10
        %v5324 = vadd.f32 %v5316, 2.7706815e-08
        %v5325 = vadd.f32 %v5317, 2.7706815e-08
        %v5326 = vadd.f32 %v5318, 2.7706815e-08
        %v5327 = vadd.f32 %v5319, 2.7706815e-08
        %v5328 = vadd.f32 %v5320, 2.7706815e-08
        %v5329 = vadd.f32 %v5321, 2.7706815e-08
        %v5330 = vadd.f32 %v5322, 2.7706815e-08
        %v5331 = vadd.f32 %v5323, 2.7706815e-08
        %v5332 = vmul.f32 %v5324, %v5308
        %v5333 = vmul.f32 %v5325, %v5309
        %v5334 = vmul.f32 %v5326, %v5310
        %v5335 = vmul.f32 %v5327, %v5311
        %v5336 = vmul.f32 %v5328, %v5312
        %v5337 = vmul.f32 %v5329, %v5313
        %v5338 = vmul.f32 %v5330, %v5314
        %v5339 = vmul.f32 %v5331, %v5315
        %v5340 = vadd.f32 %v5332, -2.101024e-06
        %v5341 = vadd.f32 %v5333, -2.101024e-06
        %v5342 = vadd.f32 %v5334, -2.101024e-06
        %v5343 = vadd.f32 %v5335, -2.101024e-06
        %v5344 = vadd.f32 %v5336, -2.101024e-06
        %v5345 = vadd.f32 %v5337, -2.101024e-06
        %v5346 = vadd.f32 %v5338, -2.101024e-06
        %v5347 = vadd.f32 %v5339, -2.101024e-06
        %v5348 = vmul.f32 %v5340, %v5308
        %v5349 = vmul.f32 %v5341, %v5309
        %v5350 = vmul.f32 %v5342, %v5310
        %v5351 = vmul.f32 %v5343, %v5311
        %v5352 = vmul.f32 %v5344, %v5312
        %v5353 = vmul.f32 %v5345, %v5313
        %v5354 = vmul.f32 %v5346, %v5314
        %v5355 = vmul.f32 %v5347, %v5315
        %v5356 = vadd.f32 %v5348, -5.6925062e-05
        %v5357 = vadd.f32 %v5349, -5.6925062e-05
        %v5358 = vadd.f32 %v5350, -5.6925062e-05
        %v5359 = vadd.f32 %v5351, -5.6925062e-05
        %v5360 = vadd.f32 %v5352, -5.6925062e-05
        %v5361 = vadd.f32 %v5353, -5.6925062e-05
        %v5362 = vadd.f32 %v5354, -5.6925062e-05
        %v5363 = vadd.f32 %v5355, -5.6925062e-05
        %v5364 = vmul.f32 %v5356, %v5308
        %v5365 = vmul.f32 %v5357, %v5309
        %v5366 = vmul.f32 %v5358, %v5310
        %v5367 = vmul.f32 %v5359, %v5311
        %v5368 = vmul.f32 %v5360, %v5312
        %v5369 = vmul.f32 %v5361, %v5313
        %v5370 = vmul.f32 %v5362, %v5314
        %v5371 = vmul.f32 %v5363, %v5315
        %v5372 = vadd.f32 %v5364, -0.00073499064
        %v5373 = vadd.f32 %v5365, -0.00073499064
        %v5374 = vadd.f32 %v5366, -0.00073499064
        %v5375 = vadd.f32 %v5367, -0.00073499064
        %v5376 = vadd.f32 %v5368, -0.00073499064
        %v5377 = vadd.f32 %v5369, -0.00073499064
        %v5378 = vadd.f32 %v5370, -0.00073499064
        %v5379 = vadd.f32 %v5371, -0.00073499064
        %v5380 = vmul.f32 %v5372, %v5308
        %v5381 = vmul.f32 %v5373, %v5309
        %v5382 = vmul.f32 %v5374, %v5310
        %v5383 = vmul.f32 %v5375, %v5311
        %v5384 = vmul.f32 %v5376, %v5312
        %v5385 = vmul.f32 %v5377, %v5313
        %v5386 = vmul.f32 %v5378, %v5314
        %v5387 = vmul.f32 %v5379, %v5315
        %v5388 = vadd.f32 %v5380, -0.0029546
        %v5389 = vadd.f32 %v5381, -0.0029546
        %v5390 = vadd.f32 %v5382, -0.0029546
        %v5391 = vadd.f32 %v5383, -0.0029546
        %v5392 = vadd.f32 %v5384, -0.0029546
        %v5393 = vadd.f32 %v5385, -0.0029546
        %v5394 = vadd.f32 %v5386, -0.0029546
        %v5395 = vadd.f32 %v5387, -0.0029546
        %v5396 = vmul.f32 %v5388, %v5308
        %v5397 = vmul.f32 %v5389, %v5309
        %v5398 = vmul.f32 %v5390, %v5310
        %v5399 = vmul.f32 %v5391, %v5311
        %v5400 = vmul.f32 %v5392, %v5312
        %v5401 = vmul.f32 %v5393, %v5313
        %v5402 = vmul.f32 %v5394, %v5314
        %v5403 = vmul.f32 %v5395, %v5315
        %v5404 = vadd.f32 %v5396, -0.016096033
        %v5405 = vadd.f32 %v5397, -0.016096033
        %v5406 = vadd.f32 %v5398, -0.016096033
        %v5407 = vadd.f32 %v5399, -0.016096033
        %v5408 = vadd.f32 %v5400, -0.016096033
        %v5409 = vadd.f32 %v5401, -0.016096033
        %v5410 = vadd.f32 %v5402, -0.016096033
        %v5411 = vadd.f32 %v5403, -0.016096033
        %v5412 = vmul.f32 %v5404, %v5300
        %v5413 = vmul.f32 %v5405, %v5301
        %v5414 = vmul.f32 %v5406, %v5302
        %v5415 = vmul.f32 %v5407, %v5303
        %v5416 = vmul.f32 %v5408, %v5304
        %v5417 = vmul.f32 %v5409, %v5305
        %v5418 = vmul.f32 %v5410, %v5306
        %v5419 = vmul.f32 %v5411, %v5307
        %v5420 = vmul.f32 %v5308, -1.45660715e-05
        %v5421 = vmul.f32 %v5309, -1.45660715e-05
        %v5422 = vmul.f32 %v5310, -1.45660715e-05
        %v5423 = vmul.f32 %v5311, -1.45660715e-05
        %v5424 = vmul.f32 %v5312, -1.45660715e-05
        %v5425 = vmul.f32 %v5313, -1.45660715e-05
        %v5426 = vmul.f32 %v5314, -1.45660715e-05
        %v5427 = vmul.f32 %v5315, -1.45660715e-05
        %v5428 = vadd.f32 %v5420, -0.00021337405
        %v5429 = vadd.f32 %v5421, -0.00021337405
        %v5430 = vadd.f32 %v5422, -0.00021337405
        %v5431 = vadd.f32 %v5423, -0.00021337405
        %v5432 = vadd.f32 %v5424, -0.00021337405
        %v5433 = vadd.f32 %v5425, -0.00021337405
        %v5434 = vadd.f32 %v5426, -0.00021337405
        %v5435 = vadd.f32 %v5427, -0.00021337405
        %v5436 = vmul.f32 %v5428, %v5308
        %v5437 = vmul.f32 %v5429, %v5309
        %v5438 = vmul.f32 %v5430, %v5310
        %v5439 = vmul.f32 %v5431, %v5311
        %v5440 = vmul.f32 %v5432, %v5312
        %v5441 = vmul.f32 %v5433, %v5313
        %v5442 = vmul.f32 %v5434, %v5314
        %v5443 = vmul.f32 %v5435, %v5315
        %v5444 = vadd.f32 %v5436, -0.001682827
        %v5445 = vadd.f32 %v5437, -0.001682827
        %v5446 = vadd.f32 %v5438, -0.001682827
        %v5447 = vadd.f32 %v5439, -0.001682827
        %v5448 = vadd.f32 %v5440, -0.001682827
        %v5449 = vadd.f32 %v5441, -0.001682827
        %v5450 = vadd.f32 %v5442, -0.001682827
        %v5451 = vadd.f32 %v5443, -0.001682827
        %v5452 = vmul.f32 %v5444, %v5308
        %v5453 = vmul.f32 %v5445, %v5309
        %v5454 = vmul.f32 %v5446, %v5310
        %v5455 = vmul.f32 %v5447, %v5311
        %v5456 = vmul.f32 %v5448, %v5312
        %v5457 = vmul.f32 %v5449, %v5313
        %v5458 = vmul.f32 %v5450, %v5314
        %v5459 = vmul.f32 %v5451, %v5315
        %v5460 = vadd.f32 %v5452, -0.0073733293
        %v5461 = vadd.f32 %v5453, -0.0073733293
        %v5462 = vadd.f32 %v5454, -0.0073733293
        %v5463 = vadd.f32 %v5455, -0.0073733293
        %v5464 = vadd.f32 %v5456, -0.0073733293
        %v5465 = vadd.f32 %v5457, -0.0073733293
        %v5466 = vadd.f32 %v5458, -0.0073733293
        %v5467 = vadd.f32 %v5459, -0.0073733293
        %v5468 = vmul.f32 %v5460, %v5308
        %v5469 = vmul.f32 %v5461, %v5309
        %v5470 = vmul.f32 %v5462, %v5310
        %v5471 = vmul.f32 %v5463, %v5311
        %v5472 = vmul.f32 %v5464, %v5312
        %v5473 = vmul.f32 %v5465, %v5313
        %v5474 = vmul.f32 %v5466, %v5314
        %v5475 = vmul.f32 %v5467, %v5315
        %v5476 = vadd.f32 %v5468, -0.014264739
        %v5477 = vadd.f32 %v5469, -0.014264739
        %v5478 = vadd.f32 %v5470, -0.014264739
        %v5479 = vadd.f32 %v5471, -0.014264739
        %v5480 = vadd.f32 %v5472, -0.014264739
        %v5481 = vadd.f32 %v5473, -0.014264739
        %v5482 = vadd.f32 %v5474, -0.014264739
        %v5483 = vadd.f32 %v5475, -0.014264739
        %v5484 = vrcp.pop %v5476
        %v5485 = vmul.f32 %v5412, %v5484
        %v5486 = vrcp.pop %v5477
        %v5487 = vmul.f32 %v5413, %v5486
        %v5488 = vrcp.pop %v5478
        %v5489 = vmul.f32 %v5414, %v5488
        %v5490 = vrcp.pop %v5479
        %v5491 = vmul.f32 %v5415, %v5490
        %v5492 = vrcp.pop %v5480
        %v5493 = vmul.f32 %v5416, %v5492
        %v5494 = vrcp.pop %v5481
        %v5495 = vmul.f32 %v5417, %v5494
        %v5496 = vrcp.pop %v5482
        %v5497 = vmul.f32 %v5418, %v5496
        %v5498 = vrcp.pop %v5483
        %v5499 = vmul.f32 %v5419, %v5498
        %v5500 = vadd.f32 %v5485, 1.0
        %v5501 = vadd.f32 %v5487, 1.0
        %v5502 = vadd.f32 %v5489, 1.0
        %v5503 = vadd.f32 %v5491, 1.0
        %v5504 = vadd.f32 %v5493, 1.0
        %v5505 = vadd.f32 %v5495, 1.0
        %v5506 = vadd.f32 %v5497, 1.0
        %v5507 = vadd.f32 %v5499, 1.0
        %v5508 = vmul.f32 %v5276, %v5500
        %v5509 = vmul.f32 %v5277, %v5501
        %v5510 = vmul.f32 %v5278, %v5502
        %v5511 = vmul.f32 %v5279, %v5503
        %v5512 = vmul.f32 %v5280, %v5504
        %v5513 = vmul.f32 %v5281, %v5505
        %v5514 = vmul.f32 %v5282, %v5506
        %v5515 = vmul.f32 %v5283, %v5507
        %v5516 = vld [vmem:[%s13] sm:$0x3]
        %v5517 = vld [vmem:[%s14] sm:$0x3]
        %v5518 = vadd.f32 %v5508, %v5509
        %5519 = vadd.xlane.f32.xlu0 %v5518
        %v5520 = vpop.xlane.xlu0 %5519
        %v5521 = vadd.f32 %v5510, %v5511
        %5522 = vadd.xlane.f32.xlu0 %v5521
        %v5523 = vpop.xlane.xlu0 %5522
        %v5524 = vadd.f32 %v5512, %v5513
        %5525 = vadd.xlane.f32.xlu0 %v5524
        %v5526 = vpop.xlane.xlu0 %5525
        %v5527 = vadd.f32 %v5514, %v5515
        %5528 = vadd.xlane.f32.xlu0 %v5527
        %v5529 = vpop.xlane.xlu0 %5528
        %v5530 = vrcp.pop 256.0
        %v5531 = vmul.f32 %v5520, %v5530
        %v5532 = vmul.f32 %v5523, %v5530
        %v5533 = vmul.f32 %v5526, %v5530
        %v5534 = vmul.f32 %v5529, %v5530
        %v5535 = vsub.f32 %v5508, %v5531
        %v5536 = vsub.f32 %v5509, %v5531
        %v5537 = vsub.f32 %v5510, %v5532
        %v5538 = vsub.f32 %v5511, %v5532
        %v5539 = vsub.f32 %v5512, %v5533
        %v5540 = vsub.f32 %v5513, %v5533
        %v5541 = vsub.f32 %v5514, %v5534
        %v5542 = vsub.f32 %v5515, %v5534
        %v5543 = vmul.f32 %v5535, %v5535
        %v5544 = vmul.f32 %v5536, %v5536
        %v5545 = vmul.f32 %v5537, %v5537
        %v5546 = vmul.f32 %v5538, %v5538
        %v5547 = vmul.f32 %v5539, %v5539
        %v5548 = vmul.f32 %v5540, %v5540
        %v5549 = vmul.f32 %v5541, %v5541
        %v5550 = vmul.f32 %v5542, %v5542
        %v5551 = vadd.f32 %v5543, %v5544
        %5552 = vadd.xlane.f32.xlu0 %v5551
        %v5553 = vpop.xlane.xlu0 %5552
        %v5554 = vadd.f32 %v5545, %v5546
        %5555 = vadd.xlane.f32.xlu0 %v5554
        %v5556 = vpop.xlane.xlu0 %5555
        %v5557 = vadd.f32 %v5547, %v5548
        %5558 = vadd.xlane.f32.xlu0 %v5557
        %v5559 = vpop.xlane.xlu0 %5558
        %v5560 = vadd.f32 %v5549, %v5550
        %5561 = vadd.xlane.f32.xlu0 %v5560
        %v5562 = vpop.xlane.xlu0 %5561
        %v5563 = vmul.f32 %v5553, %v5530
        %v5564 = vmul.f32 %v5556, %v5530
        %v5565 = vmul.f32 %v5559, %v5530
        %v5566 = vmul.f32 %v5562, %v5530
        %v5567 = vadd.f32 %v5563, 1e-05
        %v5568 = vadd.f32 %v5564, 1e-05
        %v5569 = vadd.f32 %v5565, 1e-05
        %v5570 = vadd.f32 %v5566, 1e-05
        %v5571 = vrsqrt.pop %v5567
        %v5572 = vrsqrt.pop %v5568
        %v5573 = vrsqrt.pop %v5569
        %v5574 = vrsqrt.pop %v5570
        %v5575 = vmul.f32 %v5535, %v5571
        %v5576 = vmul.f32 %v5536, %v5571
        %v5577 = vmul.f32 %v5537, %v5572
        %v5578 = vmul.f32 %v5538, %v5572
        %v5579 = vmul.f32 %v5539, %v5573
        %v5580 = vmul.f32 %v5540, %v5573
        %v5581 = vmul.f32 %v5541, %v5574
        %v5582 = vmul.f32 %v5542, %v5574
        %v5584 = vlaneseq
        %v5585 = vshrl.u32 %v5584, 7
        %v5586 = vsub.s32 0, %v5585
        %v5587 = vrot.slane %v5516, %v5586
        %v5588 = vlaneseq
        %v5589 = vshrl.u32 %v5588, 7
        %v5590 = vsub.s32 1, %v5589
        %v5591 = vrot.slane %v5516, %v5590
        %v5594 = vmul.f32 %v5575, %v5587
        %v5595 = vmul.f32 %v5576, %v5591
        %v5596 = vmul.f32 %v5577, %v5587
        %v5597 = vmul.f32 %v5578, %v5591
        %v5598 = vmul.f32 %v5579, %v5587
        %v5599 = vmul.f32 %v5580, %v5591
        %v5600 = vmul.f32 %v5581, %v5587
        %v5601 = vmul.f32 %v5582, %v5591
        %v5603 = vlaneseq
        %v5604 = vshrl.u32 %v5603, 7
        %v5605 = vsub.s32 0, %v5604
        %v5606 = vrot.slane %v5517, %v5605
        %v5607 = vlaneseq
        %v5608 = vshrl.u32 %v5607, 7
        %v5609 = vsub.s32 1, %v5608
        %v5610 = vrot.slane %v5517, %v5609
        %v5613 = vadd.f32 %v5594, %v5606
        %v5614 = vadd.f32 %v5595, %v5610
        %v5615 = vadd.f32 %v5596, %v5606
        %v5616 = vadd.f32 %v5597, %v5610
        %v5617 = vadd.f32 %v5598, %v5606
        %v5618 = vadd.f32 %v5599, %v5610
        %v5619 = vadd.f32 %v5600, %v5606
        %v5620 = vadd.f32 %v5601, %v5610
        %v5621 = vld [vmem:[#allocation13] sm:$0xff]
        %v5622 = vld [vmem:[#allocation13 + $0x8] sm:$0xff]
        %v5623 = vld [vmem:[#allocation13 + $0x10] sm:$0xff]
        %v5624 = vld [vmem:[#allocation13 + $0x18] sm:$0xff]
        %v5625 = vld [vmem:[#allocation13 + $0x20] sm:$0xff]
        %v5626 = vld [vmem:[#allocation13 + $0x28] sm:$0xff]
        %v5627 = vld [vmem:[#allocation13 + $0x30] sm:$0xff]
        %v5628 = vld [vmem:[#allocation13 + $0x38] sm:$0xff]
        %v5629 = vld [vmem:[#allocation13 + $0x40] sm:$0xff]
        %v5630 = vld [vmem:[#allocation13 + $0x48] sm:$0xff]
        %v5631 = vld [vmem:[#allocation13 + $0x50] sm:$0xff]
        %v5632 = vld [vmem:[#allocation13 + $0x58] sm:$0xff]
        %v5633 = vld [vmem:[#allocation13 + $0x60] sm:$0xff]
        %v5634 = vld [vmem:[#allocation13 + $0x68] sm:$0xff]
        %v5635 = vld [vmem:[#allocation13 + $0x70] sm:$0xff]
        %v5636 = vld [vmem:[#allocation13 + $0x78] sm:$0xff]
        %v5637 = vld [vmem:[#allocation13 + $0x80] sm:$0xff]
        %v5638 = vld [vmem:[#allocation13 + $0x88] sm:$0xff]
        %v5639 = vld [vmem:[#allocation13 + $0x90] sm:$0xff]
        %v5640 = vld [vmem:[#allocation13 + $0x98] sm:$0xff]
        %v5641 = vld [vmem:[#allocation13 + $0xa0] sm:$0xff]
        %v5642 = vld [vmem:[#allocation13 + $0xa8] sm:$0xff]
        %v5643 = vld [vmem:[#allocation13 + $0xb0] sm:$0xff]
        %v5644 = vld [vmem:[#allocation13 + $0xb8] sm:$0xff]
        %v5645 = vld [vmem:[#allocation13 + $0xc0] sm:$0xff]
        %v5646 = vld [vmem:[#allocation13 + $0xc8] sm:$0xff]
        %v5647 = vld [vmem:[#allocation13 + $0xd0] sm:$0xff]
        %v5648 = vld [vmem:[#allocation13 + $0xd8] sm:$0xff]
        %v5649 = vld [vmem:[#allocation13 + $0xe0] sm:$0xff]
        %v5650 = vld [vmem:[#allocation13 + $0xe8] sm:$0xff]
        %v5651 = vld [vmem:[#allocation13 + $0xf0] sm:$0xff]
        %v5652 = vld [vmem:[#allocation13 + $0xf8] sm:$0xff]
        %v5653 = vld [vmem:[%s16] sm:$0x1]
        %v5655 = vlaneseq
        %v5656 = vshrl.u32 %v5655, 7
        %v5657 = vsub.s32 0, %v5656
        %v5658 = vrot.slane %v5653, %v5657
        %5660 = vmatprep.subr.mxu0 0.0
        %5661 = vmatpush1.msra.mxu0 %v5621
        %5662 = vmatprep.subr.mxu0 0.0
        %5663 = vmatpush1.msra.mxu0 %v5622
        %5664 = vmatprep.subr.mxu0 0.0
        %5665 = vmatpush1.msra.mxu0 %v5623
        %5666 = vmatprep.subr.mxu0 0.0
        %5667 = vmatpush1.msra.mxu0 %v5624
        %5668 = vmatprep.subr.mxu0 0.0
        %5669 = vmatpush1.msra.mxu0 %v5625
        %5670 = vmatprep.subr.mxu0 0.0
        %5671 = vmatpush1.msra.mxu0 %v5626
        %5672 = vmatprep.subr.mxu0 0.0
        %5673 = vmatpush1.msra.mxu0 %v5627
        %5674 = vmatprep.subr.mxu0 0.0
        %5675 = vmatpush1.msra.mxu0 %v5628
        %5676 = vmatprep.subr.mxu0 0.0
        %5677 = vmatpush1.msra.mxu0 %v5629
        %5678 = vmatprep.subr.mxu0 0.0
        %5679 = vmatpush1.msra.mxu0 %v5630
        %5680 = vmatprep.subr.mxu0 0.0
        %5681 = vmatpush1.msra.mxu0 %v5631
        %5682 = vmatprep.subr.mxu0 0.0
        %5683 = vmatpush1.msra.mxu0 %v5632
        %5684 = vmatprep.subr.mxu0 0.0
        %5685 = vmatpush1.msra.mxu0 %v5633
        %5686 = vmatprep.subr.mxu0 0.0
        %5687 = vmatpush1.msra.mxu0 %v5634
        %5688 = vmatprep.subr.mxu0 0.0
        %5689 = vmatpush1.msra.mxu0 %v5635
        %5690 = vmatprep.subr.mxu0 0.0
        %5691 = vmatpush1.msra.mxu0 %v5636
        %5692 = vmatprep.subr.mxu0 0.0
        %5693 = vmatpush1.msra.mxu0 %v5637
        %5694 = vmatprep.subr.mxu0 0.0
        %5695 = vmatpush1.msra.mxu0 %v5638
        %5696 = vmatprep.subr.mxu0 0.0
        %5697 = vmatpush1.msra.mxu0 %v5639
        %5698 = vmatprep.subr.mxu0 0.0
        %5699 = vmatpush1.msra.mxu0 %v5640
        %5700 = vmatprep.subr.mxu0 0.0
        %5701 = vmatpush1.msra.mxu0 %v5641
        %5702 = vmatprep.subr.mxu0 0.0
        %5703 = vmatpush1.msra.mxu0 %v5642
        %5704 = vmatprep.subr.mxu0 0.0
        %5705 = vmatpush1.msra.mxu0 %v5643
        %5706 = vmatprep.subr.mxu0 0.0
        %5707 = vmatpush1.msra.mxu0 %v5644
        %5708 = vmatprep.subr.mxu0 0.0
        %5709 = vmatpush1.msra.mxu0 %v5645
        %5710 = vmatprep.subr.mxu0 0.0
        %5711 = vmatpush1.msra.mxu0 %v5646
        %5712 = vmatprep.subr.mxu0 0.0
        %5713 = vmatpush1.msra.mxu0 %v5647
        %5714 = vmatprep.subr.mxu0 0.0
        %5715 = vmatpush1.msra.mxu0 %v5648
        %5716 = vmatprep.subr.mxu0 0.0
        %5717 = vmatpush1.msra.mxu0 %v5649
        %5718 = vmatprep.subr.mxu0 0.0
        %5719 = vmatpush1.msra.mxu0 %v5650
        %5720 = vmatprep.subr.mxu0 0.0
        %5721 = vmatpush1.msra.mxu0 %v5651
        %5722 = vmatprep.subr.mxu0 0.0
        %5723 = vmatpush1.msra.mxu0 %v5652
        %5724 = vmatprep.mubr.f32.mxu0 %v5614
        %5725 = vmatmul.mubr.f32.gmra.mrb[0].mxu0 %v5613
        %v5726 = vpop.f32.mrb[0].mxu0
        %v5727 = vadd.f32 %v5658, %v5726
        %v5728 = vpop.f32.mrb[0].mxu0
        %5729 = vmatprep.mubr.f32.mxu0 %v5616
        %5730 = vmatmul.mubr.f32.gmra.mrb[0].mxu0 %v5615
        %v5731 = vpop.f32.mrb[0].mxu0
        %v5732 = vadd.f32 %v5658, %v5731
        %v5733 = vpop.f32.mrb[0].mxu0
        %5734 = vmatprep.mubr.f32.mxu0 %v5618
        %5735 = vmatmul.mubr.f32.gmra.mrb[0].mxu0 %v5617
        %v5736 = vpop.f32.mrb[0].mxu0
        %v5737 = vadd.f32 %v5658, %v5736
        %v5738 = vpop.f32.mrb[0].mxu0
        %5739 = vmatprep.mubr.f32.mxu0 %v5620
        %5740 = vmatmul.mubr.f32.gmra.mrb[0].mxu0 %v5619
        %v5741 = vpop.f32.mrb[0].mxu0
        %v5742 = vadd.f32 %v5658, %v5741
        %v5743 = vpop.f32.mrb[0].mxu0
        %5744 = vdwg.mxu0
        %v5745 = vadd.f32 %v5139, %v5727
        %v5746 = vadd.f32 %v5140, %v5732
        %v5747 = vadd.f32 %v5141, %v5737
        %v5748 = vadd.f32 %v5142, %v5742
        %5749 = vst [vmem:[%s650] sm:$0xff] %v5745
        %5750 = vst [vmem:[%s650 + $0x8] sm:$0xff] %v5746
        %5751 = vst [vmem:[%s650 + $0x10] sm:$0xff] %v5747
        %5752 = vst [vmem:[%s650 + $0x18] sm:$0xff] %v5748
        %s5753 = sand.u32 %s407, 1
        %s5754 = scalar_lea.sflag [#allocation4], %s5753
        %s5755 = sand.u32 %s407, 1
        %s5756 = smul.addr %s5755, 32
        %s5757 = scalar_lea.vmem [#allocation14], %s5756
        // Predicated region
        $region117: #{tpu_custom_call.1} parent=87 // pred_check
          %p5758 = pneg %p417
        $region118: #{tpu_custom_call.1} parent=87 // pred_check_branch
          %5760 = sbr.rel (%p5758) target = $region120
        $region119: #{tpu_custom_call.1} parent=87 // pred_region
          %s5761 = smul.u32 2, %s37
          %s5763 = ssub.s32 512, 512
          %5764 = vsyncadd %s5754, %s5763
          %s5765 = smul.addr %s5761, 2
          %s5766 = smul.addr %s5765, 128
          %s5767 = scalar_lea.hbm %s17, %s5766
          %s5768 = sshll.u32 %s5757, 4
          %s5769 = int_to_ptr.vmem [resolvable:$true] %s5768
          %5774 = dma.vmem_to_hbm [thread:$0]  %s5769, 512, %s5767, %s5754, 128, 128, 8
        $region120: #{tpu_custom_call.1} parent=87 // pred_fallthru
          _
      $region88: #{tpu_custom_call.1} parent=5 // pred_fallthru
        _
      %p5775 = scmp.le.s32.totalorder 2, %s32
      // Predicated region
      $region121: #{tpu_custom_call.1} parent=5 // pred_check
        %p5776 = pneg %p5775
      $region122: #{tpu_custom_call.1} parent=5 // pred_check_branch
        %5778 = sbr.rel (%p5776) target = $region124
      $region123: #{tpu_custom_call.1} parent=5 // pred_region
        %s5779 = ssub.s32 %s32, 2
        // Predicated region
        $region125: #{tpu_custom_call.1} parent=123 // pred_check
          %p5780 = pneg %p423
        $region126: #{tpu_custom_call.1} parent=123 // pred_check_branch
          %5782 = sbr.rel (%p5780) target = $region128
        $region127: #{tpu_custom_call.1} parent=123 // pred_region
          %s5783 = sand.u32 %s408, 1
          %s5784 = scalar_lea.sflag [#allocation4], %s5783
          %s5785 = sand.u32 %s408, 1
          %s5786 = smul.addr %s5785, 32
          %s5787 = scalar_lea.vmem [#allocation14], %s5786
          %5788 = dma.done %s5784, 512
        $region128: #{tpu_custom_call.1} parent=123 // pred_fallthru
          _
      $region124: #{tpu_custom_call.1} parent=5 // pred_fallthru
        _
    $region6: #{tpu_custom_call.1} parent=1 // loop_footer
      %s36 = sadd.s32 1, %s32
    $region7: #{tpu_custom_call.1} parent=1 // loop_footer_branch
      %31 = sbr.rel target = $region3
    $region8: #{tpu_custom_call.1} parent=1 // loop_exit
      _
    %5789 = vsyncpa [#allocation3], 1
    %s5790 = scalar_lea.sflag [#allocation3], 1
    %5791 = vsyncpa %s5790, 1
    %5792 = vsyncpa [#allocation6], 1
    %5793 = vsyncpa [#allocation9], 1
    %5794 = vsyncpa [#allocation12], 1
    %5795 = vsyncpa [#allocation4], 1
    %s5796 = scalar_lea.sflag [#allocation4], 1
    %5797 = vsyncpa %s5796, 1

</llo_original>
